<compile_context>
chip_gen: v6e
topology: v6e:2x2x1
jax: 0.10.0
libtpu: 0.0.40
codegen_flags: <defaults>
</compile_context>

<pallas_src>
import functools

import jax
import jax.numpy as jnp
from jax.experimental import pallas as pl
from jax.experimental.pallas import tpu as pltpu

EPS = 1e-5                       # nn.LayerNorm default eps
_VMEM_LIMIT = 32 * 1024 * 1024   # >= scoped default on v5e/v6e/v7x, <= physical on all


def _pick_row_tile(rows, in_row_bytes, out_row_bytes, budget=16 * 1024 * 1024):
    """Row-tile height: a multiple of 8 dividing `rows` whose double-buffered working
    set fits the VMEM budget; prefers >=2 tiles per image so the grid really pipelines.
    Falls back to the whole image for tiny inputs."""
    assert rows % 2 == 0, "spatial size must be even"

    def fits(t):
        return 2 * ((t + 2) * in_row_bytes + t * out_row_bytes) <= budget

    cands = [t for t in range(8, max(rows // 2, 8) + 1, 8)
             if rows % t == 0 and fits(t)]
    return max(cands) if cands else rows


# ---------------- Pallas kernels ----------------

def _conv3x3_bias_kernel(xm_ref, xh_ref, w_ref, b_ref, o_ref, *, th, wo):
    """3x3 conv (input already zero-padded by 1) + bias, on one halo row tile.
      xm_ref: (1, th, wo+2, cin) bf16   main rows of the padded image
      xh_ref: (1, 2,  wo+2, cin) bf16   2-row halo below the main rows
      w_ref : (3, 3, cin, cout)  bf16
      b_ref : (1, cout)          f32
      o_ref : (1, th, wo, cout)  f32
    """
    x = jnp.concatenate([xm_ref[0], xh_ref[0]], axis=0)        # (th+2, wo+2, cin)
    cin = x.shape[-1]
    cout = w_ref.shape[-1]
    m = th * wo
    acc = jnp.zeros((m, cout), jnp.float32)
    for dy in range(3):
        for dx in range(3):
            p = x[dy:dy + th, dx:dx + wo, :].reshape(m, cin)   # in-VMEM im2col tap
            acc = acc + jnp.dot(p, w_ref[dy, dx],
                                preferred_element_type=jnp.float32)
    z = acc + b_ref[...]
    o_ref[0] = z.reshape(th, wo, cout).astype(o_ref.dtype)


def _conv3x3_ln_silu_res_kernel(xm_ref, xh_ref, w_ref, b_ref, g_ref, bt_ref,
                                o_ref, *, th, wo):
    """Fused residual block: y + SiLU(LN_c(Conv3x3(y))) on one halo row tile.
      xm_ref: (1, th, wo+2, c) f32   main rows of zero-padded y
      xh_ref: (1, 2,  wo+2, c) f32   halo rows
      w_ref : (3, 3, c, c) bf16 ; b_ref/g_ref/bt_ref: (1, c) f32
      o_ref : (1, th, wo, c)   f32
    """
    x = jnp.concatenate([xm_ref[0], xh_ref[0]], axis=0)        # (th+2, wo+2, c) f32
    c = x.shape[-1]
    m = th * wo
    xb = x.astype(jnp.bfloat16)                                # MXU operands in bf16
    acc = jnp.zeros((m, c), jnp.float32)
    for dy in range(3):
        for dx in range(3):
            p = xb[dy:dy + th, dx:dx + wo, :].reshape(m, c)
            acc = acc + jnp.dot(p, w_ref[dy, dx],
                                preferred_element_type=jnp.float32)
    # TODO(synk): nn.Dropout(p=0.1) treated as identity (eval/inference mode).
    z = acc + b_ref[...]
    # LayerNorm2d: normalize over channels only, biased variance (matches the spec).
    mu = jnp.mean(z, axis=-1, keepdims=True)
    zc = z - mu
    var = jnp.mean(zc * zc, axis=-1, keepdims=True)
    a = zc * jax.lax.rsqrt(var + EPS) * g_ref[...] + bt_ref[...]
    # SiLU: exp + reciprocal land on the EUP.
    s = a * pl.reciprocal(1.0 + jnp.exp(-a), approx=True)
    res = x[1:th + 1, 1:wo + 1, :].reshape(m, c)               # resident y tile (f32)
    o_ref[0] = (res + s).reshape(th, wo, c).astype(o_ref.dtype)


# ---------------- pallas_call launchers ----------------

def _halo_specs(wp, cin, th):
    half = th // 2
    main = pl.BlockSpec((1, th, wp, cin), lambda b, t: (b, t, 0, 0))
    halo = pl.BlockSpec((1, 2, wp, cin), lambda b, t: (b, (t + 1) * half, 0, 0))
    return main, halo


def _conv_transpose_stage(xpad, w1, b1):
    """Stage 1: 3x3 conv (cin -> 4*cout phase channels) on the 1-padded bf16 input."""
    n, hp, wp, cin = xpad.shape
    rows, wo = hp - 2, wp - 2
    c4 = w1.shape[-1]
    th = _pick_row_tile(rows, wp * cin * 2, wo * c4 * 4)
    grid = (n, rows // th)
    main, halo = _halo_specs(wp, cin, th)
    kern = functools.partial(_conv3x3_bias_kernel, th=th, wo=wo)
    cost = pl.CostEstimate(
        flops=int(2 * n * rows * wo * 9 * cin * c4),
        transcendentals=0,
        bytes_accessed=int(xpad.size * 2 + w1.size * 2 + n * rows * wo * c4 * 4),
    )
    return pl.pallas_call(
        kern,
        out_shape=jax.ShapeDtypeStruct((n, rows, wo, c4), jnp.float32),
        grid=grid,
        in_specs=[
            main,
            halo,
            pl.BlockSpec((3, 3, cin, c4), lambda b, t: (0, 0, 0, 0)),
            pl.BlockSpec((1, c4), lambda b, t: (0, 0)),
        ],
        out_specs=pl.BlockSpec((1, th, wo, c4), lambda b, t: (b, t, 0, 0)),
        compiler_params=pltpu.CompilerParams(
            dimension_semantics=("parallel", "parallel"),
            vmem_limit_bytes=_VMEM_LIMIT),
        cost_estimate=cost,
    )(xpad, xpad, w1, b1)


def _res_block_stage(ypad, w2, b2, gam, bet):
    """Stage 2: fused Conv3x3 + LayerNorm2d + SiLU + residual on the 1-padded f32 y."""
    n, hp, wp, c = ypad.shape
    rows, wo = hp - 2, wp - 2
    th = _pick_row_tile(rows, wp * c * 4, wo * c * 4)
    grid = (n, rows // th)
    main, halo = _halo_specs(wp, c, th)
    kern = functools.partial(_conv3x3_ln_silu_res_kernel, th=th, wo=wo)
    cost = pl.CostEstimate(
        flops=int(2 * n * rows * wo * 9 * c * c),
        transcendentals=int(n * rows * wo * c),
        bytes_accessed=int(ypad.size * 4 + w2.size * 2 + n * rows * wo * c * 4),
    )
    return pl.pallas_call(
        kern,
        out_shape=jax.ShapeDtypeStruct((n, rows, wo, c), jnp.float32),
        grid=grid,
        in_specs=[
            main,
            halo,
            pl.BlockSpec((3, 3, c, c), lambda b, t: (0, 0, 0, 0)),
            pl.BlockSpec((1, c), lambda b, t: (0, 0)),
            pl.BlockSpec((1, c), lambda b, t: (0, 0)),
            pl.BlockSpec((1, c), lambda b, t: (0, 0)),
        ],
        out_specs=pl.BlockSpec((1, th, wo, c), lambda b, t: (b, t, 0, 0)),
        compiler_params=pltpu.CompilerParams(
            dimension_semantics=("parallel", "parallel"),
            vmem_limit_bytes=_VMEM_LIMIT),
        cost_estimate=cost,
    )(ypad, ypad, w2, b2, gam, bet)


# ---------------- JAX glue (weight rewrites, layout, pixel shuffle) ----------------

def _convtranspose_as_conv3x3(ct_w):
    """Rewrite ConvTranspose2d(k=4, s=2, p=1) weights (cin, cout, 4, 4) as an equivalent
    3x3 conv (run on the 1-padded input) that produces 4*cout phase channels, followed by
    PixelShuffle(2).  Output channel layout: (a*2 + b)*cout + co, phase (a, b) = output
    row/col parity."""
    cin, cout = ct_w.shape[0], ct_w.shape[1]
    w = jnp.zeros((3, 3, cin, 4 * cout), ct_w.dtype)
    for a in (0, 1):
        for b in (0, 1):
            g = (a * 2 + b) * cout
            for dy in (a, a + 1):
                for dx in (b, b + 1):
                    ky = 3 + a - 2 * dy
                    kx = 3 + b - 2 * dx
                    w = w.at[dy, dx, :, g:g + cout].set(ct_w[:, :, ky, kx])
    return w


def upblock_forward(x_nchw, params):
    n, cin, h, w = x_nchw.shape
    cout = params["ct_w"].shape[1]
    x = jnp.transpose(x_nchw, (0, 2, 3, 1)).astype(jnp.float32)          # NHWC

    # Stage 1: ConvTranspose2d(4,2,1) == Conv3x3(pad=1, cin -> 4*cout) + PixelShuffle(2).
    w1 = _convtranspose_as_conv3x3(params["ct_w"]).astype(jnp.bfloat16)
    b1 = jnp.tile(params["ct_b"].astype(jnp.float32), 4).reshape(1, 4 * cout)
    xpad = jnp.pad(x, ((0, 0), (1, 1), (1, 1), (0, 0))).astype(jnp.bfloat16)
    y1p = _conv_transpose_stage(xpad, w1, b1)                            # (n, h, w, 4*cout) f32
    y1 = (y1p.reshape(n, h, w, 2, 2, cout)
             .transpose(0, 1, 3, 2, 4, 5)
             .reshape(n, 2 * h, 2 * w, cout))                            # pixel shuffle

    # Stage 2: fused residual block  y1 + SiLU(LN_c(Conv3x3(y1))).
    w2 = jnp.transpose(params["conv_w"], (2, 3, 1, 0)).astype(jnp.bfloat16)
    b2 = params["conv_b"].astype(jnp.float32).reshape(1, cout)
    gam = params["ln_w"].astype(jnp.float32).reshape(1, cout)
    bet = params["ln_b"].astype(jnp.float32).reshape(1, cout)
    y1pad = jnp.pad(y1, ((0, 0), (1, 1), (1, 1), (0, 0)))                # f32 (exact residual)
    out = _res_block_stage(y1pad, w2, b2, gam, bet)                      # (n, 2h, 2w, cout)
    return jnp.transpose(out, (0, 3, 1, 2))                              # back to NCHW


def upblock_reference(x_nchw, params):
    """Pure-JAX reference (same bf16 MXU operand precision) for a correctness check."""
    f32 = jnp.float32
    x = jnp.transpose(x_nchw, (0, 2, 3, 1)).astype(f32)
    # ConvTranspose2d(4,2,1) via lhs dilation + spatially flipped kernel.
    wt = jnp.transpose(params["ct_w"][:, :, ::-1, ::-1], (2, 3, 0, 1))   # (4,4,cin,cout) HWIO
    y1 = jax.lax.conv_general_dilated(
        x.astype(jnp.bfloat16), wt.astype(jnp.bfloat16),
        window_strides=(1, 1), padding=((2, 2), (2, 2)), lhs_dilation=(2, 2),
        dimension_numbers=("NHWC", "HWIO", "NHWC"),
        preferred_element_type=f32) + params["ct_b"]
    # res_block: Dropout(identity) -> Conv3x3 -> LayerNorm2d -> SiLU, then residual add.
    w2 = jnp.transpose(params["conv_w"], (2, 3, 1, 0))                   # (3,3,cin,cout) HWIO
    z = jax.lax.conv_general_dilated(
        y1.astype(jnp.bfloat16), w2.astype(jnp.bfloat16),
        window_strides=(1, 1), padding=((1, 1), (1, 1)),
        dimension_numbers=("NHWC", "HWIO", "NHWC"),
        preferred_element_type=f32) + params["conv_b"]
    mu = jnp.mean(z, axis=-1, keepdims=True)
    zc = z - mu
    var = jnp.mean(zc * zc, axis=-1, keepdims=True)
    a = zc * jax.lax.rsqrt(var + EPS) * params["ln_w"] + params["ln_b"]
    out = y1 + a * jax.nn.sigmoid(a)
    return jnp.transpose(out, (0, 3, 1, 2))


if __name__ == "__main__":
    key = jax.random.PRNGKey(0)
    in_channels, out_channels = 4, 8
    N, H, W = 2, 16, 16                     # output spatial 32x32

    ks = jax.random.split(key, 7)
    params = {
        "ct_w": 0.1 * jax.random.normal(ks[0], (in_channels, out_channels, 4, 4), jnp.float32),
        "ct_b": 0.1 * jax.random.normal(ks[1], (out_channels,), jnp.float32),
        "conv_w": 0.1 * jax.random.normal(ks[2], (out_channels, out_channels, 3, 3), jnp.float32),
        "conv_b": 0.1 * jax.random.normal(ks[3], (out_channels,), jnp.float32),
        "ln_w": 1.0 + 0.05 * jax.random.normal(ks[4], (out_channels,), jnp.float32),
        "ln_b": 0.05 * jax.random.normal(ks[5], (out_channels,), jnp.float32),
    }
    x = jax.random.normal(ks[6], (N, in_channels, H, W), jnp.float32)

    out = jax.block_until_ready(jax.jit(upblock_forward)(x, params))
    assert out.shape == (N, out_channels, 2 * H, 2 * W), out.shape
    assert bool(jnp.isfinite(out).all())

    # Correctness check against a pure-JAX reference (tolerance covers bf16 MXU operands,
    # accumulation-order differences and the approximate EUP reciprocal in SiLU).
    ref = jax.block_until_ready(jax.jit(upblock_reference)(x, params))
    max_err = float(jnp.max(jnp.abs(out - ref)))
    mean_err = float(jnp.mean(jnp.abs(out - ref)))
    assert max_err < 8e-2 and mean_err < 2e-2, (max_err, mean_err)

    print("KERNEL_OK")
</pallas_src>

<mosaic_0001>
module attributes {stable_mosaic.version = 11 : i64} {
  func.func @_conv3x3_bias_kernel(%arg0: i32, %arg1: i32, %arg2: memref<1x8x18x4xbf16, #tpu.memory_space<vmem>>, %arg3: memref<1x2x18x4xbf16, #tpu.memory_space<vmem>>, %arg4: memref<3x3x4x32xbf16, #tpu.memory_space<vmem>>, %arg5: memref<1x32xf32, #tpu.memory_space<vmem>>, %arg6: memref<1x8x16x32xf32, #tpu.memory_space<vmem>>) attributes {dimension_semantics = [#tpu.dimension_semantics<parallel>, #tpu.dimension_semantics<parallel>], iteration_bounds = array<i64: 2, 2>, scalar_prefetch = 0 : i64, scratch_operands = 0 : i64, tpu.core_type = #tpu.core_type<tc>, window_params = [{transform_indices = @transform_0, window_bounds = array<i64: 1, 8, 18, 4>}, {transform_indices = @transform_1, window_bounds = array<i64: 1, 2, 18, 4>}, {pipeline_mode = #tpu.pipeline_mode<synchronous>, transform_indices = @transform_2, window_bounds = array<i64: 3, 3, 4, 32>}, {pipeline_mode = #tpu.pipeline_mode<synchronous>, transform_indices = @transform_3, window_bounds = array<i64: 1, 32>}, {transform_indices = @transform_4, window_bounds = array<i64: 1, 8, 16, 32>}]} {
    %c0 = arith.constant 0 : index
    %c0_0 = arith.constant 0 : index
    %c0_1 = arith.constant 0 : index
    %c0_2 = arith.constant 0 : index
    %0 = vector.load %arg2[%c0, %c0_0, %c0_1, %c0_2] : memref<1x8x18x4xbf16, #tpu.memory_space<vmem>>, vector<1x8x18x4xbf16>
    %1 = vector.shape_cast %0 : vector<1x8x18x4xbf16> to vector<8x18x4xbf16>
    %c0_3 = arith.constant 0 : index
    %c0_4 = arith.constant 0 : index
    %c0_5 = arith.constant 0 : index
    %c0_6 = arith.constant 0 : index
    %2 = vector.load %arg3[%c0_3, %c0_4, %c0_5, %c0_6] : memref<1x2x18x4xbf16, #tpu.memory_space<vmem>>, vector<1x2x18x4xbf16>
    %3 = vector.shape_cast %2 : vector<1x2x18x4xbf16> to vector<2x18x4xbf16>
    %4 = tpu.concatenate %1, %3 in 0 : vector<8x18x4xbf16>, vector<2x18x4xbf16> -> vector<10x18x4xbf16>
    %cst = arith.constant 0.000000e+00 : f32
    %5 = vector.broadcast %cst : f32 to vector<128x32xf32>
    %6 = vector.extract_strided_slice %4 {offsets = [0, 0, 0], sizes = [8, 16, 4], strides = [1, 1, 1]} : vector<10x18x4xbf16> to vector<8x16x4xbf16>
    %7 = vector.shape_cast %6 : vector<8x16x4xbf16> to vector<128x4xbf16>
    %c0_7 = arith.constant 0 : index
    %c0_8 = arith.constant 0 : index
    %c0_9 = arith.constant 0 : index
    %c0_10 = arith.constant 0 : index
    %8 = vector.load %arg4[%c0_7, %c0_8, %c0_9, %c0_10] : memref<3x3x4x32xbf16, #tpu.memory_space<vmem>>, vector<1x1x4x32xbf16>
    %9 = vector.shape_cast %8 : vector<1x1x4x32xbf16> to vector<4x32xbf16>
    %cst_11 = arith.constant dense<0.000000e+00> : vector<128x32xf32>
    %10 = tpu.matmul %7, %9, %cst_11 {dimension_numbers = #tpu.dot_dimension_numbers<[1], [0], [0], [1], [0, 0, 1, 1], [], []>} : vector<128x4xbf16>, vector<4x32xbf16>, vector<128x32xf32> -> vector<128x32xf32>
    %11 = arith.addf %5, %10 : vector<128x32xf32>
    %12 = vector.extract_strided_slice %4 {offsets = [0, 1, 0], sizes = [8, 16, 4], strides = [1, 1, 1]} : vector<10x18x4xbf16> to vector<8x16x4xbf16>
    %13 = vector.shape_cast %12 : vector<8x16x4xbf16> to vector<128x4xbf16>
    %c0_12 = arith.constant 0 : index
    %c1 = arith.constant 1 : index
    %c0_13 = arith.constant 0 : index
    %c0_14 = arith.constant 0 : index
    %14 = vector.load %arg4[%c0_12, %c1, %c0_13, %c0_14] : memref<3x3x4x32xbf16, #tpu.memory_space<vmem>>, vector<1x1x4x32xbf16>
    %15 = vector.shape_cast %14 : vector<1x1x4x32xbf16> to vector<4x32xbf16>
    %cst_15 = arith.constant dense<0.000000e+00> : vector<128x32xf32>
    %16 = tpu.matmul %13, %15, %cst_15 {dimension_numbers = #tpu.dot_dimension_numbers<[1], [0], [0], [1], [0, 0, 1, 1], [], []>} : vector<128x4xbf16>, vector<4x32xbf16>, vector<128x32xf32> -> vector<128x32xf32>
    %17 = arith.addf %11, %16 : vector<128x32xf32>
    %18 = vector.extract_strided_slice %4 {offsets = [0, 2, 0], sizes = [8, 16, 4], strides = [1, 1, 1]} : vector<10x18x4xbf16> to vector<8x16x4xbf16>
    %19 = vector.shape_cast %18 : vector<8x16x4xbf16> to vector<128x4xbf16>
    %c0_16 = arith.constant 0 : index
    %c2 = arith.constant 2 : index
    %c0_17 = arith.constant 0 : index
    %c0_18 = arith.constant 0 : index
    %20 = vector.load %arg4[%c0_16, %c2, %c0_17, %c0_18] : memref<3x3x4x32xbf16, #tpu.memory_space<vmem>>, vector<1x1x4x32xbf16>
    %21 = vector.shape_cast %20 : vector<1x1x4x32xbf16> to vector<4x32xbf16>
    %cst_19 = arith.constant dense<0.000000e+00> : vector<128x32xf32>
    %22 = tpu.matmul %19, %21, %cst_19 {dimension_numbers = #tpu.dot_dimension_numbers<[1], [0], [0], [1], [0, 0, 1, 1], [], []>} : vector<128x4xbf16>, vector<4x32xbf16>, vector<128x32xf32> -> vector<128x32xf32>
    %23 = arith.addf %17, %22 : vector<128x32xf32>
    %24 = vector.extract_strided_slice %4 {offsets = [1, 0, 0], sizes = [8, 16, 4], strides = [1, 1, 1]} : vector<10x18x4xbf16> to vector<8x16x4xbf16>
    %25 = vector.shape_cast %24 : vector<8x16x4xbf16> to vector<128x4xbf16>
    %c1_20 = arith.constant 1 : index
    %c0_21 = arith.constant 0 : index
    %c0_22 = arith.constant 0 : index
    %c0_23 = arith.constant 0 : index
    %26 = vector.load %arg4[%c1_20, %c0_21, %c0_22, %c0_23] : memref<3x3x4x32xbf16, #tpu.memory_space<vmem>>, vector<1x1x4x32xbf16>
    %27 = vector.shape_cast %26 : vector<1x1x4x32xbf16> to vector<4x32xbf16>
    %cst_24 = arith.constant dense<0.000000e+00> : vector<128x32xf32>
    %28 = tpu.matmul %25, %27, %cst_24 {dimension_numbers = #tpu.dot_dimension_numbers<[1], [0], [0], [1], [0, 0, 1, 1], [], []>} : vector<128x4xbf16>, vector<4x32xbf16>, vector<128x32xf32> -> vector<128x32xf32>
    %29 = arith.addf %23, %28 : vector<128x32xf32>
    %30 = vector.extract_strided_slice %4 {offsets = [1, 1, 0], sizes = [8, 16, 4], strides = [1, 1, 1]} : vector<10x18x4xbf16> to vector<8x16x4xbf16>
    %31 = vector.shape_cast %30 : vector<8x16x4xbf16> to vector<128x4xbf16>
    %c1_25 = arith.constant 1 : index
    %c1_26 = arith.constant 1 : index
    %c0_27 = arith.constant 0 : index
    %c0_28 = arith.constant 0 : index
    %32 = vector.load %arg4[%c1_25, %c1_26, %c0_27, %c0_28] : memref<3x3x4x32xbf16, #tpu.memory_space<vmem>>, vector<1x1x4x32xbf16>
    %33 = vector.shape_cast %32 : vector<1x1x4x32xbf16> to vector<4x32xbf16>
    %cst_29 = arith.constant dense<0.000000e+00> : vector<128x32xf32>
    %34 = tpu.matmul %31, %33, %cst_29 {dimension_numbers = #tpu.dot_dimension_numbers<[1], [0], [0], [1], [0, 0, 1, 1], [], []>} : vector<128x4xbf16>, vector<4x32xbf16>, vector<128x32xf32> -> vector<128x32xf32>
    %35 = arith.addf %29, %34 : vector<128x32xf32>
    %36 = vector.extract_strided_slice %4 {offsets = [1, 2, 0], sizes = [8, 16, 4], strides = [1, 1, 1]} : vector<10x18x4xbf16> to vector<8x16x4xbf16>
    %37 = vector.shape_cast %36 : vector<8x16x4xbf16> to vector<128x4xbf16>
    %c1_30 = arith.constant 1 : index
    %c2_31 = arith.constant 2 : index
    %c0_32 = arith.constant 0 : index
    %c0_33 = arith.constant 0 : index
    %38 = vector.load %arg4[%c1_30, %c2_31, %c0_32, %c0_33] : memref<3x3x4x32xbf16, #tpu.memory_space<vmem>>, vector<1x1x4x32xbf16>
    %39 = vector.shape_cast %38 : vector<1x1x4x32xbf16> to vector<4x32xbf16>
    %cst_34 = arith.constant dense<0.000000e+00> : vector<128x32xf32>
    %40 = tpu.matmul %37, %39, %cst_34 {dimension_numbers = #tpu.dot_dimension_numbers<[1], [0], [0], [1], [0, 0, 1, 1], [], []>} : vector<128x4xbf16>, vector<4x32xbf16>, vector<128x32xf32> -> vector<128x32xf32>
    %41 = arith.addf %35, %40 : vector<128x32xf32>
    %42 = vector.extract_strided_slice %4 {offsets = [2, 0, 0], sizes = [8, 16, 4], strides = [1, 1, 1]} : vector<10x18x4xbf16> to vector<8x16x4xbf16>
    %43 = vector.shape_cast %42 : vector<8x16x4xbf16> to vector<128x4xbf16>
    %c2_35 = arith.constant 2 : index
    %c0_36 = arith.constant 0 : index
    %c0_37 = arith.constant 0 : index
    %c0_38 = arith.constant 0 : index
    %44 = vector.load %arg4[%c2_35, %c0_36, %c0_37, %c0_38] : memref<3x3x4x32xbf16, #tpu.memory_space<vmem>>, vector<1x1x4x32xbf16>
    %45 = vector.shape_cast %44 : vector<1x1x4x32xbf16> to vector<4x32xbf16>
    %cst_39 = arith.constant dense<0.000000e+00> : vector<128x32xf32>
    %46 = tpu.matmul %43, %45, %cst_39 {dimension_numbers = #tpu.dot_dimension_numbers<[1], [0], [0], [1], [0, 0, 1, 1], [], []>} : vector<128x4xbf16>, vector<4x32xbf16>, vector<128x32xf32> -> vector<128x32xf32>
    %47 = arith.addf %41, %46 : vector<128x32xf32>
    %48 = vector.extract_strided_slice %4 {offsets = [2, 1, 0], sizes = [8, 16, 4], strides = [1, 1, 1]} : vector<10x18x4xbf16> to vector<8x16x4xbf16>
    %49 = vector.shape_cast %48 : vector<8x16x4xbf16> to vector<128x4xbf16>
    %c2_40 = arith.constant 2 : index
    %c1_41 = arith.constant 1 : index
    %c0_42 = arith.constant 0 : index
    %c0_43 = arith.constant 0 : index
    %50 = vector.load %arg4[%c2_40, %c1_41, %c0_42, %c0_43] : memref<3x3x4x32xbf16, #tpu.memory_space<vmem>>, vector<1x1x4x32xbf16>
    %51 = vector.shape_cast %50 : vector<1x1x4x32xbf16> to vector<4x32xbf16>
    %cst_44 = arith.constant dense<0.000000e+00> : vector<128x32xf32>
    %52 = tpu.matmul %49, %51, %cst_44 {dimension_numbers = #tpu.dot_dimension_numbers<[1], [0], [0], [1], [0, 0, 1, 1], [], []>} : vector<128x4xbf16>, vector<4x32xbf16>, vector<128x32xf32> -> vector<128x32xf32>
    %53 = arith.addf %47, %52 : vector<128x32xf32>
    %54 = vector.extract_strided_slice %4 {offsets = [2, 2, 0], sizes = [8, 16, 4], strides = [1, 1, 1]} : vector<10x18x4xbf16> to vector<8x16x4xbf16>
    %55 = vector.shape_cast %54 : vector<8x16x4xbf16> to vector<128x4xbf16>
    %c2_45 = arith.constant 2 : index
    %c2_46 = arith.constant 2 : index
    %c0_47 = arith.constant 0 : index
    %c0_48 = arith.constant 0 : index
    %56 = vector.load %arg4[%c2_45, %c2_46, %c0_47, %c0_48] : memref<3x3x4x32xbf16, #tpu.memory_space<vmem>>, vector<1x1x4x32xbf16>
    %57 = vector.shape_cast %56 : vector<1x1x4x32xbf16> to vector<4x32xbf16>
    %cst_49 = arith.constant dense<0.000000e+00> : vector<128x32xf32>
    %58 = tpu.matmul %55, %57, %cst_49 {dimension_numbers = #tpu.dot_dimension_numbers<[1], [0], [0], [1], [0, 0, 1, 1], [], []>} : vector<128x4xbf16>, vector<4x32xbf16>, vector<128x32xf32> -> vector<128x32xf32>
    %59 = arith.addf %53, %58 : vector<128x32xf32>
    %c0_50 = arith.constant 0 : index
    %c0_51 = arith.constant 0 : index
    %60 = vector.load %arg5[%c0_50, %c0_51] : memref<1x32xf32, #tpu.memory_space<vmem>>, vector<1x32xf32>
    %61 = vector.broadcast %60 : vector<1x32xf32> to vector<128x32xf32>
    %62 = arith.addf %59, %61 : vector<128x32xf32>
    %63 = vector.shape_cast %62 : vector<128x32xf32> to vector<8x16x32xf32>
    %c0_52 = arith.constant 0 : index
    %c0_53 = arith.constant 0 : index
    %c0_54 = arith.constant 0 : index
    %c0_55 = arith.constant 0 : index
    %64 = vector.load %arg6[%c0_52, %c0_53, %c0_54, %c0_55] : memref<1x8x16x32xf32, #tpu.memory_space<vmem>>, vector<1x8x16x32xf32>
    %65 = vector.shape_cast %64 : vector<1x8x16x32xf32> to vector<8x16x32xf32>
    %66 = vector.shape_cast %63 : vector<8x16x32xf32> to vector<1x8x16x32xf32>
    tpu.vector_store %arg6[%c0_52, %c0_53, %c0_54, %c0_55], %66 {strides = array<i32>} : memref<1x8x16x32xf32, #tpu.memory_space<vmem>>, vector<1x8x16x32xf32>,
    return
  }
  func.func @transform_0(%arg0: i32, %arg1: i32) -> (i32, i32, i32, i32) {
    %c0_i32 = arith.constant 0 : i32
    %c0_i32_0 = arith.constant 0 : i32
    %c0_i32_1 = arith.constant 0 : i32
    return %arg0, %arg1, %c0_i32, %c0_i32_0 : i32, i32, i32, i32
  }
  func.func @transform_1(%arg0: i32, %arg1: i32) -> (i32, i32, i32, i32) {
    %c1_i32 = arith.constant 1 : i32
    %0 = arith.addi %arg1, %c1_i32 : i32
    %c4_i32 = arith.constant 4 : i32
    %1 = arith.muli %0, %c4_i32 : i32
    %c0_i32 = arith.constant 0 : i32
    %c0_i32_0 = arith.constant 0 : i32
    %c0_i32_1 = arith.constant 0 : i32
    return %arg0, %1, %c0_i32, %c0_i32_0 : i32, i32, i32, i32
  }
  func.func @transform_2(%arg0: i32, %arg1: i32) -> (i32, i32, i32, i32) {
    %c0_i32 = arith.constant 0 : i32
    %c0_i32_0 = arith.constant 0 : i32
    %c0_i32_1 = arith.constant 0 : i32
    %c0_i32_2 = arith.constant 0 : i32
    %c0_i32_3 = arith.constant 0 : i32
    return %c0_i32, %c0_i32_0, %c0_i32_1, %c0_i32_2 : i32, i32, i32, i32
  }
  func.func @transform_3(%arg0: i32, %arg1: i32) -> (i32, i32) {
    %c0_i32 = arith.constant 0 : i32
    %c0_i32_0 = arith.constant 0 : i32
    %c0_i32_1 = arith.constant 0 : i32
    return %c0_i32, %c0_i32_0 : i32, i32
  }
  func.func @transform_4(%arg0: i32, %arg1: i32) -> (i32, i32, i32, i32) {
    %c0_i32 = arith.constant 0 : i32
    %c0_i32_0 = arith.constant 0 : i32
    %c0_i32_1 = arith.constant 0 : i32
    return %arg0, %arg1, %c0_i32, %c0_i32_0 : i32, i32, i32, i32
  }
}

module attributes {stable_mosaic.version = 11 : i64} {
  func.func @_conv3x3_ln_silu_res_kernel(%arg0: i32, %arg1: i32, %arg2: memref<1x16x34x8xf32, #tpu.memory_space<vmem>>, %arg3: memref<1x2x34x8xf32, #tpu.memory_space<vmem>>, %arg4: memref<3x3x8x8xbf16, #tpu.memory_space<vmem>>, %arg5: memref<1x8xf32, #tpu.memory_space<vmem>>, %arg6: memref<1x8xf32, #tpu.memory_space<vmem>>, %arg7: memref<1x8xf32, #tpu.memory_space<vmem>>, %arg8: memref<1x16x32x8xf32, #tpu.memory_space<vmem>>) attributes {dimension_semantics = [#tpu.dimension_semantics<parallel>, #tpu.dimension_semantics<parallel>], iteration_bounds = array<i64: 2, 2>, scalar_prefetch = 0 : i64, scratch_operands = 0 : i64, tpu.core_type = #tpu.core_type<tc>, window_params = [{transform_indices = @transform_0, window_bounds = array<i64: 1, 16, 34, 8>}, {transform_indices = @transform_1, window_bounds = array<i64: 1, 2, 34, 8>}, {pipeline_mode = #tpu.pipeline_mode<synchronous>, transform_indices = @transform_2, window_bounds = array<i64: 3, 3, 8, 8>}, {pipeline_mode = #tpu.pipeline_mode<synchronous>, transform_indices = @transform_3, window_bounds = array<i64: 1, 8>}, {pipeline_mode = #tpu.pipeline_mode<synchronous>, transform_indices = @transform_4, window_bounds = array<i64: 1, 8>}, {pipeline_mode = #tpu.pipeline_mode<synchronous>, transform_indices = @transform_5, window_bounds = array<i64: 1, 8>}, {transform_indices = @transform_6, window_bounds = array<i64: 1, 16, 32, 8>}]} {
    %c0 = arith.constant 0 : index
    %c0_0 = arith.constant 0 : index
    %c0_1 = arith.constant 0 : index
    %c0_2 = arith.constant 0 : index
    %0 = vector.load %arg2[%c0, %c0_0, %c0_1, %c0_2] : memref<1x16x34x8xf32, #tpu.memory_space<vmem>>, vector<1x16x34x8xf32>
    %1 = vector.shape_cast %0 : vector<1x16x34x8xf32> to vector<16x34x8xf32>
    %c0_3 = arith.constant 0 : index
    %c0_4 = arith.constant 0 : index
    %c0_5 = arith.constant 0 : index
    %c0_6 = arith.constant 0 : index
    %2 = vector.load %arg3[%c0_3, %c0_4, %c0_5, %c0_6] : memref<1x2x34x8xf32, #tpu.memory_space<vmem>>, vector<1x2x34x8xf32>
    %3 = vector.shape_cast %2 : vector<1x2x34x8xf32> to vector<2x34x8xf32>
    %4 = tpu.concatenate %1, %3 in 0 : vector<16x34x8xf32>, vector<2x34x8xf32> -> vector<18x34x8xf32>
    %5 = arith.truncf %4 : vector<18x34x8xf32> to vector<18x34x8xbf16>
    %cst = arith.constant 0.000000e+00 : f32
    %6 = vector.broadcast %cst : f32 to vector<512x8xf32>
    %7 = vector.extract_strided_slice %5 {offsets = [0, 0, 0], sizes = [16, 32, 8], strides = [1, 1, 1]} : vector<18x34x8xbf16> to vector<16x32x8xbf16>
    %8 = vector.shape_cast %7 : vector<16x32x8xbf16> to vector<512x8xbf16>
    %c0_7 = arith.constant 0 : index
    %c0_8 = arith.constant 0 : index
    %c0_9 = arith.constant 0 : index
    %c0_10 = arith.constant 0 : index
    %9 = vector.load %arg4[%c0_7, %c0_8, %c0_9, %c0_10] : memref<3x3x8x8xbf16, #tpu.memory_space<vmem>>, vector<1x1x8x8xbf16>
    %10 = vector.shape_cast %9 : vector<1x1x8x8xbf16> to vector<8x8xbf16>
    %cst_11 = arith.constant dense<0.000000e+00> : vector<512x8xf32>
    %11 = tpu.matmul %8, %10, %cst_11 {dimension_numbers = #tpu.dot_dimension_numbers<[1], [0], [0], [1], [0, 0, 1, 1], [], []>} : vector<512x8xbf16>, vector<8x8xbf16>, vector<512x8xf32> -> vector<512x8xf32>
    %12 = arith.addf %6, %11 : vector<512x8xf32>
    %13 = vector.extract_strided_slice %5 {offsets = [0, 1, 0], sizes = [16, 32, 8], strides = [1, 1, 1]} : vector<18x34x8xbf16> to vector<16x32x8xbf16>
    %14 = vector.shape_cast %13 : vector<16x32x8xbf16> to vector<512x8xbf16>
    %c0_12 = arith.constant 0 : index
    %c1 = arith.constant 1 : index
    %c0_13 = arith.constant 0 : index
    %c0_14 = arith.constant 0 : index
    %15 = vector.load %arg4[%c0_12, %c1, %c0_13, %c0_14] : memref<3x3x8x8xbf16, #tpu.memory_space<vmem>>, vector<1x1x8x8xbf16>
    %16 = vector.shape_cast %15 : vector<1x1x8x8xbf16> to vector<8x8xbf16>
    %cst_15 = arith.constant dense<0.000000e+00> : vector<512x8xf32>
    %17 = tpu.matmul %14, %16, %cst_15 {dimension_numbers = #tpu.dot_dimension_numbers<[1], [0], [0], [1], [0, 0, 1, 1], [], []>} : vector<512x8xbf16>, vector<8x8xbf16>, vector<512x8xf32> -> vector<512x8xf32>
    %18 = arith.addf %12, %17 : vector<512x8xf32>
    %19 = vector.extract_strided_slice %5 {offsets = [0, 2, 0], sizes = [16, 32, 8], strides = [1, 1, 1]} : vector<18x34x8xbf16> to vector<16x32x8xbf16>
    %20 = vector.shape_cast %19 : vector<16x32x8xbf16> to vector<512x8xbf16>
    %c0_16 = arith.constant 0 : index
    %c2 = arith.constant 2 : index
    %c0_17 = arith.constant 0 : index
    %c0_18 = arith.constant 0 : index
    %21 = vector.load %arg4[%c0_16, %c2, %c0_17, %c0_18] : memref<3x3x8x8xbf16, #tpu.memory_space<vmem>>, vector<1x1x8x8xbf16>
    %22 = vector.shape_cast %21 : vector<1x1x8x8xbf16> to vector<8x8xbf16>
    %cst_19 = arith.constant dense<0.000000e+00> : vector<512x8xf32>
    %23 = tpu.matmul %20, %22, %cst_19 {dimension_numbers = #tpu.dot_dimension_numbers<[1], [0], [0], [1], [0, 0, 1, 1], [], []>} : vector<512x8xbf16>, vector<8x8xbf16>, vector<512x8xf32> -> vector<512x8xf32>
    %24 = arith.addf %18, %23 : vector<512x8xf32>
    %25 = vector.extract_strided_slice %5 {offsets = [1, 0, 0], sizes = [16, 32, 8], strides = [1, 1, 1]} : vector<18x34x8xbf16> to vector<16x32x8xbf16>
    %26 = vector.shape_cast %25 : vector<16x32x8xbf16> to vector<512x8xbf16>
    %c1_20 = arith.constant 1 : index
    %c0_21 = arith.constant 0 : index
    %c0_22 = arith.constant 0 : index
    %c0_23 = arith.constant 0 : index
    %27 = vector.load %arg4[%c1_20, %c0_21, %c0_22, %c0_23] : memref<3x3x8x8xbf16, #tpu.memory_space<vmem>>, vector<1x1x8x8xbf16>
    %28 = vector.shape_cast %27 : vector<1x1x8x8xbf16> to vector<8x8xbf16>
    %cst_24 = arith.constant dense<0.000000e+00> : vector<512x8xf32>
    %29 = tpu.matmul %26, %28, %cst_24 {dimension_numbers = #tpu.dot_dimension_numbers<[1], [0], [0], [1], [0, 0, 1, 1], [], []>} : vector<512x8xbf16>, vector<8x8xbf16>, vector<512x8xf32> -> vector<512x8xf32>
    %30 = arith.addf %24, %29 : vector<512x8xf32>
    %31 = vector.extract_strided_slice %5 {offsets = [1, 1, 0], sizes = [16, 32, 8], strides = [1, 1, 1]} : vector<18x34x8xbf16> to vector<16x32x8xbf16>
    %32 = vector.shape_cast %31 : vector<16x32x8xbf16> to vector<512x8xbf16>
    %c1_25 = arith.constant 1 : index
    %c1_26 = arith.constant 1 : index
    %c0_27 = arith.constant 0 : index
    %c0_28 = arith.constant 0 : index
    %33 = vector.load %arg4[%c1_25, %c1_26, %c0_27, %c0_28] : memref<3x3x8x8xbf16, #tpu.memory_space<vmem>>, vector<1x1x8x8xbf16>
    %34 = vector.shape_cast %33 : vector<1x1x8x8xbf16> to vector<8x8xbf16>
    %cst_29 = arith.constant dense<0.000000e+00> : vector<512x8xf32>
    %35 = tpu.matmul %32, %34, %cst_29 {dimension_numbers = #tpu.dot_dimension_numbers<[1], [0], [0], [1], [0, 0, 1, 1], [], []>} : vector<512x8xbf16>, vector<8x8xbf16>, vector<512x8xf32> -> vector<512x8xf32>
    %36 = arith.addf %30, %35 : vector<512x8xf32>
    %37 = vector.extract_strided_slice %5 {offsets = [1, 2, 0], sizes = [16, 32, 8], strides = [1, 1, 1]} : vector<18x34x8xbf16> to vector<16x32x8xbf16>
    %38 = vector.shape_cast %37 : vector<16x32x8xbf16> to vector<512x8xbf16>
    %c1_30 = arith.constant 1 : index
    %c2_31 = arith.constant 2 : index
    %c0_32 = arith.constant 0 : index
    %c0_33 = arith.constant 0 : index
    %39 = vector.load %arg4[%c1_30, %c2_31, %c0_32, %c0_33] : memref<3x3x8x8xbf16, #tpu.memory_space<vmem>>, vector<1x1x8x8xbf16>
    %40 = vector.shape_cast %39 : vector<1x1x8x8xbf16> to vector<8x8xbf16>
    %cst_34 = arith.constant dense<0.000000e+00> : vector<512x8xf32>
    %41 = tpu.matmul %38, %40, %cst_34 {dimension_numbers = #tpu.dot_dimension_numbers<[1], [0], [0], [1], [0, 0, 1, 1], [], []>} : vector<512x8xbf16>, vector<8x8xbf16>, vector<512x8xf32> -> vector<512x8xf32>
    %42 = arith.addf %36, %41 : vector<512x8xf32>
    %43 = vector.extract_strided_slice %5 {offsets = [2, 0, 0], sizes = [16, 32, 8], strides = [1, 1, 1]} : vector<18x34x8xbf16> to vector<16x32x8xbf16>
    %44 = vector.shape_cast %43 : vector<16x32x8xbf16> to vector<512x8xbf16>
    %c2_35 = arith.constant 2 : index
    %c0_36 = arith.constant 0 : index
    %c0_37 = arith.constant 0 : index
    %c0_38 = arith.constant 0 : index
    %45 = vector.load %arg4[%c2_35, %c0_36, %c0_37, %c0_38] : memref<3x3x8x8xbf16, #tpu.memory_space<vmem>>, vector<1x1x8x8xbf16>
    %46 = vector.shape_cast %45 : vector<1x1x8x8xbf16> to vector<8x8xbf16>
    %cst_39 = arith.constant dense<0.000000e+00> : vector<512x8xf32>
    %47 = tpu.matmul %44, %46, %cst_39 {dimension_numbers = #tpu.dot_dimension_numbers<[1], [0], [0], [1], [0, 0, 1, 1], [], []>} : vector<512x8xbf16>, vector<8x8xbf16>, vector<512x8xf32> -> vector<512x8xf32>
    %48 = arith.addf %42, %47 : vector<512x8xf32>
    %49 = vector.extract_strided_slice %5 {offsets = [2, 1, 0], sizes = [16, 32, 8], strides = [1, 1, 1]} : vector<18x34x8xbf16> to vector<16x32x8xbf16>
    %50 = vector.shape_cast %49 : vector<16x32x8xbf16> to vector<512x8xbf16>
    %c2_40 = arith.constant 2 : index
    %c1_41 = arith.constant 1 : index
    %c0_42 = arith.constant 0 : index
    %c0_43 = arith.constant 0 : index
    %51 = vector.load %arg4[%c2_40, %c1_41, %c0_42, %c0_43] : memref<3x3x8x8xbf16, #tpu.memory_space<vmem>>, vector<1x1x8x8xbf16>
    %52 = vector.shape_cast %51 : vector<1x1x8x8xbf16> to vector<8x8xbf16>
    %cst_44 = arith.constant dense<0.000000e+00> : vector<512x8xf32>
    %53 = tpu.matmul %50, %52, %cst_44 {dimension_numbers = #tpu.dot_dimension_numbers<[1], [0], [0], [1], [0, 0, 1, 1], [], []>} : vector<512x8xbf16>, vector<8x8xbf16>, vector<512x8xf32> -> vector<512x8xf32>
    %54 = arith.addf %48, %53 : vector<512x8xf32>
    %55 = vector.extract_strided_slice %5 {offsets = [2, 2, 0], sizes = [16, 32, 8], strides = [1, 1, 1]} : vector<18x34x8xbf16> to vector<16x32x8xbf16>
    %56 = vector.shape_cast %55 : vector<16x32x8xbf16> to vector<512x8xbf16>
    %c2_45 = arith.constant 2 : index
    %c2_46 = arith.constant 2 : index
    %c0_47 = arith.constant 0 : index
    %c0_48 = arith.constant 0 : index
    %57 = vector.load %arg4[%c2_45, %c2_46, %c0_47, %c0_48] : memref<3x3x8x8xbf16, #tpu.memory_space<vmem>>, vector<1x1x8x8xbf16>
    %58 = vector.shape_cast %57 : vector<1x1x8x8xbf16> to vector<8x8xbf16>
    %cst_49 = arith.constant dense<0.000000e+00> : vector<512x8xf32>
    %59 = tpu.matmul %56, %58, %cst_49 {dimension_numbers = #tpu.dot_dimension_numbers<[1], [0], [0], [1], [0, 0, 1, 1], [], []>} : vector<512x8xbf16>, vector<8x8xbf16>, vector<512x8xf32> -> vector<512x8xf32>
    %60 = arith.addf %54, %59 : vector<512x8xf32>
    %c0_50 = arith.constant 0 : index
    %c0_51 = arith.constant 0 : index
    %61 = vector.load %arg5[%c0_50, %c0_51] : memref<1x8xf32, #tpu.memory_space<vmem>>, vector<1x8xf32>
    %62 = vector.broadcast %61 : vector<1x8xf32> to vector<512x8xf32>
    %63 = arith.addf %60, %62 : vector<512x8xf32>
    %cst_52 = arith.constant dense<0.000000e+00> : vector<512xf32>
    %64 = vector.multi_reduction <add>, %63, %cst_52 [1] : vector<512x8xf32> to vector<512xf32>
    %65 = vector.shape_cast %64 : vector<512xf32> to vector<512x1xf32>
    %cst_53 = arith.constant 8.000000e+00 : f32
    %66 = vector.broadcast %cst_53 : f32 to vector<512x1xf32>
    %67 = arith.divf %65, %66 : vector<512x1xf32>
    %68 = vector.broadcast %67 : vector<512x1xf32> to vector<512x8xf32>
    %69 = arith.subf %63, %68 : vector<512x8xf32>
    %70 = arith.mulf %69, %69 : vector<512x8xf32>
    %cst_54 = arith.constant dense<0.000000e+00> : vector<512xf32>
    %71 = vector.multi_reduction <add>, %70, %cst_54 [1] : vector<512x8xf32> to vector<512xf32>
    %72 = vector.shape_cast %71 : vector<512xf32> to vector<512x1xf32>
    %cst_55 = arith.constant 8.000000e+00 : f32
    %73 = vector.broadcast %cst_55 : f32 to vector<512x1xf32>
    %74 = arith.divf %72, %73 : vector<512x1xf32>
    %cst_56 = arith.constant 9.99999974E-6 : f32
    %75 = vector.broadcast %cst_56 : f32 to vector<512x1xf32>
    %76 = arith.addf %74, %75 : vector<512x1xf32>
    %77 = math.rsqrt %76 : vector<512x1xf32>
    %78 = vector.broadcast %77 : vector<512x1xf32> to vector<512x8xf32>
    %79 = arith.mulf %69, %78 : vector<512x8xf32>
    %c0_57 = arith.constant 0 : index
    %c0_58 = arith.constant 0 : index
    %80 = vector.load %arg6[%c0_57, %c0_58] : memref<1x8xf32, #tpu.memory_space<vmem>>, vector<1x8xf32>
    %81 = vector.broadcast %80 : vector<1x8xf32> to vector<512x8xf32>
    %82 = arith.mulf %79, %81 : vector<512x8xf32>
    %c0_59 = arith.constant 0 : index
    %c0_60 = arith.constant 0 : index
    %83 = vector.load %arg7[%c0_59, %c0_60] : memref<1x8xf32, #tpu.memory_space<vmem>>, vector<1x8xf32>
    %84 = vector.broadcast %83 : vector<1x8xf32> to vector<512x8xf32>
    %85 = arith.addf %82, %84 : vector<512x8xf32>
    %cst_61 = arith.constant 0.000000e+00 : f32
    %86 = vector.broadcast %cst_61 : f32 to vector<512x8xf32>
    %87 = arith.subf %86, %85 : vector<512x8xf32>
    %88 = math.exp %87 : vector<512x8xf32>
    %cst_62 = arith.constant 1.000000e+00 : f32
    %89 = vector.broadcast %cst_62 : f32 to vector<512x8xf32>
    %90 = arith.addf %89, %88 : vector<512x8xf32>
    %91 = tpu.reciprocal %90 {approx = true} : vector<512x8xf32> -> vector<512x8xf32>
    %92 = arith.mulf %85, %91 : vector<512x8xf32>
    %93 = vector.extract_strided_slice %4 {offsets = [1, 1, 0], sizes = [16, 32, 8], strides = [1, 1, 1]} : vector<18x34x8xf32> to vector<16x32x8xf32>
    %94 = vector.shape_cast %93 : vector<16x32x8xf32> to vector<512x8xf32>
    %95 = arith.addf %94, %92 : vector<512x8xf32>
    %96 = vector.shape_cast %95 : vector<512x8xf32> to vector<16x32x8xf32>
    %c0_63 = arith.constant 0 : index
    %c0_64 = arith.constant 0 : index
    %c0_65 = arith.constant 0 : index
    %c0_66 = arith.constant 0 : index
    %97 = vector.load %arg8[%c0_63, %c0_64, %c0_65, %c0_66] : memref<1x16x32x8xf32, #tpu.memory_space<vmem>>, vector<1x16x32x8xf32>
    %98 = vector.shape_cast %97 : vector<1x16x32x8xf32> to vector<16x32x8xf32>
    %99 = vector.shape_cast %96 : vector<16x32x8xf32> to vector<1x16x32x8xf32>
    tpu.vector_store %arg8[%c0_63, %c0_64, %c0_65, %c0_66], %99 {strides = array<i32>} : memref<1x16x32x8xf32, #tpu.memory_space<vmem>>, vector<1x16x32x8xf32>,
    return
  }
  func.func @transform_0(%arg0: i32, %arg1: i32) -> (i32, i32, i32, i32) {
    %c0_i32 = arith.constant 0 : i32
    %c0_i32_0 = arith.constant 0 : i32
    %c0_i32_1 = arith.constant 0 : i32
    return %arg0, %arg1, %c0_i32, %c0_i32_0 : i32, i32, i32, i32
  }
  func.func @transform_1(%arg0: i32, %arg1: i32) -> (i32, i32, i32, i32) {
    %c1_i32 = arith.constant 1 : i32
    %0 = arith.addi %arg1, %c1_i32 : i32
    %c8_i32 = arith.constant 8 : i32
    %1 = arith.muli %0, %c8_i32 : i32
    %c0_i32 = arith.constant 0 : i32
    %c0_i32_0 = arith.constant 0 : i32
    %c0_i32_1 = arith.constant 0 : i32
    return %arg0, %1, %c0_i32, %c0_i32_0 : i32, i32, i32, i32
  }
  func.func @transform_2(%arg0: i32, %arg1: i32) -> (i32, i32, i32, i32) {
    %c0_i32 = arith.constant 0 : i32
    %c0_i32_0 = arith.constant 0 : i32
    %c0_i32_1 = arith.constant 0 : i32
    %c0_i32_2 = arith.constant 0 : i32
    %c0_i32_3 = arith.constant 0 : i32
    return %c0_i32, %c0_i32_0, %c0_i32_1, %c0_i32_2 : i32, i32, i32, i32
  }
  func.func @transform_3(%arg0: i32, %arg1: i32) -> (i32, i32) {
    %c0_i32 = arith.constant 0 : i32
    %c0_i32_0 = arith.constant 0 : i32
    %c0_i32_1 = arith.constant 0 : i32
    return %c0_i32, %c0_i32_0 : i32, i32
  }
  func.func @transform_4(%arg0: i32, %arg1: i32) -> (i32, i32) {
    %c0_i32 = arith.constant 0 : i32
    %c0_i32_0 = arith.constant 0 : i32
    %c0_i32_1 = arith.constant 0 : i32
    return %c0_i32, %c0_i32_0 : i32, i32
  }
  func.func @transform_5(%arg0: i32, %arg1: i32) -> (i32, i32) {
    %c0_i32 = arith.constant 0 : i32
    %c0_i32_0 = arith.constant 0 : i32
    %c0_i32_1 = arith.constant 0 : i32
    return %c0_i32, %c0_i32_0 : i32, i32
  }
  func.func @transform_6(%arg0: i32, %arg1: i32) -> (i32, i32, i32, i32) {
    %c0_i32 = arith.constant 0 : i32
    %c0_i32_0 = arith.constant 0 : i32
    %c0_i32_1 = arith.constant 0 : i32
    return %arg0, %arg1, %c0_i32, %c0_i32_0 : i32, i32, i32, i32
  }
}

</mosaic_0001>

<llo_original>
// kernel: tile.9
$region0: #{tile.9}
  %s0 = inlined_call_operand.vmem [shape: f32[4,8], index: 0, kind: input, shape index: {}]
  %s1 = inlined_call_operand.vmem [shape: f32[1,32], index: 1, kind: output, shape index: {}]
  $region1: #{tile.9} parent=0
    #allocation0 [shape = 'u8[4096]{0}', space=vmem, size = 0x1000, scoped, tag = 'scoped mem for output reshape']
    #allocation1 [shape = 'u8[4096]{0}', space=vmem, size = 0x1000, scoped, tag = 'scoped mem for input reshape']
    %s3 = sshll.u32 1, 4
    %s4 = ssub.s32 %s3, 1
    %v5 = vld [vmem:[%s0] sm:%s4]
    %6 = vst [vmem:[#allocation1] sm:%s4] %v5
    %v7 = vld [vmem:[#allocation1] sm:$0x1]
    %vm8 = vcmask 64512
    %9 = vst.msk [vmem:[#allocation0] sm:$0x1] %vm8, %v7
    %s10 = scalar_lea.vmem [#allocation1], 3
    %v11 = vld [vmem:[%s10] sm:$0x1]
    %12 = vrot.lane.b32.xlu0 %v11, 24
    %v13 = vpop.permute.xlu0 %12
    %vm14 = vcmask 261312
    %15 = vst.msk [vmem:[#allocation0] sm:$0x1] %vm14, %v13
    %s16 = scalar_lea.vmem [#allocation1], 2
    %v17 = vld [vmem:[%s16] sm:$0x1]
    %18 = vrot.lane.b32.xlu0 %v17, 16
    %v19 = vpop.permute.xlu0 %18
    %vm20 = vcmask 195712
    %21 = vst.msk [vmem:[#allocation0] sm:$0x1] %vm20, %v19
    %s22 = scalar_lea.vmem [#allocation1], 1
    %v23 = vld [vmem:[%s22] sm:$0x1]
    %24 = vrot.lane.b32.xlu0 %v23, 8
    %v25 = vpop.permute.xlu0 %24
    %vm26 = vcmask 130112
    %27 = vst.msk [vmem:[#allocation0] sm:$0x1] %vm26, %v25
    %s29 = sshll.u32 1, 1
    %s30 = ssub.s32 %s29, 1
    %v32 = vld [vmem:[#allocation0] sm:%s30]
    %s33 = sshll.u32 1, 1
    %s34 = ssub.s32 %s33, 1
    %35 = vst [vmem:[%s1] sm:%s34] %v32

// kernel: tile.8
$region0: #{tile.8}
  #allocation2 [shape = 's32[1]{0}', space=sflag, size = 0x4, scoped, tag = 'scoped memory for tile.8']
  %s0 = inlined_call_operand.hbm [shape: f32[8], index: 0, kind: input, shape index: {}]
  %s1 = inlined_call_operand.vmem [shape: f32[4,8], index: 1, kind: output, shape index: {}]
  $region1: #{tile.8} parent=0
    #allocation0 [shape = 'u8[512]{0}', space=vmem, size = 0x400, scoped, tag = 'operand span for operand 0']
    #allocation1 [shape = 's32[1]{0}', space=sflag, size = 0x4, scoped, tag = 'scoped memory for tile.8']
    %2 = vsyncpa [#allocation1], 0
    // Predicated region
    $region2: #{tile.8} parent=1 // pred_check
      _
    $region3: #{tile.8} parent=1 // pred_check_branch
      %4 = sbr.rel (0) target = $region5
    $region4: #{tile.8} parent=1 // pred_region
      %s6 = ssub.s32 16, 16
      %7 = vsyncadd [#allocation1], %s6
      %s9 = sshll.u32 [#allocation0], 4
      %s10 = int_to_ptr.vmem [resolvable:$true] %s9
      %12 = dma.hbm_to_vmem [thread:$0]  %s0, 16, %s10, [#allocation1]
    $region5: #{tile.8} parent=1 // pred_fallthru
      _
    // Predicated region
    $region6: #{tile.8} parent=1 // pred_check
      _
    $region7: #{tile.8} parent=1 // pred_check_branch
      %14 = sbr.rel (0) target = $region9
    $region8: #{tile.8} parent=1 // pred_region
      %15 = dma.done [#allocation1], 16
    $region9: #{tile.8} parent=1 // pred_fallthru
      _
    %v16 = vld [vmem:[#allocation0] ss:$0 sm:$0xff]
    %17 = vst [vmem:[%s1] sm:$0xf] %v16
    %18 = vsyncpa [#allocation1], 1

// kernel: upblock_forward.2
$region0: #{upblock_forward.2}
  #allocation0 [shape = 'u32[]', space=smem, size = 0x4, offset = 0x4, fixed_abs, tag = 'smem constant byte address 0x4 - core index']
  #allocation1 [shape = 'u32[144,128]{1,0:T(1,128)}', space=vmem, size = 0x12000, scoped, tag = 'internal scratch']
  %s0 = inlined_call_operand.vmem [shape: bf16[2,18,18,4], index: 0, kind: input, shape index: {}, may-alias: {0,1}]
  %s1 = inlined_call_operand.vmem [shape: bf16[2,18,18,4], index: 1, kind: input, shape index: {}, may-alias: {0,1}]
  %s2 = inlined_call_operand.vmem [shape: bf16[3,3,4,32], index: 2, kind: input, shape index: {}]
  %s3 = inlined_call_operand.vmem [shape: f32[1,32], index: 3, kind: input, shape index: {}]
  %s4 = inlined_call_operand.vmem [shape: f32[2,16,16,32], index: 4, kind: output, shape index: {}]
  %s5 = sld [smem:[#allocation0]]
  $region49: #{upblock_forward.2} parent=0
    _
  %s7 = ssub.s32 1, %s5
  %s8 = scalar_select 0, %s7, %s5
  loop: start=0, step=1, limit=6
  $region2: #{upblock_forward.2} parent=0 // loop_pre_header
    _
  $region3: #{upblock_forward.2} parent=0 // loop_header
    %s10 = sphi 0, %s14
    %p11 = scmp.ge.s32.totalorder %s10, 6
    %s17 = sphi 0, %s29
    %s18 = sphi 0, %s25
    %s19 = sphi 0, %s17
    %s20 = sphi 0, %s18
    %s21 = sphi 0, %s19
    %s22 = sphi 0, %s20
    %s34 = sphi 0, %s36
    %s37 = sphi 0, %s34
    %s38 = sphi 0, %s37
    %s54 = sphi 0, %s38
    %s66 = sphi 0, %s68
    %s69 = sphi 0, %s66
    %s70 = sphi 0, %s69
    %s86 = sphi 0, %s70
    %s90 = sphi 0, %s90
    %s92 = sphi 0, %s90
    %s93 = sphi 0, %s92
    %s107 = sphi 0, %s93
    %s111 = sphi 0, %s111
    %s113 = sphi 0, %s111
    %s114 = sphi 0, %s113
    %s128 = sphi 0, %s114
    %s136 = sphi 0, %s138
    %s139 = sphi 0, %s136
    %s140 = sphi 0, %s139
    %s156 = sphi 0, %s140
  $region4: #{upblock_forward.2} parent=0 // loop_header_branch
    %13 = sbr.rel (%p11) target = $region8
  $region5: #{upblock_forward.2} parent=0 // loop_body
    %s15 = ssub.s32 %s10, 1
    %s16 = ssub.s32 %s10, 2
    %s23 = sadd.s32 1, %s18
    %p24 = scmp.ge.s32.totalorder %s23, 2
    %s25 = scalar_select %p24, 0, %s23
    %s26 = sadd.s32 1, %s17
    %s27 = scalar_select %p24, %s26, %s17
    %p28 = scmp.ge.s32.totalorder %s27, 2
    %s29 = scalar_select %p28, 0, %s27
    %s30 = ssub.s32 %s17, %s29
    %s31 = ssub.s32 %s18, %s25
    %s32 = sor.u32 %s30, %s31
    %p33 = scmp.eq.s32.totalorder %s32, 0
    %s35 = sadd.s32 %s34, 1
    %s36 = scalar_select %p33, %s34, %s35
    %p39 = pneg %p33
    %p40 = scmp.eq.s32.totalorder %s10, 3
    %p41 = por %p39, %p40
    %p42 = scmp.ne.s32.totalorder %s34, %s37
    %p43 = scmp.eq.s32.totalorder %s10, 0
    %p44 = por %p42, %p43
    %p45 = scmp.ne.s32.totalorder %s34, %s37
    %p46 = scmp.eq.s32.totalorder %s15, 3
    %p47 = por %p45, %p46
    %p48 = scmp.ne.s32.totalorder %s37, %s38
    %p49 = scmp.eq.s32.totalorder %s15, 0
    %p50 = por %p48, %p49
    %p51 = scmp.ne.s32.totalorder %s37, %s38
    %p52 = scmp.eq.s32.totalorder %s16, 3
    %p53 = por %p51, %p52
    %p55 = scmp.ne.s32.totalorder %s38, %s54
    %p56 = scmp.eq.s32.totalorder %s16, 0
    %p57 = por %p55, %p56
    %s58 = sadd.s32 %s18, 1
    %s59 = smul.u32 %s58, 4
    %s60 = sadd.s32 %s25, 1
    %s61 = smul.u32 %s60, 4
    %s62 = ssub.s32 %s17, %s29
    %s63 = ssub.s32 %s59, %s61
    %s64 = sor.u32 %s62, %s63
    %p65 = scmp.eq.s32.totalorder %s64, 0
    %s67 = sadd.s32 %s66, 1
    %s68 = scalar_select %p65, %s66, %s67
    %p71 = pneg %p65
    %p72 = scmp.eq.s32.totalorder %s10, 3
    %p73 = por %p71, %p72
    %p74 = scmp.ne.s32.totalorder %s66, %s69
    %p75 = scmp.eq.s32.totalorder %s10, 0
    %p76 = por %p74, %p75
    %p77 = scmp.ne.s32.totalorder %s66, %s69
    %p78 = scmp.eq.s32.totalorder %s15, 3
    %p79 = por %p77, %p78
    %p80 = scmp.ne.s32.totalorder %s69, %s70
    %p81 = scmp.eq.s32.totalorder %s15, 0
    %p82 = por %p80, %p81
    %p83 = scmp.ne.s32.totalorder %s69, %s70
    %p84 = scmp.eq.s32.totalorder %s16, 3
    %p85 = por %p83, %p84
    %p87 = scmp.ne.s32.totalorder %s70, %s86
    %p88 = scmp.eq.s32.totalorder %s16, 0
    %p89 = por %p87, %p88
    %s91 = sadd.s32 %s90, 1
    %p94 = scmp.eq.s32.totalorder %s10, 3
    %p95 = scmp.ne.s32.totalorder %s90, %s92
    %p96 = scmp.eq.s32.totalorder %s10, 0
    %p97 = por %p95, %p96
    %p98 = scmp.ne.s32.totalorder %s90, %s92
    %p99 = scmp.eq.s32.totalorder %s15, 3
    %p100 = por %p98, %p99
    %p101 = scmp.ne.s32.totalorder %s92, %s93
    %p102 = scmp.eq.s32.totalorder %s15, 0
    %p103 = por %p101, %p102
    %p104 = scmp.ne.s32.totalorder %s92, %s93
    %p105 = scmp.eq.s32.totalorder %s16, 3
    %p106 = por %p104, %p105
    %p108 = scmp.ne.s32.totalorder %s93, %s107
    %p109 = scmp.eq.s32.totalorder %s16, 0
    %p110 = por %p108, %p109
    %s112 = sadd.s32 %s111, 1
    %p115 = scmp.eq.s32.totalorder %s10, 3
    %p116 = scmp.ne.s32.totalorder %s111, %s113
    %p117 = scmp.eq.s32.totalorder %s10, 0
    %p118 = por %p116, %p117
    %p119 = scmp.ne.s32.totalorder %s111, %s113
    %p120 = scmp.eq.s32.totalorder %s15, 3
    %p121 = por %p119, %p120
    %p122 = scmp.ne.s32.totalorder %s113, %s114
    %p123 = scmp.eq.s32.totalorder %s15, 0
    %p124 = por %p122, %p123
    %p125 = scmp.ne.s32.totalorder %s113, %s114
    %p126 = scmp.eq.s32.totalorder %s16, 3
    %p127 = por %p125, %p126
    %p129 = scmp.ne.s32.totalorder %s114, %s128
    %p130 = scmp.eq.s32.totalorder %s16, 0
    %p131 = por %p129, %p130
    %s132 = ssub.s32 %s17, %s29
    %s133 = ssub.s32 %s18, %s25
    %s134 = sor.u32 %s132, %s133
    %p135 = scmp.eq.s32.totalorder %s134, 0
    %s137 = sadd.s32 %s136, 1
    %s138 = scalar_select %p135, %s136, %s137
    %p141 = pneg %p135
    %p142 = scmp.eq.s32.totalorder %s10, 3
    %p143 = por %p141, %p142
    %p144 = scmp.ne.s32.totalorder %s136, %s139
    %p145 = scmp.eq.s32.totalorder %s10, 0
    %p146 = por %p144, %p145
    %p147 = scmp.ne.s32.totalorder %s136, %s139
    %p148 = scmp.eq.s32.totalorder %s15, 3
    %p149 = por %p147, %p148
    %p150 = scmp.ne.s32.totalorder %s139, %s140
    %p151 = scmp.eq.s32.totalorder %s15, 0
    %p152 = por %p150, %p151
    %p153 = scmp.ne.s32.totalorder %s139, %s140
    %p154 = scmp.eq.s32.totalorder %s16, 3
    %p155 = por %p153, %p154
    %p157 = scmp.ne.s32.totalorder %s140, %s156
    %p158 = scmp.eq.s32.totalorder %s16, 0
    %p159 = por %p157, %p158
    %p160 = scmp.le.s32.totalorder 1, %s10
    %p161 = scmp.lt.s32.totalorder %s10, 5
    %p162 = pnand %p160, %p161
    %p163 = pneg %p162
    // Predicated region
    $region9: #{upblock_forward.2} parent=5 // pred_check
      _
    $region10: #{upblock_forward.2} parent=5 // pred_check_branch
      %165 = sbr.rel (%p162) target = $region12
    $region11: #{upblock_forward.2} parent=5 // pred_region
      %s166 = ssub.s32 %s10, 1
      // Predicated region
      $region13: #{upblock_forward.2} parent=11 // pred_check
        %p167 = pneg %p103
      $region14: #{upblock_forward.2} parent=11 // pred_check_branch
        %169 = sbr.rel (%p167) target = $region16
      $region15: #{upblock_forward.2} parent=11 // pred_region
        _
      $region16: #{upblock_forward.2} parent=11 // pred_fallthru
        _
      // Predicated region
      $region17: #{upblock_forward.2} parent=11 // pred_check
        %p170 = pneg %p124
      $region18: #{upblock_forward.2} parent=11 // pred_check_branch
        %172 = sbr.rel (%p170) target = $region20
      $region19: #{upblock_forward.2} parent=11 // pred_region
        _
      $region20: #{upblock_forward.2} parent=11 // pred_fallthru
        _
    $region12: #{upblock_forward.2} parent=5 // pred_fallthru
      _
    %p173 = scmp.lt.s32.totalorder %s10, 4
    // Predicated region
    $region21: #{upblock_forward.2} parent=5 // pred_check
      %p174 = pneg %p173
    $region22: #{upblock_forward.2} parent=5 // pred_check_branch
      %176 = sbr.rel (%p174) target = $region24
    $region23: #{upblock_forward.2} parent=5 // pred_region
      // Predicated region
      $region25: #{upblock_forward.2} parent=23 // pred_check
        %p177 = pneg %p44
      $region26: #{upblock_forward.2} parent=23 // pred_check_branch
        %179 = sbr.rel (%p177) target = $region28
      $region27: #{upblock_forward.2} parent=23 // pred_region
        %s180 = smul.u32 8, %s18
        %s181 = ssub.s32 18, %s180
        %p182 = scmp.lt.s32.totalorder %s181, 8
        %s183 = scalar_select %p182, %s181, 8
        %s184 = smul.u32 64, %s183
        %s185 = smul.u32 %s184, 3
        %p186 = scmp.lt.s32.totalorder %s17, 1
        %s187 = scalar_select %p186, %s17, 1
        %p188 = scmp.lt.s32.totalorder %s180, 17
        %s189 = scalar_select %p188, %s180, 17
        %s190 = smul.addr %s189, 3
        %s191 = smul.addr %s187, 54
        %s192 = sadd.s32 %s190, %s191
        %s193 = smul.addr %s192, 4
        %s194 = scalar_lea.vmem %s0, %s193
        %s195 = smul.u32 8, %s18
        %s196 = ssub.s32 18, %s195
        %p197 = scmp.lt.s32.totalorder %s196, 8
        %s198 = scalar_select %p197, %s196, 8
        %s199 = smul.u32 64, %s198
        %s200 = smul.u32 %s199, 3
      $region28: #{upblock_forward.2} parent=23 // pred_fallthru
        _
      // Predicated region
      $region29: #{upblock_forward.2} parent=23 // pred_check
        %p201 = pneg %p76
      $region30: #{upblock_forward.2} parent=23 // pred_check_branch
        %203 = sbr.rel (%p201) target = $region32
      $region31: #{upblock_forward.2} parent=23 // pred_region
        %s204 = sadd.s32 %s18, 1
        %s205 = smul.u32 %s204, 4
        %s206 = smul.u32 2, %s205
        %p207 = scmp.lt.s32.totalorder %s17, 1
        %s208 = scalar_select %p207, %s17, 1
        %p209 = scmp.lt.s32.totalorder %s206, 17
        %s210 = scalar_select %p209, %s206, 17
        %s211 = smul.addr %s210, 3
        %s212 = smul.addr %s208, 54
        %s213 = sadd.s32 %s211, %s212
        %s214 = smul.addr %s213, 4
        %s215 = scalar_lea.vmem %s1, %s214
        %s216 = sadd.s32 %s18, 1
        %s217 = smul.u32 %s216, 4
        %s218 = smul.u32 2, %s217
      $region32: #{upblock_forward.2} parent=23 // pred_fallthru
        _
    $region24: #{upblock_forward.2} parent=5 // pred_fallthru
      _
    %p219 = scmp.le.s32.totalorder 1, %s10
    %p220 = scmp.lt.s32.totalorder %s10, 5
    %p221 = pnand %p219, %p220
    %p222 = pneg %p221
    // Predicated region
    $region33: #{upblock_forward.2} parent=5 // pred_check
      _
    $region34: #{upblock_forward.2} parent=5 // pred_check_branch
      %224 = sbr.rel (%p221) target = $region36
    $region35: #{upblock_forward.2} parent=5 // pred_region
      %s225 = ssub.s32 %s10, 1
      %s226 = smul.u32 8, %s20
      %s227 = ssub.s32 18, %s226
      %p228 = scmp.lt.s32.totalorder %s227, 8
      %s229 = scalar_select %p228, %s227, 8
      %s230 = smul.u32 64, %s229
      %s231 = smul.u32 %s230, 3
      %p232 = scmp.lt.s32.totalorder %s19, 1
      %s233 = scalar_select %p232, %s19, 1
      %p234 = scmp.lt.s32.totalorder %s226, 17
      %s235 = scalar_select %p234, %s226, 17
      %s236 = smul.addr %s235, 3
      %s237 = smul.addr %s233, 54
      %s238 = sadd.s32 %s236, %s237
      %s239 = smul.addr %s238, 4
      %s240 = scalar_lea.vmem %s0, %s239
      %p241 = pneg %p50
      %p242 = pneg %p47
      %s243 = sadd.s32 %s20, 1
      %s244 = smul.u32 %s243, 4
      %s245 = smul.u32 2, %s244
      %p246 = scmp.lt.s32.totalorder %s19, 1
      %s247 = scalar_select %p246, %s19, 1
      %p248 = scmp.lt.s32.totalorder %s245, 17
      %s249 = scalar_select %p248, %s245, 17
      %s250 = smul.addr %s249, 3
      %s251 = smul.addr %s247, 54
      %s252 = sadd.s32 %s250, %s251
      %s253 = smul.addr %s252, 4
      %s254 = scalar_lea.vmem %s1, %s253
      %p255 = pneg %p82
      %p256 = pneg %p79
      %p257 = pneg %p103
      %p258 = pneg %p100
      %p259 = pneg %p124
      %p260 = pneg %p121
      %p261 = pneg %p152
      %p262 = pneg %p149
      %s263 = smul.u32 8, %s20
      %p264 = scmp.lt.s32.totalorder %s19, 1
      %s265 = scalar_select %p264, %s19, 1
      %p266 = scmp.lt.s32.totalorder %s263, 15
      %s267 = scalar_select %p266, %s263, 15
      %s268 = smul.addr %s267, 2
      %s269 = smul.addr %s265, 32
      %s270 = sadd.s32 %s268, %s269
      %s271 = smul.addr %s270, 8
      %s272 = scalar_lea.vmem %s4, %s271
      %s273 = smul.u32 8, %s20
      %s274 = ssub.s32 18, %s273
      %p275 = scmp.lt.s32.totalorder %s274, 8
      %s276 = scalar_select %p275, %s274, 8
      %s277 = smul.u32 64, %s276
      %s278 = smul.u32 %s277, 3
      %p279 = scmp.lt.s32.totalorder %s19, 1
      %s280 = scalar_select %p279, %s19, 1
      %p281 = scmp.lt.s32.totalorder %s273, 17
      %s282 = scalar_select %p281, %s273, 17
      %s283 = smul.addr %s282, 3
      %s284 = smul.addr %s280, 54
      %s285 = sadd.s32 %s283, %s284
      %s286 = smul.addr %s285, 4
      %s287 = scalar_lea.vmem %s0, %s286
      %s288 = smul.u32 8, %s20
      %s289 = ssub.s32 18, %s288
      %p290 = scmp.lt.s32.totalorder %s289, 8
      %s291 = scalar_select %p290, %s289, 8
      %s292 = smul.u32 64, %s291
      %s293 = smul.u32 %s292, 3
      %s294 = sadd.s32 %s20, 1
      %s295 = smul.u32 %s294, 4
      %s296 = smul.u32 2, %s295
      %p297 = scmp.lt.s32.totalorder %s19, 1
      %s298 = scalar_select %p297, %s19, 1
      %p299 = scmp.lt.s32.totalorder %s296, 17
      %s300 = scalar_select %p299, %s296, 17
      %s301 = smul.addr %s300, 3
      %s302 = smul.addr %s298, 54
      %s303 = sadd.s32 %s301, %s302
      %s304 = smul.addr %s303, 4
      %s305 = scalar_lea.vmem %s1, %s304
      %s306 = sadd.s32 %s20, 1
      %s307 = smul.u32 %s306, 4
      %s308 = smul.u32 2, %s307
      %s309 = smul.u32 8, %s20
      %p310 = scmp.lt.s32.totalorder %s19, 1
      %s311 = scalar_select %p310, %s19, 1
      %p312 = scmp.lt.s32.totalorder %s309, 15
      %s313 = scalar_select %p312, %s309, 15
      %s314 = smul.addr %s313, 2
      %s315 = smul.addr %s311, 32
      %s316 = sadd.s32 %s314, %s315
      %s317 = smul.addr %s316, 8
      %s318 = scalar_lea.vmem %s4, %s317
      %s319 = smul.u32 8, %s20
      %v321 = vld [vmem:[%s287] sm:$0xf]
      %v322 = vld [vmem:[%s287 + $0x4] sm:$0xf]
      %v323 = vld [vmem:[%s287 + $0x8] sm:$0x1]
      %v324 = vld [vmem:[%s287 + $0xc] sm:$0xf]
      %v325 = vld [vmem:[%s287 + $0x10] sm:$0xf]
      %v326 = vld [vmem:[%s287 + $0x14] sm:$0x1]
      %v327 = vld [vmem:[%s287 + $0x18] sm:$0xf]
      %v328 = vld [vmem:[%s287 + $0x1c] sm:$0xf]
      %v329 = vld [vmem:[%s287 + $0x20] sm:$0x1]
      %v330 = vld [vmem:[%s287 + $0x24] sm:$0xf]
      %v331 = vld [vmem:[%s287 + $0x28] sm:$0xf]
      %v332 = vld [vmem:[%s287 + $0x2c] sm:$0x1]
      %v333 = vld [vmem:[%s287 + $0x30] sm:$0xf]
      %v334 = vld [vmem:[%s287 + $0x34] sm:$0xf]
      %v335 = vld [vmem:[%s287 + $0x38] sm:$0x1]
      %v336 = vld [vmem:[%s287 + $0x3c] sm:$0xf]
      %v337 = vld [vmem:[%s287 + $0x40] sm:$0xf]
      %v338 = vld [vmem:[%s287 + $0x44] sm:$0x1]
      %v339 = vld [vmem:[%s287 + $0x48] sm:$0xf]
      %v340 = vld [vmem:[%s287 + $0x4c] sm:$0xf]
      %v341 = vld [vmem:[%s287 + $0x50] sm:$0x1]
      %v342 = vld [vmem:[%s287 + $0x54] sm:$0xf]
      %v343 = vld [vmem:[%s287 + $0x58] sm:$0xf]
      %v344 = vld [vmem:[%s287 + $0x5c] sm:$0x1]
      %v345 = vld [vmem:[%s305] sm:$0xf]
      %v346 = vld [vmem:[%s305 + $0x4] sm:$0xf]
      %v347 = vld [vmem:[%s305 + $0x8] sm:$0x1]
      %v348 = vld [vmem:[%s305 + $0xc] sm:$0xf]
      %v349 = vld [vmem:[%s305 + $0x10] sm:$0xf]
      %v350 = vld [vmem:[%s305 + $0x14] sm:$0x1]
      %v351 = vld [vmem:[%s2] sm:$0x3]
      %vm352 = vsmask.f32 3328
      %vm353 = vsmask.f32 7440
      %vm354 = vmor %vm352, %vm353
      %v356 = vshrl.u32 %v321, 16
      %v358 = vrot.slane %v356, 4
      %v359 = vshll.u32 %v321, 16
      %v361 = vrot.slane %v359, 5
      %v362 = vor.u32 %v358, %v361
      %v363 = vrot.slane %v362, 4
      %v365 = vshll.u32 %v322, 16
      %v367 = vrot.slane %v365, 5
      %v368 = vsel %vm354, %v363, %v367
      %v369 = vshrl.u32 %v322, 16
      %v371 = vrot.slane %v369, 4
      %v372 = vor.u32 %v371, %v367
      %v373 = vrot.slane %v372, 4
      %v375 = vshll.u32 %v323, 16
      %v377 = vrot.slane %v375, 5
      %v378 = vsel %vm354, %v373, %v377
      %v380 = vshrl.u32 %v324, 16
      %v382 = vrot.slane %v380, 4
      %v383 = vshll.u32 %v324, 16
      %v385 = vrot.slane %v383, 5
      %v386 = vor.u32 %v382, %v385
      %v387 = vrot.slane %v386, 4
      %v389 = vshll.u32 %v325, 16
      %v391 = vrot.slane %v389, 5
      %v392 = vsel %vm354, %v387, %v391
      %v393 = vshrl.u32 %v325, 16
      %v395 = vrot.slane %v393, 4
      %v396 = vor.u32 %v395, %v391
      %v397 = vrot.slane %v396, 4
      %v399 = vshll.u32 %v326, 16
      %v401 = vrot.slane %v399, 5
      %v402 = vsel %vm354, %v397, %v401
      %v404 = vshrl.u32 %v327, 16
      %v406 = vrot.slane %v404, 4
      %v407 = vshll.u32 %v327, 16
      %v409 = vrot.slane %v407, 5
      %v410 = vor.u32 %v406, %v409
      %v411 = vrot.slane %v410, 4
      %v413 = vshll.u32 %v328, 16
      %v415 = vrot.slane %v413, 5
      %v416 = vsel %vm354, %v411, %v415
      %v417 = vshrl.u32 %v328, 16
      %v419 = vrot.slane %v417, 4
      %v420 = vor.u32 %v419, %v415
      %v421 = vrot.slane %v420, 4
      %v423 = vshll.u32 %v329, 16
      %v425 = vrot.slane %v423, 5
      %v426 = vsel %vm354, %v421, %v425
      %v428 = vshrl.u32 %v330, 16
      %v430 = vrot.slane %v428, 4
      %v431 = vshll.u32 %v330, 16
      %v433 = vrot.slane %v431, 5
      %v434 = vor.u32 %v430, %v433
      %v435 = vrot.slane %v434, 4
      %v437 = vshll.u32 %v331, 16
      %v439 = vrot.slane %v437, 5
      %v440 = vsel %vm354, %v435, %v439
      %v441 = vshrl.u32 %v331, 16
      %v443 = vrot.slane %v441, 4
      %v444 = vor.u32 %v443, %v439
      %v445 = vrot.slane %v444, 4
      %v447 = vshll.u32 %v332, 16
      %v449 = vrot.slane %v447, 5
      %v450 = vsel %vm354, %v445, %v449
      %v452 = vshrl.u32 %v333, 16
      %v454 = vrot.slane %v452, 4
      %v455 = vshll.u32 %v333, 16
      %v457 = vrot.slane %v455, 5
      %v458 = vor.u32 %v454, %v457
      %v459 = vrot.slane %v458, 4
      %v461 = vshll.u32 %v334, 16
      %v463 = vrot.slane %v461, 5
      %v464 = vsel %vm354, %v459, %v463
      %v465 = vshrl.u32 %v334, 16
      %v467 = vrot.slane %v465, 4
      %v468 = vor.u32 %v467, %v463
      %v469 = vrot.slane %v468, 4
      %v471 = vshll.u32 %v335, 16
      %v473 = vrot.slane %v471, 5
      %v474 = vsel %vm354, %v469, %v473
      %v476 = vshrl.u32 %v336, 16
      %v478 = vrot.slane %v476, 4
      %v479 = vshll.u32 %v336, 16
      %v481 = vrot.slane %v479, 5
      %v482 = vor.u32 %v478, %v481
      %v483 = vrot.slane %v482, 4
      %v485 = vshll.u32 %v337, 16
      %v487 = vrot.slane %v485, 5
      %v488 = vsel %vm354, %v483, %v487
      %v489 = vshrl.u32 %v337, 16
      %v491 = vrot.slane %v489, 4
      %v492 = vor.u32 %v491, %v487
      %v493 = vrot.slane %v492, 4
      %v495 = vshll.u32 %v338, 16
      %v497 = vrot.slane %v495, 5
      %v498 = vsel %vm354, %v493, %v497
      %v500 = vshrl.u32 %v339, 16
      %v502 = vrot.slane %v500, 4
      %v503 = vshll.u32 %v339, 16
      %v505 = vrot.slane %v503, 5
      %v506 = vor.u32 %v502, %v505
      %v507 = vrot.slane %v506, 4
      %v509 = vshll.u32 %v340, 16
      %v511 = vrot.slane %v509, 5
      %v512 = vsel %vm354, %v507, %v511
      %v513 = vshrl.u32 %v340, 16
      %v515 = vrot.slane %v513, 4
      %v516 = vor.u32 %v515, %v511
      %v517 = vrot.slane %v516, 4
      %v519 = vshll.u32 %v341, 16
      %v521 = vrot.slane %v519, 5
      %v522 = vsel %vm354, %v517, %v521
      %v524 = vshrl.u32 %v342, 16
      %v526 = vrot.slane %v524, 4
      %v527 = vshll.u32 %v342, 16
      %v529 = vrot.slane %v527, 5
      %v530 = vor.u32 %v526, %v529
      %v531 = vrot.slane %v530, 4
      %v533 = vshll.u32 %v343, 16
      %v535 = vrot.slane %v533, 5
      %v536 = vsel %vm354, %v531, %v535
      %v537 = vshrl.u32 %v343, 16
      %v539 = vrot.slane %v537, 4
      %v540 = vor.u32 %v539, %v535
      %v541 = vrot.slane %v540, 4
      %v543 = vshll.u32 %v344, 16
      %v545 = vrot.slane %v543, 5
      %v546 = vsel %vm354, %v541, %v545
      %s547 = scalar_lea.vmem %s2, 2
      %v548 = vld [vmem:[%s547] sm:$0x3]
      %v549 = vunpack.c.l.b16 %v368
      %v550 = vunpack.c.l.b16 %v378
      %v551 = vunpack.c.l.b16 %v392
      %v552 = vunpack.c.l.b16 %v402
      %v553 = vunpack.c.l.b16 %v416
      %v554 = vunpack.c.l.b16 %v426
      %v555 = vunpack.c.l.b16 %v440
      %v556 = vunpack.c.l.b16 %v450
      %v557 = vunpack.c.l.b16 %v464
      %v558 = vunpack.c.l.b16 %v474
      %v559 = vunpack.c.l.b16 %v488
      %v560 = vunpack.c.l.b16 %v498
      %v561 = vunpack.c.l.b16 %v512
      %v562 = vunpack.c.l.b16 %v522
      %v563 = vunpack.c.l.b16 %v536
      %v564 = vunpack.c.l.b16 %v546
      %v565 = vpack.c.b16 %v550, %v549
      %v566 = vpack.c.b16 %v552, %v551
      %v567 = vpack.c.b16 %v554, %v553
      %v568 = vpack.c.b16 %v556, %v555
      %v569 = vpack.c.b16 %v558, %v557
      %v570 = vpack.c.b16 %v560, %v559
      %v571 = vpack.c.b16 %v562, %v561
      %v572 = vpack.c.b16 %v564, %v563
      %vm573 = vcmask 31744
      %v575 = vsel %vm573, %v565, 0
      %v578 = vsel %vm573, %v566, 0
      %v581 = vsel %vm573, %v567, 0
      %v584 = vsel %vm573, %v568, 0
      %v587 = vsel %vm573, %v569, 0
      %v590 = vsel %vm573, %v570, 0
      %v593 = vsel %vm573, %v571, 0
      %v596 = vsel %vm573, %v572, 0
      %vm598 = vcmask 1041408
      %v600 = vsel %vm598, %v548, 0
      %602 = vmatprep.subr.bf16.mxu0 0
      %603 = vmatpush1.bf16.msra.mxu0 0
      %604 = vmatprep.subr.bf16.mxu0 0
      %605 = vmatpush1.bf16.msra.mxu0 0
      %606 = vmatprep.subr.bf16.mxu0 0
      %607 = vmatpush1.bf16.msra.mxu0 0
      %608 = vmatprep.subr.bf16.mxu0 0
      %609 = vmatpush1.bf16.msra.mxu0 0
      %610 = vmatprep.subr.bf16.mxu0 0
      %611 = vmatpush1.bf16.msra.mxu0 0
      %612 = vmatprep.subr.bf16.mxu0 0
      %613 = vmatpush1.bf16.msra.mxu0 0
      %614 = vmatprep.subr.bf16.mxu0 0
      %615 = vmatpush1.bf16.msra.mxu0 0
      %616 = vmatprep.subr.bf16.mxu0 0
      %617 = vmatpush1.bf16.msra.mxu0 %v600
      %618 = vmatprep.subr.bf16.mxu0 0
      %619 = vmatpush2.bf16.msra.mxu0 0
      %620 = vmatprep.subr.bf16.mxu0 0
      %621 = vmatpush2.bf16.msra.mxu0 0
      %622 = vmatprep.subr.bf16.mxu0 0
      %623 = vmatpush2.bf16.msra.mxu0 0
      %624 = vmatprep.subr.bf16.mxu0 0
      %625 = vmatpush2.bf16.msra.mxu0 0
      %626 = vmatprep.subr.bf16.mxu0 0
      %627 = vmatpush2.bf16.msra.mxu0 0
      %628 = vmatprep.subr.bf16.mxu0 0
      %629 = vmatpush2.bf16.msra.mxu0 0
      %630 = vmatprep.subr.bf16.mxu0 0
      %631 = vmatpush2.bf16.msra.mxu0 0
      %632 = vmatprep.subr.bf16.mxu0 0
      %633 = vmatpush2.bf16.msra.mxu0 0
      %634 = vmatprep.mubr.bf16.mxu0 0
      %635 = vmatmul.mubr.bf16.gmra.mxu0 %v575
      %v636 = vpop.f32.mrf.mxu0
      %v637 = vadd.f32 0.0, %v636
      %v638 = vpop.f32.mrf.mxu0
      %v639 = vpop.f32.mrf.mxu0
      %v640 = vadd.f32 0.0, %v639
      %v641 = vpop.f32.mrf.mxu0
      %642 = vmatprep.mubr.bf16.mxu0 0
      %643 = vmatmul.mubr.bf16.gmra.mxu0 %v578
      %v644 = vpop.f32.mrf.mxu0
      %v645 = vadd.f32 0.0, %v644
      %v646 = vpop.f32.mrf.mxu0
      %v647 = vpop.f32.mrf.mxu0
      %v648 = vadd.f32 0.0, %v647
      %v649 = vpop.f32.mrf.mxu0
      %650 = vmatprep.mubr.bf16.mxu0 0
      %651 = vmatmul.mubr.bf16.gmra.mxu0 %v581
      %v652 = vpop.f32.mrf.mxu0
      %v653 = vadd.f32 0.0, %v652
      %v654 = vpop.f32.mrf.mxu0
      %v655 = vpop.f32.mrf.mxu0
      %v656 = vadd.f32 0.0, %v655
      %v657 = vpop.f32.mrf.mxu0
      %658 = vmatprep.mubr.bf16.mxu0 0
      %659 = vmatmul.mubr.bf16.gmra.mxu0 %v584
      %v660 = vpop.f32.mrf.mxu0
      %v661 = vadd.f32 0.0, %v660
      %v662 = vpop.f32.mrf.mxu0
      %v663 = vpop.f32.mrf.mxu0
      %v664 = vadd.f32 0.0, %v663
      %v665 = vpop.f32.mrf.mxu0
      %666 = vmatprep.mubr.bf16.mxu0 0
      %667 = vmatmul.mubr.bf16.gmra.mxu0 %v587
      %v668 = vpop.f32.mrf.mxu0
      %v669 = vadd.f32 0.0, %v668
      %v670 = vpop.f32.mrf.mxu0
      %v671 = vpop.f32.mrf.mxu0
      %v672 = vadd.f32 0.0, %v671
      %v673 = vpop.f32.mrf.mxu0
      %674 = vmatprep.mubr.bf16.mxu0 0
      %675 = vmatmul.mubr.bf16.gmra.mxu0 %v590
      %v676 = vpop.f32.mrf.mxu0
      %v677 = vadd.f32 0.0, %v676
      %v678 = vpop.f32.mrf.mxu0
      %v679 = vpop.f32.mrf.mxu0
      %v680 = vadd.f32 0.0, %v679
      %v681 = vpop.f32.mrf.mxu0
      %682 = vmatprep.mubr.bf16.mxu0 0
      %683 = vmatmul.mubr.bf16.gmra.mxu0 %v593
      %v684 = vpop.f32.mrf.mxu0
      %v685 = vadd.f32 0.0, %v684
      %v686 = vpop.f32.mrf.mxu0
      %v687 = vpop.f32.mrf.mxu0
      %v688 = vadd.f32 0.0, %v687
      %v689 = vpop.f32.mrf.mxu0
      %690 = vmatprep.mubr.bf16.mxu0 0
      %691 = vmatmul.mubr.bf16.gmra.mxu0 %v596
      %v692 = vpop.f32.mrf.mxu0
      %v693 = vadd.f32 0.0, %v692
      %v694 = vpop.f32.mrf.mxu0
      %v695 = vpop.f32.mrf.mxu0
      %v696 = vadd.f32 0.0, %v695
      %v697 = vpop.f32.mrf.mxu0
      %698 = vdwg.mxu0
      %v715 = vunpack.c.l.b16 %v321
      %v716 = vunpack.c.l.b16 %v322
      %v717 = vunpack.c.l.b16 %v324
      %v718 = vunpack.c.l.b16 %v325
      %v719 = vunpack.c.l.b16 %v327
      %v720 = vunpack.c.l.b16 %v328
      %v721 = vunpack.c.l.b16 %v330
      %v722 = vunpack.c.l.b16 %v331
      %v723 = vunpack.c.l.b16 %v333
      %v724 = vunpack.c.l.b16 %v334
      %v725 = vunpack.c.l.b16 %v336
      %v726 = vunpack.c.l.b16 %v337
      %v727 = vunpack.c.l.b16 %v339
      %v728 = vunpack.c.l.b16 %v340
      %v729 = vunpack.c.l.b16 %v342
      %v730 = vunpack.c.l.b16 %v343
      %v731 = vpack.c.b16 %v716, %v715
      %v732 = vpack.c.b16 %v718, %v717
      %v733 = vpack.c.b16 %v720, %v719
      %v734 = vpack.c.b16 %v722, %v721
      %v735 = vpack.c.b16 %v724, %v723
      %v736 = vpack.c.b16 %v726, %v725
      %v737 = vpack.c.b16 %v728, %v727
      %v738 = vpack.c.b16 %v730, %v729
      %v740 = vsel %vm573, %v731, 0
      %v743 = vsel %vm573, %v732, 0
      %v746 = vsel %vm573, %v733, 0
      %v749 = vsel %vm573, %v734, 0
      %v752 = vsel %vm573, %v735, 0
      %v755 = vsel %vm573, %v736, 0
      %v758 = vsel %vm573, %v737, 0
      %v761 = vsel %vm573, %v738, 0
      %v764 = vsel %vm598, %v351, 0
      %766 = vmatprep.subr.bf16.mxu0 0
      %767 = vmatpush1.bf16.msra.mxu0 0
      %768 = vmatprep.subr.bf16.mxu0 0
      %769 = vmatpush1.bf16.msra.mxu0 0
      %770 = vmatprep.subr.bf16.mxu0 0
      %771 = vmatpush1.bf16.msra.mxu0 0
      %772 = vmatprep.subr.bf16.mxu0 0
      %773 = vmatpush1.bf16.msra.mxu0 0
      %774 = vmatprep.subr.bf16.mxu0 0
      %775 = vmatpush1.bf16.msra.mxu0 0
      %776 = vmatprep.subr.bf16.mxu0 0
      %777 = vmatpush1.bf16.msra.mxu0 0
      %778 = vmatprep.subr.bf16.mxu0 0
      %779 = vmatpush1.bf16.msra.mxu0 0
      %780 = vmatprep.subr.bf16.mxu0 0
      %781 = vmatpush1.bf16.msra.mxu0 %v764
      %782 = vmatprep.subr.bf16.mxu0 0
      %783 = vmatpush2.bf16.msra.mxu0 0
      %784 = vmatprep.subr.bf16.mxu0 0
      %785 = vmatpush2.bf16.msra.mxu0 0
      %786 = vmatprep.subr.bf16.mxu0 0
      %787 = vmatpush2.bf16.msra.mxu0 0
      %788 = vmatprep.subr.bf16.mxu0 0
      %789 = vmatpush2.bf16.msra.mxu0 0
      %790 = vmatprep.subr.bf16.mxu0 0
      %791 = vmatpush2.bf16.msra.mxu0 0
      %792 = vmatprep.subr.bf16.mxu0 0
      %793 = vmatpush2.bf16.msra.mxu0 0
      %794 = vmatprep.subr.bf16.mxu0 0
      %795 = vmatpush2.bf16.msra.mxu0 0
      %796 = vmatprep.subr.bf16.mxu0 0
      %797 = vmatpush2.bf16.msra.mxu0 0
      %798 = vmatprep.mubr.bf16.mxu0 0
      %799 = vmatmul.mubr.bf16.gmra.mxu0 %v740
      %v800 = vpop.f32.mrf.mxu0
      %v801 = vadd.f32 %v637, %v800
      %v802 = vpop.f32.mrf.mxu0
      %v803 = vpop.f32.mrf.mxu0
      %v804 = vadd.f32 %v640, %v803
      %v805 = vpop.f32.mrf.mxu0
      %806 = vmatprep.mubr.bf16.mxu0 0
      %807 = vmatmul.mubr.bf16.gmra.mxu0 %v743
      %v808 = vpop.f32.mrf.mxu0
      %v809 = vadd.f32 %v645, %v808
      %v810 = vpop.f32.mrf.mxu0
      %v811 = vpop.f32.mrf.mxu0
      %v812 = vadd.f32 %v648, %v811
      %v813 = vpop.f32.mrf.mxu0
      %814 = vmatprep.mubr.bf16.mxu0 0
      %815 = vmatmul.mubr.bf16.gmra.mxu0 %v746
      %v816 = vpop.f32.mrf.mxu0
      %v817 = vadd.f32 %v653, %v816
      %v818 = vpop.f32.mrf.mxu0
      %v819 = vpop.f32.mrf.mxu0
      %v820 = vadd.f32 %v656, %v819
      %v821 = vpop.f32.mrf.mxu0
      %822 = vmatprep.mubr.bf16.mxu0 0
      %823 = vmatmul.mubr.bf16.gmra.mxu0 %v749
      %v824 = vpop.f32.mrf.mxu0
      %v825 = vadd.f32 %v661, %v824
      %v826 = vpop.f32.mrf.mxu0
      %v827 = vpop.f32.mrf.mxu0
      %v828 = vadd.f32 %v664, %v827
      %v829 = vpop.f32.mrf.mxu0
      %830 = vmatprep.mubr.bf16.mxu0 0
      %831 = vmatmul.mubr.bf16.gmra.mxu0 %v752
      %v832 = vpop.f32.mrf.mxu0
      %v833 = vadd.f32 %v669, %v832
      %v834 = vpop.f32.mrf.mxu0
      %v835 = vpop.f32.mrf.mxu0
      %v836 = vadd.f32 %v672, %v835
      %v837 = vpop.f32.mrf.mxu0
      %838 = vmatprep.mubr.bf16.mxu0 0
      %839 = vmatmul.mubr.bf16.gmra.mxu0 %v755
      %v840 = vpop.f32.mrf.mxu0
      %v841 = vadd.f32 %v677, %v840
      %v842 = vpop.f32.mrf.mxu0
      %v843 = vpop.f32.mrf.mxu0
      %v844 = vadd.f32 %v680, %v843
      %v845 = vpop.f32.mrf.mxu0
      %846 = vmatprep.mubr.bf16.mxu0 0
      %847 = vmatmul.mubr.bf16.gmra.mxu0 %v758
      %v848 = vpop.f32.mrf.mxu0
      %v849 = vadd.f32 %v685, %v848
      %v850 = vpop.f32.mrf.mxu0
      %v851 = vpop.f32.mrf.mxu0
      %v852 = vadd.f32 %v688, %v851
      %v853 = vpop.f32.mrf.mxu0
      %854 = vmatprep.mubr.bf16.mxu0 0
      %855 = vmatmul.mubr.bf16.gmra.mxu0 %v761
      %v856 = vpop.f32.mrf.mxu0
      %v857 = vadd.f32 %v693, %v856
      %v858 = vpop.f32.mrf.mxu0
      %v859 = vpop.f32.mrf.mxu0
      %v860 = vadd.f32 %v696, %v859
      %v861 = vpop.f32.mrf.mxu0
      %862 = vdwg.mxu0
      %vm871 = vcmask 1042432
      %vm872 = vcmask 1046532
      %vm873 = vmor %vm871, %vm872
      %v874 = vrot.slane %v321, 5
      %v875 = vrot.slane %v874, 4
      %v876 = vrot.slane %v322, 5
      %v877 = vsel %vm873, %v875, %v876
      %v878 = vrot.slane %v876, 4
      %v879 = vrot.slane %v323, 5
      %v880 = vsel %vm873, %v878, %v879
      %v881 = vrot.slane %v324, 5
      %v882 = vrot.slane %v881, 4
      %v883 = vrot.slane %v325, 5
      %v884 = vsel %vm873, %v882, %v883
      %v885 = vrot.slane %v883, 4
      %v886 = vrot.slane %v326, 5
      %v887 = vsel %vm873, %v885, %v886
      %v888 = vrot.slane %v327, 5
      %v889 = vrot.slane %v888, 4
      %v890 = vrot.slane %v328, 5
      %v891 = vsel %vm873, %v889, %v890
      %v892 = vrot.slane %v890, 4
      %v893 = vrot.slane %v329, 5
      %v894 = vsel %vm873, %v892, %v893
      %v895 = vrot.slane %v330, 5
      %v896 = vrot.slane %v895, 4
      %v897 = vrot.slane %v331, 5
      %v898 = vsel %vm873, %v896, %v897
      %v899 = vrot.slane %v897, 4
      %v900 = vrot.slane %v332, 5
      %v901 = vsel %vm873, %v899, %v900
      %v902 = vrot.slane %v333, 5
      %v903 = vrot.slane %v902, 4
      %v904 = vrot.slane %v334, 5
      %v905 = vsel %vm873, %v903, %v904
      %v906 = vrot.slane %v904, 4
      %v907 = vrot.slane %v335, 5
      %v908 = vsel %vm873, %v906, %v907
      %v909 = vrot.slane %v336, 5
      %v910 = vrot.slane %v909, 4
      %v911 = vrot.slane %v337, 5
      %v912 = vsel %vm873, %v910, %v911
      %v913 = vrot.slane %v911, 4
      %v914 = vrot.slane %v338, 5
      %v915 = vsel %vm873, %v913, %v914
      %v916 = vrot.slane %v339, 5
      %v917 = vrot.slane %v916, 4
      %v918 = vrot.slane %v340, 5
      %v919 = vsel %vm873, %v917, %v918
      %v920 = vrot.slane %v918, 4
      %v921 = vrot.slane %v341, 5
      %v922 = vsel %vm873, %v920, %v921
      %v923 = vrot.slane %v342, 5
      %v924 = vrot.slane %v923, 4
      %v925 = vrot.slane %v343, 5
      %v926 = vsel %vm873, %v924, %v925
      %v927 = vrot.slane %v925, 4
      %v928 = vrot.slane %v344, 5
      %v929 = vsel %vm873, %v927, %v928
      %s930 = scalar_lea.vmem %s2, 4
      %v931 = vld [vmem:[%s930] sm:$0x3]
      %v932 = vunpack.c.l.b16 %v877
      %v933 = vunpack.c.l.b16 %v880
      %v934 = vunpack.c.l.b16 %v884
      %v935 = vunpack.c.l.b16 %v887
      %v936 = vunpack.c.l.b16 %v891
      %v937 = vunpack.c.l.b16 %v894
      %v938 = vunpack.c.l.b16 %v898
      %v939 = vunpack.c.l.b16 %v901
      %v940 = vunpack.c.l.b16 %v905
      %v941 = vunpack.c.l.b16 %v908
      %v942 = vunpack.c.l.b16 %v912
      %v943 = vunpack.c.l.b16 %v915
      %v944 = vunpack.c.l.b16 %v919
      %v945 = vunpack.c.l.b16 %v922
      %v946 = vunpack.c.l.b16 %v926
      %v947 = vunpack.c.l.b16 %v929
      %v948 = vpack.c.b16 %v933, %v932
      %v949 = vpack.c.b16 %v935, %v934
      %v950 = vpack.c.b16 %v937, %v936
      %v951 = vpack.c.b16 %v939, %v938
      %v952 = vpack.c.b16 %v941, %v940
      %v953 = vpack.c.b16 %v943, %v942
      %v954 = vpack.c.b16 %v945, %v944
      %v955 = vpack.c.b16 %v947, %v946
      %v957 = vsel %vm573, %v948, 0
      %v960 = vsel %vm573, %v949, 0
      %v963 = vsel %vm573, %v950, 0
      %v966 = vsel %vm573, %v951, 0
      %v969 = vsel %vm573, %v952, 0
      %v972 = vsel %vm573, %v953, 0
      %v975 = vsel %vm573, %v954, 0
      %v978 = vsel %vm573, %v955, 0
      %v981 = vsel %vm598, %v931, 0
      %983 = vmatprep.subr.bf16.mxu0 0
      %984 = vmatpush1.bf16.msra.mxu0 0
      %985 = vmatprep.subr.bf16.mxu0 0
      %986 = vmatpush1.bf16.msra.mxu0 0
      %987 = vmatprep.subr.bf16.mxu0 0
      %988 = vmatpush1.bf16.msra.mxu0 0
      %989 = vmatprep.subr.bf16.mxu0 0
      %990 = vmatpush1.bf16.msra.mxu0 0
      %991 = vmatprep.subr.bf16.mxu0 0
      %992 = vmatpush1.bf16.msra.mxu0 0
      %993 = vmatprep.subr.bf16.mxu0 0
      %994 = vmatpush1.bf16.msra.mxu0 0
      %995 = vmatprep.subr.bf16.mxu0 0
      %996 = vmatpush1.bf16.msra.mxu0 0
      %997 = vmatprep.subr.bf16.mxu0 0
      %998 = vmatpush1.bf16.msra.mxu0 %v981
      %999 = vmatprep.subr.bf16.mxu0 0
      %1000 = vmatpush2.bf16.msra.mxu0 0
      %1001 = vmatprep.subr.bf16.mxu0 0
      %1002 = vmatpush2.bf16.msra.mxu0 0
      %1003 = vmatprep.subr.bf16.mxu0 0
      %1004 = vmatpush2.bf16.msra.mxu0 0
      %1005 = vmatprep.subr.bf16.mxu0 0
      %1006 = vmatpush2.bf16.msra.mxu0 0
      %1007 = vmatprep.subr.bf16.mxu0 0
      %1008 = vmatpush2.bf16.msra.mxu0 0
      %1009 = vmatprep.subr.bf16.mxu0 0
      %1010 = vmatpush2.bf16.msra.mxu0 0
      %1011 = vmatprep.subr.bf16.mxu0 0
      %1012 = vmatpush2.bf16.msra.mxu0 0
      %1013 = vmatprep.subr.bf16.mxu0 0
      %1014 = vmatpush2.bf16.msra.mxu0 0
      %1015 = vmatprep.mubr.bf16.mxu0 0
      %1016 = vmatmul.mubr.bf16.gmra.mxu0 %v957
      %v1017 = vpop.f32.mrf.mxu0
      %v1018 = vadd.f32 0.0, %v1017
      %v1019 = vpop.f32.mrf.mxu0
      %v1020 = vpop.f32.mrf.mxu0
      %v1021 = vadd.f32 0.0, %v1020
      %v1022 = vpop.f32.mrf.mxu0
      %1023 = vmatprep.mubr.bf16.mxu0 0
      %1024 = vmatmul.mubr.bf16.gmra.mxu0 %v960
      %v1025 = vpop.f32.mrf.mxu0
      %v1026 = vadd.f32 0.0, %v1025
      %v1027 = vpop.f32.mrf.mxu0
      %v1028 = vpop.f32.mrf.mxu0
      %v1029 = vadd.f32 0.0, %v1028
      %v1030 = vpop.f32.mrf.mxu0
      %1031 = vmatprep.mubr.bf16.mxu0 0
      %1032 = vmatmul.mubr.bf16.gmra.mxu0 %v963
      %v1033 = vpop.f32.mrf.mxu0
      %v1034 = vadd.f32 0.0, %v1033
      %v1035 = vpop.f32.mrf.mxu0
      %v1036 = vpop.f32.mrf.mxu0
      %v1037 = vadd.f32 0.0, %v1036
      %v1038 = vpop.f32.mrf.mxu0
      %1039 = vmatprep.mubr.bf16.mxu0 0
      %1040 = vmatmul.mubr.bf16.gmra.mxu0 %v966
      %v1041 = vpop.f32.mrf.mxu0
      %v1042 = vadd.f32 0.0, %v1041
      %v1043 = vpop.f32.mrf.mxu0
      %v1044 = vpop.f32.mrf.mxu0
      %v1045 = vadd.f32 0.0, %v1044
      %v1046 = vpop.f32.mrf.mxu0
      %1047 = vmatprep.mubr.bf16.mxu0 0
      %1048 = vmatmul.mubr.bf16.gmra.mxu0 %v969
      %v1049 = vpop.f32.mrf.mxu0
      %v1050 = vadd.f32 0.0, %v1049
      %v1051 = vpop.f32.mrf.mxu0
      %v1052 = vpop.f32.mrf.mxu0
      %v1053 = vadd.f32 0.0, %v1052
      %v1054 = vpop.f32.mrf.mxu0
      %1055 = vmatprep.mubr.bf16.mxu0 0
      %1056 = vmatmul.mubr.bf16.gmra.mxu0 %v972
      %v1057 = vpop.f32.mrf.mxu0
      %v1058 = vadd.f32 0.0, %v1057
      %v1059 = vpop.f32.mrf.mxu0
      %v1060 = vpop.f32.mrf.mxu0
      %v1061 = vadd.f32 0.0, %v1060
      %v1062 = vpop.f32.mrf.mxu0
      %1063 = vmatprep.mubr.bf16.mxu0 0
      %1064 = vmatmul.mubr.bf16.gmra.mxu0 %v975
      %v1065 = vpop.f32.mrf.mxu0
      %v1066 = vadd.f32 0.0, %v1065
      %v1067 = vpop.f32.mrf.mxu0
      %v1068 = vpop.f32.mrf.mxu0
      %v1069 = vadd.f32 0.0, %v1068
      %v1070 = vpop.f32.mrf.mxu0
      %1071 = vmatprep.mubr.bf16.mxu0 0
      %1072 = vmatmul.mubr.bf16.gmra.mxu0 %v978
      %v1073 = vpop.f32.mrf.mxu0
      %v1074 = vadd.f32 0.0, %v1073
      %v1075 = vpop.f32.mrf.mxu0
      %v1076 = vpop.f32.mrf.mxu0
      %v1077 = vadd.f32 0.0, %v1076
      %v1078 = vpop.f32.mrf.mxu0
      %1079 = vdwg.mxu0
      %v1080 = vadd.f32 %v801, %v1018
      %v1081 = vadd.f32 %v804, %v1021
      %v1082 = vadd.f32 %v809, %v1026
      %v1083 = vadd.f32 %v812, %v1029
      %v1084 = vadd.f32 %v817, %v1034
      %v1085 = vadd.f32 %v820, %v1037
      %v1086 = vadd.f32 %v825, %v1042
      %v1087 = vadd.f32 %v828, %v1045
      %v1088 = vadd.f32 %v833, %v1050
      %v1089 = vadd.f32 %v836, %v1053
      %v1090 = vadd.f32 %v841, %v1058
      %v1091 = vadd.f32 %v844, %v1061
      %v1092 = vadd.f32 %v849, %v1066
      %v1093 = vadd.f32 %v852, %v1069
      %v1094 = vadd.f32 %v857, %v1074
      %v1095 = vadd.f32 %v860, %v1077
      %s1096 = scalar_lea.vmem %s2, 6
      %v1097 = vld [vmem:[%s1096] sm:$0x3]
      %v1100 = vunpack.c.l.b16 %v345
      %v1101 = vunpack.c.l.b16 %v346
      %v1102 = vpack.c.b16 %v1101, %v1100
      %v1104 = vsel %vm573, %v1102, 0
      %v1107 = vsel %vm598, %v1097, 0
      %1109 = vmatprep.subr.bf16.mxu0 0
      %1110 = vmatpush1.bf16.msra.mxu0 0
      %1111 = vmatprep.subr.bf16.mxu0 0
      %1112 = vmatpush1.bf16.msra.mxu0 0
      %1113 = vmatprep.subr.bf16.mxu0 0
      %1114 = vmatpush1.bf16.msra.mxu0 0
      %1115 = vmatprep.subr.bf16.mxu0 0
      %1116 = vmatpush1.bf16.msra.mxu0 0
      %1117 = vmatprep.subr.bf16.mxu0 0
      %1118 = vmatpush1.bf16.msra.mxu0 0
      %1119 = vmatprep.subr.bf16.mxu0 0
      %1120 = vmatpush1.bf16.msra.mxu0 0
      %1121 = vmatprep.subr.bf16.mxu0 0
      %1122 = vmatpush1.bf16.msra.mxu0 0
      %1123 = vmatprep.subr.bf16.mxu0 0
      %1124 = vmatpush1.bf16.msra.mxu0 %v1107
      %1125 = vmatprep.subr.bf16.mxu0 0
      %1126 = vmatpush2.bf16.msra.mxu0 0
      %1127 = vmatprep.subr.bf16.mxu0 0
      %1128 = vmatpush2.bf16.msra.mxu0 0
      %1129 = vmatprep.subr.bf16.mxu0 0
      %1130 = vmatpush2.bf16.msra.mxu0 0
      %1131 = vmatprep.subr.bf16.mxu0 0
      %1132 = vmatpush2.bf16.msra.mxu0 0
      %1133 = vmatprep.subr.bf16.mxu0 0
      %1134 = vmatpush2.bf16.msra.mxu0 0
      %1135 = vmatprep.subr.bf16.mxu0 0
      %1136 = vmatpush2.bf16.msra.mxu0 0
      %1137 = vmatprep.subr.bf16.mxu0 0
      %1138 = vmatpush2.bf16.msra.mxu0 0
      %1139 = vmatprep.subr.bf16.mxu0 0
      %1140 = vmatpush2.bf16.msra.mxu0 0
      %1141 = vmatprep.mubr.bf16.mxu0 0
      %1142 = vmatmul.mubr.bf16.gmra.mxu0 %v743
      %v1143 = vpop.f32.mrf.mxu0
      %v1144 = vadd.f32 0.0, %v1143
      %v1145 = vpop.f32.mrf.mxu0
      %v1146 = vpop.f32.mrf.mxu0
      %v1147 = vadd.f32 0.0, %v1146
      %v1148 = vpop.f32.mrf.mxu0
      %1149 = vmatprep.mubr.bf16.mxu0 0
      %1150 = vmatmul.mubr.bf16.gmra.mxu0 %v746
      %v1151 = vpop.f32.mrf.mxu0
      %v1152 = vadd.f32 0.0, %v1151
      %v1153 = vpop.f32.mrf.mxu0
      %v1154 = vpop.f32.mrf.mxu0
      %v1155 = vadd.f32 0.0, %v1154
      %v1156 = vpop.f32.mrf.mxu0
      %1157 = vmatprep.mubr.bf16.mxu0 0
      %1158 = vmatmul.mubr.bf16.gmra.mxu0 %v749
      %v1159 = vpop.f32.mrf.mxu0
      %v1160 = vadd.f32 0.0, %v1159
      %v1161 = vpop.f32.mrf.mxu0
      %v1162 = vpop.f32.mrf.mxu0
      %v1163 = vadd.f32 0.0, %v1162
      %v1164 = vpop.f32.mrf.mxu0
      %1165 = vmatprep.mubr.bf16.mxu0 0
      %1166 = vmatmul.mubr.bf16.gmra.mxu0 %v752
      %v1167 = vpop.f32.mrf.mxu0
      %v1168 = vadd.f32 0.0, %v1167
      %v1169 = vpop.f32.mrf.mxu0
      %v1170 = vpop.f32.mrf.mxu0
      %v1171 = vadd.f32 0.0, %v1170
      %v1172 = vpop.f32.mrf.mxu0
      %1173 = vmatprep.mubr.bf16.mxu0 0
      %1174 = vmatmul.mubr.bf16.gmra.mxu0 %v755
      %v1175 = vpop.f32.mrf.mxu0
      %v1176 = vadd.f32 0.0, %v1175
      %v1177 = vpop.f32.mrf.mxu0
      %v1178 = vpop.f32.mrf.mxu0
      %v1179 = vadd.f32 0.0, %v1178
      %v1180 = vpop.f32.mrf.mxu0
      %1181 = vmatprep.mubr.bf16.mxu0 0
      %1182 = vmatmul.mubr.bf16.gmra.mxu0 %v758
      %v1183 = vpop.f32.mrf.mxu0
      %v1184 = vadd.f32 0.0, %v1183
      %v1185 = vpop.f32.mrf.mxu0
      %v1186 = vpop.f32.mrf.mxu0
      %v1187 = vadd.f32 0.0, %v1186
      %v1188 = vpop.f32.mrf.mxu0
      %1189 = vmatprep.mubr.bf16.mxu0 0
      %1190 = vmatmul.mubr.bf16.gmra.mxu0 %v761
      %v1191 = vpop.f32.mrf.mxu0
      %v1192 = vadd.f32 0.0, %v1191
      %v1193 = vpop.f32.mrf.mxu0
      %v1194 = vpop.f32.mrf.mxu0
      %v1195 = vadd.f32 0.0, %v1194
      %v1196 = vpop.f32.mrf.mxu0
      %1197 = vmatprep.mubr.bf16.mxu0 0
      %1198 = vmatmul.mubr.bf16.gmra.mxu0 %v1104
      %v1199 = vpop.f32.mrf.mxu0
      %v1200 = vadd.f32 0.0, %v1199
      %v1201 = vpop.f32.mrf.mxu0
      %v1202 = vpop.f32.mrf.mxu0
      %v1203 = vadd.f32 0.0, %v1202
      %v1204 = vpop.f32.mrf.mxu0
      %1205 = vdwg.mxu0
      %v1206 = vadd.f32 %v1080, %v1144
      %v1207 = vadd.f32 %v1081, %v1147
      %v1208 = vadd.f32 %v1082, %v1152
      %v1209 = vadd.f32 %v1083, %v1155
      %v1210 = vadd.f32 %v1084, %v1160
      %v1211 = vadd.f32 %v1085, %v1163
      %v1212 = vadd.f32 %v1086, %v1168
      %v1213 = vadd.f32 %v1087, %v1171
      %v1214 = vadd.f32 %v1088, %v1176
      %v1215 = vadd.f32 %v1089, %v1179
      %v1216 = vadd.f32 %v1090, %v1184
      %v1217 = vadd.f32 %v1091, %v1187
      %v1218 = vadd.f32 %v1092, %v1192
      %v1219 = vadd.f32 %v1093, %v1195
      %v1220 = vadd.f32 %v1094, %v1200
      %v1221 = vadd.f32 %v1095, %v1203
      %v1223 = vshrl.u32 %v345, 16
      %v1225 = vrot.slane %v1223, 4
      %v1226 = vshll.u32 %v345, 16
      %v1228 = vrot.slane %v1226, 5
      %v1229 = vor.u32 %v1225, %v1228
      %v1230 = vrot.slane %v1229, 4
      %v1232 = vshll.u32 %v346, 16
      %v1234 = vrot.slane %v1232, 5
      %v1235 = vsel %vm354, %v1230, %v1234
      %v1236 = vshrl.u32 %v346, 16
      %v1238 = vrot.slane %v1236, 4
      %v1239 = vor.u32 %v1238, %v1234
      %v1240 = vrot.slane %v1239, 4
      %v1242 = vshll.u32 %v347, 16
      %v1244 = vrot.slane %v1242, 5
      %v1245 = vsel %vm354, %v1240, %v1244
      %s1246 = scalar_lea.vmem %s2, 8
      %v1247 = vld [vmem:[%s1246] sm:$0x3]
      %v1248 = vunpack.c.l.b16 %v1235
      %v1249 = vunpack.c.l.b16 %v1245
      %v1250 = vpack.c.b16 %v1249, %v1248
      %v1252 = vsel %vm573, %v1250, 0
      %v1255 = vsel %vm598, %v1247, 0
      %1257 = vmatprep.subr.bf16.mxu0 0
      %1258 = vmatpush1.bf16.msra.mxu0 0
      %1259 = vmatprep.subr.bf16.mxu0 0
      %1260 = vmatpush1.bf16.msra.mxu0 0
      %1261 = vmatprep.subr.bf16.mxu0 0
      %1262 = vmatpush1.bf16.msra.mxu0 0
      %1263 = vmatprep.subr.bf16.mxu0 0
      %1264 = vmatpush1.bf16.msra.mxu0 0
      %1265 = vmatprep.subr.bf16.mxu0 0
      %1266 = vmatpush1.bf16.msra.mxu0 0
      %1267 = vmatprep.subr.bf16.mxu0 0
      %1268 = vmatpush1.bf16.msra.mxu0 0
      %1269 = vmatprep.subr.bf16.mxu0 0
      %1270 = vmatpush1.bf16.msra.mxu0 0
      %1271 = vmatprep.subr.bf16.mxu0 0
      %1272 = vmatpush1.bf16.msra.mxu0 %v1255
      %1273 = vmatprep.subr.bf16.mxu0 0
      %1274 = vmatpush2.bf16.msra.mxu0 0
      %1275 = vmatprep.subr.bf16.mxu0 0
      %1276 = vmatpush2.bf16.msra.mxu0 0
      %1277 = vmatprep.subr.bf16.mxu0 0
      %1278 = vmatpush2.bf16.msra.mxu0 0
      %1279 = vmatprep.subr.bf16.mxu0 0
      %1280 = vmatpush2.bf16.msra.mxu0 0
      %1281 = vmatprep.subr.bf16.mxu0 0
      %1282 = vmatpush2.bf16.msra.mxu0 0
      %1283 = vmatprep.subr.bf16.mxu0 0
      %1284 = vmatpush2.bf16.msra.mxu0 0
      %1285 = vmatprep.subr.bf16.mxu0 0
      %1286 = vmatpush2.bf16.msra.mxu0 0
      %1287 = vmatprep.subr.bf16.mxu0 0
      %1288 = vmatpush2.bf16.msra.mxu0 0
      %1289 = vmatprep.mubr.bf16.mxu0 0
      %1290 = vmatmul.mubr.bf16.gmra.mxu0 %v578
      %v1291 = vpop.f32.mrf.mxu0
      %v1292 = vadd.f32 0.0, %v1291
      %v1293 = vpop.f32.mrf.mxu0
      %v1294 = vpop.f32.mrf.mxu0
      %v1295 = vadd.f32 0.0, %v1294
      %v1296 = vpop.f32.mrf.mxu0
      %1297 = vmatprep.mubr.bf16.mxu0 0
      %1298 = vmatmul.mubr.bf16.gmra.mxu0 %v581
      %v1299 = vpop.f32.mrf.mxu0
      %v1300 = vadd.f32 0.0, %v1299
      %v1301 = vpop.f32.mrf.mxu0
      %v1302 = vpop.f32.mrf.mxu0
      %v1303 = vadd.f32 0.0, %v1302
      %v1304 = vpop.f32.mrf.mxu0
      %1305 = vmatprep.mubr.bf16.mxu0 0
      %1306 = vmatmul.mubr.bf16.gmra.mxu0 %v584
      %v1307 = vpop.f32.mrf.mxu0
      %v1308 = vadd.f32 0.0, %v1307
      %v1309 = vpop.f32.mrf.mxu0
      %v1310 = vpop.f32.mrf.mxu0
      %v1311 = vadd.f32 0.0, %v1310
      %v1312 = vpop.f32.mrf.mxu0
      %1313 = vmatprep.mubr.bf16.mxu0 0
      %1314 = vmatmul.mubr.bf16.gmra.mxu0 %v587
      %v1315 = vpop.f32.mrf.mxu0
      %v1316 = vadd.f32 0.0, %v1315
      %v1317 = vpop.f32.mrf.mxu0
      %v1318 = vpop.f32.mrf.mxu0
      %v1319 = vadd.f32 0.0, %v1318
      %v1320 = vpop.f32.mrf.mxu0
      %1321 = vmatprep.mubr.bf16.mxu0 0
      %1322 = vmatmul.mubr.bf16.gmra.mxu0 %v590
      %v1323 = vpop.f32.mrf.mxu0
      %v1324 = vadd.f32 0.0, %v1323
      %v1325 = vpop.f32.mrf.mxu0
      %v1326 = vpop.f32.mrf.mxu0
      %v1327 = vadd.f32 0.0, %v1326
      %v1328 = vpop.f32.mrf.mxu0
      %1329 = vmatprep.mubr.bf16.mxu0 0
      %1330 = vmatmul.mubr.bf16.gmra.mxu0 %v593
      %v1331 = vpop.f32.mrf.mxu0
      %v1332 = vadd.f32 0.0, %v1331
      %v1333 = vpop.f32.mrf.mxu0
      %v1334 = vpop.f32.mrf.mxu0
      %v1335 = vadd.f32 0.0, %v1334
      %v1336 = vpop.f32.mrf.mxu0
      %1337 = vmatprep.mubr.bf16.mxu0 0
      %1338 = vmatmul.mubr.bf16.gmra.mxu0 %v596
      %v1339 = vpop.f32.mrf.mxu0
      %v1340 = vadd.f32 0.0, %v1339
      %v1341 = vpop.f32.mrf.mxu0
      %v1342 = vpop.f32.mrf.mxu0
      %v1343 = vadd.f32 0.0, %v1342
      %v1344 = vpop.f32.mrf.mxu0
      %1345 = vmatprep.mubr.bf16.mxu0 0
      %1346 = vmatmul.mubr.bf16.gmra.mxu0 %v1252
      %v1347 = vpop.f32.mrf.mxu0
      %v1348 = vadd.f32 0.0, %v1347
      %v1349 = vpop.f32.mrf.mxu0
      %v1350 = vpop.f32.mrf.mxu0
      %v1351 = vadd.f32 0.0, %v1350
      %v1352 = vpop.f32.mrf.mxu0
      %1353 = vdwg.mxu0
      %v1354 = vadd.f32 %v1206, %v1292
      %v1355 = vadd.f32 %v1207, %v1295
      %v1356 = vadd.f32 %v1208, %v1300
      %v1357 = vadd.f32 %v1209, %v1303
      %v1358 = vadd.f32 %v1210, %v1308
      %v1359 = vadd.f32 %v1211, %v1311
      %v1360 = vadd.f32 %v1212, %v1316
      %v1361 = vadd.f32 %v1213, %v1319
      %v1362 = vadd.f32 %v1214, %v1324
      %v1363 = vadd.f32 %v1215, %v1327
      %v1364 = vadd.f32 %v1216, %v1332
      %v1365 = vadd.f32 %v1217, %v1335
      %v1366 = vadd.f32 %v1218, %v1340
      %v1367 = vadd.f32 %v1219, %v1343
      %v1368 = vadd.f32 %v1220, %v1348
      %v1369 = vadd.f32 %v1221, %v1351
      %v1371 = vrot.slane %v345, 5
      %v1372 = vrot.slane %v1371, 4
      %v1373 = vrot.slane %v346, 5
      %v1374 = vsel %vm873, %v1372, %v1373
      %v1375 = vrot.slane %v1373, 4
      %v1376 = vrot.slane %v347, 5
      %v1377 = vsel %vm873, %v1375, %v1376
      %s1378 = scalar_lea.vmem %s2, 10
      %v1379 = vld [vmem:[%s1378] sm:$0x3]
      %v1380 = vunpack.c.l.b16 %v1374
      %v1381 = vunpack.c.l.b16 %v1377
      %v1382 = vpack.c.b16 %v1381, %v1380
      %v1384 = vsel %vm573, %v1382, 0
      %v1387 = vsel %vm598, %v1379, 0
      %1389 = vmatprep.subr.bf16.mxu0 0
      %1390 = vmatpush1.bf16.msra.mxu0 0
      %1391 = vmatprep.subr.bf16.mxu0 0
      %1392 = vmatpush1.bf16.msra.mxu0 0
      %1393 = vmatprep.subr.bf16.mxu0 0
      %1394 = vmatpush1.bf16.msra.mxu0 0
      %1395 = vmatprep.subr.bf16.mxu0 0
      %1396 = vmatpush1.bf16.msra.mxu0 0
      %1397 = vmatprep.subr.bf16.mxu0 0
      %1398 = vmatpush1.bf16.msra.mxu0 0
      %1399 = vmatprep.subr.bf16.mxu0 0
      %1400 = vmatpush1.bf16.msra.mxu0 0
      %1401 = vmatprep.subr.bf16.mxu0 0
      %1402 = vmatpush1.bf16.msra.mxu0 0
      %1403 = vmatprep.subr.bf16.mxu0 0
      %1404 = vmatpush1.bf16.msra.mxu0 %v1387
      %1405 = vmatprep.subr.bf16.mxu0 0
      %1406 = vmatpush2.bf16.msra.mxu0 0
      %1407 = vmatprep.subr.bf16.mxu0 0
      %1408 = vmatpush2.bf16.msra.mxu0 0
      %1409 = vmatprep.subr.bf16.mxu0 0
      %1410 = vmatpush2.bf16.msra.mxu0 0
      %1411 = vmatprep.subr.bf16.mxu0 0
      %1412 = vmatpush2.bf16.msra.mxu0 0
      %1413 = vmatprep.subr.bf16.mxu0 0
      %1414 = vmatpush2.bf16.msra.mxu0 0
      %1415 = vmatprep.subr.bf16.mxu0 0
      %1416 = vmatpush2.bf16.msra.mxu0 0
      %1417 = vmatprep.subr.bf16.mxu0 0
      %1418 = vmatpush2.bf16.msra.mxu0 0
      %1419 = vmatprep.subr.bf16.mxu0 0
      %1420 = vmatpush2.bf16.msra.mxu0 0
      %1421 = vmatprep.mubr.bf16.mxu0 0
      %1422 = vmatmul.mubr.bf16.gmra.mxu0 %v960
      %v1423 = vpop.f32.mrf.mxu0
      %v1424 = vadd.f32 0.0, %v1423
      %v1425 = vpop.f32.mrf.mxu0
      %v1426 = vpop.f32.mrf.mxu0
      %v1427 = vadd.f32 0.0, %v1426
      %v1428 = vpop.f32.mrf.mxu0
      %1429 = vmatprep.mubr.bf16.mxu0 0
      %1430 = vmatmul.mubr.bf16.gmra.mxu0 %v963
      %v1431 = vpop.f32.mrf.mxu0
      %v1432 = vadd.f32 0.0, %v1431
      %v1433 = vpop.f32.mrf.mxu0
      %v1434 = vpop.f32.mrf.mxu0
      %v1435 = vadd.f32 0.0, %v1434
      %v1436 = vpop.f32.mrf.mxu0
      %1437 = vmatprep.mubr.bf16.mxu0 0
      %1438 = vmatmul.mubr.bf16.gmra.mxu0 %v966
      %v1439 = vpop.f32.mrf.mxu0
      %v1440 = vadd.f32 0.0, %v1439
      %v1441 = vpop.f32.mrf.mxu0
      %v1442 = vpop.f32.mrf.mxu0
      %v1443 = vadd.f32 0.0, %v1442
      %v1444 = vpop.f32.mrf.mxu0
      %1445 = vmatprep.mubr.bf16.mxu0 0
      %1446 = vmatmul.mubr.bf16.gmra.mxu0 %v969
      %v1447 = vpop.f32.mrf.mxu0
      %v1448 = vadd.f32 0.0, %v1447
      %v1449 = vpop.f32.mrf.mxu0
      %v1450 = vpop.f32.mrf.mxu0
      %v1451 = vadd.f32 0.0, %v1450
      %v1452 = vpop.f32.mrf.mxu0
      %1453 = vmatprep.mubr.bf16.mxu0 0
      %1454 = vmatmul.mubr.bf16.gmra.mxu0 %v972
      %v1455 = vpop.f32.mrf.mxu0
      %v1456 = vadd.f32 0.0, %v1455
      %v1457 = vpop.f32.mrf.mxu0
      %v1458 = vpop.f32.mrf.mxu0
      %v1459 = vadd.f32 0.0, %v1458
      %v1460 = vpop.f32.mrf.mxu0
      %1461 = vmatprep.mubr.bf16.mxu0 0
      %1462 = vmatmul.mubr.bf16.gmra.mxu0 %v975
      %v1463 = vpop.f32.mrf.mxu0
      %v1464 = vadd.f32 0.0, %v1463
      %v1465 = vpop.f32.mrf.mxu0
      %v1466 = vpop.f32.mrf.mxu0
      %v1467 = vadd.f32 0.0, %v1466
      %v1468 = vpop.f32.mrf.mxu0
      %1469 = vmatprep.mubr.bf16.mxu0 0
      %1470 = vmatmul.mubr.bf16.gmra.mxu0 %v978
      %v1471 = vpop.f32.mrf.mxu0
      %v1472 = vadd.f32 0.0, %v1471
      %v1473 = vpop.f32.mrf.mxu0
      %v1474 = vpop.f32.mrf.mxu0
      %v1475 = vadd.f32 0.0, %v1474
      %v1476 = vpop.f32.mrf.mxu0
      %1477 = vmatprep.mubr.bf16.mxu0 0
      %1478 = vmatmul.mubr.bf16.gmra.mxu0 %v1384
      %v1479 = vpop.f32.mrf.mxu0
      %v1480 = vadd.f32 0.0, %v1479
      %v1481 = vpop.f32.mrf.mxu0
      %v1482 = vpop.f32.mrf.mxu0
      %v1483 = vadd.f32 0.0, %v1482
      %v1484 = vpop.f32.mrf.mxu0
      %1485 = vdwg.mxu0
      %v1486 = vadd.f32 %v1354, %v1424
      %v1487 = vadd.f32 %v1355, %v1427
      %v1488 = vadd.f32 %v1356, %v1432
      %v1489 = vadd.f32 %v1357, %v1435
      %v1490 = vadd.f32 %v1358, %v1440
      %v1491 = vadd.f32 %v1359, %v1443
      %v1492 = vadd.f32 %v1360, %v1448
      %v1493 = vadd.f32 %v1361, %v1451
      %v1494 = vadd.f32 %v1362, %v1456
      %v1495 = vadd.f32 %v1363, %v1459
      %v1496 = vadd.f32 %v1364, %v1464
      %v1497 = vadd.f32 %v1365, %v1467
      %v1498 = vadd.f32 %v1366, %v1472
      %v1499 = vadd.f32 %v1367, %v1475
      %v1500 = vadd.f32 %v1368, %v1480
      %v1501 = vadd.f32 %v1369, %v1483
      %s1502 = scalar_lea.vmem %s2, 12
      %v1503 = vld [vmem:[%s1502] sm:$0x3]
      %v1506 = vunpack.c.l.b16 %v348
      %v1507 = vunpack.c.l.b16 %v349
      %v1508 = vpack.c.b16 %v1507, %v1506
      %v1510 = vsel %vm573, %v1508, 0
      %v1513 = vsel %vm598, %v1503, 0
      %1515 = vmatprep.subr.bf16.mxu0 0
      %1516 = vmatpush1.bf16.msra.mxu0 0
      %1517 = vmatprep.subr.bf16.mxu0 0
      %1518 = vmatpush1.bf16.msra.mxu0 0
      %1519 = vmatprep.subr.bf16.mxu0 0
      %1520 = vmatpush1.bf16.msra.mxu0 0
      %1521 = vmatprep.subr.bf16.mxu0 0
      %1522 = vmatpush1.bf16.msra.mxu0 0
      %1523 = vmatprep.subr.bf16.mxu0 0
      %1524 = vmatpush1.bf16.msra.mxu0 0
      %1525 = vmatprep.subr.bf16.mxu0 0
      %1526 = vmatpush1.bf16.msra.mxu0 0
      %1527 = vmatprep.subr.bf16.mxu0 0
      %1528 = vmatpush1.bf16.msra.mxu0 0
      %1529 = vmatprep.subr.bf16.mxu0 0
      %1530 = vmatpush1.bf16.msra.mxu0 %v1513
      %1531 = vmatprep.subr.bf16.mxu0 0
      %1532 = vmatpush2.bf16.msra.mxu0 0
      %1533 = vmatprep.subr.bf16.mxu0 0
      %1534 = vmatpush2.bf16.msra.mxu0 0
      %1535 = vmatprep.subr.bf16.mxu0 0
      %1536 = vmatpush2.bf16.msra.mxu0 0
      %1537 = vmatprep.subr.bf16.mxu0 0
      %1538 = vmatpush2.bf16.msra.mxu0 0
      %1539 = vmatprep.subr.bf16.mxu0 0
      %1540 = vmatpush2.bf16.msra.mxu0 0
      %1541 = vmatprep.subr.bf16.mxu0 0
      %1542 = vmatpush2.bf16.msra.mxu0 0
      %1543 = vmatprep.subr.bf16.mxu0 0
      %1544 = vmatpush2.bf16.msra.mxu0 0
      %1545 = vmatprep.subr.bf16.mxu0 0
      %1546 = vmatpush2.bf16.msra.mxu0 0
      %1547 = vmatprep.mubr.bf16.mxu0 0
      %1548 = vmatmul.mubr.bf16.gmra.mxu0 %v746
      %v1549 = vpop.f32.mrf.mxu0
      %v1550 = vadd.f32 0.0, %v1549
      %v1551 = vpop.f32.mrf.mxu0
      %v1552 = vpop.f32.mrf.mxu0
      %v1553 = vadd.f32 0.0, %v1552
      %v1554 = vpop.f32.mrf.mxu0
      %1555 = vmatprep.mubr.bf16.mxu0 0
      %1556 = vmatmul.mubr.bf16.gmra.mxu0 %v749
      %v1557 = vpop.f32.mrf.mxu0
      %v1558 = vadd.f32 0.0, %v1557
      %v1559 = vpop.f32.mrf.mxu0
      %v1560 = vpop.f32.mrf.mxu0
      %v1561 = vadd.f32 0.0, %v1560
      %v1562 = vpop.f32.mrf.mxu0
      %1563 = vmatprep.mubr.bf16.mxu0 0
      %1564 = vmatmul.mubr.bf16.gmra.mxu0 %v752
      %v1565 = vpop.f32.mrf.mxu0
      %v1566 = vadd.f32 0.0, %v1565
      %v1567 = vpop.f32.mrf.mxu0
      %v1568 = vpop.f32.mrf.mxu0
      %v1569 = vadd.f32 0.0, %v1568
      %v1570 = vpop.f32.mrf.mxu0
      %1571 = vmatprep.mubr.bf16.mxu0 0
      %1572 = vmatmul.mubr.bf16.gmra.mxu0 %v755
      %v1573 = vpop.f32.mrf.mxu0
      %v1574 = vadd.f32 0.0, %v1573
      %v1575 = vpop.f32.mrf.mxu0
      %v1576 = vpop.f32.mrf.mxu0
      %v1577 = vadd.f32 0.0, %v1576
      %v1578 = vpop.f32.mrf.mxu0
      %1579 = vmatprep.mubr.bf16.mxu0 0
      %1580 = vmatmul.mubr.bf16.gmra.mxu0 %v758
      %v1581 = vpop.f32.mrf.mxu0
      %v1582 = vadd.f32 0.0, %v1581
      %v1583 = vpop.f32.mrf.mxu0
      %v1584 = vpop.f32.mrf.mxu0
      %v1585 = vadd.f32 0.0, %v1584
      %v1586 = vpop.f32.mrf.mxu0
      %1587 = vmatprep.mubr.bf16.mxu0 0
      %1588 = vmatmul.mubr.bf16.gmra.mxu0 %v761
      %v1589 = vpop.f32.mrf.mxu0
      %v1590 = vadd.f32 0.0, %v1589
      %v1591 = vpop.f32.mrf.mxu0
      %v1592 = vpop.f32.mrf.mxu0
      %v1593 = vadd.f32 0.0, %v1592
      %v1594 = vpop.f32.mrf.mxu0
      %1595 = vmatprep.mubr.bf16.mxu0 0
      %1596 = vmatmul.mubr.bf16.gmra.mxu0 %v1104
      %v1597 = vpop.f32.mrf.mxu0
      %v1598 = vadd.f32 0.0, %v1597
      %v1599 = vpop.f32.mrf.mxu0
      %v1600 = vpop.f32.mrf.mxu0
      %v1601 = vadd.f32 0.0, %v1600
      %v1602 = vpop.f32.mrf.mxu0
      %1603 = vmatprep.mubr.bf16.mxu0 0
      %1604 = vmatmul.mubr.bf16.gmra.mxu0 %v1510
      %v1605 = vpop.f32.mrf.mxu0
      %v1606 = vadd.f32 0.0, %v1605
      %v1607 = vpop.f32.mrf.mxu0
      %v1608 = vpop.f32.mrf.mxu0
      %v1609 = vadd.f32 0.0, %v1608
      %v1610 = vpop.f32.mrf.mxu0
      %1611 = vdwg.mxu0
      %v1612 = vadd.f32 %v1486, %v1550
      %v1613 = vadd.f32 %v1487, %v1553
      %v1614 = vadd.f32 %v1488, %v1558
      %v1615 = vadd.f32 %v1489, %v1561
      %v1616 = vadd.f32 %v1490, %v1566
      %v1617 = vadd.f32 %v1491, %v1569
      %v1618 = vadd.f32 %v1492, %v1574
      %v1619 = vadd.f32 %v1493, %v1577
      %v1620 = vadd.f32 %v1494, %v1582
      %v1621 = vadd.f32 %v1495, %v1585
      %v1622 = vadd.f32 %v1496, %v1590
      %v1623 = vadd.f32 %v1497, %v1593
      %v1624 = vadd.f32 %v1498, %v1598
      %v1625 = vadd.f32 %v1499, %v1601
      %v1626 = vadd.f32 %v1500, %v1606
      %v1627 = vadd.f32 %v1501, %v1609
      %v1629 = vshrl.u32 %v348, 16
      %v1631 = vrot.slane %v1629, 4
      %v1632 = vshll.u32 %v348, 16
      %v1634 = vrot.slane %v1632, 5
      %v1635 = vor.u32 %v1631, %v1634
      %v1636 = vrot.slane %v1635, 4
      %v1638 = vshll.u32 %v349, 16
      %v1640 = vrot.slane %v1638, 5
      %v1641 = vsel %vm354, %v1636, %v1640
      %v1642 = vshrl.u32 %v349, 16
      %v1644 = vrot.slane %v1642, 4
      %v1645 = vor.u32 %v1644, %v1640
      %v1646 = vrot.slane %v1645, 4
      %v1648 = vshll.u32 %v350, 16
      %v1650 = vrot.slane %v1648, 5
      %v1651 = vsel %vm354, %v1646, %v1650
      %s1652 = scalar_lea.vmem %s2, 14
      %v1653 = vld [vmem:[%s1652] sm:$0x3]
      %v1654 = vunpack.c.l.b16 %v1641
      %v1655 = vunpack.c.l.b16 %v1651
      %v1656 = vpack.c.b16 %v1655, %v1654
      %v1658 = vsel %vm573, %v1656, 0
      %v1661 = vsel %vm598, %v1653, 0
      %1663 = vmatprep.subr.bf16.mxu0 0
      %1664 = vmatpush1.bf16.msra.mxu0 0
      %1665 = vmatprep.subr.bf16.mxu0 0
      %1666 = vmatpush1.bf16.msra.mxu0 0
      %1667 = vmatprep.subr.bf16.mxu0 0
      %1668 = vmatpush1.bf16.msra.mxu0 0
      %1669 = vmatprep.subr.bf16.mxu0 0
      %1670 = vmatpush1.bf16.msra.mxu0 0
      %1671 = vmatprep.subr.bf16.mxu0 0
      %1672 = vmatpush1.bf16.msra.mxu0 0
      %1673 = vmatprep.subr.bf16.mxu0 0
      %1674 = vmatpush1.bf16.msra.mxu0 0
      %1675 = vmatprep.subr.bf16.mxu0 0
      %1676 = vmatpush1.bf16.msra.mxu0 0
      %1677 = vmatprep.subr.bf16.mxu0 0
      %1678 = vmatpush1.bf16.msra.mxu0 %v1661
      %1679 = vmatprep.subr.bf16.mxu0 0
      %1680 = vmatpush2.bf16.msra.mxu0 0
      %1681 = vmatprep.subr.bf16.mxu0 0
      %1682 = vmatpush2.bf16.msra.mxu0 0
      %1683 = vmatprep.subr.bf16.mxu0 0
      %1684 = vmatpush2.bf16.msra.mxu0 0
      %1685 = vmatprep.subr.bf16.mxu0 0
      %1686 = vmatpush2.bf16.msra.mxu0 0
      %1687 = vmatprep.subr.bf16.mxu0 0
      %1688 = vmatpush2.bf16.msra.mxu0 0
      %1689 = vmatprep.subr.bf16.mxu0 0
      %1690 = vmatpush2.bf16.msra.mxu0 0
      %1691 = vmatprep.subr.bf16.mxu0 0
      %1692 = vmatpush2.bf16.msra.mxu0 0
      %1693 = vmatprep.subr.bf16.mxu0 0
      %1694 = vmatpush2.bf16.msra.mxu0 0
      %1695 = vmatprep.mubr.bf16.mxu0 0
      %1696 = vmatmul.mubr.bf16.gmra.mxu0 %v581
      %v1697 = vpop.f32.mrf.mxu0
      %v1698 = vadd.f32 0.0, %v1697
      %v1699 = vpop.f32.mrf.mxu0
      %v1700 = vpop.f32.mrf.mxu0
      %v1701 = vadd.f32 0.0, %v1700
      %v1702 = vpop.f32.mrf.mxu0
      %1703 = vmatprep.mubr.bf16.mxu0 0
      %1704 = vmatmul.mubr.bf16.gmra.mxu0 %v584
      %v1705 = vpop.f32.mrf.mxu0
      %v1706 = vadd.f32 0.0, %v1705
      %v1707 = vpop.f32.mrf.mxu0
      %v1708 = vpop.f32.mrf.mxu0
      %v1709 = vadd.f32 0.0, %v1708
      %v1710 = vpop.f32.mrf.mxu0
      %1711 = vmatprep.mubr.bf16.mxu0 0
      %1712 = vmatmul.mubr.bf16.gmra.mxu0 %v587
      %v1713 = vpop.f32.mrf.mxu0
      %v1714 = vadd.f32 0.0, %v1713
      %v1715 = vpop.f32.mrf.mxu0
      %v1716 = vpop.f32.mrf.mxu0
      %v1717 = vadd.f32 0.0, %v1716
      %v1718 = vpop.f32.mrf.mxu0
      %1719 = vmatprep.mubr.bf16.mxu0 0
      %1720 = vmatmul.mubr.bf16.gmra.mxu0 %v590
      %v1721 = vpop.f32.mrf.mxu0
      %v1722 = vadd.f32 0.0, %v1721
      %v1723 = vpop.f32.mrf.mxu0
      %v1724 = vpop.f32.mrf.mxu0
      %v1725 = vadd.f32 0.0, %v1724
      %v1726 = vpop.f32.mrf.mxu0
      %1727 = vmatprep.mubr.bf16.mxu0 0
      %1728 = vmatmul.mubr.bf16.gmra.mxu0 %v593
      %v1729 = vpop.f32.mrf.mxu0
      %v1730 = vadd.f32 0.0, %v1729
      %v1731 = vpop.f32.mrf.mxu0
      %v1732 = vpop.f32.mrf.mxu0
      %v1733 = vadd.f32 0.0, %v1732
      %v1734 = vpop.f32.mrf.mxu0
      %1735 = vmatprep.mubr.bf16.mxu0 0
      %1736 = vmatmul.mubr.bf16.gmra.mxu0 %v596
      %v1737 = vpop.f32.mrf.mxu0
      %v1738 = vadd.f32 0.0, %v1737
      %v1739 = vpop.f32.mrf.mxu0
      %v1740 = vpop.f32.mrf.mxu0
      %v1741 = vadd.f32 0.0, %v1740
      %v1742 = vpop.f32.mrf.mxu0
      %1743 = vmatprep.mubr.bf16.mxu0 0
      %1744 = vmatmul.mubr.bf16.gmra.mxu0 %v1252
      %v1745 = vpop.f32.mrf.mxu0
      %v1746 = vadd.f32 0.0, %v1745
      %v1747 = vpop.f32.mrf.mxu0
      %v1748 = vpop.f32.mrf.mxu0
      %v1749 = vadd.f32 0.0, %v1748
      %v1750 = vpop.f32.mrf.mxu0
      %1751 = vmatprep.mubr.bf16.mxu0 0
      %1752 = vmatmul.mubr.bf16.gmra.mxu0 %v1658
      %v1753 = vpop.f32.mrf.mxu0
      %v1754 = vadd.f32 0.0, %v1753
      %v1755 = vpop.f32.mrf.mxu0
      %v1756 = vpop.f32.mrf.mxu0
      %v1757 = vadd.f32 0.0, %v1756
      %v1758 = vpop.f32.mrf.mxu0
      %1759 = vdwg.mxu0
      %v1760 = vadd.f32 %v1612, %v1698
      %v1761 = vadd.f32 %v1613, %v1701
      %v1762 = vadd.f32 %v1614, %v1706
      %v1763 = vadd.f32 %v1615, %v1709
      %v1764 = vadd.f32 %v1616, %v1714
      %v1765 = vadd.f32 %v1617, %v1717
      %v1766 = vadd.f32 %v1618, %v1722
      %v1767 = vadd.f32 %v1619, %v1725
      %v1768 = vadd.f32 %v1620, %v1730
      %v1769 = vadd.f32 %v1621, %v1733
      %v1770 = vadd.f32 %v1622, %v1738
      %v1771 = vadd.f32 %v1623, %v1741
      %v1772 = vadd.f32 %v1624, %v1746
      %v1773 = vadd.f32 %v1625, %v1749
      %v1774 = vadd.f32 %v1626, %v1754
      %v1775 = vadd.f32 %v1627, %v1757
      %v1777 = vrot.slane %v348, 5
      %v1778 = vrot.slane %v1777, 4
      %v1779 = vrot.slane %v349, 5
      %v1780 = vsel %vm873, %v1778, %v1779
      %v1781 = vrot.slane %v1779, 4
      %v1782 = vrot.slane %v350, 5
      %v1783 = vsel %vm873, %v1781, %v1782
      %s1784 = scalar_lea.vmem %s2, 16
      %v1785 = vld [vmem:[%s1784] sm:$0x3]
      %v1786 = vunpack.c.l.b16 %v1780
      %v1787 = vunpack.c.l.b16 %v1783
      %v1788 = vpack.c.b16 %v1787, %v1786
      %v1790 = vsel %vm573, %v1788, 0
      %v1793 = vsel %vm598, %v1785, 0
      %1795 = vmatprep.subr.bf16.mxu0 0
      %1796 = vmatpush1.bf16.msra.mxu0 0
      %1797 = vmatprep.subr.bf16.mxu0 0
      %1798 = vmatpush1.bf16.msra.mxu0 0
      %1799 = vmatprep.subr.bf16.mxu0 0
      %1800 = vmatpush1.bf16.msra.mxu0 0
      %1801 = vmatprep.subr.bf16.mxu0 0
      %1802 = vmatpush1.bf16.msra.mxu0 0
      %1803 = vmatprep.subr.bf16.mxu0 0
      %1804 = vmatpush1.bf16.msra.mxu0 0
      %1805 = vmatprep.subr.bf16.mxu0 0
      %1806 = vmatpush1.bf16.msra.mxu0 0
      %1807 = vmatprep.subr.bf16.mxu0 0
      %1808 = vmatpush1.bf16.msra.mxu0 0
      %1809 = vmatprep.subr.bf16.mxu0 0
      %1810 = vmatpush1.bf16.msra.mxu0 %v1793
      %1811 = vmatprep.subr.bf16.mxu0 0
      %1812 = vmatpush2.bf16.msra.mxu0 0
      %1813 = vmatprep.subr.bf16.mxu0 0
      %1814 = vmatpush2.bf16.msra.mxu0 0
      %1815 = vmatprep.subr.bf16.mxu0 0
      %1816 = vmatpush2.bf16.msra.mxu0 0
      %1817 = vmatprep.subr.bf16.mxu0 0
      %1818 = vmatpush2.bf16.msra.mxu0 0
      %1819 = vmatprep.subr.bf16.mxu0 0
      %1820 = vmatpush2.bf16.msra.mxu0 0
      %1821 = vmatprep.subr.bf16.mxu0 0
      %1822 = vmatpush2.bf16.msra.mxu0 0
      %1823 = vmatprep.subr.bf16.mxu0 0
      %1824 = vmatpush2.bf16.msra.mxu0 0
      %1825 = vmatprep.subr.bf16.mxu0 0
      %1826 = vmatpush2.bf16.msra.mxu0 0
      %1827 = vmatprep.mubr.bf16.mxu0 0
      %1828 = vmatmul.mubr.bf16.gmra.mxu0 %v963
      %v1829 = vpop.f32.mrf.mxu0
      %v1830 = vadd.f32 0.0, %v1829
      %v1831 = vpop.f32.mrf.mxu0
      %v1832 = vpop.f32.mrf.mxu0
      %v1833 = vadd.f32 0.0, %v1832
      %v1834 = vpop.f32.mrf.mxu0
      %1835 = vmatprep.mubr.bf16.mxu0 0
      %1836 = vmatmul.mubr.bf16.gmra.mxu0 %v966
      %v1837 = vpop.f32.mrf.mxu0
      %v1838 = vadd.f32 0.0, %v1837
      %v1839 = vpop.f32.mrf.mxu0
      %v1840 = vpop.f32.mrf.mxu0
      %v1841 = vadd.f32 0.0, %v1840
      %v1842 = vpop.f32.mrf.mxu0
      %1843 = vmatprep.mubr.bf16.mxu0 0
      %1844 = vmatmul.mubr.bf16.gmra.mxu0 %v969
      %v1845 = vpop.f32.mrf.mxu0
      %v1846 = vadd.f32 0.0, %v1845
      %v1847 = vpop.f32.mrf.mxu0
      %v1848 = vpop.f32.mrf.mxu0
      %v1849 = vadd.f32 0.0, %v1848
      %v1850 = vpop.f32.mrf.mxu0
      %1851 = vmatprep.mubr.bf16.mxu0 0
      %1852 = vmatmul.mubr.bf16.gmra.mxu0 %v972
      %v1853 = vpop.f32.mrf.mxu0
      %v1854 = vadd.f32 0.0, %v1853
      %v1855 = vpop.f32.mrf.mxu0
      %v1856 = vpop.f32.mrf.mxu0
      %v1857 = vadd.f32 0.0, %v1856
      %v1858 = vpop.f32.mrf.mxu0
      %1859 = vmatprep.mubr.bf16.mxu0 0
      %1860 = vmatmul.mubr.bf16.gmra.mxu0 %v975
      %v1861 = vpop.f32.mrf.mxu0
      %v1862 = vadd.f32 0.0, %v1861
      %v1863 = vpop.f32.mrf.mxu0
      %v1864 = vpop.f32.mrf.mxu0
      %v1865 = vadd.f32 0.0, %v1864
      %v1866 = vpop.f32.mrf.mxu0
      %1867 = vmatprep.mubr.bf16.mxu0 0
      %1868 = vmatmul.mubr.bf16.gmra.mxu0 %v978
      %v1869 = vpop.f32.mrf.mxu0
      %v1870 = vadd.f32 0.0, %v1869
      %v1871 = vpop.f32.mrf.mxu0
      %v1872 = vpop.f32.mrf.mxu0
      %v1873 = vadd.f32 0.0, %v1872
      %v1874 = vpop.f32.mrf.mxu0
      %1875 = vmatprep.mubr.bf16.mxu0 0
      %1876 = vmatmul.mubr.bf16.gmra.mxu0 %v1384
      %v1877 = vpop.f32.mrf.mxu0
      %v1878 = vadd.f32 0.0, %v1877
      %v1879 = vpop.f32.mrf.mxu0
      %v1880 = vpop.f32.mrf.mxu0
      %v1881 = vadd.f32 0.0, %v1880
      %v1882 = vpop.f32.mrf.mxu0
      %1883 = vmatprep.mubr.bf16.mxu0 0
      %1884 = vmatmul.mubr.bf16.gmra.mxu0 %v1790
      %v1885 = vpop.f32.mrf.mxu0
      %v1886 = vadd.f32 0.0, %v1885
      %v1887 = vpop.f32.mrf.mxu0
      %v1888 = vpop.f32.mrf.mxu0
      %v1889 = vadd.f32 0.0, %v1888
      %v1890 = vpop.f32.mrf.mxu0
      %1891 = vdwg.mxu0
      %v1892 = vadd.f32 %v1760, %v1830
      %v1893 = vadd.f32 %v1761, %v1833
      %v1894 = vadd.f32 %v1762, %v1838
      %v1895 = vadd.f32 %v1763, %v1841
      %v1896 = vadd.f32 %v1764, %v1846
      %v1897 = vadd.f32 %v1765, %v1849
      %v1898 = vadd.f32 %v1766, %v1854
      %v1899 = vadd.f32 %v1767, %v1857
      %v1900 = vadd.f32 %v1768, %v1862
      %v1901 = vadd.f32 %v1769, %v1865
      %v1902 = vadd.f32 %v1770, %v1870
      %v1903 = vadd.f32 %v1771, %v1873
      %v1904 = vadd.f32 %v1772, %v1878
      %v1905 = vadd.f32 %v1773, %v1881
      %v1906 = vadd.f32 %v1774, %v1886
      %v1907 = vadd.f32 %v1775, %v1889
      %v1908 = vld [vmem:[%s3] sm:$0x1]
      %v1910 = vlaneseq
      %v1911 = vshrl.u32 %v1910, 7
      %v1912 = vsub.s32 0, %v1911
      %v1913 = vrot.slane %v1908, %v1912
      %v1915 = vadd.f32 %v1892, %v1913
      %v1916 = vadd.f32 %v1893, %v1913
      %v1917 = vadd.f32 %v1894, %v1913
      %v1918 = vadd.f32 %v1895, %v1913
      %v1919 = vadd.f32 %v1896, %v1913
      %v1920 = vadd.f32 %v1897, %v1913
      %v1921 = vadd.f32 %v1898, %v1913
      %v1922 = vadd.f32 %v1899, %v1913
      %v1923 = vadd.f32 %v1900, %v1913
      %v1924 = vadd.f32 %v1901, %v1913
      %v1925 = vadd.f32 %v1902, %v1913
      %v1926 = vadd.f32 %v1903, %v1913
      %v1927 = vadd.f32 %v1904, %v1913
      %v1928 = vadd.f32 %v1905, %v1913
      %v1929 = vadd.f32 %v1906, %v1913
      %v1930 = vadd.f32 %v1907, %v1913
      %vm1931 = vcmask 261120
      %1932 = vst.msk [vmem:[%s318] sm:$0xff] %vm1931, %v1915
      %1933 = vst.msk [vmem:[%s318 + $0x8] sm:$0xff] %vm1931, %v1916
      %1934 = vst.msk [vmem:[%s318 + $0x10] sm:$0xff] %vm1931, %v1917
      %1935 = vst.msk [vmem:[%s318 + $0x18] sm:$0xff] %vm1931, %v1918
      %1936 = vst.msk [vmem:[%s318 + $0x20] sm:$0xff] %vm1931, %v1919
      %1937 = vst.msk [vmem:[%s318 + $0x28] sm:$0xff] %vm1931, %v1920
      %1938 = vst.msk [vmem:[%s318 + $0x30] sm:$0xff] %vm1931, %v1921
      %1939 = vst.msk [vmem:[%s318 + $0x38] sm:$0xff] %vm1931, %v1922
      %1940 = vst.msk [vmem:[%s318 + $0x40] sm:$0xff] %vm1931, %v1923
      %1941 = vst.msk [vmem:[%s318 + $0x48] sm:$0xff] %vm1931, %v1924
      %1942 = vst.msk [vmem:[%s318 + $0x50] sm:$0xff] %vm1931, %v1925
      %1943 = vst.msk [vmem:[%s318 + $0x58] sm:$0xff] %vm1931, %v1926
      %1944 = vst.msk [vmem:[%s318 + $0x60] sm:$0xff] %vm1931, %v1927
      %1945 = vst.msk [vmem:[%s318 + $0x68] sm:$0xff] %vm1931, %v1928
      %1946 = vst.msk [vmem:[%s318 + $0x70] sm:$0xff] %vm1931, %v1929
      %1947 = vst.msk [vmem:[%s318 + $0x78] sm:$0xff] %vm1931, %v1930
      %s1948 = smul.u32 8, %s20
      %p1949 = scmp.lt.s32.totalorder %s19, 1
      %s1950 = scalar_select %p1949, %s19, 1
      %p1951 = scmp.lt.s32.totalorder %s1948, 15
      %s1952 = scalar_select %p1951, %s1948, 15
      %s1953 = smul.addr %s1952, 2
      %s1954 = smul.addr %s1950, 32
      %s1955 = sadd.s32 %s1953, %s1954
      %s1956 = smul.addr %s1955, 8
      %s1957 = scalar_lea.vmem %s4, %s1956
      // Predicated region
      $region37: #{upblock_forward.2} parent=35 // pred_check
        %p1958 = pneg %p149
      $region38: #{upblock_forward.2} parent=35 // pred_check_branch
        %1960 = sbr.rel (%p1958) target = $region40
      $region39: #{upblock_forward.2} parent=35 // pred_region
        %s1961 = smul.u32 8, %s20
      $region40: #{upblock_forward.2} parent=35 // pred_fallthru
        _
    $region36: #{upblock_forward.2} parent=5 // pred_fallthru
      _
    %p1962 = scmp.le.s32.totalorder 2, %s10
    // Predicated region
    $region41: #{upblock_forward.2} parent=5 // pred_check
      %p1963 = pneg %p1962
    $region42: #{upblock_forward.2} parent=5 // pred_check_branch
      %1965 = sbr.rel (%p1963) target = $region44
    $region43: #{upblock_forward.2} parent=5 // pred_region
      %s1966 = ssub.s32 %s10, 2
      // Predicated region
      $region45: #{upblock_forward.2} parent=43 // pred_check
        %p1967 = pneg %p155
      $region46: #{upblock_forward.2} parent=43 // pred_check_branch
        %1969 = sbr.rel (%p1967) target = $region48
      $region47: #{upblock_forward.2} parent=43 // pred_region
        %s1970 = smul.u32 8, %s22
        %p1971 = scmp.lt.s32.totalorder %s21, 1
        %s1972 = scalar_select %p1971, %s21, 1
        %p1973 = scmp.lt.s32.totalorder %s1970, 15
        %s1974 = scalar_select %p1973, %s1970, 15
        %s1975 = smul.addr %s1974, 2
        %s1976 = smul.addr %s1972, 32
        %s1977 = sadd.s32 %s1975, %s1976
        %s1978 = smul.addr %s1977, 8
        %s1979 = scalar_lea.vmem %s4, %s1978
      $region48: #{upblock_forward.2} parent=43 // pred_fallthru
        _
    $region44: #{upblock_forward.2} parent=5 // pred_fallthru
      _
  $region6: #{upblock_forward.2} parent=0 // loop_footer
    %s14 = sadd.s32 1, %s10
  $region7: #{upblock_forward.2} parent=0 // loop_footer_branch
    %9 = sbr.rel target = $region3
  $region8: #{upblock_forward.2} parent=0 // loop_exit
    _

// kernel: upblock_forward.3
$region0: #{upblock_forward.3}
  #allocation0 [shape = 'u32[]', space=smem, size = 0x4, offset = 0x4, fixed_abs, tag = 'smem constant byte address 0x4 - core index']
  #allocation1 [shape = 'u32[144,128]{1,0:T(1,128)}', space=vmem, size = 0x12000, scoped, tag = 'internal scratch']
  %s0 = inlined_call_operand.vmem [shape: f32[2,34,34,8], index: 0, kind: input, shape index: {}, may-alias: {0,1}]
  %s1 = inlined_call_operand.vmem [shape: f32[2,34,34,8], index: 1, kind: input, shape index: {}, may-alias: {0,1}]
  %s2 = inlined_call_operand.vmem [shape: bf16[3,3,8,8], index: 2, kind: input, shape index: {}]
  %s3 = inlined_call_operand.vmem [shape: f32[1,8], index: 3, kind: input, shape index: {}]
  %s4 = inlined_call_operand.vmem [shape: f32[1,8], index: 4, kind: input, shape index: {}]
  %s5 = inlined_call_operand.vmem [shape: f32[1,8], index: 5, kind: input, shape index: {}]
  %s6 = inlined_call_operand.vmem [shape: f32[2,32,32,8], index: 6, kind: output, shape index: {}]
  %s7 = sld [smem:[#allocation0]]
  $region57: #{upblock_forward.3} parent=0
    _
  %s9 = ssub.s32 1, %s7
  %s10 = scalar_select 0, %s9, %s7
  loop: start=0, step=1, limit=6
  $region2: #{upblock_forward.3} parent=0 // loop_pre_header
    _
  $region3: #{upblock_forward.3} parent=0 // loop_header
    %s12 = sphi 0, %s16
    %p13 = scmp.ge.s32.totalorder %s12, 6
    %s19 = sphi 0, %s31
    %s20 = sphi 0, %s27
    %s21 = sphi 0, %s19
    %s22 = sphi 0, %s20
    %s23 = sphi 0, %s21
    %s24 = sphi 0, %s22
    %s36 = sphi 0, %s38
    %s39 = sphi 0, %s36
    %s40 = sphi 0, %s39
    %s56 = sphi 0, %s40
    %s68 = sphi 0, %s70
    %s71 = sphi 0, %s68
    %s72 = sphi 0, %s71
    %s88 = sphi 0, %s72
    %s92 = sphi 0, %s92
    %s94 = sphi 0, %s92
    %s95 = sphi 0, %s94
    %s109 = sphi 0, %s95
    %s113 = sphi 0, %s113
    %s115 = sphi 0, %s113
    %s116 = sphi 0, %s115
    %s130 = sphi 0, %s116
    %s134 = sphi 0, %s134
    %s136 = sphi 0, %s134
    %s137 = sphi 0, %s136
    %s151 = sphi 0, %s137
    %s155 = sphi 0, %s155
    %s157 = sphi 0, %s155
    %s158 = sphi 0, %s157
    %s172 = sphi 0, %s158
    %s180 = sphi 0, %s182
    %s183 = sphi 0, %s180
    %s184 = sphi 0, %s183
    %s200 = sphi 0, %s184
  $region4: #{upblock_forward.3} parent=0 // loop_header_branch
    %15 = sbr.rel (%p13) target = $region8
  $region5: #{upblock_forward.3} parent=0 // loop_body
    %s17 = ssub.s32 %s12, 1
    %s18 = ssub.s32 %s12, 2
    %s25 = sadd.s32 1, %s20
    %p26 = scmp.ge.s32.totalorder %s25, 2
    %s27 = scalar_select %p26, 0, %s25
    %s28 = sadd.s32 1, %s19
    %s29 = scalar_select %p26, %s28, %s19
    %p30 = scmp.ge.s32.totalorder %s29, 2
    %s31 = scalar_select %p30, 0, %s29
    %s32 = ssub.s32 %s19, %s31
    %s33 = ssub.s32 %s20, %s27
    %s34 = sor.u32 %s32, %s33
    %p35 = scmp.eq.s32.totalorder %s34, 0
    %s37 = sadd.s32 %s36, 1
    %s38 = scalar_select %p35, %s36, %s37
    %p41 = pneg %p35
    %p42 = scmp.eq.s32.totalorder %s12, 3
    %p43 = por %p41, %p42
    %p44 = scmp.ne.s32.totalorder %s36, %s39
    %p45 = scmp.eq.s32.totalorder %s12, 0
    %p46 = por %p44, %p45
    %p47 = scmp.ne.s32.totalorder %s36, %s39
    %p48 = scmp.eq.s32.totalorder %s17, 3
    %p49 = por %p47, %p48
    %p50 = scmp.ne.s32.totalorder %s39, %s40
    %p51 = scmp.eq.s32.totalorder %s17, 0
    %p52 = por %p50, %p51
    %p53 = scmp.ne.s32.totalorder %s39, %s40
    %p54 = scmp.eq.s32.totalorder %s18, 3
    %p55 = por %p53, %p54
    %p57 = scmp.ne.s32.totalorder %s40, %s56
    %p58 = scmp.eq.s32.totalorder %s18, 0
    %p59 = por %p57, %p58
    %s60 = sadd.s32 %s20, 1
    %s61 = smul.u32 %s60, 8
    %s62 = sadd.s32 %s27, 1
    %s63 = smul.u32 %s62, 8
    %s64 = ssub.s32 %s19, %s31
    %s65 = ssub.s32 %s61, %s63
    %s66 = sor.u32 %s64, %s65
    %p67 = scmp.eq.s32.totalorder %s66, 0
    %s69 = sadd.s32 %s68, 1
    %s70 = scalar_select %p67, %s68, %s69
    %p73 = pneg %p67
    %p74 = scmp.eq.s32.totalorder %s12, 3
    %p75 = por %p73, %p74
    %p76 = scmp.ne.s32.totalorder %s68, %s71
    %p77 = scmp.eq.s32.totalorder %s12, 0
    %p78 = por %p76, %p77
    %p79 = scmp.ne.s32.totalorder %s68, %s71
    %p80 = scmp.eq.s32.totalorder %s17, 3
    %p81 = por %p79, %p80
    %p82 = scmp.ne.s32.totalorder %s71, %s72
    %p83 = scmp.eq.s32.totalorder %s17, 0
    %p84 = por %p82, %p83
    %p85 = scmp.ne.s32.totalorder %s71, %s72
    %p86 = scmp.eq.s32.totalorder %s18, 3
    %p87 = por %p85, %p86
    %p89 = scmp.ne.s32.totalorder %s72, %s88
    %p90 = scmp.eq.s32.totalorder %s18, 0
    %p91 = por %p89, %p90
    %s93 = sadd.s32 %s92, 1
    %p96 = scmp.eq.s32.totalorder %s12, 3
    %p97 = scmp.ne.s32.totalorder %s92, %s94
    %p98 = scmp.eq.s32.totalorder %s12, 0
    %p99 = por %p97, %p98
    %p100 = scmp.ne.s32.totalorder %s92, %s94
    %p101 = scmp.eq.s32.totalorder %s17, 3
    %p102 = por %p100, %p101
    %p103 = scmp.ne.s32.totalorder %s94, %s95
    %p104 = scmp.eq.s32.totalorder %s17, 0
    %p105 = por %p103, %p104
    %p106 = scmp.ne.s32.totalorder %s94, %s95
    %p107 = scmp.eq.s32.totalorder %s18, 3
    %p108 = por %p106, %p107
    %p110 = scmp.ne.s32.totalorder %s95, %s109
    %p111 = scmp.eq.s32.totalorder %s18, 0
    %p112 = por %p110, %p111
    %s114 = sadd.s32 %s113, 1
    %p117 = scmp.eq.s32.totalorder %s12, 3
    %p118 = scmp.ne.s32.totalorder %s113, %s115
    %p119 = scmp.eq.s32.totalorder %s12, 0
    %p120 = por %p118, %p119
    %p121 = scmp.ne.s32.totalorder %s113, %s115
    %p122 = scmp.eq.s32.totalorder %s17, 3
    %p123 = por %p121, %p122
    %p124 = scmp.ne.s32.totalorder %s115, %s116
    %p125 = scmp.eq.s32.totalorder %s17, 0
    %p126 = por %p124, %p125
    %p127 = scmp.ne.s32.totalorder %s115, %s116
    %p128 = scmp.eq.s32.totalorder %s18, 3
    %p129 = por %p127, %p128
    %p131 = scmp.ne.s32.totalorder %s116, %s130
    %p132 = scmp.eq.s32.totalorder %s18, 0
    %p133 = por %p131, %p132
    %s135 = sadd.s32 %s134, 1
    %p138 = scmp.eq.s32.totalorder %s12, 3
    %p139 = scmp.ne.s32.totalorder %s134, %s136
    %p140 = scmp.eq.s32.totalorder %s12, 0
    %p141 = por %p139, %p140
    %p142 = scmp.ne.s32.totalorder %s134, %s136
    %p143 = scmp.eq.s32.totalorder %s17, 3
    %p144 = por %p142, %p143
    %p145 = scmp.ne.s32.totalorder %s136, %s137
    %p146 = scmp.eq.s32.totalorder %s17, 0
    %p147 = por %p145, %p146
    %p148 = scmp.ne.s32.totalorder %s136, %s137
    %p149 = scmp.eq.s32.totalorder %s18, 3
    %p150 = por %p148, %p149
    %p152 = scmp.ne.s32.totalorder %s137, %s151
    %p153 = scmp.eq.s32.totalorder %s18, 0
    %p154 = por %p152, %p153
    %s156 = sadd.s32 %s155, 1
    %p159 = scmp.eq.s32.totalorder %s12, 3
    %p160 = scmp.ne.s32.totalorder %s155, %s157
    %p161 = scmp.eq.s32.totalorder %s12, 0
    %p162 = por %p160, %p161
    %p163 = scmp.ne.s32.totalorder %s155, %s157
    %p164 = scmp.eq.s32.totalorder %s17, 3
    %p165 = por %p163, %p164
    %p166 = scmp.ne.s32.totalorder %s157, %s158
    %p167 = scmp.eq.s32.totalorder %s17, 0
    %p168 = por %p166, %p167
    %p169 = scmp.ne.s32.totalorder %s157, %s158
    %p170 = scmp.eq.s32.totalorder %s18, 3
    %p171 = por %p169, %p170
    %p173 = scmp.ne.s32.totalorder %s158, %s172
    %p174 = scmp.eq.s32.totalorder %s18, 0
    %p175 = por %p173, %p174
    %s176 = ssub.s32 %s19, %s31
    %s177 = ssub.s32 %s20, %s27
    %s178 = sor.u32 %s176, %s177
    %p179 = scmp.eq.s32.totalorder %s178, 0
    %s181 = sadd.s32 %s180, 1
    %s182 = scalar_select %p179, %s180, %s181
    %p185 = pneg %p179
    %p186 = scmp.eq.s32.totalorder %s12, 3
    %p187 = por %p185, %p186
    %p188 = scmp.ne.s32.totalorder %s180, %s183
    %p189 = scmp.eq.s32.totalorder %s12, 0
    %p190 = por %p188, %p189
    %p191 = scmp.ne.s32.totalorder %s180, %s183
    %p192 = scmp.eq.s32.totalorder %s17, 3
    %p193 = por %p191, %p192
    %p194 = scmp.ne.s32.totalorder %s183, %s184
    %p195 = scmp.eq.s32.totalorder %s17, 0
    %p196 = por %p194, %p195
    %p197 = scmp.ne.s32.totalorder %s183, %s184
    %p198 = scmp.eq.s32.totalorder %s18, 3
    %p199 = por %p197, %p198
    %p201 = scmp.ne.s32.totalorder %s184, %s200
    %p202 = scmp.eq.s32.totalorder %s18, 0
    %p203 = por %p201, %p202
    %p204 = scmp.le.s32.totalorder 1, %s12
    %p205 = scmp.lt.s32.totalorder %s12, 5
    %p206 = pnand %p204, %p205
    %p207 = pneg %p206
    // Predicated region
    $region9: #{upblock_forward.3} parent=5 // pred_check
      _
    $region10: #{upblock_forward.3} parent=5 // pred_check_branch
      %209 = sbr.rel (%p206) target = $region12
    $region11: #{upblock_forward.3} parent=5 // pred_region
      %s210 = ssub.s32 %s12, 1
      // Predicated region
      $region13: #{upblock_forward.3} parent=11 // pred_check
        %p211 = pneg %p105
      $region14: #{upblock_forward.3} parent=11 // pred_check_branch
        %213 = sbr.rel (%p211) target = $region16
      $region15: #{upblock_forward.3} parent=11 // pred_region
        _
      $region16: #{upblock_forward.3} parent=11 // pred_fallthru
        _
      // Predicated region
      $region17: #{upblock_forward.3} parent=11 // pred_check
        %p214 = pneg %p126
      $region18: #{upblock_forward.3} parent=11 // pred_check_branch
        %216 = sbr.rel (%p214) target = $region20
      $region19: #{upblock_forward.3} parent=11 // pred_region
        _
      $region20: #{upblock_forward.3} parent=11 // pred_fallthru
        _
      // Predicated region
      $region21: #{upblock_forward.3} parent=11 // pred_check
        %p217 = pneg %p147
      $region22: #{upblock_forward.3} parent=11 // pred_check_branch
        %219 = sbr.rel (%p217) target = $region24
      $region23: #{upblock_forward.3} parent=11 // pred_region
        _
      $region24: #{upblock_forward.3} parent=11 // pred_fallthru
        _
      // Predicated region
      $region25: #{upblock_forward.3} parent=11 // pred_check
        %p220 = pneg %p168
      $region26: #{upblock_forward.3} parent=11 // pred_check_branch
        %222 = sbr.rel (%p220) target = $region28
      $region27: #{upblock_forward.3} parent=11 // pred_region
        _
      $region28: #{upblock_forward.3} parent=11 // pred_fallthru
        _
    $region12: #{upblock_forward.3} parent=5 // pred_fallthru
      _
    %p223 = scmp.lt.s32.totalorder %s12, 4
    // Predicated region
    $region29: #{upblock_forward.3} parent=5 // pred_check
      %p224 = pneg %p223
    $region30: #{upblock_forward.3} parent=5 // pred_check_branch
      %226 = sbr.rel (%p224) target = $region32
    $region31: #{upblock_forward.3} parent=5 // pred_region
      // Predicated region
      $region33: #{upblock_forward.3} parent=31 // pred_check
        %p227 = pneg %p46
      $region34: #{upblock_forward.3} parent=31 // pred_check_branch
        %229 = sbr.rel (%p227) target = $region36
      $region35: #{upblock_forward.3} parent=31 // pred_region
        %s230 = smul.u32 16, %s20
        %s231 = ssub.s32 34, %s230
        %p232 = scmp.lt.s32.totalorder %s231, 16
        %s233 = scalar_select %p232, %s231, 16
        %s234 = smul.u32 128, %s233
        %s235 = smul.u32 %s234, 5
        %p236 = scmp.lt.s32.totalorder %s19, 1
        %s237 = scalar_select %p236, %s19, 1
        %p238 = scmp.lt.s32.totalorder %s230, 33
        %s239 = scalar_select %p238, %s230, 33
        %s240 = smul.addr %s239, 5
        %s241 = smul.addr %s237, 170
        %s242 = sadd.s32 %s240, %s241
        %s243 = smul.addr %s242, 8
        %s244 = scalar_lea.vmem %s0, %s243
        %s245 = smul.u32 16, %s20
        %s246 = ssub.s32 34, %s245
        %p247 = scmp.lt.s32.totalorder %s246, 16
        %s248 = scalar_select %p247, %s246, 16
        %s249 = smul.u32 128, %s248
        %s250 = smul.u32 %s249, 5
      $region36: #{upblock_forward.3} parent=31 // pred_fallthru
        _
      // Predicated region
      $region37: #{upblock_forward.3} parent=31 // pred_check
        %p251 = pneg %p78
      $region38: #{upblock_forward.3} parent=31 // pred_check_branch
        %253 = sbr.rel (%p251) target = $region40
      $region39: #{upblock_forward.3} parent=31 // pred_region
        %s254 = sadd.s32 %s20, 1
        %s255 = smul.u32 %s254, 8
        %s256 = smul.u32 2, %s255
        %p257 = scmp.lt.s32.totalorder %s19, 1
        %s258 = scalar_select %p257, %s19, 1
        %p259 = scmp.lt.s32.totalorder %s256, 33
        %s260 = scalar_select %p259, %s256, 33
        %s261 = smul.addr %s260, 5
        %s262 = smul.addr %s258, 170
        %s263 = sadd.s32 %s261, %s262
        %s264 = smul.addr %s263, 8
        %s265 = scalar_lea.vmem %s1, %s264
        %s266 = sadd.s32 %s20, 1
        %s267 = smul.u32 %s266, 8
        %s268 = smul.u32 2, %s267
      $region40: #{upblock_forward.3} parent=31 // pred_fallthru
        _
    $region32: #{upblock_forward.3} parent=5 // pred_fallthru
      _
    %p269 = scmp.le.s32.totalorder 1, %s12
    %p270 = scmp.lt.s32.totalorder %s12, 5
    %p271 = pnand %p269, %p270
    %p272 = pneg %p271
    // Predicated region
    $region41: #{upblock_forward.3} parent=5 // pred_check
      _
    $region42: #{upblock_forward.3} parent=5 // pred_check_branch
      %274 = sbr.rel (%p271) target = $region44
    $region43: #{upblock_forward.3} parent=5 // pred_region
      %s275 = ssub.s32 %s12, 1
      %s276 = smul.u32 16, %s22
      %s277 = ssub.s32 34, %s276
      %p278 = scmp.lt.s32.totalorder %s277, 16
      %s279 = scalar_select %p278, %s277, 16
      %s280 = smul.u32 128, %s279
      %s281 = smul.u32 %s280, 5
      %p282 = scmp.lt.s32.totalorder %s21, 1
      %s283 = scalar_select %p282, %s21, 1
      %p284 = scmp.lt.s32.totalorder %s276, 33
      %s285 = scalar_select %p284, %s276, 33
      %s286 = smul.addr %s285, 5
      %s287 = smul.addr %s283, 170
      %s288 = sadd.s32 %s286, %s287
      %s289 = smul.addr %s288, 8
      %s290 = scalar_lea.vmem %s0, %s289
      %p291 = pneg %p52
      %p292 = pneg %p49
      %s293 = sadd.s32 %s22, 1
      %s294 = smul.u32 %s293, 8
      %s295 = smul.u32 2, %s294
      %p296 = scmp.lt.s32.totalorder %s21, 1
      %s297 = scalar_select %p296, %s21, 1
      %p298 = scmp.lt.s32.totalorder %s295, 33
      %s299 = scalar_select %p298, %s295, 33
      %s300 = smul.addr %s299, 5
      %s301 = smul.addr %s297, 170
      %s302 = sadd.s32 %s300, %s301
      %s303 = smul.addr %s302, 8
      %s304 = scalar_lea.vmem %s1, %s303
      %p305 = pneg %p84
      %p306 = pneg %p81
      %p307 = pneg %p105
      %p308 = pneg %p102
      %p309 = pneg %p126
      %p310 = pneg %p123
      %p311 = pneg %p147
      %p312 = pneg %p144
      %p313 = pneg %p168
      %p314 = pneg %p165
      %p315 = pneg %p196
      %p316 = pneg %p193
      %s317 = smul.u32 16, %s22
      %p318 = scmp.lt.s32.totalorder %s21, 1
      %s319 = scalar_select %p318, %s21, 1
      %p320 = scmp.lt.s32.totalorder %s317, 31
      %s321 = scalar_select %p320, %s317, 31
      %s322 = smul.addr %s321, 4
      %s323 = smul.addr %s319, 128
      %s324 = sadd.s32 %s322, %s323
      %s325 = smul.addr %s324, 8
      %s326 = scalar_lea.vmem %s6, %s325
      %s327 = smul.u32 16, %s22
      %s328 = ssub.s32 34, %s327
      %p329 = scmp.lt.s32.totalorder %s328, 16
      %s330 = scalar_select %p329, %s328, 16
      %s331 = smul.u32 128, %s330
      %s332 = smul.u32 %s331, 5
      %p333 = scmp.lt.s32.totalorder %s21, 1
      %s334 = scalar_select %p333, %s21, 1
      %p335 = scmp.lt.s32.totalorder %s327, 33
      %s336 = scalar_select %p335, %s327, 33
      %s337 = smul.addr %s336, 5
      %s338 = smul.addr %s334, 170
      %s339 = sadd.s32 %s337, %s338
      %s340 = smul.addr %s339, 8
      %s341 = scalar_lea.vmem %s0, %s340
      %s342 = smul.u32 16, %s22
      %s343 = ssub.s32 34, %s342
      %p344 = scmp.lt.s32.totalorder %s343, 16
      %s345 = scalar_select %p344, %s343, 16
      %s346 = smul.u32 128, %s345
      %s347 = smul.u32 %s346, 5
      %s348 = sadd.s32 %s22, 1
      %s349 = smul.u32 %s348, 8
      %s350 = smul.u32 2, %s349
      %p351 = scmp.lt.s32.totalorder %s21, 1
      %s352 = scalar_select %p351, %s21, 1
      %p353 = scmp.lt.s32.totalorder %s350, 33
      %s354 = scalar_select %p353, %s350, 33
      %s355 = smul.addr %s354, 5
      %s356 = smul.addr %s352, 170
      %s357 = sadd.s32 %s355, %s356
      %s358 = smul.addr %s357, 8
      %s359 = scalar_lea.vmem %s1, %s358
      %s360 = sadd.s32 %s22, 1
      %s361 = smul.u32 %s360, 8
      %s362 = smul.u32 2, %s361
      %s363 = smul.u32 16, %s22
      %p364 = scmp.lt.s32.totalorder %s21, 1
      %s365 = scalar_select %p364, %s21, 1
      %p366 = scmp.lt.s32.totalorder %s363, 31
      %s367 = scalar_select %p366, %s363, 31
      %s368 = smul.addr %s367, 4
      %s369 = smul.addr %s365, 128
      %s370 = sadd.s32 %s368, %s369
      %s371 = smul.addr %s370, 8
      %s372 = scalar_lea.vmem %s6, %s371
      %s373 = smul.u32 16, %s22
      %v375 = vld [vmem:[%s341] sm:$0xff]
      %v376 = vld [vmem:[%s341 + $0x8] sm:$0xff]
      %v377 = vld [vmem:[%s341 + $0x10] sm:$0xff]
      %v378 = vld [vmem:[%s341 + $0x18] sm:$0xff]
      %v379 = vld [vmem:[%s341 + $0x20] sm:$0x3]
      %v380 = vld [vmem:[%s341 + $0x28] sm:$0xff]
      %v381 = vld [vmem:[%s341 + $0x30] sm:$0xff]
      %v382 = vld [vmem:[%s341 + $0x38] sm:$0xff]
      %v383 = vld [vmem:[%s341 + $0x40] sm:$0xff]
      %v384 = vld [vmem:[%s341 + $0x48] sm:$0x3]
      %v385 = vld [vmem:[%s341 + $0x50] sm:$0xff]
      %v386 = vld [vmem:[%s341 + $0x58] sm:$0xff]
      %v387 = vld [vmem:[%s341 + $0x60] sm:$0xff]
      %v388 = vld [vmem:[%s341 + $0x68] sm:$0xff]
      %v389 = vld [vmem:[%s341 + $0x70] sm:$0x3]
      %v390 = vld [vmem:[%s341 + $0x78] sm:$0xff]
      %v391 = vld [vmem:[%s341 + $0x80] sm:$0xff]
      %v392 = vld [vmem:[%s341 + $0x88] sm:$0xff]
      %v393 = vld [vmem:[%s341 + $0x90] sm:$0xff]
      %v394 = vld [vmem:[%s341 + $0x98] sm:$0x3]
      %v395 = vld [vmem:[%s341 + $0xa0] sm:$0xff]
      %v396 = vld [vmem:[%s341 + $0xa8] sm:$0xff]
      %v397 = vld [vmem:[%s341 + $0xb0] sm:$0xff]
      %v398 = vld [vmem:[%s341 + $0xb8] sm:$0xff]
      %v399 = vld [vmem:[%s341 + $0xc0] sm:$0x3]
      %v400 = vld [vmem:[%s341 + $0xc8] sm:$0xff]
      %v401 = vld [vmem:[%s341 + $0xd0] sm:$0xff]
      %v402 = vld [vmem:[%s341 + $0xd8] sm:$0xff]
      %v403 = vld [vmem:[%s341 + $0xe0] sm:$0xff]
      %v404 = vld [vmem:[%s341 + $0xe8] sm:$0x3]
      %v405 = vld [vmem:[%s341 + $0xf0] sm:$0xff]
      %v406 = vld [vmem:[%s341 + $0xf8] sm:$0xff]
      %v407 = vld [vmem:[%s341 + $0x100] sm:$0xff]
      %v408 = vld [vmem:[%s341 + $0x108] sm:$0xff]
      %v409 = vld [vmem:[%s341 + $0x110] sm:$0x3]
      %v410 = vld [vmem:[%s341 + $0x118] sm:$0xff]
      %v411 = vld [vmem:[%s341 + $0x120] sm:$0xff]
      %v412 = vld [vmem:[%s341 + $0x128] sm:$0xff]
      %v413 = vld [vmem:[%s341 + $0x130] sm:$0xff]
      %v414 = vld [vmem:[%s341 + $0x138] sm:$0x3]
      %v415 = vld [vmem:[%s341 + $0x140] sm:$0xff]
      %v416 = vld [vmem:[%s341 + $0x148] sm:$0xff]
      %v417 = vld [vmem:[%s341 + $0x150] sm:$0xff]
      %v418 = vld [vmem:[%s341 + $0x158] sm:$0xff]
      %v419 = vld [vmem:[%s341 + $0x160] sm:$0x3]
      %v420 = vld [vmem:[%s341 + $0x168] sm:$0xff]
      %v421 = vld [vmem:[%s341 + $0x170] sm:$0xff]
      %v422 = vld [vmem:[%s341 + $0x178] sm:$0xff]
      %v423 = vld [vmem:[%s341 + $0x180] sm:$0xff]
      %v424 = vld [vmem:[%s341 + $0x188] sm:$0x3]
      %v425 = vld [vmem:[%s341 + $0x190] sm:$0xff]
      %v426 = vld [vmem:[%s341 + $0x198] sm:$0xff]
      %v427 = vld [vmem:[%s341 + $0x1a0] sm:$0xff]
      %v428 = vld [vmem:[%s341 + $0x1a8] sm:$0xff]
      %v429 = vld [vmem:[%s341 + $0x1b0] sm:$0x3]
      %v430 = vld [vmem:[%s341 + $0x1b8] sm:$0xff]
      %v431 = vld [vmem:[%s341 + $0x1c0] sm:$0xff]
      %v432 = vld [vmem:[%s341 + $0x1c8] sm:$0xff]
      %v433 = vld [vmem:[%s341 + $0x1d0] sm:$0xff]
      %v434 = vld [vmem:[%s341 + $0x1d8] sm:$0x3]
      %v435 = vld [vmem:[%s341 + $0x1e0] sm:$0xff]
      %v436 = vld [vmem:[%s341 + $0x1e8] sm:$0xff]
      %v437 = vld [vmem:[%s341 + $0x1f0] sm:$0xff]
      %v438 = vld [vmem:[%s341 + $0x1f8] sm:$0xff]
      %v439 = vld [vmem:[%s341 + $0x200] sm:$0x3]
      %v440 = vld [vmem:[%s341 + $0x208] sm:$0xff]
      %v441 = vld [vmem:[%s341 + $0x210] sm:$0xff]
      %v442 = vld [vmem:[%s341 + $0x218] sm:$0xff]
      %v443 = vld [vmem:[%s341 + $0x220] sm:$0xff]
      %v444 = vld [vmem:[%s341 + $0x228] sm:$0x3]
      %v445 = vld [vmem:[%s341 + $0x230] sm:$0xff]
      %v446 = vld [vmem:[%s341 + $0x238] sm:$0xff]
      %v447 = vld [vmem:[%s341 + $0x240] sm:$0xff]
      %v448 = vld [vmem:[%s341 + $0x248] sm:$0xff]
      %v449 = vld [vmem:[%s341 + $0x250] sm:$0x3]
      %v450 = vld [vmem:[%s341 + $0x258] sm:$0xff]
      %v451 = vld [vmem:[%s341 + $0x260] sm:$0xff]
      %v452 = vld [vmem:[%s341 + $0x268] sm:$0xff]
      %v453 = vld [vmem:[%s341 + $0x270] sm:$0xff]
      %v454 = vld [vmem:[%s341 + $0x278] sm:$0x3]
      %v455 = vld [vmem:[%s359] sm:$0xff]
      %v456 = vld [vmem:[%s359 + $0x8] sm:$0xff]
      %v457 = vld [vmem:[%s359 + $0x10] sm:$0xff]
      %v458 = vld [vmem:[%s359 + $0x18] sm:$0xff]
      %v459 = vld [vmem:[%s359 + $0x20] sm:$0x3]
      %v460 = vld [vmem:[%s359 + $0x28] sm:$0xff]
      %v461 = vld [vmem:[%s359 + $0x30] sm:$0xff]
      %v462 = vld [vmem:[%s359 + $0x38] sm:$0xff]
      %v463 = vld [vmem:[%s359 + $0x40] sm:$0xff]
      %v464 = vld [vmem:[%s359 + $0x48] sm:$0x3]
      %v465 = vpack.c.bf16 %v376, %v375
      %v466 = vpack.c.bf16 %v378, %v377
      %v467 = vpack.c.bf16 %v379, %v379
      %v468 = vpack.c.bf16 %v381, %v380
      %v469 = vpack.c.bf16 %v383, %v382
      %v470 = vpack.c.bf16 %v384, %v384
      %v471 = vpack.c.bf16 %v386, %v385
      %v472 = vpack.c.bf16 %v388, %v387
      %v473 = vpack.c.bf16 %v389, %v389
      %v474 = vpack.c.bf16 %v391, %v390
      %v475 = vpack.c.bf16 %v393, %v392
      %v476 = vpack.c.bf16 %v394, %v394
      %v477 = vpack.c.bf16 %v396, %v395
      %v478 = vpack.c.bf16 %v398, %v397
      %v479 = vpack.c.bf16 %v399, %v399
      %v480 = vpack.c.bf16 %v401, %v400
      %v481 = vpack.c.bf16 %v403, %v402
      %v482 = vpack.c.bf16 %v404, %v404
      %v483 = vpack.c.bf16 %v406, %v405
      %v484 = vpack.c.bf16 %v408, %v407
      %v485 = vpack.c.bf16 %v409, %v409
      %v486 = vpack.c.bf16 %v411, %v410
      %v487 = vpack.c.bf16 %v413, %v412
      %v488 = vpack.c.bf16 %v414, %v414
      %v489 = vpack.c.bf16 %v416, %v415
      %v490 = vpack.c.bf16 %v418, %v417
      %v491 = vpack.c.bf16 %v419, %v419
      %v492 = vpack.c.bf16 %v421, %v420
      %v493 = vpack.c.bf16 %v423, %v422
      %v494 = vpack.c.bf16 %v424, %v424
      %v495 = vpack.c.bf16 %v426, %v425
      %v496 = vpack.c.bf16 %v428, %v427
      %v497 = vpack.c.bf16 %v429, %v429
      %v498 = vpack.c.bf16 %v431, %v430
      %v499 = vpack.c.bf16 %v433, %v432
      %v500 = vpack.c.bf16 %v434, %v434
      %v501 = vpack.c.bf16 %v436, %v435
      %v502 = vpack.c.bf16 %v438, %v437
      %v503 = vpack.c.bf16 %v439, %v439
      %v504 = vpack.c.bf16 %v441, %v440
      %v505 = vpack.c.bf16 %v443, %v442
      %v506 = vpack.c.bf16 %v444, %v444
      %v507 = vpack.c.bf16 %v446, %v445
      %v508 = vpack.c.bf16 %v448, %v447
      %v509 = vpack.c.bf16 %v449, %v449
      %v510 = vpack.c.bf16 %v451, %v450
      %v511 = vpack.c.bf16 %v453, %v452
      %v512 = vpack.c.bf16 %v454, %v454
      %v513 = vpack.c.bf16 %v456, %v455
      %v514 = vpack.c.bf16 %v458, %v457
      %v515 = vpack.c.bf16 %v459, %v459
      %v516 = vpack.c.bf16 %v461, %v460
      %v517 = vpack.c.bf16 %v463, %v462
      %v518 = vpack.c.bf16 %v464, %v464
      %v519 = vld [vmem:[%s2] sm:$0xf]
      %vm520 = vsmask.f32 7424
      %v522 = vshrl.u32 %v465, 16
      %v524 = vshll.u32 %v465, 16
      %v526 = vrot.slane %v524, 1
      %v527 = vor.u32 %v522, %v526
      %v529 = vshll.u32 %v466, 16
      %v531 = vrot.slane %v529, 1
      %v532 = vsel %vm520, %v527, %v531
      %v533 = vshrl.u32 %v466, 16
      %v535 = vor.u32 %v533, %v531
      %v537 = vshll.u32 %v467, 16
      %v539 = vrot.slane %v537, 1
      %v540 = vsel %vm520, %v535, %v539
      %v542 = vshrl.u32 %v468, 16
      %v544 = vshll.u32 %v468, 16
      %v546 = vrot.slane %v544, 1
      %v547 = vor.u32 %v542, %v546
      %v549 = vshll.u32 %v469, 16
      %v551 = vrot.slane %v549, 1
      %v552 = vsel %vm520, %v547, %v551
      %v553 = vshrl.u32 %v469, 16
      %v555 = vor.u32 %v553, %v551
      %v557 = vshll.u32 %v470, 16
      %v559 = vrot.slane %v557, 1
      %v560 = vsel %vm520, %v555, %v559
      %v562 = vshrl.u32 %v471, 16
      %v564 = vshll.u32 %v471, 16
      %v566 = vrot.slane %v564, 1
      %v567 = vor.u32 %v562, %v566
      %v569 = vshll.u32 %v472, 16
      %v571 = vrot.slane %v569, 1
      %v572 = vsel %vm520, %v567, %v571
      %v573 = vshrl.u32 %v472, 16
      %v575 = vor.u32 %v573, %v571
      %v577 = vshll.u32 %v473, 16
      %v579 = vrot.slane %v577, 1
      %v580 = vsel %vm520, %v575, %v579
      %v582 = vshrl.u32 %v474, 16
      %v584 = vshll.u32 %v474, 16
      %v586 = vrot.slane %v584, 1
      %v587 = vor.u32 %v582, %v586
      %v589 = vshll.u32 %v475, 16
      %v591 = vrot.slane %v589, 1
      %v592 = vsel %vm520, %v587, %v591
      %v593 = vshrl.u32 %v475, 16
      %v595 = vor.u32 %v593, %v591
      %v597 = vshll.u32 %v476, 16
      %v599 = vrot.slane %v597, 1
      %v600 = vsel %vm520, %v595, %v599
      %v602 = vshrl.u32 %v477, 16
      %v604 = vshll.u32 %v477, 16
      %v606 = vrot.slane %v604, 1
      %v607 = vor.u32 %v602, %v606
      %v609 = vshll.u32 %v478, 16
      %v611 = vrot.slane %v609, 1
      %v612 = vsel %vm520, %v607, %v611
      %v613 = vshrl.u32 %v478, 16
      %v615 = vor.u32 %v613, %v611
      %v617 = vshll.u32 %v479, 16
      %v619 = vrot.slane %v617, 1
      %v620 = vsel %vm520, %v615, %v619
      %v622 = vshrl.u32 %v480, 16
      %v624 = vshll.u32 %v480, 16
      %v626 = vrot.slane %v624, 1
      %v627 = vor.u32 %v622, %v626
      %v629 = vshll.u32 %v481, 16
      %v631 = vrot.slane %v629, 1
      %v632 = vsel %vm520, %v627, %v631
      %v633 = vshrl.u32 %v481, 16
      %v635 = vor.u32 %v633, %v631
      %v637 = vshll.u32 %v482, 16
      %v639 = vrot.slane %v637, 1
      %v640 = vsel %vm520, %v635, %v639
      %v642 = vshrl.u32 %v483, 16
      %v644 = vshll.u32 %v483, 16
      %v646 = vrot.slane %v644, 1
      %v647 = vor.u32 %v642, %v646
      %v649 = vshll.u32 %v484, 16
      %v651 = vrot.slane %v649, 1
      %v652 = vsel %vm520, %v647, %v651
      %v653 = vshrl.u32 %v484, 16
      %v655 = vor.u32 %v653, %v651
      %v657 = vshll.u32 %v485, 16
      %v659 = vrot.slane %v657, 1
      %v660 = vsel %vm520, %v655, %v659
      %v662 = vshrl.u32 %v486, 16
      %v664 = vshll.u32 %v486, 16
      %v666 = vrot.slane %v664, 1
      %v667 = vor.u32 %v662, %v666
      %v669 = vshll.u32 %v487, 16
      %v671 = vrot.slane %v669, 1
      %v672 = vsel %vm520, %v667, %v671
      %v673 = vshrl.u32 %v487, 16
      %v675 = vor.u32 %v673, %v671
      %v677 = vshll.u32 %v488, 16
      %v679 = vrot.slane %v677, 1
      %v680 = vsel %vm520, %v675, %v679
      %v682 = vshrl.u32 %v489, 16
      %v684 = vshll.u32 %v489, 16
      %v686 = vrot.slane %v684, 1
      %v687 = vor.u32 %v682, %v686
      %v689 = vshll.u32 %v490, 16
      %v691 = vrot.slane %v689, 1
      %v692 = vsel %vm520, %v687, %v691
      %v693 = vshrl.u32 %v490, 16
      %v695 = vor.u32 %v693, %v691
      %v697 = vshll.u32 %v491, 16
      %v699 = vrot.slane %v697, 1
      %v700 = vsel %vm520, %v695, %v699
      %v702 = vshrl.u32 %v492, 16
      %v704 = vshll.u32 %v492, 16
      %v706 = vrot.slane %v704, 1
      %v707 = vor.u32 %v702, %v706
      %v709 = vshll.u32 %v493, 16
      %v711 = vrot.slane %v709, 1
      %v712 = vsel %vm520, %v707, %v711
      %v713 = vshrl.u32 %v493, 16
      %v715 = vor.u32 %v713, %v711
      %v717 = vshll.u32 %v494, 16
      %v719 = vrot.slane %v717, 1
      %v720 = vsel %vm520, %v715, %v719
      %v722 = vshrl.u32 %v495, 16
      %v724 = vshll.u32 %v495, 16
      %v726 = vrot.slane %v724, 1
      %v727 = vor.u32 %v722, %v726
      %v729 = vshll.u32 %v496, 16
      %v731 = vrot.slane %v729, 1
      %v732 = vsel %vm520, %v727, %v731
      %v733 = vshrl.u32 %v496, 16
      %v735 = vor.u32 %v733, %v731
      %v737 = vshll.u32 %v497, 16
      %v739 = vrot.slane %v737, 1
      %v740 = vsel %vm520, %v735, %v739
      %v742 = vshrl.u32 %v498, 16
      %v744 = vshll.u32 %v498, 16
      %v746 = vrot.slane %v744, 1
      %v747 = vor.u32 %v742, %v746
      %v749 = vshll.u32 %v499, 16
      %v751 = vrot.slane %v749, 1
      %v752 = vsel %vm520, %v747, %v751
      %v753 = vshrl.u32 %v499, 16
      %v755 = vor.u32 %v753, %v751
      %v757 = vshll.u32 %v500, 16
      %v759 = vrot.slane %v757, 1
      %v760 = vsel %vm520, %v755, %v759
      %v762 = vshrl.u32 %v501, 16
      %v764 = vshll.u32 %v501, 16
      %v766 = vrot.slane %v764, 1
      %v767 = vor.u32 %v762, %v766
      %v769 = vshll.u32 %v502, 16
      %v771 = vrot.slane %v769, 1
      %v772 = vsel %vm520, %v767, %v771
      %v773 = vshrl.u32 %v502, 16
      %v775 = vor.u32 %v773, %v771
      %v777 = vshll.u32 %v503, 16
      %v779 = vrot.slane %v777, 1
      %v780 = vsel %vm520, %v775, %v779
      %v782 = vshrl.u32 %v504, 16
      %v784 = vshll.u32 %v504, 16
      %v786 = vrot.slane %v784, 1
      %v787 = vor.u32 %v782, %v786
      %v789 = vshll.u32 %v505, 16
      %v791 = vrot.slane %v789, 1
      %v792 = vsel %vm520, %v787, %v791
      %v793 = vshrl.u32 %v505, 16
      %v795 = vor.u32 %v793, %v791
      %v797 = vshll.u32 %v506, 16
      %v799 = vrot.slane %v797, 1
      %v800 = vsel %vm520, %v795, %v799
      %v802 = vshrl.u32 %v507, 16
      %v804 = vshll.u32 %v507, 16
      %v806 = vrot.slane %v804, 1
      %v807 = vor.u32 %v802, %v806
      %v809 = vshll.u32 %v508, 16
      %v811 = vrot.slane %v809, 1
      %v812 = vsel %vm520, %v807, %v811
      %v813 = vshrl.u32 %v508, 16
      %v815 = vor.u32 %v813, %v811
      %v817 = vshll.u32 %v509, 16
      %v819 = vrot.slane %v817, 1
      %v820 = vsel %vm520, %v815, %v819
      %v822 = vshrl.u32 %v510, 16
      %v824 = vshll.u32 %v510, 16
      %v826 = vrot.slane %v824, 1
      %v827 = vor.u32 %v822, %v826
      %v829 = vshll.u32 %v511, 16
      %v831 = vrot.slane %v829, 1
      %v832 = vsel %vm520, %v827, %v831
      %v833 = vshrl.u32 %v511, 16
      %v835 = vor.u32 %v833, %v831
      %v837 = vshll.u32 %v512, 16
      %v839 = vrot.slane %v837, 1
      %v840 = vsel %vm520, %v835, %v839
      %s841 = scalar_lea.vmem %s2, 4
      %v842 = vld [vmem:[%s841] sm:$0xf]
      %vm843 = vcmask 64512
      %v845 = vsel %vm843, %v532, 0
      %v848 = vsel %vm843, %v540, 0
      %v851 = vsel %vm843, %v552, 0
      %v854 = vsel %vm843, %v560, 0
      %v857 = vsel %vm843, %v572, 0
      %v860 = vsel %vm843, %v580, 0
      %v863 = vsel %vm843, %v592, 0
      %v866 = vsel %vm843, %v600, 0
      %v869 = vsel %vm843, %v612, 0
      %v872 = vsel %vm843, %v620, 0
      %v875 = vsel %vm843, %v632, 0
      %v878 = vsel %vm843, %v640, 0
      %v881 = vsel %vm843, %v652, 0
      %v884 = vsel %vm843, %v660, 0
      %v887 = vsel %vm843, %v672, 0
      %v890 = vsel %vm843, %v680, 0
      %v893 = vsel %vm843, %v692, 0
      %v896 = vsel %vm843, %v700, 0
      %v899 = vsel %vm843, %v712, 0
      %v902 = vsel %vm843, %v720, 0
      %v905 = vsel %vm843, %v732, 0
      %v908 = vsel %vm843, %v740, 0
      %v911 = vsel %vm843, %v752, 0
      %v914 = vsel %vm843, %v760, 0
      %v917 = vsel %vm843, %v772, 0
      %v920 = vsel %vm843, %v780, 0
      %v923 = vsel %vm843, %v792, 0
      %v926 = vsel %vm843, %v800, 0
      %v929 = vsel %vm843, %v812, 0
      %v932 = vsel %vm843, %v820, 0
      %v935 = vsel %vm843, %v832, 0
      %v938 = vsel %vm843, %v840, 0
      %vm940 = vcmask 1043456
      %v942 = vsel %vm940, %v842, 0
      %944 = vmatprep.subr.bf16.mxu0 0
      %945 = vmatpush1.bf16.msra.mxu0 0
      %946 = vmatprep.subr.bf16.mxu0 0
      %947 = vmatpush1.bf16.msra.mxu0 0
      %948 = vmatprep.subr.bf16.mxu0 0
      %949 = vmatpush1.bf16.msra.mxu0 0
      %950 = vmatprep.subr.bf16.mxu0 0
      %951 = vmatpush1.bf16.msra.mxu0 0
      %952 = vmatprep.subr.bf16.mxu0 0
      %953 = vmatpush1.bf16.msra.mxu0 0
      %954 = vmatprep.subr.bf16.mxu0 0
      %955 = vmatpush1.bf16.msra.mxu0 0
      %956 = vmatprep.subr.bf16.mxu0 0
      %957 = vmatpush1.bf16.msra.mxu0 0
      %958 = vmatprep.subr.bf16.mxu0 0
      %959 = vmatpush1.bf16.msra.mxu0 %v942
      %960 = vmatprep.subr.bf16.mxu0 0
      %961 = vmatpush2.bf16.msra.mxu0 0
      %962 = vmatprep.subr.bf16.mxu0 0
      %963 = vmatpush2.bf16.msra.mxu0 0
      %964 = vmatprep.subr.bf16.mxu0 0
      %965 = vmatpush2.bf16.msra.mxu0 0
      %966 = vmatprep.subr.bf16.mxu0 0
      %967 = vmatpush2.bf16.msra.mxu0 0
      %968 = vmatprep.subr.bf16.mxu0 0
      %969 = vmatpush2.bf16.msra.mxu0 0
      %970 = vmatprep.subr.bf16.mxu0 0
      %971 = vmatpush2.bf16.msra.mxu0 0
      %972 = vmatprep.subr.bf16.mxu0 0
      %973 = vmatpush2.bf16.msra.mxu0 0
      %974 = vmatprep.subr.bf16.mxu0 0
      %975 = vmatpush2.bf16.msra.mxu0 0
      %976 = vmatprep.mubr.bf16.mxu0 0
      %977 = vmatmul.mubr.bf16.gmra.mxu0 %v845
      %v978 = vpop.f32.mrf.mxu0
      %v979 = vadd.f32 0.0, %v978
      %v980 = vpop.f32.mrf.mxu0
      %v981 = vpop.f32.mrf.mxu0
      %v982 = vadd.f32 0.0, %v981
      %v983 = vpop.f32.mrf.mxu0
      %984 = vmatprep.mubr.bf16.mxu0 0
      %985 = vmatmul.mubr.bf16.gmra.mxu0 %v848
      %v986 = vpop.f32.mrf.mxu0
      %v987 = vadd.f32 0.0, %v986
      %v988 = vpop.f32.mrf.mxu0
      %v989 = vpop.f32.mrf.mxu0
      %v990 = vadd.f32 0.0, %v989
      %v991 = vpop.f32.mrf.mxu0
      %992 = vmatprep.mubr.bf16.mxu0 0
      %993 = vmatmul.mubr.bf16.gmra.mxu0 %v851
      %v994 = vpop.f32.mrf.mxu0
      %v995 = vadd.f32 0.0, %v994
      %v996 = vpop.f32.mrf.mxu0
      %v997 = vpop.f32.mrf.mxu0
      %v998 = vadd.f32 0.0, %v997
      %v999 = vpop.f32.mrf.mxu0
      %1000 = vmatprep.mubr.bf16.mxu0 0
      %1001 = vmatmul.mubr.bf16.gmra.mxu0 %v854
      %v1002 = vpop.f32.mrf.mxu0
      %v1003 = vadd.f32 0.0, %v1002
      %v1004 = vpop.f32.mrf.mxu0
      %v1005 = vpop.f32.mrf.mxu0
      %v1006 = vadd.f32 0.0, %v1005
      %v1007 = vpop.f32.mrf.mxu0
      %1008 = vmatprep.mubr.bf16.mxu0 0
      %1009 = vmatmul.mubr.bf16.gmra.mxu0 %v857
      %v1010 = vpop.f32.mrf.mxu0
      %v1011 = vadd.f32 0.0, %v1010
      %v1012 = vpop.f32.mrf.mxu0
      %v1013 = vpop.f32.mrf.mxu0
      %v1014 = vadd.f32 0.0, %v1013
      %v1015 = vpop.f32.mrf.mxu0
      %1016 = vmatprep.mubr.bf16.mxu0 0
      %1017 = vmatmul.mubr.bf16.gmra.mxu0 %v860
      %v1018 = vpop.f32.mrf.mxu0
      %v1019 = vadd.f32 0.0, %v1018
      %v1020 = vpop.f32.mrf.mxu0
      %v1021 = vpop.f32.mrf.mxu0
      %v1022 = vadd.f32 0.0, %v1021
      %v1023 = vpop.f32.mrf.mxu0
      %1024 = vmatprep.mubr.bf16.mxu0 0
      %1025 = vmatmul.mubr.bf16.gmra.mxu0 %v863
      %v1026 = vpop.f32.mrf.mxu0
      %v1027 = vadd.f32 0.0, %v1026
      %v1028 = vpop.f32.mrf.mxu0
      %v1029 = vpop.f32.mrf.mxu0
      %v1030 = vadd.f32 0.0, %v1029
      %v1031 = vpop.f32.mrf.mxu0
      %1032 = vmatprep.mubr.bf16.mxu0 0
      %1033 = vmatmul.mubr.bf16.gmra.mxu0 %v866
      %v1034 = vpop.f32.mrf.mxu0
      %v1035 = vadd.f32 0.0, %v1034
      %v1036 = vpop.f32.mrf.mxu0
      %v1037 = vpop.f32.mrf.mxu0
      %v1038 = vadd.f32 0.0, %v1037
      %v1039 = vpop.f32.mrf.mxu0
      %1040 = vmatprep.mubr.bf16.mxu0 0
      %1041 = vmatmul.mubr.bf16.gmra.mxu0 %v869
      %v1042 = vpop.f32.mrf.mxu0
      %v1043 = vadd.f32 0.0, %v1042
      %v1044 = vpop.f32.mrf.mxu0
      %v1045 = vpop.f32.mrf.mxu0
      %v1046 = vadd.f32 0.0, %v1045
      %v1047 = vpop.f32.mrf.mxu0
      %1048 = vmatprep.mubr.bf16.mxu0 0
      %1049 = vmatmul.mubr.bf16.gmra.mxu0 %v872
      %v1050 = vpop.f32.mrf.mxu0
      %v1051 = vadd.f32 0.0, %v1050
      %v1052 = vpop.f32.mrf.mxu0
      %v1053 = vpop.f32.mrf.mxu0
      %v1054 = vadd.f32 0.0, %v1053
      %v1055 = vpop.f32.mrf.mxu0
      %1056 = vmatprep.mubr.bf16.mxu0 0
      %1057 = vmatmul.mubr.bf16.gmra.mxu0 %v875
      %v1058 = vpop.f32.mrf.mxu0
      %v1059 = vadd.f32 0.0, %v1058
      %v1060 = vpop.f32.mrf.mxu0
      %v1061 = vpop.f32.mrf.mxu0
      %v1062 = vadd.f32 0.0, %v1061
      %v1063 = vpop.f32.mrf.mxu0
      %1064 = vmatprep.mubr.bf16.mxu0 0
      %1065 = vmatmul.mubr.bf16.gmra.mxu0 %v878
      %v1066 = vpop.f32.mrf.mxu0
      %v1067 = vadd.f32 0.0, %v1066
      %v1068 = vpop.f32.mrf.mxu0
      %v1069 = vpop.f32.mrf.mxu0
      %v1070 = vadd.f32 0.0, %v1069
      %v1071 = vpop.f32.mrf.mxu0
      %1072 = vmatprep.mubr.bf16.mxu0 0
      %1073 = vmatmul.mubr.bf16.gmra.mxu0 %v881
      %v1074 = vpop.f32.mrf.mxu0
      %v1075 = vadd.f32 0.0, %v1074
      %v1076 = vpop.f32.mrf.mxu0
      %v1077 = vpop.f32.mrf.mxu0
      %v1078 = vadd.f32 0.0, %v1077
      %v1079 = vpop.f32.mrf.mxu0
      %1080 = vmatprep.mubr.bf16.mxu0 0
      %1081 = vmatmul.mubr.bf16.gmra.mxu0 %v884
      %v1082 = vpop.f32.mrf.mxu0
      %v1083 = vadd.f32 0.0, %v1082
      %v1084 = vpop.f32.mrf.mxu0
      %v1085 = vpop.f32.mrf.mxu0
      %v1086 = vadd.f32 0.0, %v1085
      %v1087 = vpop.f32.mrf.mxu0
      %1088 = vmatprep.mubr.bf16.mxu0 0
      %1089 = vmatmul.mubr.bf16.gmra.mxu0 %v887
      %v1090 = vpop.f32.mrf.mxu0
      %v1091 = vadd.f32 0.0, %v1090
      %v1092 = vpop.f32.mrf.mxu0
      %v1093 = vpop.f32.mrf.mxu0
      %v1094 = vadd.f32 0.0, %v1093
      %v1095 = vpop.f32.mrf.mxu0
      %1096 = vmatprep.mubr.bf16.mxu0 0
      %1097 = vmatmul.mubr.bf16.gmra.mxu0 %v890
      %v1098 = vpop.f32.mrf.mxu0
      %v1099 = vadd.f32 0.0, %v1098
      %v1100 = vpop.f32.mrf.mxu0
      %v1101 = vpop.f32.mrf.mxu0
      %v1102 = vadd.f32 0.0, %v1101
      %v1103 = vpop.f32.mrf.mxu0
      %1104 = vmatprep.mubr.bf16.mxu0 0
      %1105 = vmatmul.mubr.bf16.gmra.mxu0 %v893
      %v1106 = vpop.f32.mrf.mxu0
      %v1107 = vadd.f32 0.0, %v1106
      %v1108 = vpop.f32.mrf.mxu0
      %v1109 = vpop.f32.mrf.mxu0
      %v1110 = vadd.f32 0.0, %v1109
      %v1111 = vpop.f32.mrf.mxu0
      %1112 = vmatprep.mubr.bf16.mxu0 0
      %1113 = vmatmul.mubr.bf16.gmra.mxu0 %v896
      %v1114 = vpop.f32.mrf.mxu0
      %v1115 = vadd.f32 0.0, %v1114
      %v1116 = vpop.f32.mrf.mxu0
      %v1117 = vpop.f32.mrf.mxu0
      %v1118 = vadd.f32 0.0, %v1117
      %v1119 = vpop.f32.mrf.mxu0
      %1120 = vmatprep.mubr.bf16.mxu0 0
      %1121 = vmatmul.mubr.bf16.gmra.mxu0 %v899
      %v1122 = vpop.f32.mrf.mxu0
      %v1123 = vadd.f32 0.0, %v1122
      %v1124 = vpop.f32.mrf.mxu0
      %v1125 = vpop.f32.mrf.mxu0
      %v1126 = vadd.f32 0.0, %v1125
      %v1127 = vpop.f32.mrf.mxu0
      %1128 = vmatprep.mubr.bf16.mxu0 0
      %1129 = vmatmul.mubr.bf16.gmra.mxu0 %v902
      %v1130 = vpop.f32.mrf.mxu0
      %v1131 = vadd.f32 0.0, %v1130
      %v1132 = vpop.f32.mrf.mxu0
      %v1133 = vpop.f32.mrf.mxu0
      %v1134 = vadd.f32 0.0, %v1133
      %v1135 = vpop.f32.mrf.mxu0
      %1136 = vmatprep.mubr.bf16.mxu0 0
      %1137 = vmatmul.mubr.bf16.gmra.mxu0 %v905
      %v1138 = vpop.f32.mrf.mxu0
      %v1139 = vadd.f32 0.0, %v1138
      %v1140 = vpop.f32.mrf.mxu0
      %v1141 = vpop.f32.mrf.mxu0
      %v1142 = vadd.f32 0.0, %v1141
      %v1143 = vpop.f32.mrf.mxu0
      %1144 = vmatprep.mubr.bf16.mxu0 0
      %1145 = vmatmul.mubr.bf16.gmra.mxu0 %v908
      %v1146 = vpop.f32.mrf.mxu0
      %v1147 = vadd.f32 0.0, %v1146
      %v1148 = vpop.f32.mrf.mxu0
      %v1149 = vpop.f32.mrf.mxu0
      %v1150 = vadd.f32 0.0, %v1149
      %v1151 = vpop.f32.mrf.mxu0
      %1152 = vmatprep.mubr.bf16.mxu0 0
      %1153 = vmatmul.mubr.bf16.gmra.mxu0 %v911
      %v1154 = vpop.f32.mrf.mxu0
      %v1155 = vadd.f32 0.0, %v1154
      %v1156 = vpop.f32.mrf.mxu0
      %v1157 = vpop.f32.mrf.mxu0
      %v1158 = vadd.f32 0.0, %v1157
      %v1159 = vpop.f32.mrf.mxu0
      %1160 = vmatprep.mubr.bf16.mxu0 0
      %1161 = vmatmul.mubr.bf16.gmra.mxu0 %v914
      %v1162 = vpop.f32.mrf.mxu0
      %v1163 = vadd.f32 0.0, %v1162
      %v1164 = vpop.f32.mrf.mxu0
      %v1165 = vpop.f32.mrf.mxu0
      %v1166 = vadd.f32 0.0, %v1165
      %v1167 = vpop.f32.mrf.mxu0
      %1168 = vmatprep.mubr.bf16.mxu0 0
      %1169 = vmatmul.mubr.bf16.gmra.mxu0 %v917
      %v1170 = vpop.f32.mrf.mxu0
      %v1171 = vadd.f32 0.0, %v1170
      %v1172 = vpop.f32.mrf.mxu0
      %v1173 = vpop.f32.mrf.mxu0
      %v1174 = vadd.f32 0.0, %v1173
      %v1175 = vpop.f32.mrf.mxu0
      %1176 = vmatprep.mubr.bf16.mxu0 0
      %1177 = vmatmul.mubr.bf16.gmra.mxu0 %v920
      %v1178 = vpop.f32.mrf.mxu0
      %v1179 = vadd.f32 0.0, %v1178
      %v1180 = vpop.f32.mrf.mxu0
      %v1181 = vpop.f32.mrf.mxu0
      %v1182 = vadd.f32 0.0, %v1181
      %v1183 = vpop.f32.mrf.mxu0
      %1184 = vmatprep.mubr.bf16.mxu0 0
      %1185 = vmatmul.mubr.bf16.gmra.mxu0 %v923
      %v1186 = vpop.f32.mrf.mxu0
      %v1187 = vadd.f32 0.0, %v1186
      %v1188 = vpop.f32.mrf.mxu0
      %v1189 = vpop.f32.mrf.mxu0
      %v1190 = vadd.f32 0.0, %v1189
      %v1191 = vpop.f32.mrf.mxu0
      %1192 = vmatprep.mubr.bf16.mxu0 0
      %1193 = vmatmul.mubr.bf16.gmra.mxu0 %v926
      %v1194 = vpop.f32.mrf.mxu0
      %v1195 = vadd.f32 0.0, %v1194
      %v1196 = vpop.f32.mrf.mxu0
      %v1197 = vpop.f32.mrf.mxu0
      %v1198 = vadd.f32 0.0, %v1197
      %v1199 = vpop.f32.mrf.mxu0
      %1200 = vmatprep.mubr.bf16.mxu0 0
      %1201 = vmatmul.mubr.bf16.gmra.mxu0 %v929
      %v1202 = vpop.f32.mrf.mxu0
      %v1203 = vadd.f32 0.0, %v1202
      %v1204 = vpop.f32.mrf.mxu0
      %v1205 = vpop.f32.mrf.mxu0
      %v1206 = vadd.f32 0.0, %v1205
      %v1207 = vpop.f32.mrf.mxu0
      %1208 = vmatprep.mubr.bf16.mxu0 0
      %1209 = vmatmul.mubr.bf16.gmra.mxu0 %v932
      %v1210 = vpop.f32.mrf.mxu0
      %v1211 = vadd.f32 0.0, %v1210
      %v1212 = vpop.f32.mrf.mxu0
      %v1213 = vpop.f32.mrf.mxu0
      %v1214 = vadd.f32 0.0, %v1213
      %v1215 = vpop.f32.mrf.mxu0
      %1216 = vmatprep.mubr.bf16.mxu0 0
      %1217 = vmatmul.mubr.bf16.gmra.mxu0 %v935
      %v1218 = vpop.f32.mrf.mxu0
      %v1219 = vadd.f32 0.0, %v1218
      %v1220 = vpop.f32.mrf.mxu0
      %v1221 = vpop.f32.mrf.mxu0
      %v1222 = vadd.f32 0.0, %v1221
      %v1223 = vpop.f32.mrf.mxu0
      %1224 = vmatprep.mubr.bf16.mxu0 0
      %1225 = vmatmul.mubr.bf16.gmra.mxu0 %v938
      %v1226 = vpop.f32.mrf.mxu0
      %v1227 = vadd.f32 0.0, %v1226
      %v1228 = vpop.f32.mrf.mxu0
      %v1229 = vpop.f32.mrf.mxu0
      %v1230 = vadd.f32 0.0, %v1229
      %v1231 = vpop.f32.mrf.mxu0
      %1232 = vdwg.mxu0
      %v1233 = vsel %vm843, %v465, 0
      %v1235 = vsel %vm843, %v466, 0
      %v1237 = vsel %vm843, %v468, 0
      %v1239 = vsel %vm843, %v469, 0
      %v1241 = vsel %vm843, %v471, 0
      %v1243 = vsel %vm843, %v472, 0
      %v1245 = vsel %vm843, %v474, 0
      %v1247 = vsel %vm843, %v475, 0
      %v1249 = vsel %vm843, %v477, 0
      %v1251 = vsel %vm843, %v478, 0
      %v1253 = vsel %vm843, %v480, 0
      %v1255 = vsel %vm843, %v481, 0
      %v1257 = vsel %vm843, %v483, 0
      %v1259 = vsel %vm843, %v484, 0
      %v1261 = vsel %vm843, %v486, 0
      %v1263 = vsel %vm843, %v487, 0
      %v1265 = vsel %vm843, %v489, 0
      %v1267 = vsel %vm843, %v490, 0
      %v1269 = vsel %vm843, %v492, 0
      %v1271 = vsel %vm843, %v493, 0
      %v1273 = vsel %vm843, %v495, 0
      %v1275 = vsel %vm843, %v496, 0
      %v1277 = vsel %vm843, %v498, 0
      %v1279 = vsel %vm843, %v499, 0
      %v1281 = vsel %vm843, %v501, 0
      %v1283 = vsel %vm843, %v502, 0
      %v1285 = vsel %vm843, %v504, 0
      %v1287 = vsel %vm843, %v505, 0
      %v1289 = vsel %vm843, %v507, 0
      %v1291 = vsel %vm843, %v508, 0
      %v1293 = vsel %vm843, %v510, 0
      %v1295 = vsel %vm843, %v511, 0
      %v1298 = vsel %vm940, %v519, 0
      %1300 = vmatprep.subr.bf16.mxu0 0
      %1301 = vmatpush1.bf16.msra.mxu0 0
      %1302 = vmatprep.subr.bf16.mxu0 0
      %1303 = vmatpush1.bf16.msra.mxu0 0
      %1304 = vmatprep.subr.bf16.mxu0 0
      %1305 = vmatpush1.bf16.msra.mxu0 0
      %1306 = vmatprep.subr.bf16.mxu0 0
      %1307 = vmatpush1.bf16.msra.mxu0 0
      %1308 = vmatprep.subr.bf16.mxu0 0
      %1309 = vmatpush1.bf16.msra.mxu0 0
      %1310 = vmatprep.subr.bf16.mxu0 0
      %1311 = vmatpush1.bf16.msra.mxu0 0
      %1312 = vmatprep.subr.bf16.mxu0 0
      %1313 = vmatpush1.bf16.msra.mxu0 0
      %1314 = vmatprep.subr.bf16.mxu0 0
      %1315 = vmatpush1.bf16.msra.mxu0 %v1298
      %1316 = vmatprep.subr.bf16.mxu0 0
      %1317 = vmatpush2.bf16.msra.mxu0 0
      %1318 = vmatprep.subr.bf16.mxu0 0
      %1319 = vmatpush2.bf16.msra.mxu0 0
      %1320 = vmatprep.subr.bf16.mxu0 0
      %1321 = vmatpush2.bf16.msra.mxu0 0
      %1322 = vmatprep.subr.bf16.mxu0 0
      %1323 = vmatpush2.bf16.msra.mxu0 0
      %1324 = vmatprep.subr.bf16.mxu0 0
      %1325 = vmatpush2.bf16.msra.mxu0 0
      %1326 = vmatprep.subr.bf16.mxu0 0
      %1327 = vmatpush2.bf16.msra.mxu0 0
      %1328 = vmatprep.subr.bf16.mxu0 0
      %1329 = vmatpush2.bf16.msra.mxu0 0
      %1330 = vmatprep.subr.bf16.mxu0 0
      %1331 = vmatpush2.bf16.msra.mxu0 0
      %1332 = vmatprep.mubr.bf16.mxu0 0
      %1333 = vmatmul.mubr.bf16.gmra.mxu0 %v1233
      %v1334 = vpop.f32.mrf.mxu0
      %v1335 = vadd.f32 %v979, %v1334
      %v1336 = vpop.f32.mrf.mxu0
      %v1337 = vpop.f32.mrf.mxu0
      %v1338 = vadd.f32 %v982, %v1337
      %v1339 = vpop.f32.mrf.mxu0
      %1340 = vmatprep.mubr.bf16.mxu0 0
      %1341 = vmatmul.mubr.bf16.gmra.mxu0 %v1235
      %v1342 = vpop.f32.mrf.mxu0
      %v1343 = vadd.f32 %v987, %v1342
      %v1344 = vpop.f32.mrf.mxu0
      %v1345 = vpop.f32.mrf.mxu0
      %v1346 = vadd.f32 %v990, %v1345
      %v1347 = vpop.f32.mrf.mxu0
      %1348 = vmatprep.mubr.bf16.mxu0 0
      %1349 = vmatmul.mubr.bf16.gmra.mxu0 %v1237
      %v1350 = vpop.f32.mrf.mxu0
      %v1351 = vadd.f32 %v995, %v1350
      %v1352 = vpop.f32.mrf.mxu0
      %v1353 = vpop.f32.mrf.mxu0
      %v1354 = vadd.f32 %v998, %v1353
      %v1355 = vpop.f32.mrf.mxu0
      %1356 = vmatprep.mubr.bf16.mxu0 0
      %1357 = vmatmul.mubr.bf16.gmra.mxu0 %v1239
      %v1358 = vpop.f32.mrf.mxu0
      %v1359 = vadd.f32 %v1003, %v1358
      %v1360 = vpop.f32.mrf.mxu0
      %v1361 = vpop.f32.mrf.mxu0
      %v1362 = vadd.f32 %v1006, %v1361
      %v1363 = vpop.f32.mrf.mxu0
      %1364 = vmatprep.mubr.bf16.mxu0 0
      %1365 = vmatmul.mubr.bf16.gmra.mxu0 %v1241
      %v1366 = vpop.f32.mrf.mxu0
      %v1367 = vadd.f32 %v1011, %v1366
      %v1368 = vpop.f32.mrf.mxu0
      %v1369 = vpop.f32.mrf.mxu0
      %v1370 = vadd.f32 %v1014, %v1369
      %v1371 = vpop.f32.mrf.mxu0
      %1372 = vmatprep.mubr.bf16.mxu0 0
      %1373 = vmatmul.mubr.bf16.gmra.mxu0 %v1243
      %v1374 = vpop.f32.mrf.mxu0
      %v1375 = vadd.f32 %v1019, %v1374
      %v1376 = vpop.f32.mrf.mxu0
      %v1377 = vpop.f32.mrf.mxu0
      %v1378 = vadd.f32 %v1022, %v1377
      %v1379 = vpop.f32.mrf.mxu0
      %1380 = vmatprep.mubr.bf16.mxu0 0
      %1381 = vmatmul.mubr.bf16.gmra.mxu0 %v1245
      %v1382 = vpop.f32.mrf.mxu0
      %v1383 = vadd.f32 %v1027, %v1382
      %v1384 = vpop.f32.mrf.mxu0
      %v1385 = vpop.f32.mrf.mxu0
      %v1386 = vadd.f32 %v1030, %v1385
      %v1387 = vpop.f32.mrf.mxu0
      %1388 = vmatprep.mubr.bf16.mxu0 0
      %1389 = vmatmul.mubr.bf16.gmra.mxu0 %v1247
      %v1390 = vpop.f32.mrf.mxu0
      %v1391 = vadd.f32 %v1035, %v1390
      %v1392 = vpop.f32.mrf.mxu0
      %v1393 = vpop.f32.mrf.mxu0
      %v1394 = vadd.f32 %v1038, %v1393
      %v1395 = vpop.f32.mrf.mxu0
      %1396 = vmatprep.mubr.bf16.mxu0 0
      %1397 = vmatmul.mubr.bf16.gmra.mxu0 %v1249
      %v1398 = vpop.f32.mrf.mxu0
      %v1399 = vadd.f32 %v1043, %v1398
      %v1400 = vpop.f32.mrf.mxu0
      %v1401 = vpop.f32.mrf.mxu0
      %v1402 = vadd.f32 %v1046, %v1401
      %v1403 = vpop.f32.mrf.mxu0
      %1404 = vmatprep.mubr.bf16.mxu0 0
      %1405 = vmatmul.mubr.bf16.gmra.mxu0 %v1251
      %v1406 = vpop.f32.mrf.mxu0
      %v1407 = vadd.f32 %v1051, %v1406
      %v1408 = vpop.f32.mrf.mxu0
      %v1409 = vpop.f32.mrf.mxu0
      %v1410 = vadd.f32 %v1054, %v1409
      %v1411 = vpop.f32.mrf.mxu0
      %1412 = vmatprep.mubr.bf16.mxu0 0
      %1413 = vmatmul.mubr.bf16.gmra.mxu0 %v1253
      %v1414 = vpop.f32.mrf.mxu0
      %v1415 = vadd.f32 %v1059, %v1414
      %v1416 = vpop.f32.mrf.mxu0
      %v1417 = vpop.f32.mrf.mxu0
      %v1418 = vadd.f32 %v1062, %v1417
      %v1419 = vpop.f32.mrf.mxu0
      %1420 = vmatprep.mubr.bf16.mxu0 0
      %1421 = vmatmul.mubr.bf16.gmra.mxu0 %v1255
      %v1422 = vpop.f32.mrf.mxu0
      %v1423 = vadd.f32 %v1067, %v1422
      %v1424 = vpop.f32.mrf.mxu0
      %v1425 = vpop.f32.mrf.mxu0
      %v1426 = vadd.f32 %v1070, %v1425
      %v1427 = vpop.f32.mrf.mxu0
      %1428 = vmatprep.mubr.bf16.mxu0 0
      %1429 = vmatmul.mubr.bf16.gmra.mxu0 %v1257
      %v1430 = vpop.f32.mrf.mxu0
      %v1431 = vadd.f32 %v1075, %v1430
      %v1432 = vpop.f32.mrf.mxu0
      %v1433 = vpop.f32.mrf.mxu0
      %v1434 = vadd.f32 %v1078, %v1433
      %v1435 = vpop.f32.mrf.mxu0
      %1436 = vmatprep.mubr.bf16.mxu0 0
      %1437 = vmatmul.mubr.bf16.gmra.mxu0 %v1259
      %v1438 = vpop.f32.mrf.mxu0
      %v1439 = vadd.f32 %v1083, %v1438
      %v1440 = vpop.f32.mrf.mxu0
      %v1441 = vpop.f32.mrf.mxu0
      %v1442 = vadd.f32 %v1086, %v1441
      %v1443 = vpop.f32.mrf.mxu0
      %1444 = vmatprep.mubr.bf16.mxu0 0
      %1445 = vmatmul.mubr.bf16.gmra.mxu0 %v1261
      %v1446 = vpop.f32.mrf.mxu0
      %v1447 = vadd.f32 %v1091, %v1446
      %v1448 = vpop.f32.mrf.mxu0
      %v1449 = vpop.f32.mrf.mxu0
      %v1450 = vadd.f32 %v1094, %v1449
      %v1451 = vpop.f32.mrf.mxu0
      %1452 = vmatprep.mubr.bf16.mxu0 0
      %1453 = vmatmul.mubr.bf16.gmra.mxu0 %v1263
      %v1454 = vpop.f32.mrf.mxu0
      %v1455 = vadd.f32 %v1099, %v1454
      %v1456 = vpop.f32.mrf.mxu0
      %v1457 = vpop.f32.mrf.mxu0
      %v1458 = vadd.f32 %v1102, %v1457
      %v1459 = vpop.f32.mrf.mxu0
      %1460 = vmatprep.mubr.bf16.mxu0 0
      %1461 = vmatmul.mubr.bf16.gmra.mxu0 %v1265
      %v1462 = vpop.f32.mrf.mxu0
      %v1463 = vadd.f32 %v1107, %v1462
      %v1464 = vpop.f32.mrf.mxu0
      %v1465 = vpop.f32.mrf.mxu0
      %v1466 = vadd.f32 %v1110, %v1465
      %v1467 = vpop.f32.mrf.mxu0
      %1468 = vmatprep.mubr.bf16.mxu0 0
      %1469 = vmatmul.mubr.bf16.gmra.mxu0 %v1267
      %v1470 = vpop.f32.mrf.mxu0
      %v1471 = vadd.f32 %v1115, %v1470
      %v1472 = vpop.f32.mrf.mxu0
      %v1473 = vpop.f32.mrf.mxu0
      %v1474 = vadd.f32 %v1118, %v1473
      %v1475 = vpop.f32.mrf.mxu0
      %1476 = vmatprep.mubr.bf16.mxu0 0
      %1477 = vmatmul.mubr.bf16.gmra.mxu0 %v1269
      %v1478 = vpop.f32.mrf.mxu0
      %v1479 = vadd.f32 %v1123, %v1478
      %v1480 = vpop.f32.mrf.mxu0
      %v1481 = vpop.f32.mrf.mxu0
      %v1482 = vadd.f32 %v1126, %v1481
      %v1483 = vpop.f32.mrf.mxu0
      %1484 = vmatprep.mubr.bf16.mxu0 0
      %1485 = vmatmul.mubr.bf16.gmra.mxu0 %v1271
      %v1486 = vpop.f32.mrf.mxu0
      %v1487 = vadd.f32 %v1131, %v1486
      %v1488 = vpop.f32.mrf.mxu0
      %v1489 = vpop.f32.mrf.mxu0
      %v1490 = vadd.f32 %v1134, %v1489
      %v1491 = vpop.f32.mrf.mxu0
      %1492 = vmatprep.mubr.bf16.mxu0 0
      %1493 = vmatmul.mubr.bf16.gmra.mxu0 %v1273
      %v1494 = vpop.f32.mrf.mxu0
      %v1495 = vadd.f32 %v1139, %v1494
      %v1496 = vpop.f32.mrf.mxu0
      %v1497 = vpop.f32.mrf.mxu0
      %v1498 = vadd.f32 %v1142, %v1497
      %v1499 = vpop.f32.mrf.mxu0
      %1500 = vmatprep.mubr.bf16.mxu0 0
      %1501 = vmatmul.mubr.bf16.gmra.mxu0 %v1275
      %v1502 = vpop.f32.mrf.mxu0
      %v1503 = vadd.f32 %v1147, %v1502
      %v1504 = vpop.f32.mrf.mxu0
      %v1505 = vpop.f32.mrf.mxu0
      %v1506 = vadd.f32 %v1150, %v1505
      %v1507 = vpop.f32.mrf.mxu0
      %1508 = vmatprep.mubr.bf16.mxu0 0
      %1509 = vmatmul.mubr.bf16.gmra.mxu0 %v1277
      %v1510 = vpop.f32.mrf.mxu0
      %v1511 = vadd.f32 %v1155, %v1510
      %v1512 = vpop.f32.mrf.mxu0
      %v1513 = vpop.f32.mrf.mxu0
      %v1514 = vadd.f32 %v1158, %v1513
      %v1515 = vpop.f32.mrf.mxu0
      %1516 = vmatprep.mubr.bf16.mxu0 0
      %1517 = vmatmul.mubr.bf16.gmra.mxu0 %v1279
      %v1518 = vpop.f32.mrf.mxu0
      %v1519 = vadd.f32 %v1163, %v1518
      %v1520 = vpop.f32.mrf.mxu0
      %v1521 = vpop.f32.mrf.mxu0
      %v1522 = vadd.f32 %v1166, %v1521
      %v1523 = vpop.f32.mrf.mxu0
      %1524 = vmatprep.mubr.bf16.mxu0 0
      %1525 = vmatmul.mubr.bf16.gmra.mxu0 %v1281
      %v1526 = vpop.f32.mrf.mxu0
      %v1527 = vadd.f32 %v1171, %v1526
      %v1528 = vpop.f32.mrf.mxu0
      %v1529 = vpop.f32.mrf.mxu0
      %v1530 = vadd.f32 %v1174, %v1529
      %v1531 = vpop.f32.mrf.mxu0
      %1532 = vmatprep.mubr.bf16.mxu0 0
      %1533 = vmatmul.mubr.bf16.gmra.mxu0 %v1283
      %v1534 = vpop.f32.mrf.mxu0
      %v1535 = vadd.f32 %v1179, %v1534
      %v1536 = vpop.f32.mrf.mxu0
      %v1537 = vpop.f32.mrf.mxu0
      %v1538 = vadd.f32 %v1182, %v1537
      %v1539 = vpop.f32.mrf.mxu0
      %1540 = vmatprep.mubr.bf16.mxu0 0
      %1541 = vmatmul.mubr.bf16.gmra.mxu0 %v1285
      %v1542 = vpop.f32.mrf.mxu0
      %v1543 = vadd.f32 %v1187, %v1542
      %v1544 = vpop.f32.mrf.mxu0
      %v1545 = vpop.f32.mrf.mxu0
      %v1546 = vadd.f32 %v1190, %v1545
      %v1547 = vpop.f32.mrf.mxu0
      %1548 = vmatprep.mubr.bf16.mxu0 0
      %1549 = vmatmul.mubr.bf16.gmra.mxu0 %v1287
      %v1550 = vpop.f32.mrf.mxu0
      %v1551 = vadd.f32 %v1195, %v1550
      %v1552 = vpop.f32.mrf.mxu0
      %v1553 = vpop.f32.mrf.mxu0
      %v1554 = vadd.f32 %v1198, %v1553
      %v1555 = vpop.f32.mrf.mxu0
      %1556 = vmatprep.mubr.bf16.mxu0 0
      %1557 = vmatmul.mubr.bf16.gmra.mxu0 %v1289
      %v1558 = vpop.f32.mrf.mxu0
      %v1559 = vadd.f32 %v1203, %v1558
      %v1560 = vpop.f32.mrf.mxu0
      %v1561 = vpop.f32.mrf.mxu0
      %v1562 = vadd.f32 %v1206, %v1561
      %v1563 = vpop.f32.mrf.mxu0
      %1564 = vmatprep.mubr.bf16.mxu0 0
      %1565 = vmatmul.mubr.bf16.gmra.mxu0 %v1291
      %v1566 = vpop.f32.mrf.mxu0
      %v1567 = vadd.f32 %v1211, %v1566
      %v1568 = vpop.f32.mrf.mxu0
      %v1569 = vpop.f32.mrf.mxu0
      %v1570 = vadd.f32 %v1214, %v1569
      %v1571 = vpop.f32.mrf.mxu0
      %1572 = vmatprep.mubr.bf16.mxu0 0
      %1573 = vmatmul.mubr.bf16.gmra.mxu0 %v1293
      %v1574 = vpop.f32.mrf.mxu0
      %v1575 = vadd.f32 %v1219, %v1574
      %v1576 = vpop.f32.mrf.mxu0
      %v1577 = vpop.f32.mrf.mxu0
      %v1578 = vadd.f32 %v1222, %v1577
      %v1579 = vpop.f32.mrf.mxu0
      %1580 = vmatprep.mubr.bf16.mxu0 0
      %1581 = vmatmul.mubr.bf16.gmra.mxu0 %v1295
      %v1582 = vpop.f32.mrf.mxu0
      %v1583 = vadd.f32 %v1227, %v1582
      %v1584 = vpop.f32.mrf.mxu0
      %v1585 = vpop.f32.mrf.mxu0
      %v1586 = vadd.f32 %v1230, %v1585
      %v1587 = vpop.f32.mrf.mxu0
      %1588 = vdwg.mxu0
      %vm1637 = vcmask 1046528
      %v1638 = vrot.slane %v465, 1
      %v1639 = vrot.slane %v466, 1
      %v1640 = vsel %vm1637, %v1638, %v1639
      %v1641 = vrot.slane %v467, 1
      %v1642 = vsel %vm1637, %v1639, %v1641
      %v1643 = vrot.slane %v468, 1
      %v1644 = vrot.slane %v469, 1
      %v1645 = vsel %vm1637, %v1643, %v1644
      %v1646 = vrot.slane %v470, 1
      %v1647 = vsel %vm1637, %v1644, %v1646
      %v1648 = vrot.slane %v471, 1
      %v1649 = vrot.slane %v472, 1
      %v1650 = vsel %vm1637, %v1648, %v1649
      %v1651 = vrot.slane %v473, 1
      %v1652 = vsel %vm1637, %v1649, %v1651
      %v1653 = vrot.slane %v474, 1
      %v1654 = vrot.slane %v475, 1
      %v1655 = vsel %vm1637, %v1653, %v1654
      %v1656 = vrot.slane %v476, 1
      %v1657 = vsel %vm1637, %v1654, %v1656
      %v1658 = vrot.slane %v477, 1
      %v1659 = vrot.slane %v478, 1
      %v1660 = vsel %vm1637, %v1658, %v1659
      %v1661 = vrot.slane %v479, 1
      %v1662 = vsel %vm1637, %v1659, %v1661
      %v1663 = vrot.slane %v480, 1
      %v1664 = vrot.slane %v481, 1
      %v1665 = vsel %vm1637, %v1663, %v1664
      %v1666 = vrot.slane %v482, 1
      %v1667 = vsel %vm1637, %v1664, %v1666
      %v1668 = vrot.slane %v483, 1
      %v1669 = vrot.slane %v484, 1
      %v1670 = vsel %vm1637, %v1668, %v1669
      %v1671 = vrot.slane %v485, 1
      %v1672 = vsel %vm1637, %v1669, %v1671
      %v1673 = vrot.slane %v486, 1
      %v1674 = vrot.slane %v487, 1
      %v1675 = vsel %vm1637, %v1673, %v1674
      %v1676 = vrot.slane %v488, 1
      %v1677 = vsel %vm1637, %v1674, %v1676
      %v1678 = vrot.slane %v489, 1
      %v1679 = vrot.slane %v490, 1
      %v1680 = vsel %vm1637, %v1678, %v1679
      %v1681 = vrot.slane %v491, 1
      %v1682 = vsel %vm1637, %v1679, %v1681
      %v1683 = vrot.slane %v492, 1
      %v1684 = vrot.slane %v493, 1
      %v1685 = vsel %vm1637, %v1683, %v1684
      %v1686 = vrot.slane %v494, 1
      %v1687 = vsel %vm1637, %v1684, %v1686
      %v1688 = vrot.slane %v495, 1
      %v1689 = vrot.slane %v496, 1
      %v1690 = vsel %vm1637, %v1688, %v1689
      %v1691 = vrot.slane %v497, 1
      %v1692 = vsel %vm1637, %v1689, %v1691
      %v1693 = vrot.slane %v498, 1
      %v1694 = vrot.slane %v499, 1
      %v1695 = vsel %vm1637, %v1693, %v1694
      %v1696 = vrot.slane %v500, 1
      %v1697 = vsel %vm1637, %v1694, %v1696
      %v1698 = vrot.slane %v501, 1
      %v1699 = vrot.slane %v502, 1
      %v1700 = vsel %vm1637, %v1698, %v1699
      %v1701 = vrot.slane %v503, 1
      %v1702 = vsel %vm1637, %v1699, %v1701
      %v1703 = vrot.slane %v504, 1
      %v1704 = vrot.slane %v505, 1
      %v1705 = vsel %vm1637, %v1703, %v1704
      %v1706 = vrot.slane %v506, 1
      %v1707 = vsel %vm1637, %v1704, %v1706
      %v1708 = vrot.slane %v507, 1
      %v1709 = vrot.slane %v508, 1
      %v1710 = vsel %vm1637, %v1708, %v1709
      %v1711 = vrot.slane %v509, 1
      %v1712 = vsel %vm1637, %v1709, %v1711
      %v1713 = vrot.slane %v510, 1
      %v1714 = vrot.slane %v511, 1
      %v1715 = vsel %vm1637, %v1713, %v1714
      %v1716 = vrot.slane %v512, 1
      %v1717 = vsel %vm1637, %v1714, %v1716
      %s1718 = scalar_lea.vmem %s2, 8
      %v1719 = vld [vmem:[%s1718] sm:$0xf]
      %v1721 = vsel %vm843, %v1640, 0
      %v1724 = vsel %vm843, %v1642, 0
      %v1727 = vsel %vm843, %v1645, 0
      %v1730 = vsel %vm843, %v1647, 0
      %v1733 = vsel %vm843, %v1650, 0
      %v1736 = vsel %vm843, %v1652, 0
      %v1739 = vsel %vm843, %v1655, 0
      %v1742 = vsel %vm843, %v1657, 0
      %v1745 = vsel %vm843, %v1660, 0
      %v1748 = vsel %vm843, %v1662, 0
      %v1751 = vsel %vm843, %v1665, 0
      %v1754 = vsel %vm843, %v1667, 0
      %v1757 = vsel %vm843, %v1670, 0
      %v1760 = vsel %vm843, %v1672, 0
      %v1763 = vsel %vm843, %v1675, 0
      %v1766 = vsel %vm843, %v1677, 0
      %v1769 = vsel %vm843, %v1680, 0
      %v1772 = vsel %vm843, %v1682, 0
      %v1775 = vsel %vm843, %v1685, 0
      %v1778 = vsel %vm843, %v1687, 0
      %v1781 = vsel %vm843, %v1690, 0
      %v1784 = vsel %vm843, %v1692, 0
      %v1787 = vsel %vm843, %v1695, 0
      %v1790 = vsel %vm843, %v1697, 0
      %v1793 = vsel %vm843, %v1700, 0
      %v1796 = vsel %vm843, %v1702, 0
      %v1799 = vsel %vm843, %v1705, 0
      %v1802 = vsel %vm843, %v1707, 0
      %v1805 = vsel %vm843, %v1710, 0
      %v1808 = vsel %vm843, %v1712, 0
      %v1811 = vsel %vm843, %v1715, 0
      %v1814 = vsel %vm843, %v1717, 0
      %v1817 = vsel %vm940, %v1719, 0
      %1819 = vmatprep.subr.bf16.mxu0 0
      %1820 = vmatpush1.bf16.msra.mxu0 0
      %1821 = vmatprep.subr.bf16.mxu0 0
      %1822 = vmatpush1.bf16.msra.mxu0 0
      %1823 = vmatprep.subr.bf16.mxu0 0
      %1824 = vmatpush1.bf16.msra.mxu0 0
      %1825 = vmatprep.subr.bf16.mxu0 0
      %1826 = vmatpush1.bf16.msra.mxu0 0
      %1827 = vmatprep.subr.bf16.mxu0 0
      %1828 = vmatpush1.bf16.msra.mxu0 0
      %1829 = vmatprep.subr.bf16.mxu0 0
      %1830 = vmatpush1.bf16.msra.mxu0 0
      %1831 = vmatprep.subr.bf16.mxu0 0
      %1832 = vmatpush1.bf16.msra.mxu0 0
      %1833 = vmatprep.subr.bf16.mxu0 0
      %1834 = vmatpush1.bf16.msra.mxu0 %v1817
      %1835 = vmatprep.subr.bf16.mxu0 0
      %1836 = vmatpush2.bf16.msra.mxu0 0
      %1837 = vmatprep.subr.bf16.mxu0 0
      %1838 = vmatpush2.bf16.msra.mxu0 0
      %1839 = vmatprep.subr.bf16.mxu0 0
      %1840 = vmatpush2.bf16.msra.mxu0 0
      %1841 = vmatprep.subr.bf16.mxu0 0
      %1842 = vmatpush2.bf16.msra.mxu0 0
      %1843 = vmatprep.subr.bf16.mxu0 0
      %1844 = vmatpush2.bf16.msra.mxu0 0
      %1845 = vmatprep.subr.bf16.mxu0 0
      %1846 = vmatpush2.bf16.msra.mxu0 0
      %1847 = vmatprep.subr.bf16.mxu0 0
      %1848 = vmatpush2.bf16.msra.mxu0 0
      %1849 = vmatprep.subr.bf16.mxu0 0
      %1850 = vmatpush2.bf16.msra.mxu0 0
      %1851 = vmatprep.mubr.bf16.mxu0 0
      %1852 = vmatmul.mubr.bf16.gmra.mxu0 %v1721
      %v1853 = vpop.f32.mrf.mxu0
      %v1854 = vadd.f32 0.0, %v1853
      %v1855 = vpop.f32.mrf.mxu0
      %v1856 = vpop.f32.mrf.mxu0
      %v1857 = vadd.f32 0.0, %v1856
      %v1858 = vpop.f32.mrf.mxu0
      %1859 = vmatprep.mubr.bf16.mxu0 0
      %1860 = vmatmul.mubr.bf16.gmra.mxu0 %v1724
      %v1861 = vpop.f32.mrf.mxu0
      %v1862 = vadd.f32 0.0, %v1861
      %v1863 = vpop.f32.mrf.mxu0
      %v1864 = vpop.f32.mrf.mxu0
      %v1865 = vadd.f32 0.0, %v1864
      %v1866 = vpop.f32.mrf.mxu0
      %1867 = vmatprep.mubr.bf16.mxu0 0
      %1868 = vmatmul.mubr.bf16.gmra.mxu0 %v1727
      %v1869 = vpop.f32.mrf.mxu0
      %v1870 = vadd.f32 0.0, %v1869
      %v1871 = vpop.f32.mrf.mxu0
      %v1872 = vpop.f32.mrf.mxu0
      %v1873 = vadd.f32 0.0, %v1872
      %v1874 = vpop.f32.mrf.mxu0
      %1875 = vmatprep.mubr.bf16.mxu0 0
      %1876 = vmatmul.mubr.bf16.gmra.mxu0 %v1730
      %v1877 = vpop.f32.mrf.mxu0
      %v1878 = vadd.f32 0.0, %v1877
      %v1879 = vpop.f32.mrf.mxu0
      %v1880 = vpop.f32.mrf.mxu0
      %v1881 = vadd.f32 0.0, %v1880
      %v1882 = vpop.f32.mrf.mxu0
      %1883 = vmatprep.mubr.bf16.mxu0 0
      %1884 = vmatmul.mubr.bf16.gmra.mxu0 %v1733
      %v1885 = vpop.f32.mrf.mxu0
      %v1886 = vadd.f32 0.0, %v1885
      %v1887 = vpop.f32.mrf.mxu0
      %v1888 = vpop.f32.mrf.mxu0
      %v1889 = vadd.f32 0.0, %v1888
      %v1890 = vpop.f32.mrf.mxu0
      %1891 = vmatprep.mubr.bf16.mxu0 0
      %1892 = vmatmul.mubr.bf16.gmra.mxu0 %v1736
      %v1893 = vpop.f32.mrf.mxu0
      %v1894 = vadd.f32 0.0, %v1893
      %v1895 = vpop.f32.mrf.mxu0
      %v1896 = vpop.f32.mrf.mxu0
      %v1897 = vadd.f32 0.0, %v1896
      %v1898 = vpop.f32.mrf.mxu0
      %1899 = vmatprep.mubr.bf16.mxu0 0
      %1900 = vmatmul.mubr.bf16.gmra.mxu0 %v1739
      %v1901 = vpop.f32.mrf.mxu0
      %v1902 = vadd.f32 0.0, %v1901
      %v1903 = vpop.f32.mrf.mxu0
      %v1904 = vpop.f32.mrf.mxu0
      %v1905 = vadd.f32 0.0, %v1904
      %v1906 = vpop.f32.mrf.mxu0
      %1907 = vmatprep.mubr.bf16.mxu0 0
      %1908 = vmatmul.mubr.bf16.gmra.mxu0 %v1742
      %v1909 = vpop.f32.mrf.mxu0
      %v1910 = vadd.f32 0.0, %v1909
      %v1911 = vpop.f32.mrf.mxu0
      %v1912 = vpop.f32.mrf.mxu0
      %v1913 = vadd.f32 0.0, %v1912
      %v1914 = vpop.f32.mrf.mxu0
      %1915 = vmatprep.mubr.bf16.mxu0 0
      %1916 = vmatmul.mubr.bf16.gmra.mxu0 %v1745
      %v1917 = vpop.f32.mrf.mxu0
      %v1918 = vadd.f32 0.0, %v1917
      %v1919 = vpop.f32.mrf.mxu0
      %v1920 = vpop.f32.mrf.mxu0
      %v1921 = vadd.f32 0.0, %v1920
      %v1922 = vpop.f32.mrf.mxu0
      %1923 = vmatprep.mubr.bf16.mxu0 0
      %1924 = vmatmul.mubr.bf16.gmra.mxu0 %v1748
      %v1925 = vpop.f32.mrf.mxu0
      %v1926 = vadd.f32 0.0, %v1925
      %v1927 = vpop.f32.mrf.mxu0
      %v1928 = vpop.f32.mrf.mxu0
      %v1929 = vadd.f32 0.0, %v1928
      %v1930 = vpop.f32.mrf.mxu0
      %1931 = vmatprep.mubr.bf16.mxu0 0
      %1932 = vmatmul.mubr.bf16.gmra.mxu0 %v1751
      %v1933 = vpop.f32.mrf.mxu0
      %v1934 = vadd.f32 0.0, %v1933
      %v1935 = vpop.f32.mrf.mxu0
      %v1936 = vpop.f32.mrf.mxu0
      %v1937 = vadd.f32 0.0, %v1936
      %v1938 = vpop.f32.mrf.mxu0
      %1939 = vmatprep.mubr.bf16.mxu0 0
      %1940 = vmatmul.mubr.bf16.gmra.mxu0 %v1754
      %v1941 = vpop.f32.mrf.mxu0
      %v1942 = vadd.f32 0.0, %v1941
      %v1943 = vpop.f32.mrf.mxu0
      %v1944 = vpop.f32.mrf.mxu0
      %v1945 = vadd.f32 0.0, %v1944
      %v1946 = vpop.f32.mrf.mxu0
      %1947 = vmatprep.mubr.bf16.mxu0 0
      %1948 = vmatmul.mubr.bf16.gmra.mxu0 %v1757
      %v1949 = vpop.f32.mrf.mxu0
      %v1950 = vadd.f32 0.0, %v1949
      %v1951 = vpop.f32.mrf.mxu0
      %v1952 = vpop.f32.mrf.mxu0
      %v1953 = vadd.f32 0.0, %v1952
      %v1954 = vpop.f32.mrf.mxu0
      %1955 = vmatprep.mubr.bf16.mxu0 0
      %1956 = vmatmul.mubr.bf16.gmra.mxu0 %v1760
      %v1957 = vpop.f32.mrf.mxu0
      %v1958 = vadd.f32 0.0, %v1957
      %v1959 = vpop.f32.mrf.mxu0
      %v1960 = vpop.f32.mrf.mxu0
      %v1961 = vadd.f32 0.0, %v1960
      %v1962 = vpop.f32.mrf.mxu0
      %1963 = vmatprep.mubr.bf16.mxu0 0
      %1964 = vmatmul.mubr.bf16.gmra.mxu0 %v1763
      %v1965 = vpop.f32.mrf.mxu0
      %v1966 = vadd.f32 0.0, %v1965
      %v1967 = vpop.f32.mrf.mxu0
      %v1968 = vpop.f32.mrf.mxu0
      %v1969 = vadd.f32 0.0, %v1968
      %v1970 = vpop.f32.mrf.mxu0
      %1971 = vmatprep.mubr.bf16.mxu0 0
      %1972 = vmatmul.mubr.bf16.gmra.mxu0 %v1766
      %v1973 = vpop.f32.mrf.mxu0
      %v1974 = vadd.f32 0.0, %v1973
      %v1975 = vpop.f32.mrf.mxu0
      %v1976 = vpop.f32.mrf.mxu0
      %v1977 = vadd.f32 0.0, %v1976
      %v1978 = vpop.f32.mrf.mxu0
      %1979 = vmatprep.mubr.bf16.mxu0 0
      %1980 = vmatmul.mubr.bf16.gmra.mxu0 %v1769
      %v1981 = vpop.f32.mrf.mxu0
      %v1982 = vadd.f32 0.0, %v1981
      %v1983 = vpop.f32.mrf.mxu0
      %v1984 = vpop.f32.mrf.mxu0
      %v1985 = vadd.f32 0.0, %v1984
      %v1986 = vpop.f32.mrf.mxu0
      %1987 = vmatprep.mubr.bf16.mxu0 0
      %1988 = vmatmul.mubr.bf16.gmra.mxu0 %v1772
      %v1989 = vpop.f32.mrf.mxu0
      %v1990 = vadd.f32 0.0, %v1989
      %v1991 = vpop.f32.mrf.mxu0
      %v1992 = vpop.f32.mrf.mxu0
      %v1993 = vadd.f32 0.0, %v1992
      %v1994 = vpop.f32.mrf.mxu0
      %1995 = vmatprep.mubr.bf16.mxu0 0
      %1996 = vmatmul.mubr.bf16.gmra.mxu0 %v1775
      %v1997 = vpop.f32.mrf.mxu0
      %v1998 = vadd.f32 0.0, %v1997
      %v1999 = vpop.f32.mrf.mxu0
      %v2000 = vpop.f32.mrf.mxu0
      %v2001 = vadd.f32 0.0, %v2000
      %v2002 = vpop.f32.mrf.mxu0
      %2003 = vmatprep.mubr.bf16.mxu0 0
      %2004 = vmatmul.mubr.bf16.gmra.mxu0 %v1778
      %v2005 = vpop.f32.mrf.mxu0
      %v2006 = vadd.f32 0.0, %v2005
      %v2007 = vpop.f32.mrf.mxu0
      %v2008 = vpop.f32.mrf.mxu0
      %v2009 = vadd.f32 0.0, %v2008
      %v2010 = vpop.f32.mrf.mxu0
      %2011 = vmatprep.mubr.bf16.mxu0 0
      %2012 = vmatmul.mubr.bf16.gmra.mxu0 %v1781
      %v2013 = vpop.f32.mrf.mxu0
      %v2014 = vadd.f32 0.0, %v2013
      %v2015 = vpop.f32.mrf.mxu0
      %v2016 = vpop.f32.mrf.mxu0
      %v2017 = vadd.f32 0.0, %v2016
      %v2018 = vpop.f32.mrf.mxu0
      %2019 = vmatprep.mubr.bf16.mxu0 0
      %2020 = vmatmul.mubr.bf16.gmra.mxu0 %v1784
      %v2021 = vpop.f32.mrf.mxu0
      %v2022 = vadd.f32 0.0, %v2021
      %v2023 = vpop.f32.mrf.mxu0
      %v2024 = vpop.f32.mrf.mxu0
      %v2025 = vadd.f32 0.0, %v2024
      %v2026 = vpop.f32.mrf.mxu0
      %2027 = vmatprep.mubr.bf16.mxu0 0
      %2028 = vmatmul.mubr.bf16.gmra.mxu0 %v1787
      %v2029 = vpop.f32.mrf.mxu0
      %v2030 = vadd.f32 0.0, %v2029
      %v2031 = vpop.f32.mrf.mxu0
      %v2032 = vpop.f32.mrf.mxu0
      %v2033 = vadd.f32 0.0, %v2032
      %v2034 = vpop.f32.mrf.mxu0
      %2035 = vmatprep.mubr.bf16.mxu0 0
      %2036 = vmatmul.mubr.bf16.gmra.mxu0 %v1790
      %v2037 = vpop.f32.mrf.mxu0
      %v2038 = vadd.f32 0.0, %v2037
      %v2039 = vpop.f32.mrf.mxu0
      %v2040 = vpop.f32.mrf.mxu0
      %v2041 = vadd.f32 0.0, %v2040
      %v2042 = vpop.f32.mrf.mxu0
      %2043 = vmatprep.mubr.bf16.mxu0 0
      %2044 = vmatmul.mubr.bf16.gmra.mxu0 %v1793
      %v2045 = vpop.f32.mrf.mxu0
      %v2046 = vadd.f32 0.0, %v2045
      %v2047 = vpop.f32.mrf.mxu0
      %v2048 = vpop.f32.mrf.mxu0
      %v2049 = vadd.f32 0.0, %v2048
      %v2050 = vpop.f32.mrf.mxu0
      %2051 = vmatprep.mubr.bf16.mxu0 0
      %2052 = vmatmul.mubr.bf16.gmra.mxu0 %v1796
      %v2053 = vpop.f32.mrf.mxu0
      %v2054 = vadd.f32 0.0, %v2053
      %v2055 = vpop.f32.mrf.mxu0
      %v2056 = vpop.f32.mrf.mxu0
      %v2057 = vadd.f32 0.0, %v2056
      %v2058 = vpop.f32.mrf.mxu0
      %2059 = vmatprep.mubr.bf16.mxu0 0
      %2060 = vmatmul.mubr.bf16.gmra.mxu0 %v1799
      %v2061 = vpop.f32.mrf.mxu0
      %v2062 = vadd.f32 0.0, %v2061
      %v2063 = vpop.f32.mrf.mxu0
      %v2064 = vpop.f32.mrf.mxu0
      %v2065 = vadd.f32 0.0, %v2064
      %v2066 = vpop.f32.mrf.mxu0
      %2067 = vmatprep.mubr.bf16.mxu0 0
      %2068 = vmatmul.mubr.bf16.gmra.mxu0 %v1802
      %v2069 = vpop.f32.mrf.mxu0
      %v2070 = vadd.f32 0.0, %v2069
      %v2071 = vpop.f32.mrf.mxu0
      %v2072 = vpop.f32.mrf.mxu0
      %v2073 = vadd.f32 0.0, %v2072
      %v2074 = vpop.f32.mrf.mxu0
      %2075 = vmatprep.mubr.bf16.mxu0 0
      %2076 = vmatmul.mubr.bf16.gmra.mxu0 %v1805
      %v2077 = vpop.f32.mrf.mxu0
      %v2078 = vadd.f32 0.0, %v2077
      %v2079 = vpop.f32.mrf.mxu0
      %v2080 = vpop.f32.mrf.mxu0
      %v2081 = vadd.f32 0.0, %v2080
      %v2082 = vpop.f32.mrf.mxu0
      %2083 = vmatprep.mubr.bf16.mxu0 0
      %2084 = vmatmul.mubr.bf16.gmra.mxu0 %v1808
      %v2085 = vpop.f32.mrf.mxu0
      %v2086 = vadd.f32 0.0, %v2085
      %v2087 = vpop.f32.mrf.mxu0
      %v2088 = vpop.f32.mrf.mxu0
      %v2089 = vadd.f32 0.0, %v2088
      %v2090 = vpop.f32.mrf.mxu0
      %2091 = vmatprep.mubr.bf16.mxu0 0
      %2092 = vmatmul.mubr.bf16.gmra.mxu0 %v1811
      %v2093 = vpop.f32.mrf.mxu0
      %v2094 = vadd.f32 0.0, %v2093
      %v2095 = vpop.f32.mrf.mxu0
      %v2096 = vpop.f32.mrf.mxu0
      %v2097 = vadd.f32 0.0, %v2096
      %v2098 = vpop.f32.mrf.mxu0
      %2099 = vmatprep.mubr.bf16.mxu0 0
      %2100 = vmatmul.mubr.bf16.gmra.mxu0 %v1814
      %v2101 = vpop.f32.mrf.mxu0
      %v2102 = vadd.f32 0.0, %v2101
      %v2103 = vpop.f32.mrf.mxu0
      %v2104 = vpop.f32.mrf.mxu0
      %v2105 = vadd.f32 0.0, %v2104
      %v2106 = vpop.f32.mrf.mxu0
      %2107 = vdwg.mxu0
      %v2108 = vadd.f32 %v1335, %v1854
      %v2109 = vadd.f32 %v1338, %v1857
      %v2110 = vadd.f32 %v1343, %v1862
      %v2111 = vadd.f32 %v1346, %v1865
      %v2112 = vadd.f32 %v1351, %v1870
      %v2113 = vadd.f32 %v1354, %v1873
      %v2114 = vadd.f32 %v1359, %v1878
      %v2115 = vadd.f32 %v1362, %v1881
      %v2116 = vadd.f32 %v1367, %v1886
      %v2117 = vadd.f32 %v1370, %v1889
      %v2118 = vadd.f32 %v1375, %v1894
      %v2119 = vadd.f32 %v1378, %v1897
      %v2120 = vadd.f32 %v1383, %v1902
      %v2121 = vadd.f32 %v1386, %v1905
      %v2122 = vadd.f32 %v1391, %v1910
      %v2123 = vadd.f32 %v1394, %v1913
      %v2124 = vadd.f32 %v1399, %v1918
      %v2125 = vadd.f32 %v1402, %v1921
      %v2126 = vadd.f32 %v1407, %v1926
      %v2127 = vadd.f32 %v1410, %v1929
      %v2128 = vadd.f32 %v1415, %v1934
      %v2129 = vadd.f32 %v1418, %v1937
      %v2130 = vadd.f32 %v1423, %v1942
      %v2131 = vadd.f32 %v1426, %v1945
      %v2132 = vadd.f32 %v1431, %v1950
      %v2133 = vadd.f32 %v1434, %v1953
      %v2134 = vadd.f32 %v1439, %v1958
      %v2135 = vadd.f32 %v1442, %v1961
      %v2136 = vadd.f32 %v1447, %v1966
      %v2137 = vadd.f32 %v1450, %v1969
      %v2138 = vadd.f32 %v1455, %v1974
      %v2139 = vadd.f32 %v1458, %v1977
      %v2140 = vadd.f32 %v1463, %v1982
      %v2141 = vadd.f32 %v1466, %v1985
      %v2142 = vadd.f32 %v1471, %v1990
      %v2143 = vadd.f32 %v1474, %v1993
      %v2144 = vadd.f32 %v1479, %v1998
      %v2145 = vadd.f32 %v1482, %v2001
      %v2146 = vadd.f32 %v1487, %v2006
      %v2147 = vadd.f32 %v1490, %v2009
      %v2148 = vadd.f32 %v1495, %v2014
      %v2149 = vadd.f32 %v1498, %v2017
      %v2150 = vadd.f32 %v1503, %v2022
      %v2151 = vadd.f32 %v1506, %v2025
      %v2152 = vadd.f32 %v1511, %v2030
      %v2153 = vadd.f32 %v1514, %v2033
      %v2154 = vadd.f32 %v1519, %v2038
      %v2155 = vadd.f32 %v1522, %v2041
      %v2156 = vadd.f32 %v1527, %v2046
      %v2157 = vadd.f32 %v1530, %v2049
      %v2158 = vadd.f32 %v1535, %v2054
      %v2159 = vadd.f32 %v1538, %v2057
      %v2160 = vadd.f32 %v1543, %v2062
      %v2161 = vadd.f32 %v1546, %v2065
      %v2162 = vadd.f32 %v1551, %v2070
      %v2163 = vadd.f32 %v1554, %v2073
      %v2164 = vadd.f32 %v1559, %v2078
      %v2165 = vadd.f32 %v1562, %v2081
      %v2166 = vadd.f32 %v1567, %v2086
      %v2167 = vadd.f32 %v1570, %v2089
      %v2168 = vadd.f32 %v1575, %v2094
      %v2169 = vadd.f32 %v1578, %v2097
      %v2170 = vadd.f32 %v1583, %v2102
      %v2171 = vadd.f32 %v1586, %v2105
      %s2172 = scalar_lea.vmem %s2, 12
      %v2173 = vld [vmem:[%s2172] sm:$0xf]
      %v2175 = vsel %vm843, %v513, 0
      %v2178 = vsel %vm843, %v514, 0
      %v2181 = vsel %vm940, %v2173, 0
      %2183 = vmatprep.subr.bf16.mxu0 0
      %2184 = vmatpush1.bf16.msra.mxu0 0
      %2185 = vmatprep.subr.bf16.mxu0 0
      %2186 = vmatpush1.bf16.msra.mxu0 0
      %2187 = vmatprep.subr.bf16.mxu0 0
      %2188 = vmatpush1.bf16.msra.mxu0 0
      %2189 = vmatprep.subr.bf16.mxu0 0
      %2190 = vmatpush1.bf16.msra.mxu0 0
      %2191 = vmatprep.subr.bf16.mxu0 0
      %2192 = vmatpush1.bf16.msra.mxu0 0
      %2193 = vmatprep.subr.bf16.mxu0 0
      %2194 = vmatpush1.bf16.msra.mxu0 0
      %2195 = vmatprep.subr.bf16.mxu0 0
      %2196 = vmatpush1.bf16.msra.mxu0 0
      %2197 = vmatprep.subr.bf16.mxu0 0
      %2198 = vmatpush1.bf16.msra.mxu0 %v2181
      %2199 = vmatprep.subr.bf16.mxu0 0
      %2200 = vmatpush2.bf16.msra.mxu0 0
      %2201 = vmatprep.subr.bf16.mxu0 0
      %2202 = vmatpush2.bf16.msra.mxu0 0
      %2203 = vmatprep.subr.bf16.mxu0 0
      %2204 = vmatpush2.bf16.msra.mxu0 0
      %2205 = vmatprep.subr.bf16.mxu0 0
      %2206 = vmatpush2.bf16.msra.mxu0 0
      %2207 = vmatprep.subr.bf16.mxu0 0
      %2208 = vmatpush2.bf16.msra.mxu0 0
      %2209 = vmatprep.subr.bf16.mxu0 0
      %2210 = vmatpush2.bf16.msra.mxu0 0
      %2211 = vmatprep.subr.bf16.mxu0 0
      %2212 = vmatpush2.bf16.msra.mxu0 0
      %2213 = vmatprep.subr.bf16.mxu0 0
      %2214 = vmatpush2.bf16.msra.mxu0 0
      %2215 = vmatprep.mubr.bf16.mxu0 0
      %2216 = vmatmul.mubr.bf16.gmra.mxu0 %v1237
      %v2217 = vpop.f32.mrf.mxu0
      %v2218 = vadd.f32 0.0, %v2217
      %v2219 = vpop.f32.mrf.mxu0
      %v2220 = vpop.f32.mrf.mxu0
      %v2221 = vadd.f32 0.0, %v2220
      %v2222 = vpop.f32.mrf.mxu0
      %2223 = vmatprep.mubr.bf16.mxu0 0
      %2224 = vmatmul.mubr.bf16.gmra.mxu0 %v1239
      %v2225 = vpop.f32.mrf.mxu0
      %v2226 = vadd.f32 0.0, %v2225
      %v2227 = vpop.f32.mrf.mxu0
      %v2228 = vpop.f32.mrf.mxu0
      %v2229 = vadd.f32 0.0, %v2228
      %v2230 = vpop.f32.mrf.mxu0
      %2231 = vmatprep.mubr.bf16.mxu0 0
      %2232 = vmatmul.mubr.bf16.gmra.mxu0 %v1241
      %v2233 = vpop.f32.mrf.mxu0
      %v2234 = vadd.f32 0.0, %v2233
      %v2235 = vpop.f32.mrf.mxu0
      %v2236 = vpop.f32.mrf.mxu0
      %v2237 = vadd.f32 0.0, %v2236
      %v2238 = vpop.f32.mrf.mxu0
      %2239 = vmatprep.mubr.bf16.mxu0 0
      %2240 = vmatmul.mubr.bf16.gmra.mxu0 %v1243
      %v2241 = vpop.f32.mrf.mxu0
      %v2242 = vadd.f32 0.0, %v2241
      %v2243 = vpop.f32.mrf.mxu0
      %v2244 = vpop.f32.mrf.mxu0
      %v2245 = vadd.f32 0.0, %v2244
      %v2246 = vpop.f32.mrf.mxu0
      %2247 = vmatprep.mubr.bf16.mxu0 0
      %2248 = vmatmul.mubr.bf16.gmra.mxu0 %v1245
      %v2249 = vpop.f32.mrf.mxu0
      %v2250 = vadd.f32 0.0, %v2249
      %v2251 = vpop.f32.mrf.mxu0
      %v2252 = vpop.f32.mrf.mxu0
      %v2253 = vadd.f32 0.0, %v2252
      %v2254 = vpop.f32.mrf.mxu0
      %2255 = vmatprep.mubr.bf16.mxu0 0
      %2256 = vmatmul.mubr.bf16.gmra.mxu0 %v1247
      %v2257 = vpop.f32.mrf.mxu0
      %v2258 = vadd.f32 0.0, %v2257
      %v2259 = vpop.f32.mrf.mxu0
      %v2260 = vpop.f32.mrf.mxu0
      %v2261 = vadd.f32 0.0, %v2260
      %v2262 = vpop.f32.mrf.mxu0
      %2263 = vmatprep.mubr.bf16.mxu0 0
      %2264 = vmatmul.mubr.bf16.gmra.mxu0 %v1249
      %v2265 = vpop.f32.mrf.mxu0
      %v2266 = vadd.f32 0.0, %v2265
      %v2267 = vpop.f32.mrf.mxu0
      %v2268 = vpop.f32.mrf.mxu0
      %v2269 = vadd.f32 0.0, %v2268
      %v2270 = vpop.f32.mrf.mxu0
      %2271 = vmatprep.mubr.bf16.mxu0 0
      %2272 = vmatmul.mubr.bf16.gmra.mxu0 %v1251
      %v2273 = vpop.f32.mrf.mxu0
      %v2274 = vadd.f32 0.0, %v2273
      %v2275 = vpop.f32.mrf.mxu0
      %v2276 = vpop.f32.mrf.mxu0
      %v2277 = vadd.f32 0.0, %v2276
      %v2278 = vpop.f32.mrf.mxu0
      %2279 = vmatprep.mubr.bf16.mxu0 0
      %2280 = vmatmul.mubr.bf16.gmra.mxu0 %v1253
      %v2281 = vpop.f32.mrf.mxu0
      %v2282 = vadd.f32 0.0, %v2281
      %v2283 = vpop.f32.mrf.mxu0
      %v2284 = vpop.f32.mrf.mxu0
      %v2285 = vadd.f32 0.0, %v2284
      %v2286 = vpop.f32.mrf.mxu0
      %2287 = vmatprep.mubr.bf16.mxu0 0
      %2288 = vmatmul.mubr.bf16.gmra.mxu0 %v1255
      %v2289 = vpop.f32.mrf.mxu0
      %v2290 = vadd.f32 0.0, %v2289
      %v2291 = vpop.f32.mrf.mxu0
      %v2292 = vpop.f32.mrf.mxu0
      %v2293 = vadd.f32 0.0, %v2292
      %v2294 = vpop.f32.mrf.mxu0
      %2295 = vmatprep.mubr.bf16.mxu0 0
      %2296 = vmatmul.mubr.bf16.gmra.mxu0 %v1257
      %v2297 = vpop.f32.mrf.mxu0
      %v2298 = vadd.f32 0.0, %v2297
      %v2299 = vpop.f32.mrf.mxu0
      %v2300 = vpop.f32.mrf.mxu0
      %v2301 = vadd.f32 0.0, %v2300
      %v2302 = vpop.f32.mrf.mxu0
      %2303 = vmatprep.mubr.bf16.mxu0 0
      %2304 = vmatmul.mubr.bf16.gmra.mxu0 %v1259
      %v2305 = vpop.f32.mrf.mxu0
      %v2306 = vadd.f32 0.0, %v2305
      %v2307 = vpop.f32.mrf.mxu0
      %v2308 = vpop.f32.mrf.mxu0
      %v2309 = vadd.f32 0.0, %v2308
      %v2310 = vpop.f32.mrf.mxu0
      %2311 = vmatprep.mubr.bf16.mxu0 0
      %2312 = vmatmul.mubr.bf16.gmra.mxu0 %v1261
      %v2313 = vpop.f32.mrf.mxu0
      %v2314 = vadd.f32 0.0, %v2313
      %v2315 = vpop.f32.mrf.mxu0
      %v2316 = vpop.f32.mrf.mxu0
      %v2317 = vadd.f32 0.0, %v2316
      %v2318 = vpop.f32.mrf.mxu0
      %2319 = vmatprep.mubr.bf16.mxu0 0
      %2320 = vmatmul.mubr.bf16.gmra.mxu0 %v1263
      %v2321 = vpop.f32.mrf.mxu0
      %v2322 = vadd.f32 0.0, %v2321
      %v2323 = vpop.f32.mrf.mxu0
      %v2324 = vpop.f32.mrf.mxu0
      %v2325 = vadd.f32 0.0, %v2324
      %v2326 = vpop.f32.mrf.mxu0
      %2327 = vmatprep.mubr.bf16.mxu0 0
      %2328 = vmatmul.mubr.bf16.gmra.mxu0 %v1265
      %v2329 = vpop.f32.mrf.mxu0
      %v2330 = vadd.f32 0.0, %v2329
      %v2331 = vpop.f32.mrf.mxu0
      %v2332 = vpop.f32.mrf.mxu0
      %v2333 = vadd.f32 0.0, %v2332
      %v2334 = vpop.f32.mrf.mxu0
      %2335 = vmatprep.mubr.bf16.mxu0 0
      %2336 = vmatmul.mubr.bf16.gmra.mxu0 %v1267
      %v2337 = vpop.f32.mrf.mxu0
      %v2338 = vadd.f32 0.0, %v2337
      %v2339 = vpop.f32.mrf.mxu0
      %v2340 = vpop.f32.mrf.mxu0
      %v2341 = vadd.f32 0.0, %v2340
      %v2342 = vpop.f32.mrf.mxu0
      %2343 = vmatprep.mubr.bf16.mxu0 0
      %2344 = vmatmul.mubr.bf16.gmra.mxu0 %v1269
      %v2345 = vpop.f32.mrf.mxu0
      %v2346 = vadd.f32 0.0, %v2345
      %v2347 = vpop.f32.mrf.mxu0
      %v2348 = vpop.f32.mrf.mxu0
      %v2349 = vadd.f32 0.0, %v2348
      %v2350 = vpop.f32.mrf.mxu0
      %2351 = vmatprep.mubr.bf16.mxu0 0
      %2352 = vmatmul.mubr.bf16.gmra.mxu0 %v1271
      %v2353 = vpop.f32.mrf.mxu0
      %v2354 = vadd.f32 0.0, %v2353
      %v2355 = vpop.f32.mrf.mxu0
      %v2356 = vpop.f32.mrf.mxu0
      %v2357 = vadd.f32 0.0, %v2356
      %v2358 = vpop.f32.mrf.mxu0
      %2359 = vmatprep.mubr.bf16.mxu0 0
      %2360 = vmatmul.mubr.bf16.gmra.mxu0 %v1273
      %v2361 = vpop.f32.mrf.mxu0
      %v2362 = vadd.f32 0.0, %v2361
      %v2363 = vpop.f32.mrf.mxu0
      %v2364 = vpop.f32.mrf.mxu0
      %v2365 = vadd.f32 0.0, %v2364
      %v2366 = vpop.f32.mrf.mxu0
      %2367 = vmatprep.mubr.bf16.mxu0 0
      %2368 = vmatmul.mubr.bf16.gmra.mxu0 %v1275
      %v2369 = vpop.f32.mrf.mxu0
      %v2370 = vadd.f32 0.0, %v2369
      %v2371 = vpop.f32.mrf.mxu0
      %v2372 = vpop.f32.mrf.mxu0
      %v2373 = vadd.f32 0.0, %v2372
      %v2374 = vpop.f32.mrf.mxu0
      %2375 = vmatprep.mubr.bf16.mxu0 0
      %2376 = vmatmul.mubr.bf16.gmra.mxu0 %v1277
      %v2377 = vpop.f32.mrf.mxu0
      %v2378 = vadd.f32 0.0, %v2377
      %v2379 = vpop.f32.mrf.mxu0
      %v2380 = vpop.f32.mrf.mxu0
      %v2381 = vadd.f32 0.0, %v2380
      %v2382 = vpop.f32.mrf.mxu0
      %2383 = vmatprep.mubr.bf16.mxu0 0
      %2384 = vmatmul.mubr.bf16.gmra.mxu0 %v1279
      %v2385 = vpop.f32.mrf.mxu0
      %v2386 = vadd.f32 0.0, %v2385
      %v2387 = vpop.f32.mrf.mxu0
      %v2388 = vpop.f32.mrf.mxu0
      %v2389 = vadd.f32 0.0, %v2388
      %v2390 = vpop.f32.mrf.mxu0
      %2391 = vmatprep.mubr.bf16.mxu0 0
      %2392 = vmatmul.mubr.bf16.gmra.mxu0 %v1281
      %v2393 = vpop.f32.mrf.mxu0
      %v2394 = vadd.f32 0.0, %v2393
      %v2395 = vpop.f32.mrf.mxu0
      %v2396 = vpop.f32.mrf.mxu0
      %v2397 = vadd.f32 0.0, %v2396
      %v2398 = vpop.f32.mrf.mxu0
      %2399 = vmatprep.mubr.bf16.mxu0 0
      %2400 = vmatmul.mubr.bf16.gmra.mxu0 %v1283
      %v2401 = vpop.f32.mrf.mxu0
      %v2402 = vadd.f32 0.0, %v2401
      %v2403 = vpop.f32.mrf.mxu0
      %v2404 = vpop.f32.mrf.mxu0
      %v2405 = vadd.f32 0.0, %v2404
      %v2406 = vpop.f32.mrf.mxu0
      %2407 = vmatprep.mubr.bf16.mxu0 0
      %2408 = vmatmul.mubr.bf16.gmra.mxu0 %v1285
      %v2409 = vpop.f32.mrf.mxu0
      %v2410 = vadd.f32 0.0, %v2409
      %v2411 = vpop.f32.mrf.mxu0
      %v2412 = vpop.f32.mrf.mxu0
      %v2413 = vadd.f32 0.0, %v2412
      %v2414 = vpop.f32.mrf.mxu0
      %2415 = vmatprep.mubr.bf16.mxu0 0
      %2416 = vmatmul.mubr.bf16.gmra.mxu0 %v1287
      %v2417 = vpop.f32.mrf.mxu0
      %v2418 = vadd.f32 0.0, %v2417
      %v2419 = vpop.f32.mrf.mxu0
      %v2420 = vpop.f32.mrf.mxu0
      %v2421 = vadd.f32 0.0, %v2420
      %v2422 = vpop.f32.mrf.mxu0
      %2423 = vmatprep.mubr.bf16.mxu0 0
      %2424 = vmatmul.mubr.bf16.gmra.mxu0 %v1289
      %v2425 = vpop.f32.mrf.mxu0
      %v2426 = vadd.f32 0.0, %v2425
      %v2427 = vpop.f32.mrf.mxu0
      %v2428 = vpop.f32.mrf.mxu0
      %v2429 = vadd.f32 0.0, %v2428
      %v2430 = vpop.f32.mrf.mxu0
      %2431 = vmatprep.mubr.bf16.mxu0 0
      %2432 = vmatmul.mubr.bf16.gmra.mxu0 %v1291
      %v2433 = vpop.f32.mrf.mxu0
      %v2434 = vadd.f32 0.0, %v2433
      %v2435 = vpop.f32.mrf.mxu0
      %v2436 = vpop.f32.mrf.mxu0
      %v2437 = vadd.f32 0.0, %v2436
      %v2438 = vpop.f32.mrf.mxu0
      %2439 = vmatprep.mubr.bf16.mxu0 0
      %2440 = vmatmul.mubr.bf16.gmra.mxu0 %v1293
      %v2441 = vpop.f32.mrf.mxu0
      %v2442 = vadd.f32 0.0, %v2441
      %v2443 = vpop.f32.mrf.mxu0
      %v2444 = vpop.f32.mrf.mxu0
      %v2445 = vadd.f32 0.0, %v2444
      %v2446 = vpop.f32.mrf.mxu0
      %2447 = vmatprep.mubr.bf16.mxu0 0
      %2448 = vmatmul.mubr.bf16.gmra.mxu0 %v1295
      %v2449 = vpop.f32.mrf.mxu0
      %v2450 = vadd.f32 0.0, %v2449
      %v2451 = vpop.f32.mrf.mxu0
      %v2452 = vpop.f32.mrf.mxu0
      %v2453 = vadd.f32 0.0, %v2452
      %v2454 = vpop.f32.mrf.mxu0
      %2455 = vmatprep.mubr.bf16.mxu0 0
      %2456 = vmatmul.mubr.bf16.gmra.mxu0 %v2175
      %v2457 = vpop.f32.mrf.mxu0
      %v2458 = vadd.f32 0.0, %v2457
      %v2459 = vpop.f32.mrf.mxu0
      %v2460 = vpop.f32.mrf.mxu0
      %v2461 = vadd.f32 0.0, %v2460
      %v2462 = vpop.f32.mrf.mxu0
      %2463 = vmatprep.mubr.bf16.mxu0 0
      %2464 = vmatmul.mubr.bf16.gmra.mxu0 %v2178
      %v2465 = vpop.f32.mrf.mxu0
      %v2466 = vadd.f32 0.0, %v2465
      %v2467 = vpop.f32.mrf.mxu0
      %v2468 = vpop.f32.mrf.mxu0
      %v2469 = vadd.f32 0.0, %v2468
      %v2470 = vpop.f32.mrf.mxu0
      %2471 = vdwg.mxu0
      %v2472 = vadd.f32 %v2108, %v2218
      %v2473 = vadd.f32 %v2109, %v2221
      %v2474 = vadd.f32 %v2110, %v2226
      %v2475 = vadd.f32 %v2111, %v2229
      %v2476 = vadd.f32 %v2112, %v2234
      %v2477 = vadd.f32 %v2113, %v2237
      %v2478 = vadd.f32 %v2114, %v2242
      %v2479 = vadd.f32 %v2115, %v2245
      %v2480 = vadd.f32 %v2116, %v2250
      %v2481 = vadd.f32 %v2117, %v2253
      %v2482 = vadd.f32 %v2118, %v2258
      %v2483 = vadd.f32 %v2119, %v2261
      %v2484 = vadd.f32 %v2120, %v2266
      %v2485 = vadd.f32 %v2121, %v2269
      %v2486 = vadd.f32 %v2122, %v2274
      %v2487 = vadd.f32 %v2123, %v2277
      %v2488 = vadd.f32 %v2124, %v2282
      %v2489 = vadd.f32 %v2125, %v2285
      %v2490 = vadd.f32 %v2126, %v2290
      %v2491 = vadd.f32 %v2127, %v2293
      %v2492 = vadd.f32 %v2128, %v2298
      %v2493 = vadd.f32 %v2129, %v2301
      %v2494 = vadd.f32 %v2130, %v2306
      %v2495 = vadd.f32 %v2131, %v2309
      %v2496 = vadd.f32 %v2132, %v2314
      %v2497 = vadd.f32 %v2133, %v2317
      %v2498 = vadd.f32 %v2134, %v2322
      %v2499 = vadd.f32 %v2135, %v2325
      %v2500 = vadd.f32 %v2136, %v2330
      %v2501 = vadd.f32 %v2137, %v2333
      %v2502 = vadd.f32 %v2138, %v2338
      %v2503 = vadd.f32 %v2139, %v2341
      %v2504 = vadd.f32 %v2140, %v2346
      %v2505 = vadd.f32 %v2141, %v2349
      %v2506 = vadd.f32 %v2142, %v2354
      %v2507 = vadd.f32 %v2143, %v2357
      %v2508 = vadd.f32 %v2144, %v2362
      %v2509 = vadd.f32 %v2145, %v2365
      %v2510 = vadd.f32 %v2146, %v2370
      %v2511 = vadd.f32 %v2147, %v2373
      %v2512 = vadd.f32 %v2148, %v2378
      %v2513 = vadd.f32 %v2149, %v2381
      %v2514 = vadd.f32 %v2150, %v2386
      %v2515 = vadd.f32 %v2151, %v2389
      %v2516 = vadd.f32 %v2152, %v2394
      %v2517 = vadd.f32 %v2153, %v2397
      %v2518 = vadd.f32 %v2154, %v2402
      %v2519 = vadd.f32 %v2155, %v2405
      %v2520 = vadd.f32 %v2156, %v2410
      %v2521 = vadd.f32 %v2157, %v2413
      %v2522 = vadd.f32 %v2158, %v2418
      %v2523 = vadd.f32 %v2159, %v2421
      %v2524 = vadd.f32 %v2160, %v2426
      %v2525 = vadd.f32 %v2161, %v2429
      %v2526 = vadd.f32 %v2162, %v2434
      %v2527 = vadd.f32 %v2163, %v2437
      %v2528 = vadd.f32 %v2164, %v2442
      %v2529 = vadd.f32 %v2165, %v2445
      %v2530 = vadd.f32 %v2166, %v2450
      %v2531 = vadd.f32 %v2167, %v2453
      %v2532 = vadd.f32 %v2168, %v2458
      %v2533 = vadd.f32 %v2169, %v2461
      %v2534 = vadd.f32 %v2170, %v2466
      %v2535 = vadd.f32 %v2171, %v2469
      %v2536 = vshrl.u32 %v513, 16
      %v2538 = vshll.u32 %v513, 16
      %v2540 = vrot.slane %v2538, 1
      %v2541 = vor.u32 %v2536, %v2540
      %v2542 = vshll.u32 %v514, 16
      %v2544 = vrot.slane %v2542, 1
      %v2545 = vsel %vm520, %v2541, %v2544
      %v2546 = vshrl.u32 %v514, 16
      %v2548 = vor.u32 %v2546, %v2544
      %v2550 = vshll.u32 %v515, 16
      %v2552 = vrot.slane %v2550, 1
      %v2553 = vsel %vm520, %v2548, %v2552
      %s2554 = scalar_lea.vmem %s2, 16
      %v2555 = vld [vmem:[%s2554] sm:$0xf]
      %v2557 = vsel %vm843, %v2545, 0
      %v2560 = vsel %vm843, %v2553, 0
      %v2563 = vsel %vm940, %v2555, 0
      %2565 = vmatprep.subr.bf16.mxu0 0
      %2566 = vmatpush1.bf16.msra.mxu0 0
      %2567 = vmatprep.subr.bf16.mxu0 0
      %2568 = vmatpush1.bf16.msra.mxu0 0
      %2569 = vmatprep.subr.bf16.mxu0 0
      %2570 = vmatpush1.bf16.msra.mxu0 0
      %2571 = vmatprep.subr.bf16.mxu0 0
      %2572 = vmatpush1.bf16.msra.mxu0 0
      %2573 = vmatprep.subr.bf16.mxu0 0
      %2574 = vmatpush1.bf16.msra.mxu0 0
      %2575 = vmatprep.subr.bf16.mxu0 0
      %2576 = vmatpush1.bf16.msra.mxu0 0
      %2577 = vmatprep.subr.bf16.mxu0 0
      %2578 = vmatpush1.bf16.msra.mxu0 0
      %2579 = vmatprep.subr.bf16.mxu0 0
      %2580 = vmatpush1.bf16.msra.mxu0 %v2563
      %2581 = vmatprep.subr.bf16.mxu0 0
      %2582 = vmatpush2.bf16.msra.mxu0 0
      %2583 = vmatprep.subr.bf16.mxu0 0
      %2584 = vmatpush2.bf16.msra.mxu0 0
      %2585 = vmatprep.subr.bf16.mxu0 0
      %2586 = vmatpush2.bf16.msra.mxu0 0
      %2587 = vmatprep.subr.bf16.mxu0 0
      %2588 = vmatpush2.bf16.msra.mxu0 0
      %2589 = vmatprep.subr.bf16.mxu0 0
      %2590 = vmatpush2.bf16.msra.mxu0 0
      %2591 = vmatprep.subr.bf16.mxu0 0
      %2592 = vmatpush2.bf16.msra.mxu0 0
      %2593 = vmatprep.subr.bf16.mxu0 0
      %2594 = vmatpush2.bf16.msra.mxu0 0
      %2595 = vmatprep.subr.bf16.mxu0 0
      %2596 = vmatpush2.bf16.msra.mxu0 0
      %2597 = vmatprep.mubr.bf16.mxu0 0
      %2598 = vmatmul.mubr.bf16.gmra.mxu0 %v851
      %v2599 = vpop.f32.mrf.mxu0
      %v2600 = vadd.f32 0.0, %v2599
      %v2601 = vpop.f32.mrf.mxu0
      %v2602 = vpop.f32.mrf.mxu0
      %v2603 = vadd.f32 0.0, %v2602
      %v2604 = vpop.f32.mrf.mxu0
      %2605 = vmatprep.mubr.bf16.mxu0 0
      %2606 = vmatmul.mubr.bf16.gmra.mxu0 %v854
      %v2607 = vpop.f32.mrf.mxu0
      %v2608 = vadd.f32 0.0, %v2607
      %v2609 = vpop.f32.mrf.mxu0
      %v2610 = vpop.f32.mrf.mxu0
      %v2611 = vadd.f32 0.0, %v2610
      %v2612 = vpop.f32.mrf.mxu0
      %2613 = vmatprep.mubr.bf16.mxu0 0
      %2614 = vmatmul.mubr.bf16.gmra.mxu0 %v857
      %v2615 = vpop.f32.mrf.mxu0
      %v2616 = vadd.f32 0.0, %v2615
      %v2617 = vpop.f32.mrf.mxu0
      %v2618 = vpop.f32.mrf.mxu0
      %v2619 = vadd.f32 0.0, %v2618
      %v2620 = vpop.f32.mrf.mxu0
      %2621 = vmatprep.mubr.bf16.mxu0 0
      %2622 = vmatmul.mubr.bf16.gmra.mxu0 %v860
      %v2623 = vpop.f32.mrf.mxu0
      %v2624 = vadd.f32 0.0, %v2623
      %v2625 = vpop.f32.mrf.mxu0
      %v2626 = vpop.f32.mrf.mxu0
      %v2627 = vadd.f32 0.0, %v2626
      %v2628 = vpop.f32.mrf.mxu0
      %2629 = vmatprep.mubr.bf16.mxu0 0
      %2630 = vmatmul.mubr.bf16.gmra.mxu0 %v863
      %v2631 = vpop.f32.mrf.mxu0
      %v2632 = vadd.f32 0.0, %v2631
      %v2633 = vpop.f32.mrf.mxu0
      %v2634 = vpop.f32.mrf.mxu0
      %v2635 = vadd.f32 0.0, %v2634
      %v2636 = vpop.f32.mrf.mxu0
      %2637 = vmatprep.mubr.bf16.mxu0 0
      %2638 = vmatmul.mubr.bf16.gmra.mxu0 %v866
      %v2639 = vpop.f32.mrf.mxu0
      %v2640 = vadd.f32 0.0, %v2639
      %v2641 = vpop.f32.mrf.mxu0
      %v2642 = vpop.f32.mrf.mxu0
      %v2643 = vadd.f32 0.0, %v2642
      %v2644 = vpop.f32.mrf.mxu0
      %2645 = vmatprep.mubr.bf16.mxu0 0
      %2646 = vmatmul.mubr.bf16.gmra.mxu0 %v869
      %v2647 = vpop.f32.mrf.mxu0
      %v2648 = vadd.f32 0.0, %v2647
      %v2649 = vpop.f32.mrf.mxu0
      %v2650 = vpop.f32.mrf.mxu0
      %v2651 = vadd.f32 0.0, %v2650
      %v2652 = vpop.f32.mrf.mxu0
      %2653 = vmatprep.mubr.bf16.mxu0 0
      %2654 = vmatmul.mubr.bf16.gmra.mxu0 %v872
      %v2655 = vpop.f32.mrf.mxu0
      %v2656 = vadd.f32 0.0, %v2655
      %v2657 = vpop.f32.mrf.mxu0
      %v2658 = vpop.f32.mrf.mxu0
      %v2659 = vadd.f32 0.0, %v2658
      %v2660 = vpop.f32.mrf.mxu0
      %2661 = vmatprep.mubr.bf16.mxu0 0
      %2662 = vmatmul.mubr.bf16.gmra.mxu0 %v875
      %v2663 = vpop.f32.mrf.mxu0
      %v2664 = vadd.f32 0.0, %v2663
      %v2665 = vpop.f32.mrf.mxu0
      %v2666 = vpop.f32.mrf.mxu0
      %v2667 = vadd.f32 0.0, %v2666
      %v2668 = vpop.f32.mrf.mxu0
      %2669 = vmatprep.mubr.bf16.mxu0 0
      %2670 = vmatmul.mubr.bf16.gmra.mxu0 %v878
      %v2671 = vpop.f32.mrf.mxu0
      %v2672 = vadd.f32 0.0, %v2671
      %v2673 = vpop.f32.mrf.mxu0
      %v2674 = vpop.f32.mrf.mxu0
      %v2675 = vadd.f32 0.0, %v2674
      %v2676 = vpop.f32.mrf.mxu0
      %2677 = vmatprep.mubr.bf16.mxu0 0
      %2678 = vmatmul.mubr.bf16.gmra.mxu0 %v881
      %v2679 = vpop.f32.mrf.mxu0
      %v2680 = vadd.f32 0.0, %v2679
      %v2681 = vpop.f32.mrf.mxu0
      %v2682 = vpop.f32.mrf.mxu0
      %v2683 = vadd.f32 0.0, %v2682
      %v2684 = vpop.f32.mrf.mxu0
      %2685 = vmatprep.mubr.bf16.mxu0 0
      %2686 = vmatmul.mubr.bf16.gmra.mxu0 %v884
      %v2687 = vpop.f32.mrf.mxu0
      %v2688 = vadd.f32 0.0, %v2687
      %v2689 = vpop.f32.mrf.mxu0
      %v2690 = vpop.f32.mrf.mxu0
      %v2691 = vadd.f32 0.0, %v2690
      %v2692 = vpop.f32.mrf.mxu0
      %2693 = vmatprep.mubr.bf16.mxu0 0
      %2694 = vmatmul.mubr.bf16.gmra.mxu0 %v887
      %v2695 = vpop.f32.mrf.mxu0
      %v2696 = vadd.f32 0.0, %v2695
      %v2697 = vpop.f32.mrf.mxu0
      %v2698 = vpop.f32.mrf.mxu0
      %v2699 = vadd.f32 0.0, %v2698
      %v2700 = vpop.f32.mrf.mxu0
      %2701 = vmatprep.mubr.bf16.mxu0 0
      %2702 = vmatmul.mubr.bf16.gmra.mxu0 %v890
      %v2703 = vpop.f32.mrf.mxu0
      %v2704 = vadd.f32 0.0, %v2703
      %v2705 = vpop.f32.mrf.mxu0
      %v2706 = vpop.f32.mrf.mxu0
      %v2707 = vadd.f32 0.0, %v2706
      %v2708 = vpop.f32.mrf.mxu0
      %2709 = vmatprep.mubr.bf16.mxu0 0
      %2710 = vmatmul.mubr.bf16.gmra.mxu0 %v893
      %v2711 = vpop.f32.mrf.mxu0
      %v2712 = vadd.f32 0.0, %v2711
      %v2713 = vpop.f32.mrf.mxu0
      %v2714 = vpop.f32.mrf.mxu0
      %v2715 = vadd.f32 0.0, %v2714
      %v2716 = vpop.f32.mrf.mxu0
      %2717 = vmatprep.mubr.bf16.mxu0 0
      %2718 = vmatmul.mubr.bf16.gmra.mxu0 %v896
      %v2719 = vpop.f32.mrf.mxu0
      %v2720 = vadd.f32 0.0, %v2719
      %v2721 = vpop.f32.mrf.mxu0
      %v2722 = vpop.f32.mrf.mxu0
      %v2723 = vadd.f32 0.0, %v2722
      %v2724 = vpop.f32.mrf.mxu0
      %2725 = vmatprep.mubr.bf16.mxu0 0
      %2726 = vmatmul.mubr.bf16.gmra.mxu0 %v899
      %v2727 = vpop.f32.mrf.mxu0
      %v2728 = vadd.f32 0.0, %v2727
      %v2729 = vpop.f32.mrf.mxu0
      %v2730 = vpop.f32.mrf.mxu0
      %v2731 = vadd.f32 0.0, %v2730
      %v2732 = vpop.f32.mrf.mxu0
      %2733 = vmatprep.mubr.bf16.mxu0 0
      %2734 = vmatmul.mubr.bf16.gmra.mxu0 %v902
      %v2735 = vpop.f32.mrf.mxu0
      %v2736 = vadd.f32 0.0, %v2735
      %v2737 = vpop.f32.mrf.mxu0
      %v2738 = vpop.f32.mrf.mxu0
      %v2739 = vadd.f32 0.0, %v2738
      %v2740 = vpop.f32.mrf.mxu0
      %2741 = vmatprep.mubr.bf16.mxu0 0
      %2742 = vmatmul.mubr.bf16.gmra.mxu0 %v905
      %v2743 = vpop.f32.mrf.mxu0
      %v2744 = vadd.f32 0.0, %v2743
      %v2745 = vpop.f32.mrf.mxu0
      %v2746 = vpop.f32.mrf.mxu0
      %v2747 = vadd.f32 0.0, %v2746
      %v2748 = vpop.f32.mrf.mxu0
      %2749 = vmatprep.mubr.bf16.mxu0 0
      %2750 = vmatmul.mubr.bf16.gmra.mxu0 %v908
      %v2751 = vpop.f32.mrf.mxu0
      %v2752 = vadd.f32 0.0, %v2751
      %v2753 = vpop.f32.mrf.mxu0
      %v2754 = vpop.f32.mrf.mxu0
      %v2755 = vadd.f32 0.0, %v2754
      %v2756 = vpop.f32.mrf.mxu0
      %2757 = vmatprep.mubr.bf16.mxu0 0
      %2758 = vmatmul.mubr.bf16.gmra.mxu0 %v911
      %v2759 = vpop.f32.mrf.mxu0
      %v2760 = vadd.f32 0.0, %v2759
      %v2761 = vpop.f32.mrf.mxu0
      %v2762 = vpop.f32.mrf.mxu0
      %v2763 = vadd.f32 0.0, %v2762
      %v2764 = vpop.f32.mrf.mxu0
      %2765 = vmatprep.mubr.bf16.mxu0 0
      %2766 = vmatmul.mubr.bf16.gmra.mxu0 %v914
      %v2767 = vpop.f32.mrf.mxu0
      %v2768 = vadd.f32 0.0, %v2767
      %v2769 = vpop.f32.mrf.mxu0
      %v2770 = vpop.f32.mrf.mxu0
      %v2771 = vadd.f32 0.0, %v2770
      %v2772 = vpop.f32.mrf.mxu0
      %2773 = vmatprep.mubr.bf16.mxu0 0
      %2774 = vmatmul.mubr.bf16.gmra.mxu0 %v917
      %v2775 = vpop.f32.mrf.mxu0
      %v2776 = vadd.f32 0.0, %v2775
      %v2777 = vpop.f32.mrf.mxu0
      %v2778 = vpop.f32.mrf.mxu0
      %v2779 = vadd.f32 0.0, %v2778
      %v2780 = vpop.f32.mrf.mxu0
      %2781 = vmatprep.mubr.bf16.mxu0 0
      %2782 = vmatmul.mubr.bf16.gmra.mxu0 %v920
      %v2783 = vpop.f32.mrf.mxu0
      %v2784 = vadd.f32 0.0, %v2783
      %v2785 = vpop.f32.mrf.mxu0
      %v2786 = vpop.f32.mrf.mxu0
      %v2787 = vadd.f32 0.0, %v2786
      %v2788 = vpop.f32.mrf.mxu0
      %2789 = vmatprep.mubr.bf16.mxu0 0
      %2790 = vmatmul.mubr.bf16.gmra.mxu0 %v923
      %v2791 = vpop.f32.mrf.mxu0
      %v2792 = vadd.f32 0.0, %v2791
      %v2793 = vpop.f32.mrf.mxu0
      %v2794 = vpop.f32.mrf.mxu0
      %v2795 = vadd.f32 0.0, %v2794
      %v2796 = vpop.f32.mrf.mxu0
      %2797 = vmatprep.mubr.bf16.mxu0 0
      %2798 = vmatmul.mubr.bf16.gmra.mxu0 %v926
      %v2799 = vpop.f32.mrf.mxu0
      %v2800 = vadd.f32 0.0, %v2799
      %v2801 = vpop.f32.mrf.mxu0
      %v2802 = vpop.f32.mrf.mxu0
      %v2803 = vadd.f32 0.0, %v2802
      %v2804 = vpop.f32.mrf.mxu0
      %2805 = vmatprep.mubr.bf16.mxu0 0
      %2806 = vmatmul.mubr.bf16.gmra.mxu0 %v929
      %v2807 = vpop.f32.mrf.mxu0
      %v2808 = vadd.f32 0.0, %v2807
      %v2809 = vpop.f32.mrf.mxu0
      %v2810 = vpop.f32.mrf.mxu0
      %v2811 = vadd.f32 0.0, %v2810
      %v2812 = vpop.f32.mrf.mxu0
      %2813 = vmatprep.mubr.bf16.mxu0 0
      %2814 = vmatmul.mubr.bf16.gmra.mxu0 %v932
      %v2815 = vpop.f32.mrf.mxu0
      %v2816 = vadd.f32 0.0, %v2815
      %v2817 = vpop.f32.mrf.mxu0
      %v2818 = vpop.f32.mrf.mxu0
      %v2819 = vadd.f32 0.0, %v2818
      %v2820 = vpop.f32.mrf.mxu0
      %2821 = vmatprep.mubr.bf16.mxu0 0
      %2822 = vmatmul.mubr.bf16.gmra.mxu0 %v935
      %v2823 = vpop.f32.mrf.mxu0
      %v2824 = vadd.f32 0.0, %v2823
      %v2825 = vpop.f32.mrf.mxu0
      %v2826 = vpop.f32.mrf.mxu0
      %v2827 = vadd.f32 0.0, %v2826
      %v2828 = vpop.f32.mrf.mxu0
      %2829 = vmatprep.mubr.bf16.mxu0 0
      %2830 = vmatmul.mubr.bf16.gmra.mxu0 %v938
      %v2831 = vpop.f32.mrf.mxu0
      %v2832 = vadd.f32 0.0, %v2831
      %v2833 = vpop.f32.mrf.mxu0
      %v2834 = vpop.f32.mrf.mxu0
      %v2835 = vadd.f32 0.0, %v2834
      %v2836 = vpop.f32.mrf.mxu0
      %2837 = vmatprep.mubr.bf16.mxu0 0
      %2838 = vmatmul.mubr.bf16.gmra.mxu0 %v2557
      %v2839 = vpop.f32.mrf.mxu0
      %v2840 = vadd.f32 0.0, %v2839
      %v2841 = vpop.f32.mrf.mxu0
      %v2842 = vpop.f32.mrf.mxu0
      %v2843 = vadd.f32 0.0, %v2842
      %v2844 = vpop.f32.mrf.mxu0
      %2845 = vmatprep.mubr.bf16.mxu0 0
      %2846 = vmatmul.mubr.bf16.gmra.mxu0 %v2560
      %v2847 = vpop.f32.mrf.mxu0
      %v2848 = vadd.f32 0.0, %v2847
      %v2849 = vpop.f32.mrf.mxu0
      %v2850 = vpop.f32.mrf.mxu0
      %v2851 = vadd.f32 0.0, %v2850
      %v2852 = vpop.f32.mrf.mxu0
      %2853 = vdwg.mxu0
      %v2854 = vadd.f32 %v2472, %v2600
      %v2855 = vadd.f32 %v2473, %v2603
      %v2856 = vadd.f32 %v2474, %v2608
      %v2857 = vadd.f32 %v2475, %v2611
      %v2858 = vadd.f32 %v2476, %v2616
      %v2859 = vadd.f32 %v2477, %v2619
      %v2860 = vadd.f32 %v2478, %v2624
      %v2861 = vadd.f32 %v2479, %v2627
      %v2862 = vadd.f32 %v2480, %v2632
      %v2863 = vadd.f32 %v2481, %v2635
      %v2864 = vadd.f32 %v2482, %v2640
      %v2865 = vadd.f32 %v2483, %v2643
      %v2866 = vadd.f32 %v2484, %v2648
      %v2867 = vadd.f32 %v2485, %v2651
      %v2868 = vadd.f32 %v2486, %v2656
      %v2869 = vadd.f32 %v2487, %v2659
      %v2870 = vadd.f32 %v2488, %v2664
      %v2871 = vadd.f32 %v2489, %v2667
      %v2872 = vadd.f32 %v2490, %v2672
      %v2873 = vadd.f32 %v2491, %v2675
      %v2874 = vadd.f32 %v2492, %v2680
      %v2875 = vadd.f32 %v2493, %v2683
      %v2876 = vadd.f32 %v2494, %v2688
      %v2877 = vadd.f32 %v2495, %v2691
      %v2878 = vadd.f32 %v2496, %v2696
      %v2879 = vadd.f32 %v2497, %v2699
      %v2880 = vadd.f32 %v2498, %v2704
      %v2881 = vadd.f32 %v2499, %v2707
      %v2882 = vadd.f32 %v2500, %v2712
      %v2883 = vadd.f32 %v2501, %v2715
      %v2884 = vadd.f32 %v2502, %v2720
      %v2885 = vadd.f32 %v2503, %v2723
      %v2886 = vadd.f32 %v2504, %v2728
      %v2887 = vadd.f32 %v2505, %v2731
      %v2888 = vadd.f32 %v2506, %v2736
      %v2889 = vadd.f32 %v2507, %v2739
      %v2890 = vadd.f32 %v2508, %v2744
      %v2891 = vadd.f32 %v2509, %v2747
      %v2892 = vadd.f32 %v2510, %v2752
      %v2893 = vadd.f32 %v2511, %v2755
      %v2894 = vadd.f32 %v2512, %v2760
      %v2895 = vadd.f32 %v2513, %v2763
      %v2896 = vadd.f32 %v2514, %v2768
      %v2897 = vadd.f32 %v2515, %v2771
      %v2898 = vadd.f32 %v2516, %v2776
      %v2899 = vadd.f32 %v2517, %v2779
      %v2900 = vadd.f32 %v2518, %v2784
      %v2901 = vadd.f32 %v2519, %v2787
      %v2902 = vadd.f32 %v2520, %v2792
      %v2903 = vadd.f32 %v2521, %v2795
      %v2904 = vadd.f32 %v2522, %v2800
      %v2905 = vadd.f32 %v2523, %v2803
      %v2906 = vadd.f32 %v2524, %v2808
      %v2907 = vadd.f32 %v2525, %v2811
      %v2908 = vadd.f32 %v2526, %v2816
      %v2909 = vadd.f32 %v2527, %v2819
      %v2910 = vadd.f32 %v2528, %v2824
      %v2911 = vadd.f32 %v2529, %v2827
      %v2912 = vadd.f32 %v2530, %v2832
      %v2913 = vadd.f32 %v2531, %v2835
      %v2914 = vadd.f32 %v2532, %v2840
      %v2915 = vadd.f32 %v2533, %v2843
      %v2916 = vadd.f32 %v2534, %v2848
      %v2917 = vadd.f32 %v2535, %v2851
      %v2921 = vrot.slane %v513, 1
      %v2922 = vrot.slane %v514, 1
      %v2923 = vsel %vm1637, %v2921, %v2922
      %v2924 = vrot.slane %v515, 1
      %v2925 = vsel %vm1637, %v2922, %v2924
      %s2926 = scalar_lea.vmem %s2, 20
      %v2927 = vld [vmem:[%s2926] sm:$0xf]
      %v2929 = vsel %vm843, %v2923, 0
      %v2932 = vsel %vm843, %v2925, 0
      %v2935 = vsel %vm940, %v2927, 0
      %2937 = vmatprep.subr.bf16.mxu0 0
      %2938 = vmatpush1.bf16.msra.mxu0 0
      %2939 = vmatprep.subr.bf16.mxu0 0
      %2940 = vmatpush1.bf16.msra.mxu0 0
      %2941 = vmatprep.subr.bf16.mxu0 0
      %2942 = vmatpush1.bf16.msra.mxu0 0
      %2943 = vmatprep.subr.bf16.mxu0 0
      %2944 = vmatpush1.bf16.msra.mxu0 0
      %2945 = vmatprep.subr.bf16.mxu0 0
      %2946 = vmatpush1.bf16.msra.mxu0 0
      %2947 = vmatprep.subr.bf16.mxu0 0
      %2948 = vmatpush1.bf16.msra.mxu0 0
      %2949 = vmatprep.subr.bf16.mxu0 0
      %2950 = vmatpush1.bf16.msra.mxu0 0
      %2951 = vmatprep.subr.bf16.mxu0 0
      %2952 = vmatpush1.bf16.msra.mxu0 %v2935
      %2953 = vmatprep.subr.bf16.mxu0 0
      %2954 = vmatpush2.bf16.msra.mxu0 0
      %2955 = vmatprep.subr.bf16.mxu0 0
      %2956 = vmatpush2.bf16.msra.mxu0 0
      %2957 = vmatprep.subr.bf16.mxu0 0
      %2958 = vmatpush2.bf16.msra.mxu0 0
      %2959 = vmatprep.subr.bf16.mxu0 0
      %2960 = vmatpush2.bf16.msra.mxu0 0
      %2961 = vmatprep.subr.bf16.mxu0 0
      %2962 = vmatpush2.bf16.msra.mxu0 0
      %2963 = vmatprep.subr.bf16.mxu0 0
      %2964 = vmatpush2.bf16.msra.mxu0 0
      %2965 = vmatprep.subr.bf16.mxu0 0
      %2966 = vmatpush2.bf16.msra.mxu0 0
      %2967 = vmatprep.subr.bf16.mxu0 0
      %2968 = vmatpush2.bf16.msra.mxu0 0
      %2969 = vmatprep.mubr.bf16.mxu0 0
      %2970 = vmatmul.mubr.bf16.gmra.mxu0 %v1727
      %v2971 = vpop.f32.mrf.mxu0
      %v2972 = vadd.f32 0.0, %v2971
      %v2973 = vpop.f32.mrf.mxu0
      %v2974 = vpop.f32.mrf.mxu0
      %v2975 = vadd.f32 0.0, %v2974
      %v2976 = vpop.f32.mrf.mxu0
      %2977 = vmatprep.mubr.bf16.mxu0 0
      %2978 = vmatmul.mubr.bf16.gmra.mxu0 %v1730
      %v2979 = vpop.f32.mrf.mxu0
      %v2980 = vadd.f32 0.0, %v2979
      %v2981 = vpop.f32.mrf.mxu0
      %v2982 = vpop.f32.mrf.mxu0
      %v2983 = vadd.f32 0.0, %v2982
      %v2984 = vpop.f32.mrf.mxu0
      %2985 = vmatprep.mubr.bf16.mxu0 0
      %2986 = vmatmul.mubr.bf16.gmra.mxu0 %v1733
      %v2987 = vpop.f32.mrf.mxu0
      %v2988 = vadd.f32 0.0, %v2987
      %v2989 = vpop.f32.mrf.mxu0
      %v2990 = vpop.f32.mrf.mxu0
      %v2991 = vadd.f32 0.0, %v2990
      %v2992 = vpop.f32.mrf.mxu0
      %2993 = vmatprep.mubr.bf16.mxu0 0
      %2994 = vmatmul.mubr.bf16.gmra.mxu0 %v1736
      %v2995 = vpop.f32.mrf.mxu0
      %v2996 = vadd.f32 0.0, %v2995
      %v2997 = vpop.f32.mrf.mxu0
      %v2998 = vpop.f32.mrf.mxu0
      %v2999 = vadd.f32 0.0, %v2998
      %v3000 = vpop.f32.mrf.mxu0
      %3001 = vmatprep.mubr.bf16.mxu0 0
      %3002 = vmatmul.mubr.bf16.gmra.mxu0 %v1739
      %v3003 = vpop.f32.mrf.mxu0
      %v3004 = vadd.f32 0.0, %v3003
      %v3005 = vpop.f32.mrf.mxu0
      %v3006 = vpop.f32.mrf.mxu0
      %v3007 = vadd.f32 0.0, %v3006
      %v3008 = vpop.f32.mrf.mxu0
      %3009 = vmatprep.mubr.bf16.mxu0 0
      %3010 = vmatmul.mubr.bf16.gmra.mxu0 %v1742
      %v3011 = vpop.f32.mrf.mxu0
      %v3012 = vadd.f32 0.0, %v3011
      %v3013 = vpop.f32.mrf.mxu0
      %v3014 = vpop.f32.mrf.mxu0
      %v3015 = vadd.f32 0.0, %v3014
      %v3016 = vpop.f32.mrf.mxu0
      %3017 = vmatprep.mubr.bf16.mxu0 0
      %3018 = vmatmul.mubr.bf16.gmra.mxu0 %v1745
      %v3019 = vpop.f32.mrf.mxu0
      %v3020 = vadd.f32 0.0, %v3019
      %v3021 = vpop.f32.mrf.mxu0
      %v3022 = vpop.f32.mrf.mxu0
      %v3023 = vadd.f32 0.0, %v3022
      %v3024 = vpop.f32.mrf.mxu0
      %3025 = vmatprep.mubr.bf16.mxu0 0
      %3026 = vmatmul.mubr.bf16.gmra.mxu0 %v1748
      %v3027 = vpop.f32.mrf.mxu0
      %v3028 = vadd.f32 0.0, %v3027
      %v3029 = vpop.f32.mrf.mxu0
      %v3030 = vpop.f32.mrf.mxu0
      %v3031 = vadd.f32 0.0, %v3030
      %v3032 = vpop.f32.mrf.mxu0
      %3033 = vmatprep.mubr.bf16.mxu0 0
      %3034 = vmatmul.mubr.bf16.gmra.mxu0 %v1751
      %v3035 = vpop.f32.mrf.mxu0
      %v3036 = vadd.f32 0.0, %v3035
      %v3037 = vpop.f32.mrf.mxu0
      %v3038 = vpop.f32.mrf.mxu0
      %v3039 = vadd.f32 0.0, %v3038
      %v3040 = vpop.f32.mrf.mxu0
      %3041 = vmatprep.mubr.bf16.mxu0 0
      %3042 = vmatmul.mubr.bf16.gmra.mxu0 %v1754
      %v3043 = vpop.f32.mrf.mxu0
      %v3044 = vadd.f32 0.0, %v3043
      %v3045 = vpop.f32.mrf.mxu0
      %v3046 = vpop.f32.mrf.mxu0
      %v3047 = vadd.f32 0.0, %v3046
      %v3048 = vpop.f32.mrf.mxu0
      %3049 = vmatprep.mubr.bf16.mxu0 0
      %3050 = vmatmul.mubr.bf16.gmra.mxu0 %v1757
      %v3051 = vpop.f32.mrf.mxu0
      %v3052 = vadd.f32 0.0, %v3051
      %v3053 = vpop.f32.mrf.mxu0
      %v3054 = vpop.f32.mrf.mxu0
      %v3055 = vadd.f32 0.0, %v3054
      %v3056 = vpop.f32.mrf.mxu0
      %3057 = vmatprep.mubr.bf16.mxu0 0
      %3058 = vmatmul.mubr.bf16.gmra.mxu0 %v1760
      %v3059 = vpop.f32.mrf.mxu0
      %v3060 = vadd.f32 0.0, %v3059
      %v3061 = vpop.f32.mrf.mxu0
      %v3062 = vpop.f32.mrf.mxu0
      %v3063 = vadd.f32 0.0, %v3062
      %v3064 = vpop.f32.mrf.mxu0
      %3065 = vmatprep.mubr.bf16.mxu0 0
      %3066 = vmatmul.mubr.bf16.gmra.mxu0 %v1763
      %v3067 = vpop.f32.mrf.mxu0
      %v3068 = vadd.f32 0.0, %v3067
      %v3069 = vpop.f32.mrf.mxu0
      %v3070 = vpop.f32.mrf.mxu0
      %v3071 = vadd.f32 0.0, %v3070
      %v3072 = vpop.f32.mrf.mxu0
      %3073 = vmatprep.mubr.bf16.mxu0 0
      %3074 = vmatmul.mubr.bf16.gmra.mxu0 %v1766
      %v3075 = vpop.f32.mrf.mxu0
      %v3076 = vadd.f32 0.0, %v3075
      %v3077 = vpop.f32.mrf.mxu0
      %v3078 = vpop.f32.mrf.mxu0
      %v3079 = vadd.f32 0.0, %v3078
      %v3080 = vpop.f32.mrf.mxu0
      %3081 = vmatprep.mubr.bf16.mxu0 0
      %3082 = vmatmul.mubr.bf16.gmra.mxu0 %v1769
      %v3083 = vpop.f32.mrf.mxu0
      %v3084 = vadd.f32 0.0, %v3083
      %v3085 = vpop.f32.mrf.mxu0
      %v3086 = vpop.f32.mrf.mxu0
      %v3087 = vadd.f32 0.0, %v3086
      %v3088 = vpop.f32.mrf.mxu0
      %3089 = vmatprep.mubr.bf16.mxu0 0
      %3090 = vmatmul.mubr.bf16.gmra.mxu0 %v1772
      %v3091 = vpop.f32.mrf.mxu0
      %v3092 = vadd.f32 0.0, %v3091
      %v3093 = vpop.f32.mrf.mxu0
      %v3094 = vpop.f32.mrf.mxu0
      %v3095 = vadd.f32 0.0, %v3094
      %v3096 = vpop.f32.mrf.mxu0
      %3097 = vmatprep.mubr.bf16.mxu0 0
      %3098 = vmatmul.mubr.bf16.gmra.mxu0 %v1775
      %v3099 = vpop.f32.mrf.mxu0
      %v3100 = vadd.f32 0.0, %v3099
      %v3101 = vpop.f32.mrf.mxu0
      %v3102 = vpop.f32.mrf.mxu0
      %v3103 = vadd.f32 0.0, %v3102
      %v3104 = vpop.f32.mrf.mxu0
      %3105 = vmatprep.mubr.bf16.mxu0 0
      %3106 = vmatmul.mubr.bf16.gmra.mxu0 %v1778
      %v3107 = vpop.f32.mrf.mxu0
      %v3108 = vadd.f32 0.0, %v3107
      %v3109 = vpop.f32.mrf.mxu0
      %v3110 = vpop.f32.mrf.mxu0
      %v3111 = vadd.f32 0.0, %v3110
      %v3112 = vpop.f32.mrf.mxu0
      %3113 = vmatprep.mubr.bf16.mxu0 0
      %3114 = vmatmul.mubr.bf16.gmra.mxu0 %v1781
      %v3115 = vpop.f32.mrf.mxu0
      %v3116 = vadd.f32 0.0, %v3115
      %v3117 = vpop.f32.mrf.mxu0
      %v3118 = vpop.f32.mrf.mxu0
      %v3119 = vadd.f32 0.0, %v3118
      %v3120 = vpop.f32.mrf.mxu0
      %3121 = vmatprep.mubr.bf16.mxu0 0
      %3122 = vmatmul.mubr.bf16.gmra.mxu0 %v1784
      %v3123 = vpop.f32.mrf.mxu0
      %v3124 = vadd.f32 0.0, %v3123
      %v3125 = vpop.f32.mrf.mxu0
      %v3126 = vpop.f32.mrf.mxu0
      %v3127 = vadd.f32 0.0, %v3126
      %v3128 = vpop.f32.mrf.mxu0
      %3129 = vmatprep.mubr.bf16.mxu0 0
      %3130 = vmatmul.mubr.bf16.gmra.mxu0 %v1787
      %v3131 = vpop.f32.mrf.mxu0
      %v3132 = vadd.f32 0.0, %v3131
      %v3133 = vpop.f32.mrf.mxu0
      %v3134 = vpop.f32.mrf.mxu0
      %v3135 = vadd.f32 0.0, %v3134
      %v3136 = vpop.f32.mrf.mxu0
      %3137 = vmatprep.mubr.bf16.mxu0 0
      %3138 = vmatmul.mubr.bf16.gmra.mxu0 %v1790
      %v3139 = vpop.f32.mrf.mxu0
      %v3140 = vadd.f32 0.0, %v3139
      %v3141 = vpop.f32.mrf.mxu0
      %v3142 = vpop.f32.mrf.mxu0
      %v3143 = vadd.f32 0.0, %v3142
      %v3144 = vpop.f32.mrf.mxu0
      %3145 = vmatprep.mubr.bf16.mxu0 0
      %3146 = vmatmul.mubr.bf16.gmra.mxu0 %v1793
      %v3147 = vpop.f32.mrf.mxu0
      %v3148 = vadd.f32 0.0, %v3147
      %v3149 = vpop.f32.mrf.mxu0
      %v3150 = vpop.f32.mrf.mxu0
      %v3151 = vadd.f32 0.0, %v3150
      %v3152 = vpop.f32.mrf.mxu0
      %3153 = vmatprep.mubr.bf16.mxu0 0
      %3154 = vmatmul.mubr.bf16.gmra.mxu0 %v1796
      %v3155 = vpop.f32.mrf.mxu0
      %v3156 = vadd.f32 0.0, %v3155
      %v3157 = vpop.f32.mrf.mxu0
      %v3158 = vpop.f32.mrf.mxu0
      %v3159 = vadd.f32 0.0, %v3158
      %v3160 = vpop.f32.mrf.mxu0
      %3161 = vmatprep.mubr.bf16.mxu0 0
      %3162 = vmatmul.mubr.bf16.gmra.mxu0 %v1799
      %v3163 = vpop.f32.mrf.mxu0
      %v3164 = vadd.f32 0.0, %v3163
      %v3165 = vpop.f32.mrf.mxu0
      %v3166 = vpop.f32.mrf.mxu0
      %v3167 = vadd.f32 0.0, %v3166
      %v3168 = vpop.f32.mrf.mxu0
      %3169 = vmatprep.mubr.bf16.mxu0 0
      %3170 = vmatmul.mubr.bf16.gmra.mxu0 %v1802
      %v3171 = vpop.f32.mrf.mxu0
      %v3172 = vadd.f32 0.0, %v3171
      %v3173 = vpop.f32.mrf.mxu0
      %v3174 = vpop.f32.mrf.mxu0
      %v3175 = vadd.f32 0.0, %v3174
      %v3176 = vpop.f32.mrf.mxu0
      %3177 = vmatprep.mubr.bf16.mxu0 0
      %3178 = vmatmul.mubr.bf16.gmra.mxu0 %v1805
      %v3179 = vpop.f32.mrf.mxu0
      %v3180 = vadd.f32 0.0, %v3179
      %v3181 = vpop.f32.mrf.mxu0
      %v3182 = vpop.f32.mrf.mxu0
      %v3183 = vadd.f32 0.0, %v3182
      %v3184 = vpop.f32.mrf.mxu0
      %3185 = vmatprep.mubr.bf16.mxu0 0
      %3186 = vmatmul.mubr.bf16.gmra.mxu0 %v1808
      %v3187 = vpop.f32.mrf.mxu0
      %v3188 = vadd.f32 0.0, %v3187
      %v3189 = vpop.f32.mrf.mxu0
      %v3190 = vpop.f32.mrf.mxu0
      %v3191 = vadd.f32 0.0, %v3190
      %v3192 = vpop.f32.mrf.mxu0
      %3193 = vmatprep.mubr.bf16.mxu0 0
      %3194 = vmatmul.mubr.bf16.gmra.mxu0 %v1811
      %v3195 = vpop.f32.mrf.mxu0
      %v3196 = vadd.f32 0.0, %v3195
      %v3197 = vpop.f32.mrf.mxu0
      %v3198 = vpop.f32.mrf.mxu0
      %v3199 = vadd.f32 0.0, %v3198
      %v3200 = vpop.f32.mrf.mxu0
      %3201 = vmatprep.mubr.bf16.mxu0 0
      %3202 = vmatmul.mubr.bf16.gmra.mxu0 %v1814
      %v3203 = vpop.f32.mrf.mxu0
      %v3204 = vadd.f32 0.0, %v3203
      %v3205 = vpop.f32.mrf.mxu0
      %v3206 = vpop.f32.mrf.mxu0
      %v3207 = vadd.f32 0.0, %v3206
      %v3208 = vpop.f32.mrf.mxu0
      %3209 = vmatprep.mubr.bf16.mxu0 0
      %3210 = vmatmul.mubr.bf16.gmra.mxu0 %v2929
      %v3211 = vpop.f32.mrf.mxu0
      %v3212 = vadd.f32 0.0, %v3211
      %v3213 = vpop.f32.mrf.mxu0
      %v3214 = vpop.f32.mrf.mxu0
      %v3215 = vadd.f32 0.0, %v3214
      %v3216 = vpop.f32.mrf.mxu0
      %3217 = vmatprep.mubr.bf16.mxu0 0
      %3218 = vmatmul.mubr.bf16.gmra.mxu0 %v2932
      %v3219 = vpop.f32.mrf.mxu0
      %v3220 = vadd.f32 0.0, %v3219
      %v3221 = vpop.f32.mrf.mxu0
      %v3222 = vpop.f32.mrf.mxu0
      %v3223 = vadd.f32 0.0, %v3222
      %v3224 = vpop.f32.mrf.mxu0
      %3225 = vdwg.mxu0
      %v3226 = vadd.f32 %v2854, %v2972
      %v3227 = vadd.f32 %v2855, %v2975
      %v3228 = vadd.f32 %v2856, %v2980
      %v3229 = vadd.f32 %v2857, %v2983
      %v3230 = vadd.f32 %v2858, %v2988
      %v3231 = vadd.f32 %v2859, %v2991
      %v3232 = vadd.f32 %v2860, %v2996
      %v3233 = vadd.f32 %v2861, %v2999
      %v3234 = vadd.f32 %v2862, %v3004
      %v3235 = vadd.f32 %v2863, %v3007
      %v3236 = vadd.f32 %v2864, %v3012
      %v3237 = vadd.f32 %v2865, %v3015
      %v3238 = vadd.f32 %v2866, %v3020
      %v3239 = vadd.f32 %v2867, %v3023
      %v3240 = vadd.f32 %v2868, %v3028
      %v3241 = vadd.f32 %v2869, %v3031
      %v3242 = vadd.f32 %v2870, %v3036
      %v3243 = vadd.f32 %v2871, %v3039
      %v3244 = vadd.f32 %v2872, %v3044
      %v3245 = vadd.f32 %v2873, %v3047
      %v3246 = vadd.f32 %v2874, %v3052
      %v3247 = vadd.f32 %v2875, %v3055
      %v3248 = vadd.f32 %v2876, %v3060
      %v3249 = vadd.f32 %v2877, %v3063
      %v3250 = vadd.f32 %v2878, %v3068
      %v3251 = vadd.f32 %v2879, %v3071
      %v3252 = vadd.f32 %v2880, %v3076
      %v3253 = vadd.f32 %v2881, %v3079
      %v3254 = vadd.f32 %v2882, %v3084
      %v3255 = vadd.f32 %v2883, %v3087
      %v3256 = vadd.f32 %v2884, %v3092
      %v3257 = vadd.f32 %v2885, %v3095
      %v3258 = vadd.f32 %v2886, %v3100
      %v3259 = vadd.f32 %v2887, %v3103
      %v3260 = vadd.f32 %v2888, %v3108
      %v3261 = vadd.f32 %v2889, %v3111
      %v3262 = vadd.f32 %v2890, %v3116
      %v3263 = vadd.f32 %v2891, %v3119
      %v3264 = vadd.f32 %v2892, %v3124
      %v3265 = vadd.f32 %v2893, %v3127
      %v3266 = vadd.f32 %v2894, %v3132
      %v3267 = vadd.f32 %v2895, %v3135
      %v3268 = vadd.f32 %v2896, %v3140
      %v3269 = vadd.f32 %v2897, %v3143
      %v3270 = vadd.f32 %v2898, %v3148
      %v3271 = vadd.f32 %v2899, %v3151
      %v3272 = vadd.f32 %v2900, %v3156
      %v3273 = vadd.f32 %v2901, %v3159
      %v3274 = vadd.f32 %v2902, %v3164
      %v3275 = vadd.f32 %v2903, %v3167
      %v3276 = vadd.f32 %v2904, %v3172
      %v3277 = vadd.f32 %v2905, %v3175
      %v3278 = vadd.f32 %v2906, %v3180
      %v3279 = vadd.f32 %v2907, %v3183
      %v3280 = vadd.f32 %v2908, %v3188
      %v3281 = vadd.f32 %v2909, %v3191
      %v3282 = vadd.f32 %v2910, %v3196
      %v3283 = vadd.f32 %v2911, %v3199
      %v3284 = vadd.f32 %v2912, %v3204
      %v3285 = vadd.f32 %v2913, %v3207
      %v3286 = vadd.f32 %v2914, %v3212
      %v3287 = vadd.f32 %v2915, %v3215
      %v3288 = vadd.f32 %v2916, %v3220
      %v3289 = vadd.f32 %v2917, %v3223
      %s3290 = scalar_lea.vmem %s2, 24
      %v3291 = vld [vmem:[%s3290] sm:$0xf]
      %v3293 = vsel %vm843, %v516, 0
      %v3296 = vsel %vm843, %v517, 0
      %v3299 = vsel %vm940, %v3291, 0
      %3301 = vmatprep.subr.bf16.mxu0 0
      %3302 = vmatpush1.bf16.msra.mxu0 0
      %3303 = vmatprep.subr.bf16.mxu0 0
      %3304 = vmatpush1.bf16.msra.mxu0 0
      %3305 = vmatprep.subr.bf16.mxu0 0
      %3306 = vmatpush1.bf16.msra.mxu0 0
      %3307 = vmatprep.subr.bf16.mxu0 0
      %3308 = vmatpush1.bf16.msra.mxu0 0
      %3309 = vmatprep.subr.bf16.mxu0 0
      %3310 = vmatpush1.bf16.msra.mxu0 0
      %3311 = vmatprep.subr.bf16.mxu0 0
      %3312 = vmatpush1.bf16.msra.mxu0 0
      %3313 = vmatprep.subr.bf16.mxu0 0
      %3314 = vmatpush1.bf16.msra.mxu0 0
      %3315 = vmatprep.subr.bf16.mxu0 0
      %3316 = vmatpush1.bf16.msra.mxu0 %v3299
      %3317 = vmatprep.subr.bf16.mxu0 0
      %3318 = vmatpush2.bf16.msra.mxu0 0
      %3319 = vmatprep.subr.bf16.mxu0 0
      %3320 = vmatpush2.bf16.msra.mxu0 0
      %3321 = vmatprep.subr.bf16.mxu0 0
      %3322 = vmatpush2.bf16.msra.mxu0 0
      %3323 = vmatprep.subr.bf16.mxu0 0
      %3324 = vmatpush2.bf16.msra.mxu0 0
      %3325 = vmatprep.subr.bf16.mxu0 0
      %3326 = vmatpush2.bf16.msra.mxu0 0
      %3327 = vmatprep.subr.bf16.mxu0 0
      %3328 = vmatpush2.bf16.msra.mxu0 0
      %3329 = vmatprep.subr.bf16.mxu0 0
      %3330 = vmatpush2.bf16.msra.mxu0 0
      %3331 = vmatprep.subr.bf16.mxu0 0
      %3332 = vmatpush2.bf16.msra.mxu0 0
      %3333 = vmatprep.mubr.bf16.mxu0 0
      %3334 = vmatmul.mubr.bf16.gmra.mxu0 %v1241
      %v3335 = vpop.f32.mrf.mxu0
      %v3336 = vadd.f32 0.0, %v3335
      %v3337 = vpop.f32.mrf.mxu0
      %v3338 = vpop.f32.mrf.mxu0
      %v3339 = vadd.f32 0.0, %v3338
      %v3340 = vpop.f32.mrf.mxu0
      %3341 = vmatprep.mubr.bf16.mxu0 0
      %3342 = vmatmul.mubr.bf16.gmra.mxu0 %v1243
      %v3343 = vpop.f32.mrf.mxu0
      %v3344 = vadd.f32 0.0, %v3343
      %v3345 = vpop.f32.mrf.mxu0
      %v3346 = vpop.f32.mrf.mxu0
      %v3347 = vadd.f32 0.0, %v3346
      %v3348 = vpop.f32.mrf.mxu0
      %3349 = vmatprep.mubr.bf16.mxu0 0
      %3350 = vmatmul.mubr.bf16.gmra.mxu0 %v1245
      %v3351 = vpop.f32.mrf.mxu0
      %v3352 = vadd.f32 0.0, %v3351
      %v3353 = vpop.f32.mrf.mxu0
      %v3354 = vpop.f32.mrf.mxu0
      %v3355 = vadd.f32 0.0, %v3354
      %v3356 = vpop.f32.mrf.mxu0
      %3357 = vmatprep.mubr.bf16.mxu0 0
      %3358 = vmatmul.mubr.bf16.gmra.mxu0 %v1247
      %v3359 = vpop.f32.mrf.mxu0
      %v3360 = vadd.f32 0.0, %v3359
      %v3361 = vpop.f32.mrf.mxu0
      %v3362 = vpop.f32.mrf.mxu0
      %v3363 = vadd.f32 0.0, %v3362
      %v3364 = vpop.f32.mrf.mxu0
      %3365 = vmatprep.mubr.bf16.mxu0 0
      %3366 = vmatmul.mubr.bf16.gmra.mxu0 %v1249
      %v3367 = vpop.f32.mrf.mxu0
      %v3368 = vadd.f32 0.0, %v3367
      %v3369 = vpop.f32.mrf.mxu0
      %v3370 = vpop.f32.mrf.mxu0
      %v3371 = vadd.f32 0.0, %v3370
      %v3372 = vpop.f32.mrf.mxu0
      %3373 = vmatprep.mubr.bf16.mxu0 0
      %3374 = vmatmul.mubr.bf16.gmra.mxu0 %v1251
      %v3375 = vpop.f32.mrf.mxu0
      %v3376 = vadd.f32 0.0, %v3375
      %v3377 = vpop.f32.mrf.mxu0
      %v3378 = vpop.f32.mrf.mxu0
      %v3379 = vadd.f32 0.0, %v3378
      %v3380 = vpop.f32.mrf.mxu0
      %3381 = vmatprep.mubr.bf16.mxu0 0
      %3382 = vmatmul.mubr.bf16.gmra.mxu0 %v1253
      %v3383 = vpop.f32.mrf.mxu0
      %v3384 = vadd.f32 0.0, %v3383
      %v3385 = vpop.f32.mrf.mxu0
      %v3386 = vpop.f32.mrf.mxu0
      %v3387 = vadd.f32 0.0, %v3386
      %v3388 = vpop.f32.mrf.mxu0
      %3389 = vmatprep.mubr.bf16.mxu0 0
      %3390 = vmatmul.mubr.bf16.gmra.mxu0 %v1255
      %v3391 = vpop.f32.mrf.mxu0
      %v3392 = vadd.f32 0.0, %v3391
      %v3393 = vpop.f32.mrf.mxu0
      %v3394 = vpop.f32.mrf.mxu0
      %v3395 = vadd.f32 0.0, %v3394
      %v3396 = vpop.f32.mrf.mxu0
      %3397 = vmatprep.mubr.bf16.mxu0 0
      %3398 = vmatmul.mubr.bf16.gmra.mxu0 %v1257
      %v3399 = vpop.f32.mrf.mxu0
      %v3400 = vadd.f32 0.0, %v3399
      %v3401 = vpop.f32.mrf.mxu0
      %v3402 = vpop.f32.mrf.mxu0
      %v3403 = vadd.f32 0.0, %v3402
      %v3404 = vpop.f32.mrf.mxu0
      %3405 = vmatprep.mubr.bf16.mxu0 0
      %3406 = vmatmul.mubr.bf16.gmra.mxu0 %v1259
      %v3407 = vpop.f32.mrf.mxu0
      %v3408 = vadd.f32 0.0, %v3407
      %v3409 = vpop.f32.mrf.mxu0
      %v3410 = vpop.f32.mrf.mxu0
      %v3411 = vadd.f32 0.0, %v3410
      %v3412 = vpop.f32.mrf.mxu0
      %3413 = vmatprep.mubr.bf16.mxu0 0
      %3414 = vmatmul.mubr.bf16.gmra.mxu0 %v1261
      %v3415 = vpop.f32.mrf.mxu0
      %v3416 = vadd.f32 0.0, %v3415
      %v3417 = vpop.f32.mrf.mxu0
      %v3418 = vpop.f32.mrf.mxu0
      %v3419 = vadd.f32 0.0, %v3418
      %v3420 = vpop.f32.mrf.mxu0
      %3421 = vmatprep.mubr.bf16.mxu0 0
      %3422 = vmatmul.mubr.bf16.gmra.mxu0 %v1263
      %v3423 = vpop.f32.mrf.mxu0
      %v3424 = vadd.f32 0.0, %v3423
      %v3425 = vpop.f32.mrf.mxu0
      %v3426 = vpop.f32.mrf.mxu0
      %v3427 = vadd.f32 0.0, %v3426
      %v3428 = vpop.f32.mrf.mxu0
      %3429 = vmatprep.mubr.bf16.mxu0 0
      %3430 = vmatmul.mubr.bf16.gmra.mxu0 %v1265
      %v3431 = vpop.f32.mrf.mxu0
      %v3432 = vadd.f32 0.0, %v3431
      %v3433 = vpop.f32.mrf.mxu0
      %v3434 = vpop.f32.mrf.mxu0
      %v3435 = vadd.f32 0.0, %v3434
      %v3436 = vpop.f32.mrf.mxu0
      %3437 = vmatprep.mubr.bf16.mxu0 0
      %3438 = vmatmul.mubr.bf16.gmra.mxu0 %v1267
      %v3439 = vpop.f32.mrf.mxu0
      %v3440 = vadd.f32 0.0, %v3439
      %v3441 = vpop.f32.mrf.mxu0
      %v3442 = vpop.f32.mrf.mxu0
      %v3443 = vadd.f32 0.0, %v3442
      %v3444 = vpop.f32.mrf.mxu0
      %3445 = vmatprep.mubr.bf16.mxu0 0
      %3446 = vmatmul.mubr.bf16.gmra.mxu0 %v1269
      %v3447 = vpop.f32.mrf.mxu0
      %v3448 = vadd.f32 0.0, %v3447
      %v3449 = vpop.f32.mrf.mxu0
      %v3450 = vpop.f32.mrf.mxu0
      %v3451 = vadd.f32 0.0, %v3450
      %v3452 = vpop.f32.mrf.mxu0
      %3453 = vmatprep.mubr.bf16.mxu0 0
      %3454 = vmatmul.mubr.bf16.gmra.mxu0 %v1271
      %v3455 = vpop.f32.mrf.mxu0
      %v3456 = vadd.f32 0.0, %v3455
      %v3457 = vpop.f32.mrf.mxu0
      %v3458 = vpop.f32.mrf.mxu0
      %v3459 = vadd.f32 0.0, %v3458
      %v3460 = vpop.f32.mrf.mxu0
      %3461 = vmatprep.mubr.bf16.mxu0 0
      %3462 = vmatmul.mubr.bf16.gmra.mxu0 %v1273
      %v3463 = vpop.f32.mrf.mxu0
      %v3464 = vadd.f32 0.0, %v3463
      %v3465 = vpop.f32.mrf.mxu0
      %v3466 = vpop.f32.mrf.mxu0
      %v3467 = vadd.f32 0.0, %v3466
      %v3468 = vpop.f32.mrf.mxu0
      %3469 = vmatprep.mubr.bf16.mxu0 0
      %3470 = vmatmul.mubr.bf16.gmra.mxu0 %v1275
      %v3471 = vpop.f32.mrf.mxu0
      %v3472 = vadd.f32 0.0, %v3471
      %v3473 = vpop.f32.mrf.mxu0
      %v3474 = vpop.f32.mrf.mxu0
      %v3475 = vadd.f32 0.0, %v3474
      %v3476 = vpop.f32.mrf.mxu0
      %3477 = vmatprep.mubr.bf16.mxu0 0
      %3478 = vmatmul.mubr.bf16.gmra.mxu0 %v1277
      %v3479 = vpop.f32.mrf.mxu0
      %v3480 = vadd.f32 0.0, %v3479
      %v3481 = vpop.f32.mrf.mxu0
      %v3482 = vpop.f32.mrf.mxu0
      %v3483 = vadd.f32 0.0, %v3482
      %v3484 = vpop.f32.mrf.mxu0
      %3485 = vmatprep.mubr.bf16.mxu0 0
      %3486 = vmatmul.mubr.bf16.gmra.mxu0 %v1279
      %v3487 = vpop.f32.mrf.mxu0
      %v3488 = vadd.f32 0.0, %v3487
      %v3489 = vpop.f32.mrf.mxu0
      %v3490 = vpop.f32.mrf.mxu0
      %v3491 = vadd.f32 0.0, %v3490
      %v3492 = vpop.f32.mrf.mxu0
      %3493 = vmatprep.mubr.bf16.mxu0 0
      %3494 = vmatmul.mubr.bf16.gmra.mxu0 %v1281
      %v3495 = vpop.f32.mrf.mxu0
      %v3496 = vadd.f32 0.0, %v3495
      %v3497 = vpop.f32.mrf.mxu0
      %v3498 = vpop.f32.mrf.mxu0
      %v3499 = vadd.f32 0.0, %v3498
      %v3500 = vpop.f32.mrf.mxu0
      %3501 = vmatprep.mubr.bf16.mxu0 0
      %3502 = vmatmul.mubr.bf16.gmra.mxu0 %v1283
      %v3503 = vpop.f32.mrf.mxu0
      %v3504 = vadd.f32 0.0, %v3503
      %v3505 = vpop.f32.mrf.mxu0
      %v3506 = vpop.f32.mrf.mxu0
      %v3507 = vadd.f32 0.0, %v3506
      %v3508 = vpop.f32.mrf.mxu0
      %3509 = vmatprep.mubr.bf16.mxu0 0
      %3510 = vmatmul.mubr.bf16.gmra.mxu0 %v1285
      %v3511 = vpop.f32.mrf.mxu0
      %v3512 = vadd.f32 0.0, %v3511
      %v3513 = vpop.f32.mrf.mxu0
      %v3514 = vpop.f32.mrf.mxu0
      %v3515 = vadd.f32 0.0, %v3514
      %v3516 = vpop.f32.mrf.mxu0
      %3517 = vmatprep.mubr.bf16.mxu0 0
      %3518 = vmatmul.mubr.bf16.gmra.mxu0 %v1287
      %v3519 = vpop.f32.mrf.mxu0
      %v3520 = vadd.f32 0.0, %v3519
      %v3521 = vpop.f32.mrf.mxu0
      %v3522 = vpop.f32.mrf.mxu0
      %v3523 = vadd.f32 0.0, %v3522
      %v3524 = vpop.f32.mrf.mxu0
      %3525 = vmatprep.mubr.bf16.mxu0 0
      %3526 = vmatmul.mubr.bf16.gmra.mxu0 %v1289
      %v3527 = vpop.f32.mrf.mxu0
      %v3528 = vadd.f32 0.0, %v3527
      %v3529 = vpop.f32.mrf.mxu0
      %v3530 = vpop.f32.mrf.mxu0
      %v3531 = vadd.f32 0.0, %v3530
      %v3532 = vpop.f32.mrf.mxu0
      %3533 = vmatprep.mubr.bf16.mxu0 0
      %3534 = vmatmul.mubr.bf16.gmra.mxu0 %v1291
      %v3535 = vpop.f32.mrf.mxu0
      %v3536 = vadd.f32 0.0, %v3535
      %v3537 = vpop.f32.mrf.mxu0
      %v3538 = vpop.f32.mrf.mxu0
      %v3539 = vadd.f32 0.0, %v3538
      %v3540 = vpop.f32.mrf.mxu0
      %3541 = vmatprep.mubr.bf16.mxu0 0
      %3542 = vmatmul.mubr.bf16.gmra.mxu0 %v1293
      %v3543 = vpop.f32.mrf.mxu0
      %v3544 = vadd.f32 0.0, %v3543
      %v3545 = vpop.f32.mrf.mxu0
      %v3546 = vpop.f32.mrf.mxu0
      %v3547 = vadd.f32 0.0, %v3546
      %v3548 = vpop.f32.mrf.mxu0
      %3549 = vmatprep.mubr.bf16.mxu0 0
      %3550 = vmatmul.mubr.bf16.gmra.mxu0 %v1295
      %v3551 = vpop.f32.mrf.mxu0
      %v3552 = vadd.f32 0.0, %v3551
      %v3553 = vpop.f32.mrf.mxu0
      %v3554 = vpop.f32.mrf.mxu0
      %v3555 = vadd.f32 0.0, %v3554
      %v3556 = vpop.f32.mrf.mxu0
      %3557 = vmatprep.mubr.bf16.mxu0 0
      %3558 = vmatmul.mubr.bf16.gmra.mxu0 %v2175
      %v3559 = vpop.f32.mrf.mxu0
      %v3560 = vadd.f32 0.0, %v3559
      %v3561 = vpop.f32.mrf.mxu0
      %v3562 = vpop.f32.mrf.mxu0
      %v3563 = vadd.f32 0.0, %v3562
      %v3564 = vpop.f32.mrf.mxu0
      %3565 = vmatprep.mubr.bf16.mxu0 0
      %3566 = vmatmul.mubr.bf16.gmra.mxu0 %v2178
      %v3567 = vpop.f32.mrf.mxu0
      %v3568 = vadd.f32 0.0, %v3567
      %v3569 = vpop.f32.mrf.mxu0
      %v3570 = vpop.f32.mrf.mxu0
      %v3571 = vadd.f32 0.0, %v3570
      %v3572 = vpop.f32.mrf.mxu0
      %3573 = vmatprep.mubr.bf16.mxu0 0
      %3574 = vmatmul.mubr.bf16.gmra.mxu0 %v3293
      %v3575 = vpop.f32.mrf.mxu0
      %v3576 = vadd.f32 0.0, %v3575
      %v3577 = vpop.f32.mrf.mxu0
      %v3578 = vpop.f32.mrf.mxu0
      %v3579 = vadd.f32 0.0, %v3578
      %v3580 = vpop.f32.mrf.mxu0
      %3581 = vmatprep.mubr.bf16.mxu0 0
      %3582 = vmatmul.mubr.bf16.gmra.mxu0 %v3296
      %v3583 = vpop.f32.mrf.mxu0
      %v3584 = vadd.f32 0.0, %v3583
      %v3585 = vpop.f32.mrf.mxu0
      %v3586 = vpop.f32.mrf.mxu0
      %v3587 = vadd.f32 0.0, %v3586
      %v3588 = vpop.f32.mrf.mxu0
      %3589 = vdwg.mxu0
      %v3590 = vadd.f32 %v3226, %v3336
      %v3591 = vadd.f32 %v3227, %v3339
      %v3592 = vadd.f32 %v3228, %v3344
      %v3593 = vadd.f32 %v3229, %v3347
      %v3594 = vadd.f32 %v3230, %v3352
      %v3595 = vadd.f32 %v3231, %v3355
      %v3596 = vadd.f32 %v3232, %v3360
      %v3597 = vadd.f32 %v3233, %v3363
      %v3598 = vadd.f32 %v3234, %v3368
      %v3599 = vadd.f32 %v3235, %v3371
      %v3600 = vadd.f32 %v3236, %v3376
      %v3601 = vadd.f32 %v3237, %v3379
      %v3602 = vadd.f32 %v3238, %v3384
      %v3603 = vadd.f32 %v3239, %v3387
      %v3604 = vadd.f32 %v3240, %v3392
      %v3605 = vadd.f32 %v3241, %v3395
      %v3606 = vadd.f32 %v3242, %v3400
      %v3607 = vadd.f32 %v3243, %v3403
      %v3608 = vadd.f32 %v3244, %v3408
      %v3609 = vadd.f32 %v3245, %v3411
      %v3610 = vadd.f32 %v3246, %v3416
      %v3611 = vadd.f32 %v3247, %v3419
      %v3612 = vadd.f32 %v3248, %v3424
      %v3613 = vadd.f32 %v3249, %v3427
      %v3614 = vadd.f32 %v3250, %v3432
      %v3615 = vadd.f32 %v3251, %v3435
      %v3616 = vadd.f32 %v3252, %v3440
      %v3617 = vadd.f32 %v3253, %v3443
      %v3618 = vadd.f32 %v3254, %v3448
      %v3619 = vadd.f32 %v3255, %v3451
      %v3620 = vadd.f32 %v3256, %v3456
      %v3621 = vadd.f32 %v3257, %v3459
      %v3622 = vadd.f32 %v3258, %v3464
      %v3623 = vadd.f32 %v3259, %v3467
      %v3624 = vadd.f32 %v3260, %v3472
      %v3625 = vadd.f32 %v3261, %v3475
      %v3626 = vadd.f32 %v3262, %v3480
      %v3627 = vadd.f32 %v3263, %v3483
      %v3628 = vadd.f32 %v3264, %v3488
      %v3629 = vadd.f32 %v3265, %v3491
      %v3630 = vadd.f32 %v3266, %v3496
      %v3631 = vadd.f32 %v3267, %v3499
      %v3632 = vadd.f32 %v3268, %v3504
      %v3633 = vadd.f32 %v3269, %v3507
      %v3634 = vadd.f32 %v3270, %v3512
      %v3635 = vadd.f32 %v3271, %v3515
      %v3636 = vadd.f32 %v3272, %v3520
      %v3637 = vadd.f32 %v3273, %v3523
      %v3638 = vadd.f32 %v3274, %v3528
      %v3639 = vadd.f32 %v3275, %v3531
      %v3640 = vadd.f32 %v3276, %v3536
      %v3641 = vadd.f32 %v3277, %v3539
      %v3642 = vadd.f32 %v3278, %v3544
      %v3643 = vadd.f32 %v3279, %v3547
      %v3644 = vadd.f32 %v3280, %v3552
      %v3645 = vadd.f32 %v3281, %v3555
      %v3646 = vadd.f32 %v3282, %v3560
      %v3647 = vadd.f32 %v3283, %v3563
      %v3648 = vadd.f32 %v3284, %v3568
      %v3649 = vadd.f32 %v3285, %v3571
      %v3650 = vadd.f32 %v3286, %v3576
      %v3651 = vadd.f32 %v3287, %v3579
      %v3652 = vadd.f32 %v3288, %v3584
      %v3653 = vadd.f32 %v3289, %v3587
      %v3654 = vshrl.u32 %v516, 16
      %v3656 = vshll.u32 %v516, 16
      %v3658 = vrot.slane %v3656, 1
      %v3659 = vor.u32 %v3654, %v3658
      %v3660 = vshll.u32 %v517, 16
      %v3662 = vrot.slane %v3660, 1
      %v3663 = vsel %vm520, %v3659, %v3662
      %v3664 = vshrl.u32 %v517, 16
      %v3666 = vor.u32 %v3664, %v3662
      %v3668 = vshll.u32 %v518, 16
      %v3670 = vrot.slane %v3668, 1
      %v3671 = vsel %vm520, %v3666, %v3670
      %s3672 = scalar_lea.vmem %s2, 28
      %v3673 = vld [vmem:[%s3672] sm:$0xf]
      %v3675 = vsel %vm843, %v3663, 0
      %v3678 = vsel %vm843, %v3671, 0
      %v3681 = vsel %vm940, %v3673, 0
      %3683 = vmatprep.subr.bf16.mxu0 0
      %3684 = vmatpush1.bf16.msra.mxu0 0
      %3685 = vmatprep.subr.bf16.mxu0 0
      %3686 = vmatpush1.bf16.msra.mxu0 0
      %3687 = vmatprep.subr.bf16.mxu0 0
      %3688 = vmatpush1.bf16.msra.mxu0 0
      %3689 = vmatprep.subr.bf16.mxu0 0
      %3690 = vmatpush1.bf16.msra.mxu0 0
      %3691 = vmatprep.subr.bf16.mxu0 0
      %3692 = vmatpush1.bf16.msra.mxu0 0
      %3693 = vmatprep.subr.bf16.mxu0 0
      %3694 = vmatpush1.bf16.msra.mxu0 0
      %3695 = vmatprep.subr.bf16.mxu0 0
      %3696 = vmatpush1.bf16.msra.mxu0 0
      %3697 = vmatprep.subr.bf16.mxu0 0
      %3698 = vmatpush1.bf16.msra.mxu0 %v3681
      %3699 = vmatprep.subr.bf16.mxu0 0
      %3700 = vmatpush2.bf16.msra.mxu0 0
      %3701 = vmatprep.subr.bf16.mxu0 0
      %3702 = vmatpush2.bf16.msra.mxu0 0
      %3703 = vmatprep.subr.bf16.mxu0 0
      %3704 = vmatpush2.bf16.msra.mxu0 0
      %3705 = vmatprep.subr.bf16.mxu0 0
      %3706 = vmatpush2.bf16.msra.mxu0 0
      %3707 = vmatprep.subr.bf16.mxu0 0
      %3708 = vmatpush2.bf16.msra.mxu0 0
      %3709 = vmatprep.subr.bf16.mxu0 0
      %3710 = vmatpush2.bf16.msra.mxu0 0
      %3711 = vmatprep.subr.bf16.mxu0 0
      %3712 = vmatpush2.bf16.msra.mxu0 0
      %3713 = vmatprep.subr.bf16.mxu0 0
      %3714 = vmatpush2.bf16.msra.mxu0 0
      %3715 = vmatprep.mubr.bf16.mxu0 0
      %3716 = vmatmul.mubr.bf16.gmra.mxu0 %v857
      %v3717 = vpop.f32.mrf.mxu0
      %v3718 = vadd.f32 0.0, %v3717
      %v3719 = vpop.f32.mrf.mxu0
      %v3720 = vpop.f32.mrf.mxu0
      %v3721 = vadd.f32 0.0, %v3720
      %v3722 = vpop.f32.mrf.mxu0
      %3723 = vmatprep.mubr.bf16.mxu0 0
      %3724 = vmatmul.mubr.bf16.gmra.mxu0 %v860
      %v3725 = vpop.f32.mrf.mxu0
      %v3726 = vadd.f32 0.0, %v3725
      %v3727 = vpop.f32.mrf.mxu0
      %v3728 = vpop.f32.mrf.mxu0
      %v3729 = vadd.f32 0.0, %v3728
      %v3730 = vpop.f32.mrf.mxu0
      %3731 = vmatprep.mubr.bf16.mxu0 0
      %3732 = vmatmul.mubr.bf16.gmra.mxu0 %v863
      %v3733 = vpop.f32.mrf.mxu0
      %v3734 = vadd.f32 0.0, %v3733
      %v3735 = vpop.f32.mrf.mxu0
      %v3736 = vpop.f32.mrf.mxu0
      %v3737 = vadd.f32 0.0, %v3736
      %v3738 = vpop.f32.mrf.mxu0
      %3739 = vmatprep.mubr.bf16.mxu0 0
      %3740 = vmatmul.mubr.bf16.gmra.mxu0 %v866
      %v3741 = vpop.f32.mrf.mxu0
      %v3742 = vadd.f32 0.0, %v3741
      %v3743 = vpop.f32.mrf.mxu0
      %v3744 = vpop.f32.mrf.mxu0
      %v3745 = vadd.f32 0.0, %v3744
      %v3746 = vpop.f32.mrf.mxu0
      %3747 = vmatprep.mubr.bf16.mxu0 0
      %3748 = vmatmul.mubr.bf16.gmra.mxu0 %v869
      %v3749 = vpop.f32.mrf.mxu0
      %v3750 = vadd.f32 0.0, %v3749
      %v3751 = vpop.f32.mrf.mxu0
      %v3752 = vpop.f32.mrf.mxu0
      %v3753 = vadd.f32 0.0, %v3752
      %v3754 = vpop.f32.mrf.mxu0
      %3755 = vmatprep.mubr.bf16.mxu0 0
      %3756 = vmatmul.mubr.bf16.gmra.mxu0 %v872
      %v3757 = vpop.f32.mrf.mxu0
      %v3758 = vadd.f32 0.0, %v3757
      %v3759 = vpop.f32.mrf.mxu0
      %v3760 = vpop.f32.mrf.mxu0
      %v3761 = vadd.f32 0.0, %v3760
      %v3762 = vpop.f32.mrf.mxu0
      %3763 = vmatprep.mubr.bf16.mxu0 0
      %3764 = vmatmul.mubr.bf16.gmra.mxu0 %v875
      %v3765 = vpop.f32.mrf.mxu0
      %v3766 = vadd.f32 0.0, %v3765
      %v3767 = vpop.f32.mrf.mxu0
      %v3768 = vpop.f32.mrf.mxu0
      %v3769 = vadd.f32 0.0, %v3768
      %v3770 = vpop.f32.mrf.mxu0
      %3771 = vmatprep.mubr.bf16.mxu0 0
      %3772 = vmatmul.mubr.bf16.gmra.mxu0 %v878
      %v3773 = vpop.f32.mrf.mxu0
      %v3774 = vadd.f32 0.0, %v3773
      %v3775 = vpop.f32.mrf.mxu0
      %v3776 = vpop.f32.mrf.mxu0
      %v3777 = vadd.f32 0.0, %v3776
      %v3778 = vpop.f32.mrf.mxu0
      %3779 = vmatprep.mubr.bf16.mxu0 0
      %3780 = vmatmul.mubr.bf16.gmra.mxu0 %v881
      %v3781 = vpop.f32.mrf.mxu0
      %v3782 = vadd.f32 0.0, %v3781
      %v3783 = vpop.f32.mrf.mxu0
      %v3784 = vpop.f32.mrf.mxu0
      %v3785 = vadd.f32 0.0, %v3784
      %v3786 = vpop.f32.mrf.mxu0
      %3787 = vmatprep.mubr.bf16.mxu0 0
      %3788 = vmatmul.mubr.bf16.gmra.mxu0 %v884
      %v3789 = vpop.f32.mrf.mxu0
      %v3790 = vadd.f32 0.0, %v3789
      %v3791 = vpop.f32.mrf.mxu0
      %v3792 = vpop.f32.mrf.mxu0
      %v3793 = vadd.f32 0.0, %v3792
      %v3794 = vpop.f32.mrf.mxu0
      %3795 = vmatprep.mubr.bf16.mxu0 0
      %3796 = vmatmul.mubr.bf16.gmra.mxu0 %v887
      %v3797 = vpop.f32.mrf.mxu0
      %v3798 = vadd.f32 0.0, %v3797
      %v3799 = vpop.f32.mrf.mxu0
      %v3800 = vpop.f32.mrf.mxu0
      %v3801 = vadd.f32 0.0, %v3800
      %v3802 = vpop.f32.mrf.mxu0
      %3803 = vmatprep.mubr.bf16.mxu0 0
      %3804 = vmatmul.mubr.bf16.gmra.mxu0 %v890
      %v3805 = vpop.f32.mrf.mxu0
      %v3806 = vadd.f32 0.0, %v3805
      %v3807 = vpop.f32.mrf.mxu0
      %v3808 = vpop.f32.mrf.mxu0
      %v3809 = vadd.f32 0.0, %v3808
      %v3810 = vpop.f32.mrf.mxu0
      %3811 = vmatprep.mubr.bf16.mxu0 0
      %3812 = vmatmul.mubr.bf16.gmra.mxu0 %v893
      %v3813 = vpop.f32.mrf.mxu0
      %v3814 = vadd.f32 0.0, %v3813
      %v3815 = vpop.f32.mrf.mxu0
      %v3816 = vpop.f32.mrf.mxu0
      %v3817 = vadd.f32 0.0, %v3816
      %v3818 = vpop.f32.mrf.mxu0
      %3819 = vmatprep.mubr.bf16.mxu0 0
      %3820 = vmatmul.mubr.bf16.gmra.mxu0 %v896
      %v3821 = vpop.f32.mrf.mxu0
      %v3822 = vadd.f32 0.0, %v3821
      %v3823 = vpop.f32.mrf.mxu0
      %v3824 = vpop.f32.mrf.mxu0
      %v3825 = vadd.f32 0.0, %v3824
      %v3826 = vpop.f32.mrf.mxu0
      %3827 = vmatprep.mubr.bf16.mxu0 0
      %3828 = vmatmul.mubr.bf16.gmra.mxu0 %v899
      %v3829 = vpop.f32.mrf.mxu0
      %v3830 = vadd.f32 0.0, %v3829
      %v3831 = vpop.f32.mrf.mxu0
      %v3832 = vpop.f32.mrf.mxu0
      %v3833 = vadd.f32 0.0, %v3832
      %v3834 = vpop.f32.mrf.mxu0
      %3835 = vmatprep.mubr.bf16.mxu0 0
      %3836 = vmatmul.mubr.bf16.gmra.mxu0 %v902
      %v3837 = vpop.f32.mrf.mxu0
      %v3838 = vadd.f32 0.0, %v3837
      %v3839 = vpop.f32.mrf.mxu0
      %v3840 = vpop.f32.mrf.mxu0
      %v3841 = vadd.f32 0.0, %v3840
      %v3842 = vpop.f32.mrf.mxu0
      %3843 = vmatprep.mubr.bf16.mxu0 0
      %3844 = vmatmul.mubr.bf16.gmra.mxu0 %v905
      %v3845 = vpop.f32.mrf.mxu0
      %v3846 = vadd.f32 0.0, %v3845
      %v3847 = vpop.f32.mrf.mxu0
      %v3848 = vpop.f32.mrf.mxu0
      %v3849 = vadd.f32 0.0, %v3848
      %v3850 = vpop.f32.mrf.mxu0
      %3851 = vmatprep.mubr.bf16.mxu0 0
      %3852 = vmatmul.mubr.bf16.gmra.mxu0 %v908
      %v3853 = vpop.f32.mrf.mxu0
      %v3854 = vadd.f32 0.0, %v3853
      %v3855 = vpop.f32.mrf.mxu0
      %v3856 = vpop.f32.mrf.mxu0
      %v3857 = vadd.f32 0.0, %v3856
      %v3858 = vpop.f32.mrf.mxu0
      %3859 = vmatprep.mubr.bf16.mxu0 0
      %3860 = vmatmul.mubr.bf16.gmra.mxu0 %v911
      %v3861 = vpop.f32.mrf.mxu0
      %v3862 = vadd.f32 0.0, %v3861
      %v3863 = vpop.f32.mrf.mxu0
      %v3864 = vpop.f32.mrf.mxu0
      %v3865 = vadd.f32 0.0, %v3864
      %v3866 = vpop.f32.mrf.mxu0
      %3867 = vmatprep.mubr.bf16.mxu0 0
      %3868 = vmatmul.mubr.bf16.gmra.mxu0 %v914
      %v3869 = vpop.f32.mrf.mxu0
      %v3870 = vadd.f32 0.0, %v3869
      %v3871 = vpop.f32.mrf.mxu0
      %v3872 = vpop.f32.mrf.mxu0
      %v3873 = vadd.f32 0.0, %v3872
      %v3874 = vpop.f32.mrf.mxu0
      %3875 = vmatprep.mubr.bf16.mxu0 0
      %3876 = vmatmul.mubr.bf16.gmra.mxu0 %v917
      %v3877 = vpop.f32.mrf.mxu0
      %v3878 = vadd.f32 0.0, %v3877
      %v3879 = vpop.f32.mrf.mxu0
      %v3880 = vpop.f32.mrf.mxu0
      %v3881 = vadd.f32 0.0, %v3880
      %v3882 = vpop.f32.mrf.mxu0
      %3883 = vmatprep.mubr.bf16.mxu0 0
      %3884 = vmatmul.mubr.bf16.gmra.mxu0 %v920
      %v3885 = vpop.f32.mrf.mxu0
      %v3886 = vadd.f32 0.0, %v3885
      %v3887 = vpop.f32.mrf.mxu0
      %v3888 = vpop.f32.mrf.mxu0
      %v3889 = vadd.f32 0.0, %v3888
      %v3890 = vpop.f32.mrf.mxu0
      %3891 = vmatprep.mubr.bf16.mxu0 0
      %3892 = vmatmul.mubr.bf16.gmra.mxu0 %v923
      %v3893 = vpop.f32.mrf.mxu0
      %v3894 = vadd.f32 0.0, %v3893
      %v3895 = vpop.f32.mrf.mxu0
      %v3896 = vpop.f32.mrf.mxu0
      %v3897 = vadd.f32 0.0, %v3896
      %v3898 = vpop.f32.mrf.mxu0
      %3899 = vmatprep.mubr.bf16.mxu0 0
      %3900 = vmatmul.mubr.bf16.gmra.mxu0 %v926
      %v3901 = vpop.f32.mrf.mxu0
      %v3902 = vadd.f32 0.0, %v3901
      %v3903 = vpop.f32.mrf.mxu0
      %v3904 = vpop.f32.mrf.mxu0
      %v3905 = vadd.f32 0.0, %v3904
      %v3906 = vpop.f32.mrf.mxu0
      %3907 = vmatprep.mubr.bf16.mxu0 0
      %3908 = vmatmul.mubr.bf16.gmra.mxu0 %v929
      %v3909 = vpop.f32.mrf.mxu0
      %v3910 = vadd.f32 0.0, %v3909
      %v3911 = vpop.f32.mrf.mxu0
      %v3912 = vpop.f32.mrf.mxu0
      %v3913 = vadd.f32 0.0, %v3912
      %v3914 = vpop.f32.mrf.mxu0
      %3915 = vmatprep.mubr.bf16.mxu0 0
      %3916 = vmatmul.mubr.bf16.gmra.mxu0 %v932
      %v3917 = vpop.f32.mrf.mxu0
      %v3918 = vadd.f32 0.0, %v3917
      %v3919 = vpop.f32.mrf.mxu0
      %v3920 = vpop.f32.mrf.mxu0
      %v3921 = vadd.f32 0.0, %v3920
      %v3922 = vpop.f32.mrf.mxu0
      %3923 = vmatprep.mubr.bf16.mxu0 0
      %3924 = vmatmul.mubr.bf16.gmra.mxu0 %v935
      %v3925 = vpop.f32.mrf.mxu0
      %v3926 = vadd.f32 0.0, %v3925
      %v3927 = vpop.f32.mrf.mxu0
      %v3928 = vpop.f32.mrf.mxu0
      %v3929 = vadd.f32 0.0, %v3928
      %v3930 = vpop.f32.mrf.mxu0
      %3931 = vmatprep.mubr.bf16.mxu0 0
      %3932 = vmatmul.mubr.bf16.gmra.mxu0 %v938
      %v3933 = vpop.f32.mrf.mxu0
      %v3934 = vadd.f32 0.0, %v3933
      %v3935 = vpop.f32.mrf.mxu0
      %v3936 = vpop.f32.mrf.mxu0
      %v3937 = vadd.f32 0.0, %v3936
      %v3938 = vpop.f32.mrf.mxu0
      %3939 = vmatprep.mubr.bf16.mxu0 0
      %3940 = vmatmul.mubr.bf16.gmra.mxu0 %v2557
      %v3941 = vpop.f32.mrf.mxu0
      %v3942 = vadd.f32 0.0, %v3941
      %v3943 = vpop.f32.mrf.mxu0
      %v3944 = vpop.f32.mrf.mxu0
      %v3945 = vadd.f32 0.0, %v3944
      %v3946 = vpop.f32.mrf.mxu0
      %3947 = vmatprep.mubr.bf16.mxu0 0
      %3948 = vmatmul.mubr.bf16.gmra.mxu0 %v2560
      %v3949 = vpop.f32.mrf.mxu0
      %v3950 = vadd.f32 0.0, %v3949
      %v3951 = vpop.f32.mrf.mxu0
      %v3952 = vpop.f32.mrf.mxu0
      %v3953 = vadd.f32 0.0, %v3952
      %v3954 = vpop.f32.mrf.mxu0
      %3955 = vmatprep.mubr.bf16.mxu0 0
      %3956 = vmatmul.mubr.bf16.gmra.mxu0 %v3675
      %v3957 = vpop.f32.mrf.mxu0
      %v3958 = vadd.f32 0.0, %v3957
      %v3959 = vpop.f32.mrf.mxu0
      %v3960 = vpop.f32.mrf.mxu0
      %v3961 = vadd.f32 0.0, %v3960
      %v3962 = vpop.f32.mrf.mxu0
      %3963 = vmatprep.mubr.bf16.mxu0 0
      %3964 = vmatmul.mubr.bf16.gmra.mxu0 %v3678
      %v3965 = vpop.f32.mrf.mxu0
      %v3966 = vadd.f32 0.0, %v3965
      %v3967 = vpop.f32.mrf.mxu0
      %v3968 = vpop.f32.mrf.mxu0
      %v3969 = vadd.f32 0.0, %v3968
      %v3970 = vpop.f32.mrf.mxu0
      %3971 = vdwg.mxu0
      %v3972 = vadd.f32 %v3590, %v3718
      %v3973 = vadd.f32 %v3591, %v3721
      %v3974 = vadd.f32 %v3592, %v3726
      %v3975 = vadd.f32 %v3593, %v3729
      %v3976 = vadd.f32 %v3594, %v3734
      %v3977 = vadd.f32 %v3595, %v3737
      %v3978 = vadd.f32 %v3596, %v3742
      %v3979 = vadd.f32 %v3597, %v3745
      %v3980 = vadd.f32 %v3598, %v3750
      %v3981 = vadd.f32 %v3599, %v3753
      %v3982 = vadd.f32 %v3600, %v3758
      %v3983 = vadd.f32 %v3601, %v3761
      %v3984 = vadd.f32 %v3602, %v3766
      %v3985 = vadd.f32 %v3603, %v3769
      %v3986 = vadd.f32 %v3604, %v3774
      %v3987 = vadd.f32 %v3605, %v3777
      %v3988 = vadd.f32 %v3606, %v3782
      %v3989 = vadd.f32 %v3607, %v3785
      %v3990 = vadd.f32 %v3608, %v3790
      %v3991 = vadd.f32 %v3609, %v3793
      %v3992 = vadd.f32 %v3610, %v3798
      %v3993 = vadd.f32 %v3611, %v3801
      %v3994 = vadd.f32 %v3612, %v3806
      %v3995 = vadd.f32 %v3613, %v3809
      %v3996 = vadd.f32 %v3614, %v3814
      %v3997 = vadd.f32 %v3615, %v3817
      %v3998 = vadd.f32 %v3616, %v3822
      %v3999 = vadd.f32 %v3617, %v3825
      %v4000 = vadd.f32 %v3618, %v3830
      %v4001 = vadd.f32 %v3619, %v3833
      %v4002 = vadd.f32 %v3620, %v3838
      %v4003 = vadd.f32 %v3621, %v3841
      %v4004 = vadd.f32 %v3622, %v3846
      %v4005 = vadd.f32 %v3623, %v3849
      %v4006 = vadd.f32 %v3624, %v3854
      %v4007 = vadd.f32 %v3625, %v3857
      %v4008 = vadd.f32 %v3626, %v3862
      %v4009 = vadd.f32 %v3627, %v3865
      %v4010 = vadd.f32 %v3628, %v3870
      %v4011 = vadd.f32 %v3629, %v3873
      %v4012 = vadd.f32 %v3630, %v3878
      %v4013 = vadd.f32 %v3631, %v3881
      %v4014 = vadd.f32 %v3632, %v3886
      %v4015 = vadd.f32 %v3633, %v3889
      %v4016 = vadd.f32 %v3634, %v3894
      %v4017 = vadd.f32 %v3635, %v3897
      %v4018 = vadd.f32 %v3636, %v3902
      %v4019 = vadd.f32 %v3637, %v3905
      %v4020 = vadd.f32 %v3638, %v3910
      %v4021 = vadd.f32 %v3639, %v3913
      %v4022 = vadd.f32 %v3640, %v3918
      %v4023 = vadd.f32 %v3641, %v3921
      %v4024 = vadd.f32 %v3642, %v3926
      %v4025 = vadd.f32 %v3643, %v3929
      %v4026 = vadd.f32 %v3644, %v3934
      %v4027 = vadd.f32 %v3645, %v3937
      %v4028 = vadd.f32 %v3646, %v3942
      %v4029 = vadd.f32 %v3647, %v3945
      %v4030 = vadd.f32 %v3648, %v3950
      %v4031 = vadd.f32 %v3649, %v3953
      %v4032 = vadd.f32 %v3650, %v3958
      %v4033 = vadd.f32 %v3651, %v3961
      %v4034 = vadd.f32 %v3652, %v3966
      %v4035 = vadd.f32 %v3653, %v3969
      %v4039 = vrot.slane %v516, 1
      %v4040 = vrot.slane %v517, 1
      %v4041 = vsel %vm1637, %v4039, %v4040
      %v4042 = vrot.slane %v518, 1
      %v4043 = vsel %vm1637, %v4040, %v4042
      %s4044 = scalar_lea.vmem %s2, 32
      %v4045 = vld [vmem:[%s4044] sm:$0xf]
      %v4047 = vsel %vm843, %v4041, 0
      %v4050 = vsel %vm843, %v4043, 0
      %v4053 = vsel %vm940, %v4045, 0
      %4055 = vmatprep.subr.bf16.mxu0 0
      %4056 = vmatpush1.bf16.msra.mxu0 0
      %4057 = vmatprep.subr.bf16.mxu0 0
      %4058 = vmatpush1.bf16.msra.mxu0 0
      %4059 = vmatprep.subr.bf16.mxu0 0
      %4060 = vmatpush1.bf16.msra.mxu0 0
      %4061 = vmatprep.subr.bf16.mxu0 0
      %4062 = vmatpush1.bf16.msra.mxu0 0
      %4063 = vmatprep.subr.bf16.mxu0 0
      %4064 = vmatpush1.bf16.msra.mxu0 0
      %4065 = vmatprep.subr.bf16.mxu0 0
      %4066 = vmatpush1.bf16.msra.mxu0 0
      %4067 = vmatprep.subr.bf16.mxu0 0
      %4068 = vmatpush1.bf16.msra.mxu0 0
      %4069 = vmatprep.subr.bf16.mxu0 0
      %4070 = vmatpush1.bf16.msra.mxu0 %v4053
      %4071 = vmatprep.subr.bf16.mxu0 0
      %4072 = vmatpush2.bf16.msra.mxu0 0
      %4073 = vmatprep.subr.bf16.mxu0 0
      %4074 = vmatpush2.bf16.msra.mxu0 0
      %4075 = vmatprep.subr.bf16.mxu0 0
      %4076 = vmatpush2.bf16.msra.mxu0 0
      %4077 = vmatprep.subr.bf16.mxu0 0
      %4078 = vmatpush2.bf16.msra.mxu0 0
      %4079 = vmatprep.subr.bf16.mxu0 0
      %4080 = vmatpush2.bf16.msra.mxu0 0
      %4081 = vmatprep.subr.bf16.mxu0 0
      %4082 = vmatpush2.bf16.msra.mxu0 0
      %4083 = vmatprep.subr.bf16.mxu0 0
      %4084 = vmatpush2.bf16.msra.mxu0 0
      %4085 = vmatprep.subr.bf16.mxu0 0
      %4086 = vmatpush2.bf16.msra.mxu0 0
      %4087 = vmatprep.mubr.bf16.mxu0 0
      %4088 = vmatmul.mubr.bf16.gmra.mxu0 %v1733
      %v4089 = vpop.f32.mrf.mxu0
      %v4090 = vadd.f32 0.0, %v4089
      %v4091 = vpop.f32.mrf.mxu0
      %v4092 = vpop.f32.mrf.mxu0
      %v4093 = vadd.f32 0.0, %v4092
      %v4094 = vpop.f32.mrf.mxu0
      %4095 = vmatprep.mubr.bf16.mxu0 0
      %4096 = vmatmul.mubr.bf16.gmra.mxu0 %v1736
      %v4097 = vpop.f32.mrf.mxu0
      %v4098 = vadd.f32 0.0, %v4097
      %v4099 = vpop.f32.mrf.mxu0
      %v4100 = vpop.f32.mrf.mxu0
      %v4101 = vadd.f32 0.0, %v4100
      %v4102 = vpop.f32.mrf.mxu0
      %4103 = vmatprep.mubr.bf16.mxu0 0
      %4104 = vmatmul.mubr.bf16.gmra.mxu0 %v1739
      %v4105 = vpop.f32.mrf.mxu0
      %v4106 = vadd.f32 0.0, %v4105
      %v4107 = vpop.f32.mrf.mxu0
      %v4108 = vpop.f32.mrf.mxu0
      %v4109 = vadd.f32 0.0, %v4108
      %v4110 = vpop.f32.mrf.mxu0
      %4111 = vmatprep.mubr.bf16.mxu0 0
      %4112 = vmatmul.mubr.bf16.gmra.mxu0 %v1742
      %v4113 = vpop.f32.mrf.mxu0
      %v4114 = vadd.f32 0.0, %v4113
      %v4115 = vpop.f32.mrf.mxu0
      %v4116 = vpop.f32.mrf.mxu0
      %v4117 = vadd.f32 0.0, %v4116
      %v4118 = vpop.f32.mrf.mxu0
      %4119 = vmatprep.mubr.bf16.mxu0 0
      %4120 = vmatmul.mubr.bf16.gmra.mxu0 %v1745
      %v4121 = vpop.f32.mrf.mxu0
      %v4122 = vadd.f32 0.0, %v4121
      %v4123 = vpop.f32.mrf.mxu0
      %v4124 = vpop.f32.mrf.mxu0
      %v4125 = vadd.f32 0.0, %v4124
      %v4126 = vpop.f32.mrf.mxu0
      %4127 = vmatprep.mubr.bf16.mxu0 0
      %4128 = vmatmul.mubr.bf16.gmra.mxu0 %v1748
      %v4129 = vpop.f32.mrf.mxu0
      %v4130 = vadd.f32 0.0, %v4129
      %v4131 = vpop.f32.mrf.mxu0
      %v4132 = vpop.f32.mrf.mxu0
      %v4133 = vadd.f32 0.0, %v4132
      %v4134 = vpop.f32.mrf.mxu0
      %4135 = vmatprep.mubr.bf16.mxu0 0
      %4136 = vmatmul.mubr.bf16.gmra.mxu0 %v1751
      %v4137 = vpop.f32.mrf.mxu0
      %v4138 = vadd.f32 0.0, %v4137
      %v4139 = vpop.f32.mrf.mxu0
      %v4140 = vpop.f32.mrf.mxu0
      %v4141 = vadd.f32 0.0, %v4140
      %v4142 = vpop.f32.mrf.mxu0
      %4143 = vmatprep.mubr.bf16.mxu0 0
      %4144 = vmatmul.mubr.bf16.gmra.mxu0 %v1754
      %v4145 = vpop.f32.mrf.mxu0
      %v4146 = vadd.f32 0.0, %v4145
      %v4147 = vpop.f32.mrf.mxu0
      %v4148 = vpop.f32.mrf.mxu0
      %v4149 = vadd.f32 0.0, %v4148
      %v4150 = vpop.f32.mrf.mxu0
      %4151 = vmatprep.mubr.bf16.mxu0 0
      %4152 = vmatmul.mubr.bf16.gmra.mxu0 %v1757
      %v4153 = vpop.f32.mrf.mxu0
      %v4154 = vadd.f32 0.0, %v4153
      %v4155 = vpop.f32.mrf.mxu0
      %v4156 = vpop.f32.mrf.mxu0
      %v4157 = vadd.f32 0.0, %v4156
      %v4158 = vpop.f32.mrf.mxu0
      %4159 = vmatprep.mubr.bf16.mxu0 0
      %4160 = vmatmul.mubr.bf16.gmra.mxu0 %v1760
      %v4161 = vpop.f32.mrf.mxu0
      %v4162 = vadd.f32 0.0, %v4161
      %v4163 = vpop.f32.mrf.mxu0
      %v4164 = vpop.f32.mrf.mxu0
      %v4165 = vadd.f32 0.0, %v4164
      %v4166 = vpop.f32.mrf.mxu0
      %4167 = vmatprep.mubr.bf16.mxu0 0
      %4168 = vmatmul.mubr.bf16.gmra.mxu0 %v1763
      %v4169 = vpop.f32.mrf.mxu0
      %v4170 = vadd.f32 0.0, %v4169
      %v4171 = vpop.f32.mrf.mxu0
      %v4172 = vpop.f32.mrf.mxu0
      %v4173 = vadd.f32 0.0, %v4172
      %v4174 = vpop.f32.mrf.mxu0
      %4175 = vmatprep.mubr.bf16.mxu0 0
      %4176 = vmatmul.mubr.bf16.gmra.mxu0 %v1766
      %v4177 = vpop.f32.mrf.mxu0
      %v4178 = vadd.f32 0.0, %v4177
      %v4179 = vpop.f32.mrf.mxu0
      %v4180 = vpop.f32.mrf.mxu0
      %v4181 = vadd.f32 0.0, %v4180
      %v4182 = vpop.f32.mrf.mxu0
      %4183 = vmatprep.mubr.bf16.mxu0 0
      %4184 = vmatmul.mubr.bf16.gmra.mxu0 %v1769
      %v4185 = vpop.f32.mrf.mxu0
      %v4186 = vadd.f32 0.0, %v4185
      %v4187 = vpop.f32.mrf.mxu0
      %v4188 = vpop.f32.mrf.mxu0
      %v4189 = vadd.f32 0.0, %v4188
      %v4190 = vpop.f32.mrf.mxu0
      %4191 = vmatprep.mubr.bf16.mxu0 0
      %4192 = vmatmul.mubr.bf16.gmra.mxu0 %v1772
      %v4193 = vpop.f32.mrf.mxu0
      %v4194 = vadd.f32 0.0, %v4193
      %v4195 = vpop.f32.mrf.mxu0
      %v4196 = vpop.f32.mrf.mxu0
      %v4197 = vadd.f32 0.0, %v4196
      %v4198 = vpop.f32.mrf.mxu0
      %4199 = vmatprep.mubr.bf16.mxu0 0
      %4200 = vmatmul.mubr.bf16.gmra.mxu0 %v1775
      %v4201 = vpop.f32.mrf.mxu0
      %v4202 = vadd.f32 0.0, %v4201
      %v4203 = vpop.f32.mrf.mxu0
      %v4204 = vpop.f32.mrf.mxu0
      %v4205 = vadd.f32 0.0, %v4204
      %v4206 = vpop.f32.mrf.mxu0
      %4207 = vmatprep.mubr.bf16.mxu0 0
      %4208 = vmatmul.mubr.bf16.gmra.mxu0 %v1778
      %v4209 = vpop.f32.mrf.mxu0
      %v4210 = vadd.f32 0.0, %v4209
      %v4211 = vpop.f32.mrf.mxu0
      %v4212 = vpop.f32.mrf.mxu0
      %v4213 = vadd.f32 0.0, %v4212
      %v4214 = vpop.f32.mrf.mxu0
      %4215 = vmatprep.mubr.bf16.mxu0 0
      %4216 = vmatmul.mubr.bf16.gmra.mxu0 %v1781
      %v4217 = vpop.f32.mrf.mxu0
      %v4218 = vadd.f32 0.0, %v4217
      %v4219 = vpop.f32.mrf.mxu0
      %v4220 = vpop.f32.mrf.mxu0
      %v4221 = vadd.f32 0.0, %v4220
      %v4222 = vpop.f32.mrf.mxu0
      %4223 = vmatprep.mubr.bf16.mxu0 0
      %4224 = vmatmul.mubr.bf16.gmra.mxu0 %v1784
      %v4225 = vpop.f32.mrf.mxu0
      %v4226 = vadd.f32 0.0, %v4225
      %v4227 = vpop.f32.mrf.mxu0
      %v4228 = vpop.f32.mrf.mxu0
      %v4229 = vadd.f32 0.0, %v4228
      %v4230 = vpop.f32.mrf.mxu0
      %4231 = vmatprep.mubr.bf16.mxu0 0
      %4232 = vmatmul.mubr.bf16.gmra.mxu0 %v1787
      %v4233 = vpop.f32.mrf.mxu0
      %v4234 = vadd.f32 0.0, %v4233
      %v4235 = vpop.f32.mrf.mxu0
      %v4236 = vpop.f32.mrf.mxu0
      %v4237 = vadd.f32 0.0, %v4236
      %v4238 = vpop.f32.mrf.mxu0
      %4239 = vmatprep.mubr.bf16.mxu0 0
      %4240 = vmatmul.mubr.bf16.gmra.mxu0 %v1790
      %v4241 = vpop.f32.mrf.mxu0
      %v4242 = vadd.f32 0.0, %v4241
      %v4243 = vpop.f32.mrf.mxu0
      %v4244 = vpop.f32.mrf.mxu0
      %v4245 = vadd.f32 0.0, %v4244
      %v4246 = vpop.f32.mrf.mxu0
      %4247 = vmatprep.mubr.bf16.mxu0 0
      %4248 = vmatmul.mubr.bf16.gmra.mxu0 %v1793
      %v4249 = vpop.f32.mrf.mxu0
      %v4250 = vadd.f32 0.0, %v4249
      %v4251 = vpop.f32.mrf.mxu0
      %v4252 = vpop.f32.mrf.mxu0
      %v4253 = vadd.f32 0.0, %v4252
      %v4254 = vpop.f32.mrf.mxu0
      %4255 = vmatprep.mubr.bf16.mxu0 0
      %4256 = vmatmul.mubr.bf16.gmra.mxu0 %v1796
      %v4257 = vpop.f32.mrf.mxu0
      %v4258 = vadd.f32 0.0, %v4257
      %v4259 = vpop.f32.mrf.mxu0
      %v4260 = vpop.f32.mrf.mxu0
      %v4261 = vadd.f32 0.0, %v4260
      %v4262 = vpop.f32.mrf.mxu0
      %4263 = vmatprep.mubr.bf16.mxu0 0
      %4264 = vmatmul.mubr.bf16.gmra.mxu0 %v1799
      %v4265 = vpop.f32.mrf.mxu0
      %v4266 = vadd.f32 0.0, %v4265
      %v4267 = vpop.f32.mrf.mxu0
      %v4268 = vpop.f32.mrf.mxu0
      %v4269 = vadd.f32 0.0, %v4268
      %v4270 = vpop.f32.mrf.mxu0
      %4271 = vmatprep.mubr.bf16.mxu0 0
      %4272 = vmatmul.mubr.bf16.gmra.mxu0 %v1802
      %v4273 = vpop.f32.mrf.mxu0
      %v4274 = vadd.f32 0.0, %v4273
      %v4275 = vpop.f32.mrf.mxu0
      %v4276 = vpop.f32.mrf.mxu0
      %v4277 = vadd.f32 0.0, %v4276
      %v4278 = vpop.f32.mrf.mxu0
      %4279 = vmatprep.mubr.bf16.mxu0 0
      %4280 = vmatmul.mubr.bf16.gmra.mxu0 %v1805
      %v4281 = vpop.f32.mrf.mxu0
      %v4282 = vadd.f32 0.0, %v4281
      %v4283 = vpop.f32.mrf.mxu0
      %v4284 = vpop.f32.mrf.mxu0
      %v4285 = vadd.f32 0.0, %v4284
      %v4286 = vpop.f32.mrf.mxu0
      %4287 = vmatprep.mubr.bf16.mxu0 0
      %4288 = vmatmul.mubr.bf16.gmra.mxu0 %v1808
      %v4289 = vpop.f32.mrf.mxu0
      %v4290 = vadd.f32 0.0, %v4289
      %v4291 = vpop.f32.mrf.mxu0
      %v4292 = vpop.f32.mrf.mxu0
      %v4293 = vadd.f32 0.0, %v4292
      %v4294 = vpop.f32.mrf.mxu0
      %4295 = vmatprep.mubr.bf16.mxu0 0
      %4296 = vmatmul.mubr.bf16.gmra.mxu0 %v1811
      %v4297 = vpop.f32.mrf.mxu0
      %v4298 = vadd.f32 0.0, %v4297
      %v4299 = vpop.f32.mrf.mxu0
      %v4300 = vpop.f32.mrf.mxu0
      %v4301 = vadd.f32 0.0, %v4300
      %v4302 = vpop.f32.mrf.mxu0
      %4303 = vmatprep.mubr.bf16.mxu0 0
      %4304 = vmatmul.mubr.bf16.gmra.mxu0 %v1814
      %v4305 = vpop.f32.mrf.mxu0
      %v4306 = vadd.f32 0.0, %v4305
      %v4307 = vpop.f32.mrf.mxu0
      %v4308 = vpop.f32.mrf.mxu0
      %v4309 = vadd.f32 0.0, %v4308
      %v4310 = vpop.f32.mrf.mxu0
      %4311 = vmatprep.mubr.bf16.mxu0 0
      %4312 = vmatmul.mubr.bf16.gmra.mxu0 %v2929
      %v4313 = vpop.f32.mrf.mxu0
      %v4314 = vadd.f32 0.0, %v4313
      %v4315 = vpop.f32.mrf.mxu0
      %v4316 = vpop.f32.mrf.mxu0
      %v4317 = vadd.f32 0.0, %v4316
      %v4318 = vpop.f32.mrf.mxu0
      %4319 = vmatprep.mubr.bf16.mxu0 0
      %4320 = vmatmul.mubr.bf16.gmra.mxu0 %v2932
      %v4321 = vpop.f32.mrf.mxu0
      %v4322 = vadd.f32 0.0, %v4321
      %v4323 = vpop.f32.mrf.mxu0
      %v4324 = vpop.f32.mrf.mxu0
      %v4325 = vadd.f32 0.0, %v4324
      %v4326 = vpop.f32.mrf.mxu0
      %4327 = vmatprep.mubr.bf16.mxu0 0
      %4328 = vmatmul.mubr.bf16.gmra.mxu0 %v4047
      %v4329 = vpop.f32.mrf.mxu0
      %v4330 = vadd.f32 0.0, %v4329
      %v4331 = vpop.f32.mrf.mxu0
      %v4332 = vpop.f32.mrf.mxu0
      %v4333 = vadd.f32 0.0, %v4332
      %v4334 = vpop.f32.mrf.mxu0
      %4335 = vmatprep.mubr.bf16.mxu0 0
      %4336 = vmatmul.mubr.bf16.gmra.mxu0 %v4050
      %v4337 = vpop.f32.mrf.mxu0
      %v4338 = vadd.f32 0.0, %v4337
      %v4339 = vpop.f32.mrf.mxu0
      %v4340 = vpop.f32.mrf.mxu0
      %v4341 = vadd.f32 0.0, %v4340
      %v4342 = vpop.f32.mrf.mxu0
      %4343 = vdwg.mxu0
      %v4344 = vadd.f32 %v3972, %v4090
      %v4345 = vadd.f32 %v3973, %v4093
      %v4346 = vadd.f32 %v3974, %v4098
      %v4347 = vadd.f32 %v3975, %v4101
      %v4348 = vadd.f32 %v3976, %v4106
      %v4349 = vadd.f32 %v3977, %v4109
      %v4350 = vadd.f32 %v3978, %v4114
      %v4351 = vadd.f32 %v3979, %v4117
      %v4352 = vadd.f32 %v3980, %v4122
      %v4353 = vadd.f32 %v3981, %v4125
      %v4354 = vadd.f32 %v3982, %v4130
      %v4355 = vadd.f32 %v3983, %v4133
      %v4356 = vadd.f32 %v3984, %v4138
      %v4357 = vadd.f32 %v3985, %v4141
      %v4358 = vadd.f32 %v3986, %v4146
      %v4359 = vadd.f32 %v3987, %v4149
      %v4360 = vadd.f32 %v3988, %v4154
      %v4361 = vadd.f32 %v3989, %v4157
      %v4362 = vadd.f32 %v3990, %v4162
      %v4363 = vadd.f32 %v3991, %v4165
      %v4364 = vadd.f32 %v3992, %v4170
      %v4365 = vadd.f32 %v3993, %v4173
      %v4366 = vadd.f32 %v3994, %v4178
      %v4367 = vadd.f32 %v3995, %v4181
      %v4368 = vadd.f32 %v3996, %v4186
      %v4369 = vadd.f32 %v3997, %v4189
      %v4370 = vadd.f32 %v3998, %v4194
      %v4371 = vadd.f32 %v3999, %v4197
      %v4372 = vadd.f32 %v4000, %v4202
      %v4373 = vadd.f32 %v4001, %v4205
      %v4374 = vadd.f32 %v4002, %v4210
      %v4375 = vadd.f32 %v4003, %v4213
      %v4376 = vadd.f32 %v4004, %v4218
      %v4377 = vadd.f32 %v4005, %v4221
      %v4378 = vadd.f32 %v4006, %v4226
      %v4379 = vadd.f32 %v4007, %v4229
      %v4380 = vadd.f32 %v4008, %v4234
      %v4381 = vadd.f32 %v4009, %v4237
      %v4382 = vadd.f32 %v4010, %v4242
      %v4383 = vadd.f32 %v4011, %v4245
      %v4384 = vadd.f32 %v4012, %v4250
      %v4385 = vadd.f32 %v4013, %v4253
      %v4386 = vadd.f32 %v4014, %v4258
      %v4387 = vadd.f32 %v4015, %v4261
      %v4388 = vadd.f32 %v4016, %v4266
      %v4389 = vadd.f32 %v4017, %v4269
      %v4390 = vadd.f32 %v4018, %v4274
      %v4391 = vadd.f32 %v4019, %v4277
      %v4392 = vadd.f32 %v4020, %v4282
      %v4393 = vadd.f32 %v4021, %v4285
      %v4394 = vadd.f32 %v4022, %v4290
      %v4395 = vadd.f32 %v4023, %v4293
      %v4396 = vadd.f32 %v4024, %v4298
      %v4397 = vadd.f32 %v4025, %v4301
      %v4398 = vadd.f32 %v4026, %v4306
      %v4399 = vadd.f32 %v4027, %v4309
      %v4400 = vadd.f32 %v4028, %v4314
      %v4401 = vadd.f32 %v4029, %v4317
      %v4402 = vadd.f32 %v4030, %v4322
      %v4403 = vadd.f32 %v4031, %v4325
      %v4404 = vadd.f32 %v4032, %v4330
      %v4405 = vadd.f32 %v4033, %v4333
      %v4406 = vadd.f32 %v4034, %v4338
      %v4407 = vadd.f32 %v4035, %v4341
      %v4408 = vld [vmem:[%s3] sm:$0x1]
      %v4410 = vlaneseq
      %v4411 = vshrl.u32 %v4410, 7
      %v4412 = vsub.s32 0, %v4411
      %v4413 = vrot.slane %v4408, %v4412
      %v4415 = vadd.f32 %v4344, %v4413
      %v4416 = vadd.f32 %v4345, %v4413
      %v4417 = vadd.f32 %v4346, %v4413
      %v4418 = vadd.f32 %v4347, %v4413
      %v4419 = vadd.f32 %v4348, %v4413
      %v4420 = vadd.f32 %v4349, %v4413
      %v4421 = vadd.f32 %v4350, %v4413
      %v4422 = vadd.f32 %v4351, %v4413
      %v4423 = vadd.f32 %v4352, %v4413
      %v4424 = vadd.f32 %v4353, %v4413
      %v4425 = vadd.f32 %v4354, %v4413
      %v4426 = vadd.f32 %v4355, %v4413
      %v4427 = vadd.f32 %v4356, %v4413
      %v4428 = vadd.f32 %v4357, %v4413
      %v4429 = vadd.f32 %v4358, %v4413
      %v4430 = vadd.f32 %v4359, %v4413
      %v4431 = vadd.f32 %v4360, %v4413
      %v4432 = vadd.f32 %v4361, %v4413
      %v4433 = vadd.f32 %v4362, %v4413
      %v4434 = vadd.f32 %v4363, %v4413
      %v4435 = vadd.f32 %v4364, %v4413
      %v4436 = vadd.f32 %v4365, %v4413
      %v4437 = vadd.f32 %v4366, %v4413
      %v4438 = vadd.f32 %v4367, %v4413
      %v4439 = vadd.f32 %v4368, %v4413
      %v4440 = vadd.f32 %v4369, %v4413
      %v4441 = vadd.f32 %v4370, %v4413
      %v4442 = vadd.f32 %v4371, %v4413
      %v4443 = vadd.f32 %v4372, %v4413
      %v4444 = vadd.f32 %v4373, %v4413
      %v4445 = vadd.f32 %v4374, %v4413
      %v4446 = vadd.f32 %v4375, %v4413
      %v4447 = vadd.f32 %v4376, %v4413
      %v4448 = vadd.f32 %v4377, %v4413
      %v4449 = vadd.f32 %v4378, %v4413
      %v4450 = vadd.f32 %v4379, %v4413
      %v4451 = vadd.f32 %v4380, %v4413
      %v4452 = vadd.f32 %v4381, %v4413
      %v4453 = vadd.f32 %v4382, %v4413
      %v4454 = vadd.f32 %v4383, %v4413
      %v4455 = vadd.f32 %v4384, %v4413
      %v4456 = vadd.f32 %v4385, %v4413
      %v4457 = vadd.f32 %v4386, %v4413
      %v4458 = vadd.f32 %v4387, %v4413
      %v4459 = vadd.f32 %v4388, %v4413
      %v4460 = vadd.f32 %v4389, %v4413
      %v4461 = vadd.f32 %v4390, %v4413
      %v4462 = vadd.f32 %v4391, %v4413
      %v4463 = vadd.f32 %v4392, %v4413
      %v4464 = vadd.f32 %v4393, %v4413
      %v4465 = vadd.f32 %v4394, %v4413
      %v4466 = vadd.f32 %v4395, %v4413
      %v4467 = vadd.f32 %v4396, %v4413
      %v4468 = vadd.f32 %v4397, %v4413
      %v4469 = vadd.f32 %v4398, %v4413
      %v4470 = vadd.f32 %v4399, %v4413
      %v4471 = vadd.f32 %v4400, %v4413
      %v4472 = vadd.f32 %v4401, %v4413
      %v4473 = vadd.f32 %v4402, %v4413
      %v4474 = vadd.f32 %v4403, %v4413
      %v4475 = vadd.f32 %v4404, %v4413
      %v4476 = vadd.f32 %v4405, %v4413
      %v4477 = vadd.f32 %v4406, %v4413
      %v4478 = vadd.f32 %v4407, %v4413
      %v4479 = vsel %vm843, %v4415, 0.0
      %4480 = vadd.xlane.f32.xlu0 %v4479
      %v4481 = vpop.xlane.xlu0 %4480
      %v4482 = vsel %vm843, %v4416, 0.0
      %4483 = vadd.xlane.f32.xlu0 %v4482
      %v4484 = vpop.xlane.xlu0 %4483
      %v4485 = vsel %vm843, %v4417, 0.0
      %4486 = vadd.xlane.f32.xlu0 %v4485
      %v4487 = vpop.xlane.xlu0 %4486
      %v4488 = vsel %vm843, %v4418, 0.0
      %4489 = vadd.xlane.f32.xlu0 %v4488
      %v4490 = vpop.xlane.xlu0 %4489
      %v4491 = vsel %vm843, %v4419, 0.0
      %4492 = vadd.xlane.f32.xlu0 %v4491
      %v4493 = vpop.xlane.xlu0 %4492
      %v4494 = vsel %vm843, %v4420, 0.0
      %4495 = vadd.xlane.f32.xlu0 %v4494
      %v4496 = vpop.xlane.xlu0 %4495
      %v4497 = vsel %vm843, %v4421, 0.0
      %4498 = vadd.xlane.f32.xlu0 %v4497
      %v4499 = vpop.xlane.xlu0 %4498
      %v4500 = vsel %vm843, %v4422, 0.0
      %4501 = vadd.xlane.f32.xlu0 %v4500
      %v4502 = vpop.xlane.xlu0 %4501
      %v4503 = vsel %vm843, %v4423, 0.0
      %4504 = vadd.xlane.f32.xlu0 %v4503
      %v4505 = vpop.xlane.xlu0 %4504
      %v4506 = vsel %vm843, %v4424, 0.0
      %4507 = vadd.xlane.f32.xlu0 %v4506
      %v4508 = vpop.xlane.xlu0 %4507
      %v4509 = vsel %vm843, %v4425, 0.0
      %4510 = vadd.xlane.f32.xlu0 %v4509
      %v4511 = vpop.xlane.xlu0 %4510
      %v4512 = vsel %vm843, %v4426, 0.0
      %4513 = vadd.xlane.f32.xlu0 %v4512
      %v4514 = vpop.xlane.xlu0 %4513
      %v4515 = vsel %vm843, %v4427, 0.0
      %4516 = vadd.xlane.f32.xlu0 %v4515
      %v4517 = vpop.xlane.xlu0 %4516
      %v4518 = vsel %vm843, %v4428, 0.0
      %4519 = vadd.xlane.f32.xlu0 %v4518
      %v4520 = vpop.xlane.xlu0 %4519
      %v4521 = vsel %vm843, %v4429, 0.0
      %4522 = vadd.xlane.f32.xlu0 %v4521
      %v4523 = vpop.xlane.xlu0 %4522
      %v4524 = vsel %vm843, %v4430, 0.0
      %4525 = vadd.xlane.f32.xlu0 %v4524
      %v4526 = vpop.xlane.xlu0 %4525
      %v4527 = vsel %vm843, %v4431, 0.0
      %4528 = vadd.xlane.f32.xlu0 %v4527
      %v4529 = vpop.xlane.xlu0 %4528
      %v4530 = vsel %vm843, %v4432, 0.0
      %4531 = vadd.xlane.f32.xlu0 %v4530
      %v4532 = vpop.xlane.xlu0 %4531
      %v4533 = vsel %vm843, %v4433, 0.0
      %4534 = vadd.xlane.f32.xlu0 %v4533
      %v4535 = vpop.xlane.xlu0 %4534
      %v4536 = vsel %vm843, %v4434, 0.0
      %4537 = vadd.xlane.f32.xlu0 %v4536
      %v4538 = vpop.xlane.xlu0 %4537
      %v4539 = vsel %vm843, %v4435, 0.0
      %4540 = vadd.xlane.f32.xlu0 %v4539
      %v4541 = vpop.xlane.xlu0 %4540
      %v4542 = vsel %vm843, %v4436, 0.0
      %4543 = vadd.xlane.f32.xlu0 %v4542
      %v4544 = vpop.xlane.xlu0 %4543
      %v4545 = vsel %vm843, %v4437, 0.0
      %4546 = vadd.xlane.f32.xlu0 %v4545
      %v4547 = vpop.xlane.xlu0 %4546
      %v4548 = vsel %vm843, %v4438, 0.0
      %4549 = vadd.xlane.f32.xlu0 %v4548
      %v4550 = vpop.xlane.xlu0 %4549
      %v4551 = vsel %vm843, %v4439, 0.0
      %4552 = vadd.xlane.f32.xlu0 %v4551
      %v4553 = vpop.xlane.xlu0 %4552
      %v4554 = vsel %vm843, %v4440, 0.0
      %4555 = vadd.xlane.f32.xlu0 %v4554
      %v4556 = vpop.xlane.xlu0 %4555
      %v4557 = vsel %vm843, %v4441, 0.0
      %4558 = vadd.xlane.f32.xlu0 %v4557
      %v4559 = vpop.xlane.xlu0 %4558
      %v4560 = vsel %vm843, %v4442, 0.0
      %4561 = vadd.xlane.f32.xlu0 %v4560
      %v4562 = vpop.xlane.xlu0 %4561
      %v4563 = vsel %vm843, %v4443, 0.0
      %4564 = vadd.xlane.f32.xlu0 %v4563
      %v4565 = vpop.xlane.xlu0 %4564
      %v4566 = vsel %vm843, %v4444, 0.0
      %4567 = vadd.xlane.f32.xlu0 %v4566
      %v4568 = vpop.xlane.xlu0 %4567
      %v4569 = vsel %vm843, %v4445, 0.0
      %4570 = vadd.xlane.f32.xlu0 %v4569
      %v4571 = vpop.xlane.xlu0 %4570
      %v4572 = vsel %vm843, %v4446, 0.0
      %4573 = vadd.xlane.f32.xlu0 %v4572
      %v4574 = vpop.xlane.xlu0 %4573
      %v4575 = vsel %vm843, %v4447, 0.0
      %4576 = vadd.xlane.f32.xlu0 %v4575
      %v4577 = vpop.xlane.xlu0 %4576
      %v4578 = vsel %vm843, %v4448, 0.0
      %4579 = vadd.xlane.f32.xlu0 %v4578
      %v4580 = vpop.xlane.xlu0 %4579
      %v4581 = vsel %vm843, %v4449, 0.0
      %4582 = vadd.xlane.f32.xlu0 %v4581
      %v4583 = vpop.xlane.xlu0 %4582
      %v4584 = vsel %vm843, %v4450, 0.0
      %4585 = vadd.xlane.f32.xlu0 %v4584
      %v4586 = vpop.xlane.xlu0 %4585
      %v4587 = vsel %vm843, %v4451, 0.0
      %4588 = vadd.xlane.f32.xlu0 %v4587
      %v4589 = vpop.xlane.xlu0 %4588
      %v4590 = vsel %vm843, %v4452, 0.0
      %4591 = vadd.xlane.f32.xlu0 %v4590
      %v4592 = vpop.xlane.xlu0 %4591
      %v4593 = vsel %vm843, %v4453, 0.0
      %4594 = vadd.xlane.f32.xlu0 %v4593
      %v4595 = vpop.xlane.xlu0 %4594
      %v4596 = vsel %vm843, %v4454, 0.0
      %4597 = vadd.xlane.f32.xlu0 %v4596
      %v4598 = vpop.xlane.xlu0 %4597
      %v4599 = vsel %vm843, %v4455, 0.0
      %4600 = vadd.xlane.f32.xlu0 %v4599
      %v4601 = vpop.xlane.xlu0 %4600
      %v4602 = vsel %vm843, %v4456, 0.0
      %4603 = vadd.xlane.f32.xlu0 %v4602
      %v4604 = vpop.xlane.xlu0 %4603
      %v4605 = vsel %vm843, %v4457, 0.0
      %4606 = vadd.xlane.f32.xlu0 %v4605
      %v4607 = vpop.xlane.xlu0 %4606
      %v4608 = vsel %vm843, %v4458, 0.0
      %4609 = vadd.xlane.f32.xlu0 %v4608
      %v4610 = vpop.xlane.xlu0 %4609
      %v4611 = vsel %vm843, %v4459, 0.0
      %4612 = vadd.xlane.f32.xlu0 %v4611
      %v4613 = vpop.xlane.xlu0 %4612
      %v4614 = vsel %vm843, %v4460, 0.0
      %4615 = vadd.xlane.f32.xlu0 %v4614
      %v4616 = vpop.xlane.xlu0 %4615
      %v4617 = vsel %vm843, %v4461, 0.0
      %4618 = vadd.xlane.f32.xlu0 %v4617
      %v4619 = vpop.xlane.xlu0 %4618
      %v4620 = vsel %vm843, %v4462, 0.0
      %4621 = vadd.xlane.f32.xlu0 %v4620
      %v4622 = vpop.xlane.xlu0 %4621
      %v4623 = vsel %vm843, %v4463, 0.0
      %4624 = vadd.xlane.f32.xlu0 %v4623
      %v4625 = vpop.xlane.xlu0 %4624
      %v4626 = vsel %vm843, %v4464, 0.0
      %4627 = vadd.xlane.f32.xlu0 %v4626
      %v4628 = vpop.xlane.xlu0 %4627
      %v4629 = vsel %vm843, %v4465, 0.0
      %4630 = vadd.xlane.f32.xlu0 %v4629
      %v4631 = vpop.xlane.xlu0 %4630
      %v4632 = vsel %vm843, %v4466, 0.0
      %4633 = vadd.xlane.f32.xlu0 %v4632
      %v4634 = vpop.xlane.xlu0 %4633
      %v4635 = vsel %vm843, %v4467, 0.0
      %4636 = vadd.xlane.f32.xlu0 %v4635
      %v4637 = vpop.xlane.xlu0 %4636
      %v4638 = vsel %vm843, %v4468, 0.0
      %4639 = vadd.xlane.f32.xlu0 %v4638
      %v4640 = vpop.xlane.xlu0 %4639
      %v4641 = vsel %vm843, %v4469, 0.0
      %4642 = vadd.xlane.f32.xlu0 %v4641
      %v4643 = vpop.xlane.xlu0 %4642
      %v4644 = vsel %vm843, %v4470, 0.0
      %4645 = vadd.xlane.f32.xlu0 %v4644
      %v4646 = vpop.xlane.xlu0 %4645
      %v4647 = vsel %vm843, %v4471, 0.0
      %4648 = vadd.xlane.f32.xlu0 %v4647
      %v4649 = vpop.xlane.xlu0 %4648
      %v4650 = vsel %vm843, %v4472, 0.0
      %4651 = vadd.xlane.f32.xlu0 %v4650
      %v4652 = vpop.xlane.xlu0 %4651
      %v4653 = vsel %vm843, %v4473, 0.0
      %4654 = vadd.xlane.f32.xlu0 %v4653
      %v4655 = vpop.xlane.xlu0 %4654
      %v4656 = vsel %vm843, %v4474, 0.0
      %4657 = vadd.xlane.f32.xlu0 %v4656
      %v4658 = vpop.xlane.xlu0 %4657
      %v4659 = vsel %vm843, %v4475, 0.0
      %4660 = vadd.xlane.f32.xlu0 %v4659
      %v4661 = vpop.xlane.xlu0 %4660
      %v4662 = vsel %vm843, %v4476, 0.0
      %4663 = vadd.xlane.f32.xlu0 %v4662
      %v4664 = vpop.xlane.xlu0 %4663
      %v4665 = vsel %vm843, %v4477, 0.0
      %4666 = vadd.xlane.f32.xlu0 %v4665
      %v4667 = vpop.xlane.xlu0 %4666
      %v4668 = vsel %vm843, %v4478, 0.0
      %4669 = vadd.xlane.f32.xlu0 %v4668
      %v4670 = vpop.xlane.xlu0 %4669
      %v4671 = vrcp.pop 8.0
      %v4672 = vmul.f32 %v4481, %v4671
      %v4673 = vmul.f32 %v4484, %v4671
      %v4674 = vmul.f32 %v4487, %v4671
      %v4675 = vmul.f32 %v4490, %v4671
      %v4676 = vmul.f32 %v4493, %v4671
      %v4677 = vmul.f32 %v4496, %v4671
      %v4678 = vmul.f32 %v4499, %v4671
      %v4679 = vmul.f32 %v4502, %v4671
      %v4680 = vmul.f32 %v4505, %v4671
      %v4681 = vmul.f32 %v4508, %v4671
      %v4682 = vmul.f32 %v4511, %v4671
      %v4683 = vmul.f32 %v4514, %v4671
      %v4684 = vmul.f32 %v4517, %v4671
      %v4685 = vmul.f32 %v4520, %v4671
      %v4686 = vmul.f32 %v4523, %v4671
      %v4687 = vmul.f32 %v4526, %v4671
      %v4688 = vmul.f32 %v4529, %v4671
      %v4689 = vmul.f32 %v4532, %v4671
      %v4690 = vmul.f32 %v4535, %v4671
      %v4691 = vmul.f32 %v4538, %v4671
      %v4692 = vmul.f32 %v4541, %v4671
      %v4693 = vmul.f32 %v4544, %v4671
      %v4694 = vmul.f32 %v4547, %v4671
      %v4695 = vmul.f32 %v4550, %v4671
      %v4696 = vmul.f32 %v4553, %v4671
      %v4697 = vmul.f32 %v4556, %v4671
      %v4698 = vmul.f32 %v4559, %v4671
      %v4699 = vmul.f32 %v4562, %v4671
      %v4700 = vmul.f32 %v4565, %v4671
      %v4701 = vmul.f32 %v4568, %v4671
      %v4702 = vmul.f32 %v4571, %v4671
      %v4703 = vmul.f32 %v4574, %v4671
      %v4704 = vmul.f32 %v4577, %v4671
      %v4705 = vmul.f32 %v4580, %v4671
      %v4706 = vmul.f32 %v4583, %v4671
      %v4707 = vmul.f32 %v4586, %v4671
      %v4708 = vmul.f32 %v4589, %v4671
      %v4709 = vmul.f32 %v4592, %v4671
      %v4710 = vmul.f32 %v4595, %v4671
      %v4711 = vmul.f32 %v4598, %v4671
      %v4712 = vmul.f32 %v4601, %v4671
      %v4713 = vmul.f32 %v4604, %v4671
      %v4714 = vmul.f32 %v4607, %v4671
      %v4715 = vmul.f32 %v4610, %v4671
      %v4716 = vmul.f32 %v4613, %v4671
      %v4717 = vmul.f32 %v4616, %v4671
      %v4718 = vmul.f32 %v4619, %v4671
      %v4719 = vmul.f32 %v4622, %v4671
      %v4720 = vmul.f32 %v4625, %v4671
      %v4721 = vmul.f32 %v4628, %v4671
      %v4722 = vmul.f32 %v4631, %v4671
      %v4723 = vmul.f32 %v4634, %v4671
      %v4724 = vmul.f32 %v4637, %v4671
      %v4725 = vmul.f32 %v4640, %v4671
      %v4726 = vmul.f32 %v4643, %v4671
      %v4727 = vmul.f32 %v4646, %v4671
      %v4728 = vmul.f32 %v4649, %v4671
      %v4729 = vmul.f32 %v4652, %v4671
      %v4730 = vmul.f32 %v4655, %v4671
      %v4731 = vmul.f32 %v4658, %v4671
      %v4732 = vmul.f32 %v4661, %v4671
      %v4733 = vmul.f32 %v4664, %v4671
      %v4734 = vmul.f32 %v4667, %v4671
      %v4735 = vmul.f32 %v4670, %v4671
      %v4736 = vsub.f32 %v4415, %v4672
      %v4737 = vsub.f32 %v4416, %v4673
      %v4738 = vsub.f32 %v4417, %v4674
      %v4739 = vsub.f32 %v4418, %v4675
      %v4740 = vsub.f32 %v4419, %v4676
      %v4741 = vsub.f32 %v4420, %v4677
      %v4742 = vsub.f32 %v4421, %v4678
      %v4743 = vsub.f32 %v4422, %v4679
      %v4744 = vsub.f32 %v4423, %v4680
      %v4745 = vsub.f32 %v4424, %v4681
      %v4746 = vsub.f32 %v4425, %v4682
      %v4747 = vsub.f32 %v4426, %v4683
      %v4748 = vsub.f32 %v4427, %v4684
      %v4749 = vsub.f32 %v4428, %v4685
      %v4750 = vsub.f32 %v4429, %v4686
      %v4751 = vsub.f32 %v4430, %v4687
      %v4752 = vsub.f32 %v4431, %v4688
      %v4753 = vsub.f32 %v4432, %v4689
      %v4754 = vsub.f32 %v4433, %v4690
      %v4755 = vsub.f32 %v4434, %v4691
      %v4756 = vsub.f32 %v4435, %v4692
      %v4757 = vsub.f32 %v4436, %v4693
      %v4758 = vsub.f32 %v4437, %v4694
      %v4759 = vsub.f32 %v4438, %v4695
      %v4760 = vsub.f32 %v4439, %v4696
      %v4761 = vsub.f32 %v4440, %v4697
      %v4762 = vsub.f32 %v4441, %v4698
      %v4763 = vsub.f32 %v4442, %v4699
      %v4764 = vsub.f32 %v4443, %v4700
      %v4765 = vsub.f32 %v4444, %v4701
      %v4766 = vsub.f32 %v4445, %v4702
      %v4767 = vsub.f32 %v4446, %v4703
      %v4768 = vsub.f32 %v4447, %v4704
      %v4769 = vsub.f32 %v4448, %v4705
      %v4770 = vsub.f32 %v4449, %v4706
      %v4771 = vsub.f32 %v4450, %v4707
      %v4772 = vsub.f32 %v4451, %v4708
      %v4773 = vsub.f32 %v4452, %v4709
      %v4774 = vsub.f32 %v4453, %v4710
      %v4775 = vsub.f32 %v4454, %v4711
      %v4776 = vsub.f32 %v4455, %v4712
      %v4777 = vsub.f32 %v4456, %v4713
      %v4778 = vsub.f32 %v4457, %v4714
      %v4779 = vsub.f32 %v4458, %v4715
      %v4780 = vsub.f32 %v4459, %v4716
      %v4781 = vsub.f32 %v4460, %v4717
      %v4782 = vsub.f32 %v4461, %v4718
      %v4783 = vsub.f32 %v4462, %v4719
      %v4784 = vsub.f32 %v4463, %v4720
      %v4785 = vsub.f32 %v4464, %v4721
      %v4786 = vsub.f32 %v4465, %v4722
      %v4787 = vsub.f32 %v4466, %v4723
      %v4788 = vsub.f32 %v4467, %v4724
      %v4789 = vsub.f32 %v4468, %v4725
      %v4790 = vsub.f32 %v4469, %v4726
      %v4791 = vsub.f32 %v4470, %v4727
      %v4792 = vsub.f32 %v4471, %v4728
      %v4793 = vsub.f32 %v4472, %v4729
      %v4794 = vsub.f32 %v4473, %v4730
      %v4795 = vsub.f32 %v4474, %v4731
      %v4796 = vsub.f32 %v4475, %v4732
      %v4797 = vsub.f32 %v4476, %v4733
      %v4798 = vsub.f32 %v4477, %v4734
      %v4799 = vsub.f32 %v4478, %v4735
      %v4800 = vmul.f32 %v4736, %v4736
      %v4801 = vmul.f32 %v4737, %v4737
      %v4802 = vmul.f32 %v4738, %v4738
      %v4803 = vmul.f32 %v4739, %v4739
      %v4804 = vmul.f32 %v4740, %v4740
      %v4805 = vmul.f32 %v4741, %v4741
      %v4806 = vmul.f32 %v4742, %v4742
      %v4807 = vmul.f32 %v4743, %v4743
      %v4808 = vmul.f32 %v4744, %v4744
      %v4809 = vmul.f32 %v4745, %v4745
      %v4810 = vmul.f32 %v4746, %v4746
      %v4811 = vmul.f32 %v4747, %v4747
      %v4812 = vmul.f32 %v4748, %v4748
      %v4813 = vmul.f32 %v4749, %v4749
      %v4814 = vmul.f32 %v4750, %v4750
      %v4815 = vmul.f32 %v4751, %v4751
      %v4816 = vmul.f32 %v4752, %v4752
      %v4817 = vmul.f32 %v4753, %v4753
      %v4818 = vmul.f32 %v4754, %v4754
      %v4819 = vmul.f32 %v4755, %v4755
      %v4820 = vmul.f32 %v4756, %v4756
      %v4821 = vmul.f32 %v4757, %v4757
      %v4822 = vmul.f32 %v4758, %v4758
      %v4823 = vmul.f32 %v4759, %v4759
      %v4824 = vmul.f32 %v4760, %v4760
      %v4825 = vmul.f32 %v4761, %v4761
      %v4826 = vmul.f32 %v4762, %v4762
      %v4827 = vmul.f32 %v4763, %v4763
      %v4828 = vmul.f32 %v4764, %v4764
      %v4829 = vmul.f32 %v4765, %v4765
      %v4830 = vmul.f32 %v4766, %v4766
      %v4831 = vmul.f32 %v4767, %v4767
      %v4832 = vmul.f32 %v4768, %v4768
      %v4833 = vmul.f32 %v4769, %v4769
      %v4834 = vmul.f32 %v4770, %v4770
      %v4835 = vmul.f32 %v4771, %v4771
      %v4836 = vmul.f32 %v4772, %v4772
      %v4837 = vmul.f32 %v4773, %v4773
      %v4838 = vmul.f32 %v4774, %v4774
      %v4839 = vmul.f32 %v4775, %v4775
      %v4840 = vmul.f32 %v4776, %v4776
      %v4841 = vmul.f32 %v4777, %v4777
      %v4842 = vmul.f32 %v4778, %v4778
      %v4843 = vmul.f32 %v4779, %v4779
      %v4844 = vmul.f32 %v4780, %v4780
      %v4845 = vmul.f32 %v4781, %v4781
      %v4846 = vmul.f32 %v4782, %v4782
      %v4847 = vmul.f32 %v4783, %v4783
      %v4848 = vmul.f32 %v4784, %v4784
      %v4849 = vmul.f32 %v4785, %v4785
      %v4850 = vmul.f32 %v4786, %v4786
      %v4851 = vmul.f32 %v4787, %v4787
      %v4852 = vmul.f32 %v4788, %v4788
      %v4853 = vmul.f32 %v4789, %v4789
      %v4854 = vmul.f32 %v4790, %v4790
      %v4855 = vmul.f32 %v4791, %v4791
      %v4856 = vmul.f32 %v4792, %v4792
      %v4857 = vmul.f32 %v4793, %v4793
      %v4858 = vmul.f32 %v4794, %v4794
      %v4859 = vmul.f32 %v4795, %v4795
      %v4860 = vmul.f32 %v4796, %v4796
      %v4861 = vmul.f32 %v4797, %v4797
      %v4862 = vmul.f32 %v4798, %v4798
      %v4863 = vmul.f32 %v4799, %v4799
      %v4864 = vsel %vm843, %v4800, 0.0
      %4865 = vadd.xlane.f32.xlu0 %v4864
      %v4866 = vpop.xlane.xlu0 %4865
      %v4867 = vsel %vm843, %v4801, 0.0
      %4868 = vadd.xlane.f32.xlu0 %v4867
      %v4869 = vpop.xlane.xlu0 %4868
      %v4870 = vsel %vm843, %v4802, 0.0
      %4871 = vadd.xlane.f32.xlu0 %v4870
      %v4872 = vpop.xlane.xlu0 %4871
      %v4873 = vsel %vm843, %v4803, 0.0
      %4874 = vadd.xlane.f32.xlu0 %v4873
      %v4875 = vpop.xlane.xlu0 %4874
      %v4876 = vsel %vm843, %v4804, 0.0
      %4877 = vadd.xlane.f32.xlu0 %v4876
      %v4878 = vpop.xlane.xlu0 %4877
      %v4879 = vsel %vm843, %v4805, 0.0
      %4880 = vadd.xlane.f32.xlu0 %v4879
      %v4881 = vpop.xlane.xlu0 %4880
      %v4882 = vsel %vm843, %v4806, 0.0
      %4883 = vadd.xlane.f32.xlu0 %v4882
      %v4884 = vpop.xlane.xlu0 %4883
      %v4885 = vsel %vm843, %v4807, 0.0
      %4886 = vadd.xlane.f32.xlu0 %v4885
      %v4887 = vpop.xlane.xlu0 %4886
      %v4888 = vsel %vm843, %v4808, 0.0
      %4889 = vadd.xlane.f32.xlu0 %v4888
      %v4890 = vpop.xlane.xlu0 %4889
      %v4891 = vsel %vm843, %v4809, 0.0
      %4892 = vadd.xlane.f32.xlu0 %v4891
      %v4893 = vpop.xlane.xlu0 %4892
      %v4894 = vsel %vm843, %v4810, 0.0
      %4895 = vadd.xlane.f32.xlu0 %v4894
      %v4896 = vpop.xlane.xlu0 %4895
      %v4897 = vsel %vm843, %v4811, 0.0
      %4898 = vadd.xlane.f32.xlu0 %v4897
      %v4899 = vpop.xlane.xlu0 %4898
      %v4900 = vsel %vm843, %v4812, 0.0
      %4901 = vadd.xlane.f32.xlu0 %v4900
      %v4902 = vpop.xlane.xlu0 %4901
      %v4903 = vsel %vm843, %v4813, 0.0
      %4904 = vadd.xlane.f32.xlu0 %v4903
      %v4905 = vpop.xlane.xlu0 %4904
      %v4906 = vsel %vm843, %v4814, 0.0
      %4907 = vadd.xlane.f32.xlu0 %v4906
      %v4908 = vpop.xlane.xlu0 %4907
      %v4909 = vsel %vm843, %v4815, 0.0
      %4910 = vadd.xlane.f32.xlu0 %v4909
      %v4911 = vpop.xlane.xlu0 %4910
      %v4912 = vsel %vm843, %v4816, 0.0
      %4913 = vadd.xlane.f32.xlu0 %v4912
      %v4914 = vpop.xlane.xlu0 %4913
      %v4915 = vsel %vm843, %v4817, 0.0
      %4916 = vadd.xlane.f32.xlu0 %v4915
      %v4917 = vpop.xlane.xlu0 %4916
      %v4918 = vsel %vm843, %v4818, 0.0
      %4919 = vadd.xlane.f32.xlu0 %v4918
      %v4920 = vpop.xlane.xlu0 %4919
      %v4921 = vsel %vm843, %v4819, 0.0
      %4922 = vadd.xlane.f32.xlu0 %v4921
      %v4923 = vpop.xlane.xlu0 %4922
      %v4924 = vsel %vm843, %v4820, 0.0
      %4925 = vadd.xlane.f32.xlu0 %v4924
      %v4926 = vpop.xlane.xlu0 %4925
      %v4927 = vsel %vm843, %v4821, 0.0
      %4928 = vadd.xlane.f32.xlu0 %v4927
      %v4929 = vpop.xlane.xlu0 %4928
      %v4930 = vsel %vm843, %v4822, 0.0
      %4931 = vadd.xlane.f32.xlu0 %v4930
      %v4932 = vpop.xlane.xlu0 %4931
      %v4933 = vsel %vm843, %v4823, 0.0
      %4934 = vadd.xlane.f32.xlu0 %v4933
      %v4935 = vpop.xlane.xlu0 %4934
      %v4936 = vsel %vm843, %v4824, 0.0
      %4937 = vadd.xlane.f32.xlu0 %v4936
      %v4938 = vpop.xlane.xlu0 %4937
      %v4939 = vsel %vm843, %v4825, 0.0
      %4940 = vadd.xlane.f32.xlu0 %v4939
      %v4941 = vpop.xlane.xlu0 %4940
      %v4942 = vsel %vm843, %v4826, 0.0
      %4943 = vadd.xlane.f32.xlu0 %v4942
      %v4944 = vpop.xlane.xlu0 %4943
      %v4945 = vsel %vm843, %v4827, 0.0
      %4946 = vadd.xlane.f32.xlu0 %v4945
      %v4947 = vpop.xlane.xlu0 %4946
      %v4948 = vsel %vm843, %v4828, 0.0
      %4949 = vadd.xlane.f32.xlu0 %v4948
      %v4950 = vpop.xlane.xlu0 %4949
      %v4951 = vsel %vm843, %v4829, 0.0
      %4952 = vadd.xlane.f32.xlu0 %v4951
      %v4953 = vpop.xlane.xlu0 %4952
      %v4954 = vsel %vm843, %v4830, 0.0
      %4955 = vadd.xlane.f32.xlu0 %v4954
      %v4956 = vpop.xlane.xlu0 %4955
      %v4957 = vsel %vm843, %v4831, 0.0
      %4958 = vadd.xlane.f32.xlu0 %v4957
      %v4959 = vpop.xlane.xlu0 %4958
      %v4960 = vsel %vm843, %v4832, 0.0
      %4961 = vadd.xlane.f32.xlu0 %v4960
      %v4962 = vpop.xlane.xlu0 %4961
      %v4963 = vsel %vm843, %v4833, 0.0
      %4964 = vadd.xlane.f32.xlu0 %v4963
      %v4965 = vpop.xlane.xlu0 %4964
      %v4966 = vsel %vm843, %v4834, 0.0
      %4967 = vadd.xlane.f32.xlu0 %v4966
      %v4968 = vpop.xlane.xlu0 %4967
      %v4969 = vsel %vm843, %v4835, 0.0
      %4970 = vadd.xlane.f32.xlu0 %v4969
      %v4971 = vpop.xlane.xlu0 %4970
      %v4972 = vsel %vm843, %v4836, 0.0
      %4973 = vadd.xlane.f32.xlu0 %v4972
      %v4974 = vpop.xlane.xlu0 %4973
      %v4975 = vsel %vm843, %v4837, 0.0
      %4976 = vadd.xlane.f32.xlu0 %v4975
      %v4977 = vpop.xlane.xlu0 %4976
      %v4978 = vsel %vm843, %v4838, 0.0
      %4979 = vadd.xlane.f32.xlu0 %v4978
      %v4980 = vpop.xlane.xlu0 %4979
      %v4981 = vsel %vm843, %v4839, 0.0
      %4982 = vadd.xlane.f32.xlu0 %v4981
      %v4983 = vpop.xlane.xlu0 %4982
      %v4984 = vsel %vm843, %v4840, 0.0
      %4985 = vadd.xlane.f32.xlu0 %v4984
      %v4986 = vpop.xlane.xlu0 %4985
      %v4987 = vsel %vm843, %v4841, 0.0
      %4988 = vadd.xlane.f32.xlu0 %v4987
      %v4989 = vpop.xlane.xlu0 %4988
      %v4990 = vsel %vm843, %v4842, 0.0
      %4991 = vadd.xlane.f32.xlu0 %v4990
      %v4992 = vpop.xlane.xlu0 %4991
      %v4993 = vsel %vm843, %v4843, 0.0
      %4994 = vadd.xlane.f32.xlu0 %v4993
      %v4995 = vpop.xlane.xlu0 %4994
      %v4996 = vsel %vm843, %v4844, 0.0
      %4997 = vadd.xlane.f32.xlu0 %v4996
      %v4998 = vpop.xlane.xlu0 %4997
      %v4999 = vsel %vm843, %v4845, 0.0
      %5000 = vadd.xlane.f32.xlu0 %v4999
      %v5001 = vpop.xlane.xlu0 %5000
      %v5002 = vsel %vm843, %v4846, 0.0
      %5003 = vadd.xlane.f32.xlu0 %v5002
      %v5004 = vpop.xlane.xlu0 %5003
      %v5005 = vsel %vm843, %v4847, 0.0
      %5006 = vadd.xlane.f32.xlu0 %v5005
      %v5007 = vpop.xlane.xlu0 %5006
      %v5008 = vsel %vm843, %v4848, 0.0
      %5009 = vadd.xlane.f32.xlu0 %v5008
      %v5010 = vpop.xlane.xlu0 %5009
      %v5011 = vsel %vm843, %v4849, 0.0
      %5012 = vadd.xlane.f32.xlu0 %v5011
      %v5013 = vpop.xlane.xlu0 %5012
      %v5014 = vsel %vm843, %v4850, 0.0
      %5015 = vadd.xlane.f32.xlu0 %v5014
      %v5016 = vpop.xlane.xlu0 %5015
      %v5017 = vsel %vm843, %v4851, 0.0
      %5018 = vadd.xlane.f32.xlu0 %v5017
      %v5019 = vpop.xlane.xlu0 %5018
      %v5020 = vsel %vm843, %v4852, 0.0
      %5021 = vadd.xlane.f32.xlu0 %v5020
      %v5022 = vpop.xlane.xlu0 %5021
      %v5023 = vsel %vm843, %v4853, 0.0
      %5024 = vadd.xlane.f32.xlu0 %v5023
      %v5025 = vpop.xlane.xlu0 %5024
      %v5026 = vsel %vm843, %v4854, 0.0
      %5027 = vadd.xlane.f32.xlu0 %v5026
      %v5028 = vpop.xlane.xlu0 %5027
      %v5029 = vsel %vm843, %v4855, 0.0
      %5030 = vadd.xlane.f32.xlu0 %v5029
      %v5031 = vpop.xlane.xlu0 %5030
      %v5032 = vsel %vm843, %v4856, 0.0
      %5033 = vadd.xlane.f32.xlu0 %v5032
      %v5034 = vpop.xlane.xlu0 %5033
      %v5035 = vsel %vm843, %v4857, 0.0
      %5036 = vadd.xlane.f32.xlu0 %v5035
      %v5037 = vpop.xlane.xlu0 %5036
      %v5038 = vsel %vm843, %v4858, 0.0
      %5039 = vadd.xlane.f32.xlu0 %v5038
      %v5040 = vpop.xlane.xlu0 %5039
      %v5041 = vsel %vm843, %v4859, 0.0
      %5042 = vadd.xlane.f32.xlu0 %v5041
      %v5043 = vpop.xlane.xlu0 %5042
      %v5044 = vsel %vm843, %v4860, 0.0
      %5045 = vadd.xlane.f32.xlu0 %v5044
      %v5046 = vpop.xlane.xlu0 %5045
      %v5047 = vsel %vm843, %v4861, 0.0
      %5048 = vadd.xlane.f32.xlu0 %v5047
      %v5049 = vpop.xlane.xlu0 %5048
      %v5050 = vsel %vm843, %v4862, 0.0
      %5051 = vadd.xlane.f32.xlu0 %v5050
      %v5052 = vpop.xlane.xlu0 %5051
      %v5053 = vsel %vm843, %v4863, 0.0
      %5054 = vadd.xlane.f32.xlu0 %v5053
      %v5055 = vpop.xlane.xlu0 %5054
      %v5056 = vmul.f32 %v4866, %v4671
      %v5057 = vmul.f32 %v4869, %v4671
      %v5058 = vmul.f32 %v4872, %v4671
      %v5059 = vmul.f32 %v4875, %v4671
      %v5060 = vmul.f32 %v4878, %v4671
      %v5061 = vmul.f32 %v4881, %v4671
      %v5062 = vmul.f32 %v4884, %v4671
      %v5063 = vmul.f32 %v4887, %v4671
      %v5064 = vmul.f32 %v4890, %v4671
      %v5065 = vmul.f32 %v4893, %v4671
      %v5066 = vmul.f32 %v4896, %v4671
      %v5067 = vmul.f32 %v4899, %v4671
      %v5068 = vmul.f32 %v4902, %v4671
      %v5069 = vmul.f32 %v4905, %v4671
      %v5070 = vmul.f32 %v4908, %v4671
      %v5071 = vmul.f32 %v4911, %v4671
      %v5072 = vmul.f32 %v4914, %v4671
      %v5073 = vmul.f32 %v4917, %v4671
      %v5074 = vmul.f32 %v4920, %v4671
      %v5075 = vmul.f32 %v4923, %v4671
      %v5076 = vmul.f32 %v4926, %v4671
      %v5077 = vmul.f32 %v4929, %v4671
      %v5078 = vmul.f32 %v4932, %v4671
      %v5079 = vmul.f32 %v4935, %v4671
      %v5080 = vmul.f32 %v4938, %v4671
      %v5081 = vmul.f32 %v4941, %v4671
      %v5082 = vmul.f32 %v4944, %v4671
      %v5083 = vmul.f32 %v4947, %v4671
      %v5084 = vmul.f32 %v4950, %v4671
      %v5085 = vmul.f32 %v4953, %v4671
      %v5086 = vmul.f32 %v4956, %v4671
      %v5087 = vmul.f32 %v4959, %v4671
      %v5088 = vmul.f32 %v4962, %v4671
      %v5089 = vmul.f32 %v4965, %v4671
      %v5090 = vmul.f32 %v4968, %v4671
      %v5091 = vmul.f32 %v4971, %v4671
      %v5092 = vmul.f32 %v4974, %v4671
      %v5093 = vmul.f32 %v4977, %v4671
      %v5094 = vmul.f32 %v4980, %v4671
      %v5095 = vmul.f32 %v4983, %v4671
      %v5096 = vmul.f32 %v4986, %v4671
      %v5097 = vmul.f32 %v4989, %v4671
      %v5098 = vmul.f32 %v4992, %v4671
      %v5099 = vmul.f32 %v4995, %v4671
      %v5100 = vmul.f32 %v4998, %v4671
      %v5101 = vmul.f32 %v5001, %v4671
      %v5102 = vmul.f32 %v5004, %v4671
      %v5103 = vmul.f32 %v5007, %v4671
      %v5104 = vmul.f32 %v5010, %v4671
      %v5105 = vmul.f32 %v5013, %v4671
      %v5106 = vmul.f32 %v5016, %v4671
      %v5107 = vmul.f32 %v5019, %v4671
      %v5108 = vmul.f32 %v5022, %v4671
      %v5109 = vmul.f32 %v5025, %v4671
      %v5110 = vmul.f32 %v5028, %v4671
      %v5111 = vmul.f32 %v5031, %v4671
      %v5112 = vmul.f32 %v5034, %v4671
      %v5113 = vmul.f32 %v5037, %v4671
      %v5114 = vmul.f32 %v5040, %v4671
      %v5115 = vmul.f32 %v5043, %v4671
      %v5116 = vmul.f32 %v5046, %v4671
      %v5117 = vmul.f32 %v5049, %v4671
      %v5118 = vmul.f32 %v5052, %v4671
      %v5119 = vmul.f32 %v5055, %v4671
      %v5120 = vadd.f32 %v5056, 1e-05
      %v5121 = vadd.f32 %v5057, 1e-05
      %v5122 = vadd.f32 %v5058, 1e-05
      %v5123 = vadd.f32 %v5059, 1e-05
      %v5124 = vadd.f32 %v5060, 1e-05
      %v5125 = vadd.f32 %v5061, 1e-05
      %v5126 = vadd.f32 %v5062, 1e-05
      %v5127 = vadd.f32 %v5063, 1e-05
      %v5128 = vadd.f32 %v5064, 1e-05
      %v5129 = vadd.f32 %v5065, 1e-05
      %v5130 = vadd.f32 %v5066, 1e-05
      %v5131 = vadd.f32 %v5067, 1e-05
      %v5132 = vadd.f32 %v5068, 1e-05
      %v5133 = vadd.f32 %v5069, 1e-05
      %v5134 = vadd.f32 %v5070, 1e-05
      %v5135 = vadd.f32 %v5071, 1e-05
      %v5136 = vadd.f32 %v5072, 1e-05
      %v5137 = vadd.f32 %v5073, 1e-05
      %v5138 = vadd.f32 %v5074, 1e-05
      %v5139 = vadd.f32 %v5075, 1e-05
      %v5140 = vadd.f32 %v5076, 1e-05
      %v5141 = vadd.f32 %v5077, 1e-05
      %v5142 = vadd.f32 %v5078, 1e-05
      %v5143 = vadd.f32 %v5079, 1e-05
      %v5144 = vadd.f32 %v5080, 1e-05
      %v5145 = vadd.f32 %v5081, 1e-05
      %v5146 = vadd.f32 %v5082, 1e-05
      %v5147 = vadd.f32 %v5083, 1e-05
      %v5148 = vadd.f32 %v5084, 1e-05
      %v5149 = vadd.f32 %v5085, 1e-05
      %v5150 = vadd.f32 %v5086, 1e-05
      %v5151 = vadd.f32 %v5087, 1e-05
      %v5152 = vadd.f32 %v5088, 1e-05
      %v5153 = vadd.f32 %v5089, 1e-05
      %v5154 = vadd.f32 %v5090, 1e-05
      %v5155 = vadd.f32 %v5091, 1e-05
      %v5156 = vadd.f32 %v5092, 1e-05
      %v5157 = vadd.f32 %v5093, 1e-05
      %v5158 = vadd.f32 %v5094, 1e-05
      %v5159 = vadd.f32 %v5095, 1e-05
      %v5160 = vadd.f32 %v5096, 1e-05
      %v5161 = vadd.f32 %v5097, 1e-05
      %v5162 = vadd.f32 %v5098, 1e-05
      %v5163 = vadd.f32 %v5099, 1e-05
      %v5164 = vadd.f32 %v5100, 1e-05
      %v5165 = vadd.f32 %v5101, 1e-05
      %v5166 = vadd.f32 %v5102, 1e-05
      %v5167 = vadd.f32 %v5103, 1e-05
      %v5168 = vadd.f32 %v5104, 1e-05
      %v5169 = vadd.f32 %v5105, 1e-05
      %v5170 = vadd.f32 %v5106, 1e-05
      %v5171 = vadd.f32 %v5107, 1e-05
      %v5172 = vadd.f32 %v5108, 1e-05
      %v5173 = vadd.f32 %v5109, 1e-05
      %v5174 = vadd.f32 %v5110, 1e-05
      %v5175 = vadd.f32 %v5111, 1e-05
      %v5176 = vadd.f32 %v5112, 1e-05
      %v5177 = vadd.f32 %v5113, 1e-05
      %v5178 = vadd.f32 %v5114, 1e-05
      %v5179 = vadd.f32 %v5115, 1e-05
      %v5180 = vadd.f32 %v5116, 1e-05
      %v5181 = vadd.f32 %v5117, 1e-05
      %v5182 = vadd.f32 %v5118, 1e-05
      %v5183 = vadd.f32 %v5119, 1e-05
      %v5184 = vrsqrt.pop %v5120
      %v5185 = vrsqrt.pop %v5121
      %v5186 = vrsqrt.pop %v5122
      %v5187 = vrsqrt.pop %v5123
      %v5188 = vrsqrt.pop %v5124
      %v5189 = vrsqrt.pop %v5125
      %v5190 = vrsqrt.pop %v5126
      %v5191 = vrsqrt.pop %v5127
      %v5192 = vrsqrt.pop %v5128
      %v5193 = vrsqrt.pop %v5129
      %v5194 = vrsqrt.pop %v5130
      %v5195 = vrsqrt.pop %v5131
      %v5196 = vrsqrt.pop %v5132
      %v5197 = vrsqrt.pop %v5133
      %v5198 = vrsqrt.pop %v5134
      %v5199 = vrsqrt.pop %v5135
      %v5200 = vrsqrt.pop %v5136
      %v5201 = vrsqrt.pop %v5137
      %v5202 = vrsqrt.pop %v5138
      %v5203 = vrsqrt.pop %v5139
      %v5204 = vrsqrt.pop %v5140
      %v5205 = vrsqrt.pop %v5141
      %v5206 = vrsqrt.pop %v5142
      %v5207 = vrsqrt.pop %v5143
      %v5208 = vrsqrt.pop %v5144
      %v5209 = vrsqrt.pop %v5145
      %v5210 = vrsqrt.pop %v5146
      %v5211 = vrsqrt.pop %v5147
      %v5212 = vrsqrt.pop %v5148
      %v5213 = vrsqrt.pop %v5149
      %v5214 = vrsqrt.pop %v5150
      %v5215 = vrsqrt.pop %v5151
      %v5216 = vrsqrt.pop %v5152
      %v5217 = vrsqrt.pop %v5153
      %v5218 = vrsqrt.pop %v5154
      %v5219 = vrsqrt.pop %v5155
      %v5220 = vrsqrt.pop %v5156
      %v5221 = vrsqrt.pop %v5157
      %v5222 = vrsqrt.pop %v5158
      %v5223 = vrsqrt.pop %v5159
      %v5224 = vrsqrt.pop %v5160
      %v5225 = vrsqrt.pop %v5161
      %v5226 = vrsqrt.pop %v5162
      %v5227 = vrsqrt.pop %v5163
      %v5228 = vrsqrt.pop %v5164
      %v5229 = vrsqrt.pop %v5165
      %v5230 = vrsqrt.pop %v5166
      %v5231 = vrsqrt.pop %v5167
      %v5232 = vrsqrt.pop %v5168
      %v5233 = vrsqrt.pop %v5169
      %v5234 = vrsqrt.pop %v5170
      %v5235 = vrsqrt.pop %v5171
      %v5236 = vrsqrt.pop %v5172
      %v5237 = vrsqrt.pop %v5173
      %v5238 = vrsqrt.pop %v5174
      %v5239 = vrsqrt.pop %v5175
      %v5240 = vrsqrt.pop %v5176
      %v5241 = vrsqrt.pop %v5177
      %v5242 = vrsqrt.pop %v5178
      %v5243 = vrsqrt.pop %v5179
      %v5244 = vrsqrt.pop %v5180
      %v5245 = vrsqrt.pop %v5181
      %v5246 = vrsqrt.pop %v5182
      %v5247 = vrsqrt.pop %v5183
      %v5248 = vmul.f32 %v4736, %v5184
      %v5249 = vmul.f32 %v4737, %v5185
      %v5250 = vmul.f32 %v4738, %v5186
      %v5251 = vmul.f32 %v4739, %v5187
      %v5252 = vmul.f32 %v4740, %v5188
      %v5253 = vmul.f32 %v4741, %v5189
      %v5254 = vmul.f32 %v4742, %v5190
      %v5255 = vmul.f32 %v4743, %v5191
      %v5256 = vmul.f32 %v4744, %v5192
      %v5257 = vmul.f32 %v4745, %v5193
      %v5258 = vmul.f32 %v4746, %v5194
      %v5259 = vmul.f32 %v4747, %v5195
      %v5260 = vmul.f32 %v4748, %v5196
      %v5261 = vmul.f32 %v4749, %v5197
      %v5262 = vmul.f32 %v4750, %v5198
      %v5263 = vmul.f32 %v4751, %v5199
      %v5264 = vmul.f32 %v4752, %v5200
      %v5265 = vmul.f32 %v4753, %v5201
      %v5266 = vmul.f32 %v4754, %v5202
      %v5267 = vmul.f32 %v4755, %v5203
      %v5268 = vmul.f32 %v4756, %v5204
      %v5269 = vmul.f32 %v4757, %v5205
      %v5270 = vmul.f32 %v4758, %v5206
      %v5271 = vmul.f32 %v4759, %v5207
      %v5272 = vmul.f32 %v4760, %v5208
      %v5273 = vmul.f32 %v4761, %v5209
      %v5274 = vmul.f32 %v4762, %v5210
      %v5275 = vmul.f32 %v4763, %v5211
      %v5276 = vmul.f32 %v4764, %v5212
      %v5277 = vmul.f32 %v4765, %v5213
      %v5278 = vmul.f32 %v4766, %v5214
      %v5279 = vmul.f32 %v4767, %v5215
      %v5280 = vmul.f32 %v4768, %v5216
      %v5281 = vmul.f32 %v4769, %v5217
      %v5282 = vmul.f32 %v4770, %v5218
      %v5283 = vmul.f32 %v4771, %v5219
      %v5284 = vmul.f32 %v4772, %v5220
      %v5285 = vmul.f32 %v4773, %v5221
      %v5286 = vmul.f32 %v4774, %v5222
      %v5287 = vmul.f32 %v4775, %v5223
      %v5288 = vmul.f32 %v4776, %v5224
      %v5289 = vmul.f32 %v4777, %v5225
      %v5290 = vmul.f32 %v4778, %v5226
      %v5291 = vmul.f32 %v4779, %v5227
      %v5292 = vmul.f32 %v4780, %v5228
      %v5293 = vmul.f32 %v4781, %v5229
      %v5294 = vmul.f32 %v4782, %v5230
      %v5295 = vmul.f32 %v4783, %v5231
      %v5296 = vmul.f32 %v4784, %v5232
      %v5297 = vmul.f32 %v4785, %v5233
      %v5298 = vmul.f32 %v4786, %v5234
      %v5299 = vmul.f32 %v4787, %v5235
      %v5300 = vmul.f32 %v4788, %v5236
      %v5301 = vmul.f32 %v4789, %v5237
      %v5302 = vmul.f32 %v4790, %v5238
      %v5303 = vmul.f32 %v4791, %v5239
      %v5304 = vmul.f32 %v4792, %v5240
      %v5305 = vmul.f32 %v4793, %v5241
      %v5306 = vmul.f32 %v4794, %v5242
      %v5307 = vmul.f32 %v4795, %v5243
      %v5308 = vmul.f32 %v4796, %v5244
      %v5309 = vmul.f32 %v4797, %v5245
      %v5310 = vmul.f32 %v4798, %v5246
      %v5311 = vmul.f32 %v4799, %v5247
      %v5312 = vld [vmem:[%s4] sm:$0x1]
      %v5314 = vlaneseq
      %v5315 = vshrl.u32 %v5314, 7
      %v5316 = vsub.s32 0, %v5315
      %v5317 = vrot.slane %v5312, %v5316
      %v5319 = vmul.f32 %v5248, %v5317
      %v5320 = vmul.f32 %v5249, %v5317
      %v5321 = vmul.f32 %v5250, %v5317
      %v5322 = vmul.f32 %v5251, %v5317
      %v5323 = vmul.f32 %v5252, %v5317
      %v5324 = vmul.f32 %v5253, %v5317
      %v5325 = vmul.f32 %v5254, %v5317
      %v5326 = vmul.f32 %v5255, %v5317
      %v5327 = vmul.f32 %v5256, %v5317
      %v5328 = vmul.f32 %v5257, %v5317
      %v5329 = vmul.f32 %v5258, %v5317
      %v5330 = vmul.f32 %v5259, %v5317
      %v5331 = vmul.f32 %v5260, %v5317
      %v5332 = vmul.f32 %v5261, %v5317
      %v5333 = vmul.f32 %v5262, %v5317
      %v5334 = vmul.f32 %v5263, %v5317
      %v5335 = vmul.f32 %v5264, %v5317
      %v5336 = vmul.f32 %v5265, %v5317
      %v5337 = vmul.f32 %v5266, %v5317
      %v5338 = vmul.f32 %v5267, %v5317
      %v5339 = vmul.f32 %v5268, %v5317
      %v5340 = vmul.f32 %v5269, %v5317
      %v5341 = vmul.f32 %v5270, %v5317
      %v5342 = vmul.f32 %v5271, %v5317
      %v5343 = vmul.f32 %v5272, %v5317
      %v5344 = vmul.f32 %v5273, %v5317
      %v5345 = vmul.f32 %v5274, %v5317
      %v5346 = vmul.f32 %v5275, %v5317
      %v5347 = vmul.f32 %v5276, %v5317
      %v5348 = vmul.f32 %v5277, %v5317
      %v5349 = vmul.f32 %v5278, %v5317
      %v5350 = vmul.f32 %v5279, %v5317
      %v5351 = vmul.f32 %v5280, %v5317
      %v5352 = vmul.f32 %v5281, %v5317
      %v5353 = vmul.f32 %v5282, %v5317
      %v5354 = vmul.f32 %v5283, %v5317
      %v5355 = vmul.f32 %v5284, %v5317
      %v5356 = vmul.f32 %v5285, %v5317
      %v5357 = vmul.f32 %v5286, %v5317
      %v5358 = vmul.f32 %v5287, %v5317
      %v5359 = vmul.f32 %v5288, %v5317
      %v5360 = vmul.f32 %v5289, %v5317
      %v5361 = vmul.f32 %v5290, %v5317
      %v5362 = vmul.f32 %v5291, %v5317
      %v5363 = vmul.f32 %v5292, %v5317
      %v5364 = vmul.f32 %v5293, %v5317
      %v5365 = vmul.f32 %v5294, %v5317
      %v5366 = vmul.f32 %v5295, %v5317
      %v5367 = vmul.f32 %v5296, %v5317
      %v5368 = vmul.f32 %v5297, %v5317
      %v5369 = vmul.f32 %v5298, %v5317
      %v5370 = vmul.f32 %v5299, %v5317
      %v5371 = vmul.f32 %v5300, %v5317
      %v5372 = vmul.f32 %v5301, %v5317
      %v5373 = vmul.f32 %v5302, %v5317
      %v5374 = vmul.f32 %v5303, %v5317
      %v5375 = vmul.f32 %v5304, %v5317
      %v5376 = vmul.f32 %v5305, %v5317
      %v5377 = vmul.f32 %v5306, %v5317
      %v5378 = vmul.f32 %v5307, %v5317
      %v5379 = vmul.f32 %v5308, %v5317
      %v5380 = vmul.f32 %v5309, %v5317
      %v5381 = vmul.f32 %v5310, %v5317
      %v5382 = vmul.f32 %v5311, %v5317
      %v5383 = vld [vmem:[%s5] sm:$0x1]
      %v5385 = vlaneseq
      %v5386 = vshrl.u32 %v5385, 7
      %v5387 = vsub.s32 0, %v5386
      %v5388 = vrot.slane %v5383, %v5387
      %v5390 = vadd.f32 %v5319, %v5388
      %v5391 = vadd.f32 %v5320, %v5388
      %v5392 = vadd.f32 %v5321, %v5388
      %v5393 = vadd.f32 %v5322, %v5388
      %v5394 = vadd.f32 %v5323, %v5388
      %v5395 = vadd.f32 %v5324, %v5388
      %v5396 = vadd.f32 %v5325, %v5388
      %v5397 = vadd.f32 %v5326, %v5388
      %v5398 = vadd.f32 %v5327, %v5388
      %v5399 = vadd.f32 %v5328, %v5388
      %v5400 = vadd.f32 %v5329, %v5388
      %v5401 = vadd.f32 %v5330, %v5388
      %v5402 = vadd.f32 %v5331, %v5388
      %v5403 = vadd.f32 %v5332, %v5388
      %v5404 = vadd.f32 %v5333, %v5388
      %v5405 = vadd.f32 %v5334, %v5388
      %v5406 = vadd.f32 %v5335, %v5388
      %v5407 = vadd.f32 %v5336, %v5388
      %v5408 = vadd.f32 %v5337, %v5388
      %v5409 = vadd.f32 %v5338, %v5388
      %v5410 = vadd.f32 %v5339, %v5388
      %v5411 = vadd.f32 %v5340, %v5388
      %v5412 = vadd.f32 %v5341, %v5388
      %v5413 = vadd.f32 %v5342, %v5388
      %v5414 = vadd.f32 %v5343, %v5388
      %v5415 = vadd.f32 %v5344, %v5388
      %v5416 = vadd.f32 %v5345, %v5388
      %v5417 = vadd.f32 %v5346, %v5388
      %v5418 = vadd.f32 %v5347, %v5388
      %v5419 = vadd.f32 %v5348, %v5388
      %v5420 = vadd.f32 %v5349, %v5388
      %v5421 = vadd.f32 %v5350, %v5388
      %v5422 = vadd.f32 %v5351, %v5388
      %v5423 = vadd.f32 %v5352, %v5388
      %v5424 = vadd.f32 %v5353, %v5388
      %v5425 = vadd.f32 %v5354, %v5388
      %v5426 = vadd.f32 %v5355, %v5388
      %v5427 = vadd.f32 %v5356, %v5388
      %v5428 = vadd.f32 %v5357, %v5388
      %v5429 = vadd.f32 %v5358, %v5388
      %v5430 = vadd.f32 %v5359, %v5388
      %v5431 = vadd.f32 %v5360, %v5388
      %v5432 = vadd.f32 %v5361, %v5388
      %v5433 = vadd.f32 %v5362, %v5388
      %v5434 = vadd.f32 %v5363, %v5388
      %v5435 = vadd.f32 %v5364, %v5388
      %v5436 = vadd.f32 %v5365, %v5388
      %v5437 = vadd.f32 %v5366, %v5388
      %v5438 = vadd.f32 %v5367, %v5388
      %v5439 = vadd.f32 %v5368, %v5388
      %v5440 = vadd.f32 %v5369, %v5388
      %v5441 = vadd.f32 %v5370, %v5388
      %v5442 = vadd.f32 %v5371, %v5388
      %v5443 = vadd.f32 %v5372, %v5388
      %v5444 = vadd.f32 %v5373, %v5388
      %v5445 = vadd.f32 %v5374, %v5388
      %v5446 = vadd.f32 %v5375, %v5388
      %v5447 = vadd.f32 %v5376, %v5388
      %v5448 = vadd.f32 %v5377, %v5388
      %v5449 = vadd.f32 %v5378, %v5388
      %v5450 = vadd.f32 %v5379, %v5388
      %v5451 = vadd.f32 %v5380, %v5388
      %v5452 = vadd.f32 %v5381, %v5388
      %v5453 = vadd.f32 %v5382, %v5388
      %v5454 = vsub.f32 0.0, %v5390
      %v5455 = vsub.f32 0.0, %v5391
      %v5456 = vsub.f32 0.0, %v5392
      %v5457 = vsub.f32 0.0, %v5393
      %v5458 = vsub.f32 0.0, %v5394
      %v5459 = vsub.f32 0.0, %v5395
      %v5460 = vsub.f32 0.0, %v5396
      %v5461 = vsub.f32 0.0, %v5397
      %v5462 = vsub.f32 0.0, %v5398
      %v5463 = vsub.f32 0.0, %v5399
      %v5464 = vsub.f32 0.0, %v5400
      %v5465 = vsub.f32 0.0, %v5401
      %v5466 = vsub.f32 0.0, %v5402
      %v5467 = vsub.f32 0.0, %v5403
      %v5468 = vsub.f32 0.0, %v5404
      %v5469 = vsub.f32 0.0, %v5405
      %v5470 = vsub.f32 0.0, %v5406
      %v5471 = vsub.f32 0.0, %v5407
      %v5472 = vsub.f32 0.0, %v5408
      %v5473 = vsub.f32 0.0, %v5409
      %v5474 = vsub.f32 0.0, %v5410
      %v5475 = vsub.f32 0.0, %v5411
      %v5476 = vsub.f32 0.0, %v5412
      %v5477 = vsub.f32 0.0, %v5413
      %v5478 = vsub.f32 0.0, %v5414
      %v5479 = vsub.f32 0.0, %v5415
      %v5480 = vsub.f32 0.0, %v5416
      %v5481 = vsub.f32 0.0, %v5417
      %v5482 = vsub.f32 0.0, %v5418
      %v5483 = vsub.f32 0.0, %v5419
      %v5484 = vsub.f32 0.0, %v5420
      %v5485 = vsub.f32 0.0, %v5421
      %v5486 = vsub.f32 0.0, %v5422
      %v5487 = vsub.f32 0.0, %v5423
      %v5488 = vsub.f32 0.0, %v5424
      %v5489 = vsub.f32 0.0, %v5425
      %v5490 = vsub.f32 0.0, %v5426
      %v5491 = vsub.f32 0.0, %v5427
      %v5492 = vsub.f32 0.0, %v5428
      %v5493 = vsub.f32 0.0, %v5429
      %v5494 = vsub.f32 0.0, %v5430
      %v5495 = vsub.f32 0.0, %v5431
      %v5496 = vsub.f32 0.0, %v5432
      %v5497 = vsub.f32 0.0, %v5433
      %v5498 = vsub.f32 0.0, %v5434
      %v5499 = vsub.f32 0.0, %v5435
      %v5500 = vsub.f32 0.0, %v5436
      %v5501 = vsub.f32 0.0, %v5437
      %v5502 = vsub.f32 0.0, %v5438
      %v5503 = vsub.f32 0.0, %v5439
      %v5504 = vsub.f32 0.0, %v5440
      %v5505 = vsub.f32 0.0, %v5441
      %v5506 = vsub.f32 0.0, %v5442
      %v5507 = vsub.f32 0.0, %v5443
      %v5508 = vsub.f32 0.0, %v5444
      %v5509 = vsub.f32 0.0, %v5445
      %v5510 = vsub.f32 0.0, %v5446
      %v5511 = vsub.f32 0.0, %v5447
      %v5512 = vsub.f32 0.0, %v5448
      %v5513 = vsub.f32 0.0, %v5449
      %v5514 = vsub.f32 0.0, %v5450
      %v5515 = vsub.f32 0.0, %v5451
      %v5516 = vsub.f32 0.0, %v5452
      %v5517 = vsub.f32 0.0, %v5453
      %v5518 = vmul.f32 %v5454, 1.442695
      %v5519 = vpow.pop %v5518
      %v5520 = vmul.f32 %v5455, 1.442695
      %v5521 = vpow.pop %v5520
      %v5522 = vmul.f32 %v5456, 1.442695
      %v5523 = vpow.pop %v5522
      %v5524 = vmul.f32 %v5457, 1.442695
      %v5525 = vpow.pop %v5524
      %v5526 = vmul.f32 %v5458, 1.442695
      %v5527 = vpow.pop %v5526
      %v5528 = vmul.f32 %v5459, 1.442695
      %v5529 = vpow.pop %v5528
      %v5530 = vmul.f32 %v5460, 1.442695
      %v5531 = vpow.pop %v5530
      %v5532 = vmul.f32 %v5461, 1.442695
      %v5533 = vpow.pop %v5532
      %v5534 = vmul.f32 %v5462, 1.442695
      %v5535 = vpow.pop %v5534
      %v5536 = vmul.f32 %v5463, 1.442695
      %v5537 = vpow.pop %v5536
      %v5538 = vmul.f32 %v5464, 1.442695
      %v5539 = vpow.pop %v5538
      %v5540 = vmul.f32 %v5465, 1.442695
      %v5541 = vpow.pop %v5540
      %v5542 = vmul.f32 %v5466, 1.442695
      %v5543 = vpow.pop %v5542
      %v5544 = vmul.f32 %v5467, 1.442695
      %v5545 = vpow.pop %v5544
      %v5546 = vmul.f32 %v5468, 1.442695
      %v5547 = vpow.pop %v5546
      %v5548 = vmul.f32 %v5469, 1.442695
      %v5549 = vpow.pop %v5548
      %v5550 = vmul.f32 %v5470, 1.442695
      %v5551 = vpow.pop %v5550
      %v5552 = vmul.f32 %v5471, 1.442695
      %v5553 = vpow.pop %v5552
      %v5554 = vmul.f32 %v5472, 1.442695
      %v5555 = vpow.pop %v5554
      %v5556 = vmul.f32 %v5473, 1.442695
      %v5557 = vpow.pop %v5556
      %v5558 = vmul.f32 %v5474, 1.442695
      %v5559 = vpow.pop %v5558
      %v5560 = vmul.f32 %v5475, 1.442695
      %v5561 = vpow.pop %v5560
      %v5562 = vmul.f32 %v5476, 1.442695
      %v5563 = vpow.pop %v5562
      %v5564 = vmul.f32 %v5477, 1.442695
      %v5565 = vpow.pop %v5564
      %v5566 = vmul.f32 %v5478, 1.442695
      %v5567 = vpow.pop %v5566
      %v5568 = vmul.f32 %v5479, 1.442695
      %v5569 = vpow.pop %v5568
      %v5570 = vmul.f32 %v5480, 1.442695
      %v5571 = vpow.pop %v5570
      %v5572 = vmul.f32 %v5481, 1.442695
      %v5573 = vpow.pop %v5572
      %v5574 = vmul.f32 %v5482, 1.442695
      %v5575 = vpow.pop %v5574
      %v5576 = vmul.f32 %v5483, 1.442695
      %v5577 = vpow.pop %v5576
      %v5578 = vmul.f32 %v5484, 1.442695
      %v5579 = vpow.pop %v5578
      %v5580 = vmul.f32 %v5485, 1.442695
      %v5581 = vpow.pop %v5580
      %v5582 = vmul.f32 %v5486, 1.442695
      %v5583 = vpow.pop %v5582
      %v5584 = vmul.f32 %v5487, 1.442695
      %v5585 = vpow.pop %v5584
      %v5586 = vmul.f32 %v5488, 1.442695
      %v5587 = vpow.pop %v5586
      %v5588 = vmul.f32 %v5489, 1.442695
      %v5589 = vpow.pop %v5588
      %v5590 = vmul.f32 %v5490, 1.442695
      %v5591 = vpow.pop %v5590
      %v5592 = vmul.f32 %v5491, 1.442695
      %v5593 = vpow.pop %v5592
      %v5594 = vmul.f32 %v5492, 1.442695
      %v5595 = vpow.pop %v5594
      %v5596 = vmul.f32 %v5493, 1.442695
      %v5597 = vpow.pop %v5596
      %v5598 = vmul.f32 %v5494, 1.442695
      %v5599 = vpow.pop %v5598
      %v5600 = vmul.f32 %v5495, 1.442695
      %v5601 = vpow.pop %v5600
      %v5602 = vmul.f32 %v5496, 1.442695
      %v5603 = vpow.pop %v5602
      %v5604 = vmul.f32 %v5497, 1.442695
      %v5605 = vpow.pop %v5604
      %v5606 = vmul.f32 %v5498, 1.442695
      %v5607 = vpow.pop %v5606
      %v5608 = vmul.f32 %v5499, 1.442695
      %v5609 = vpow.pop %v5608
      %v5610 = vmul.f32 %v5500, 1.442695
      %v5611 = vpow.pop %v5610
      %v5612 = vmul.f32 %v5501, 1.442695
      %v5613 = vpow.pop %v5612
      %v5614 = vmul.f32 %v5502, 1.442695
      %v5615 = vpow.pop %v5614
      %v5616 = vmul.f32 %v5503, 1.442695
      %v5617 = vpow.pop %v5616
      %v5618 = vmul.f32 %v5504, 1.442695
      %v5619 = vpow.pop %v5618
      %v5620 = vmul.f32 %v5505, 1.442695
      %v5621 = vpow.pop %v5620
      %v5622 = vmul.f32 %v5506, 1.442695
      %v5623 = vpow.pop %v5622
      %v5624 = vmul.f32 %v5507, 1.442695
      %v5625 = vpow.pop %v5624
      %v5626 = vmul.f32 %v5508, 1.442695
      %v5627 = vpow.pop %v5626
      %v5628 = vmul.f32 %v5509, 1.442695
      %v5629 = vpow.pop %v5628
      %v5630 = vmul.f32 %v5510, 1.442695
      %v5631 = vpow.pop %v5630
      %v5632 = vmul.f32 %v5511, 1.442695
      %v5633 = vpow.pop %v5632
      %v5634 = vmul.f32 %v5512, 1.442695
      %v5635 = vpow.pop %v5634
      %v5636 = vmul.f32 %v5513, 1.442695
      %v5637 = vpow.pop %v5636
      %v5638 = vmul.f32 %v5514, 1.442695
      %v5639 = vpow.pop %v5638
      %v5640 = vmul.f32 %v5515, 1.442695
      %v5641 = vpow.pop %v5640
      %v5642 = vmul.f32 %v5516, 1.442695
      %v5643 = vpow.pop %v5642
      %v5644 = vmul.f32 %v5517, 1.442695
      %v5645 = vpow.pop %v5644
      %v5646 = vadd.f32 %v5519, 1.0
      %v5647 = vadd.f32 %v5521, 1.0
      %v5648 = vadd.f32 %v5523, 1.0
      %v5649 = vadd.f32 %v5525, 1.0
      %v5650 = vadd.f32 %v5527, 1.0
      %v5651 = vadd.f32 %v5529, 1.0
      %v5652 = vadd.f32 %v5531, 1.0
      %v5653 = vadd.f32 %v5533, 1.0
      %v5654 = vadd.f32 %v5535, 1.0
      %v5655 = vadd.f32 %v5537, 1.0
      %v5656 = vadd.f32 %v5539, 1.0
      %v5657 = vadd.f32 %v5541, 1.0
      %v5658 = vadd.f32 %v5543, 1.0
      %v5659 = vadd.f32 %v5545, 1.0
      %v5660 = vadd.f32 %v5547, 1.0
      %v5661 = vadd.f32 %v5549, 1.0
      %v5662 = vadd.f32 %v5551, 1.0
      %v5663 = vadd.f32 %v5553, 1.0
      %v5664 = vadd.f32 %v5555, 1.0
      %v5665 = vadd.f32 %v5557, 1.0
      %v5666 = vadd.f32 %v5559, 1.0
      %v5667 = vadd.f32 %v5561, 1.0
      %v5668 = vadd.f32 %v5563, 1.0
      %v5669 = vadd.f32 %v5565, 1.0
      %v5670 = vadd.f32 %v5567, 1.0
      %v5671 = vadd.f32 %v5569, 1.0
      %v5672 = vadd.f32 %v5571, 1.0
      %v5673 = vadd.f32 %v5573, 1.0
      %v5674 = vadd.f32 %v5575, 1.0
      %v5675 = vadd.f32 %v5577, 1.0
      %v5676 = vadd.f32 %v5579, 1.0
      %v5677 = vadd.f32 %v5581, 1.0
      %v5678 = vadd.f32 %v5583, 1.0
      %v5679 = vadd.f32 %v5585, 1.0
      %v5680 = vadd.f32 %v5587, 1.0
      %v5681 = vadd.f32 %v5589, 1.0
      %v5682 = vadd.f32 %v5591, 1.0
      %v5683 = vadd.f32 %v5593, 1.0
      %v5684 = vadd.f32 %v5595, 1.0
      %v5685 = vadd.f32 %v5597, 1.0
      %v5686 = vadd.f32 %v5599, 1.0
      %v5687 = vadd.f32 %v5601, 1.0
      %v5688 = vadd.f32 %v5603, 1.0
      %v5689 = vadd.f32 %v5605, 1.0
      %v5690 = vadd.f32 %v5607, 1.0
      %v5691 = vadd.f32 %v5609, 1.0
      %v5692 = vadd.f32 %v5611, 1.0
      %v5693 = vadd.f32 %v5613, 1.0
      %v5694 = vadd.f32 %v5615, 1.0
      %v5695 = vadd.f32 %v5617, 1.0
      %v5696 = vadd.f32 %v5619, 1.0
      %v5697 = vadd.f32 %v5621, 1.0
      %v5698 = vadd.f32 %v5623, 1.0
      %v5699 = vadd.f32 %v5625, 1.0
      %v5700 = vadd.f32 %v5627, 1.0
      %v5701 = vadd.f32 %v5629, 1.0
      %v5702 = vadd.f32 %v5631, 1.0
      %v5703 = vadd.f32 %v5633, 1.0
      %v5704 = vadd.f32 %v5635, 1.0
      %v5705 = vadd.f32 %v5637, 1.0
      %v5706 = vadd.f32 %v5639, 1.0
      %v5707 = vadd.f32 %v5641, 1.0
      %v5708 = vadd.f32 %v5643, 1.0
      %v5709 = vadd.f32 %v5645, 1.0
      %v5710 = vrcp.pop %v5646
      %v5711 = vrcp.pop %v5647
      %v5712 = vrcp.pop %v5648
      %v5713 = vrcp.pop %v5649
      %v5714 = vrcp.pop %v5650
      %v5715 = vrcp.pop %v5651
      %v5716 = vrcp.pop %v5652
      %v5717 = vrcp.pop %v5653
      %v5718 = vrcp.pop %v5654
      %v5719 = vrcp.pop %v5655
      %v5720 = vrcp.pop %v5656
      %v5721 = vrcp.pop %v5657
      %v5722 = vrcp.pop %v5658
      %v5723 = vrcp.pop %v5659
      %v5724 = vrcp.pop %v5660
      %v5725 = vrcp.pop %v5661
      %v5726 = vrcp.pop %v5662
      %v5727 = vrcp.pop %v5663
      %v5728 = vrcp.pop %v5664
      %v5729 = vrcp.pop %v5665
      %v5730 = vrcp.pop %v5666
      %v5731 = vrcp.pop %v5667
      %v5732 = vrcp.pop %v5668
      %v5733 = vrcp.pop %v5669
      %v5734 = vrcp.pop %v5670
      %v5735 = vrcp.pop %v5671
      %v5736 = vrcp.pop %v5672
      %v5737 = vrcp.pop %v5673
      %v5738 = vrcp.pop %v5674
      %v5739 = vrcp.pop %v5675
      %v5740 = vrcp.pop %v5676
      %v5741 = vrcp.pop %v5677
      %v5742 = vrcp.pop %v5678
      %v5743 = vrcp.pop %v5679
      %v5744 = vrcp.pop %v5680
      %v5745 = vrcp.pop %v5681
      %v5746 = vrcp.pop %v5682
      %v5747 = vrcp.pop %v5683
      %v5748 = vrcp.pop %v5684
      %v5749 = vrcp.pop %v5685
      %v5750 = vrcp.pop %v5686
      %v5751 = vrcp.pop %v5687
      %v5752 = vrcp.pop %v5688
      %v5753 = vrcp.pop %v5689
      %v5754 = vrcp.pop %v5690
      %v5755 = vrcp.pop %v5691
      %v5756 = vrcp.pop %v5692
      %v5757 = vrcp.pop %v5693
      %v5758 = vrcp.pop %v5694
      %v5759 = vrcp.pop %v5695
      %v5760 = vrcp.pop %v5696
      %v5761 = vrcp.pop %v5697
      %v5762 = vrcp.pop %v5698
      %v5763 = vrcp.pop %v5699
      %v5764 = vrcp.pop %v5700
      %v5765 = vrcp.pop %v5701
      %v5766 = vrcp.pop %v5702
      %v5767 = vrcp.pop %v5703
      %v5768 = vrcp.pop %v5704
      %v5769 = vrcp.pop %v5705
      %v5770 = vrcp.pop %v5706
      %v5771 = vrcp.pop %v5707
      %v5772 = vrcp.pop %v5708
      %v5773 = vrcp.pop %v5709
      %v5774 = vmul.f32 %v5390, %v5710
      %v5775 = vmul.f32 %v5391, %v5711
      %v5776 = vmul.f32 %v5392, %v5712
      %v5777 = vmul.f32 %v5393, %v5713
      %v5778 = vmul.f32 %v5394, %v5714
      %v5779 = vmul.f32 %v5395, %v5715
      %v5780 = vmul.f32 %v5396, %v5716
      %v5781 = vmul.f32 %v5397, %v5717
      %v5782 = vmul.f32 %v5398, %v5718
      %v5783 = vmul.f32 %v5399, %v5719
      %v5784 = vmul.f32 %v5400, %v5720
      %v5785 = vmul.f32 %v5401, %v5721
      %v5786 = vmul.f32 %v5402, %v5722
      %v5787 = vmul.f32 %v5403, %v5723
      %v5788 = vmul.f32 %v5404, %v5724
      %v5789 = vmul.f32 %v5405, %v5725
      %v5790 = vmul.f32 %v5406, %v5726
      %v5791 = vmul.f32 %v5407, %v5727
      %v5792 = vmul.f32 %v5408, %v5728
      %v5793 = vmul.f32 %v5409, %v5729
      %v5794 = vmul.f32 %v5410, %v5730
      %v5795 = vmul.f32 %v5411, %v5731
      %v5796 = vmul.f32 %v5412, %v5732
      %v5797 = vmul.f32 %v5413, %v5733
      %v5798 = vmul.f32 %v5414, %v5734
      %v5799 = vmul.f32 %v5415, %v5735
      %v5800 = vmul.f32 %v5416, %v5736
      %v5801 = vmul.f32 %v5417, %v5737
      %v5802 = vmul.f32 %v5418, %v5738
      %v5803 = vmul.f32 %v5419, %v5739
      %v5804 = vmul.f32 %v5420, %v5740
      %v5805 = vmul.f32 %v5421, %v5741
      %v5806 = vmul.f32 %v5422, %v5742
      %v5807 = vmul.f32 %v5423, %v5743
      %v5808 = vmul.f32 %v5424, %v5744
      %v5809 = vmul.f32 %v5425, %v5745
      %v5810 = vmul.f32 %v5426, %v5746
      %v5811 = vmul.f32 %v5427, %v5747
      %v5812 = vmul.f32 %v5428, %v5748
      %v5813 = vmul.f32 %v5429, %v5749
      %v5814 = vmul.f32 %v5430, %v5750
      %v5815 = vmul.f32 %v5431, %v5751
      %v5816 = vmul.f32 %v5432, %v5752
      %v5817 = vmul.f32 %v5433, %v5753
      %v5818 = vmul.f32 %v5434, %v5754
      %v5819 = vmul.f32 %v5435, %v5755
      %v5820 = vmul.f32 %v5436, %v5756
      %v5821 = vmul.f32 %v5437, %v5757
      %v5822 = vmul.f32 %v5438, %v5758
      %v5823 = vmul.f32 %v5439, %v5759
      %v5824 = vmul.f32 %v5440, %v5760
      %v5825 = vmul.f32 %v5441, %v5761
      %v5826 = vmul.f32 %v5442, %v5762
      %v5827 = vmul.f32 %v5443, %v5763
      %v5828 = vmul.f32 %v5444, %v5764
      %v5829 = vmul.f32 %v5445, %v5765
      %v5830 = vmul.f32 %v5446, %v5766
      %v5831 = vmul.f32 %v5447, %v5767
      %v5832 = vmul.f32 %v5448, %v5768
      %v5833 = vmul.f32 %v5449, %v5769
      %v5834 = vmul.f32 %v5450, %v5770
      %v5835 = vmul.f32 %v5451, %v5771
      %v5836 = vmul.f32 %v5452, %v5772
      %v5837 = vmul.f32 %v5453, %v5773
      %vm5918 = vcmask 1046528
      %v5919 = vrot.slane %v380, 1
      %v5920 = vrot.slane %v381, 1
      %v5921 = vsel %vm5918, %v5919, %v5920
      %v5922 = vrot.slane %v382, 1
      %v5923 = vsel %vm5918, %v5920, %v5922
      %v5924 = vrot.slane %v383, 1
      %v5925 = vsel %vm5918, %v5922, %v5924
      %v5926 = vrot.slane %v384, 1
      %v5927 = vsel %vm5918, %v5924, %v5926
      %v5928 = vrot.slane %v385, 1
      %v5929 = vrot.slane %v386, 1
      %v5930 = vsel %vm5918, %v5928, %v5929
      %v5931 = vrot.slane %v387, 1
      %v5932 = vsel %vm5918, %v5929, %v5931
      %v5933 = vrot.slane %v388, 1
      %v5934 = vsel %vm5918, %v5931, %v5933
      %v5935 = vrot.slane %v389, 1
      %v5936 = vsel %vm5918, %v5933, %v5935
      %v5937 = vrot.slane %v390, 1
      %v5938 = vrot.slane %v391, 1
      %v5939 = vsel %vm5918, %v5937, %v5938
      %v5940 = vrot.slane %v392, 1
      %v5941 = vsel %vm5918, %v5938, %v5940
      %v5942 = vrot.slane %v393, 1
      %v5943 = vsel %vm5918, %v5940, %v5942
      %v5944 = vrot.slane %v394, 1
      %v5945 = vsel %vm5918, %v5942, %v5944
      %v5946 = vrot.slane %v395, 1
      %v5947 = vrot.slane %v396, 1
      %v5948 = vsel %vm5918, %v5946, %v5947
      %v5949 = vrot.slane %v397, 1
      %v5950 = vsel %vm5918, %v5947, %v5949
      %v5951 = vrot.slane %v398, 1
      %v5952 = vsel %vm5918, %v5949, %v5951
      %v5953 = vrot.slane %v399, 1
      %v5954 = vsel %vm5918, %v5951, %v5953
      %v5955 = vrot.slane %v400, 1
      %v5956 = vrot.slane %v401, 1
      %v5957 = vsel %vm5918, %v5955, %v5956
      %v5958 = vrot.slane %v402, 1
      %v5959 = vsel %vm5918, %v5956, %v5958
      %v5960 = vrot.slane %v403, 1
      %v5961 = vsel %vm5918, %v5958, %v5960
      %v5962 = vrot.slane %v404, 1
      %v5963 = vsel %vm5918, %v5960, %v5962
      %v5964 = vrot.slane %v405, 1
      %v5965 = vrot.slane %v406, 1
      %v5966 = vsel %vm5918, %v5964, %v5965
      %v5967 = vrot.slane %v407, 1
      %v5968 = vsel %vm5918, %v5965, %v5967
      %v5969 = vrot.slane %v408, 1
      %v5970 = vsel %vm5918, %v5967, %v5969
      %v5971 = vrot.slane %v409, 1
      %v5972 = vsel %vm5918, %v5969, %v5971
      %v5973 = vrot.slane %v410, 1
      %v5974 = vrot.slane %v411, 1
      %v5975 = vsel %vm5918, %v5973, %v5974
      %v5976 = vrot.slane %v412, 1
      %v5977 = vsel %vm5918, %v5974, %v5976
      %v5978 = vrot.slane %v413, 1
      %v5979 = vsel %vm5918, %v5976, %v5978
      %v5980 = vrot.slane %v414, 1
      %v5981 = vsel %vm5918, %v5978, %v5980
      %v5982 = vrot.slane %v415, 1
      %v5983 = vrot.slane %v416, 1
      %v5984 = vsel %vm5918, %v5982, %v5983
      %v5985 = vrot.slane %v417, 1
      %v5986 = vsel %vm5918, %v5983, %v5985
      %v5987 = vrot.slane %v418, 1
      %v5988 = vsel %vm5918, %v5985, %v5987
      %v5989 = vrot.slane %v419, 1
      %v5990 = vsel %vm5918, %v5987, %v5989
      %v5991 = vrot.slane %v420, 1
      %v5992 = vrot.slane %v421, 1
      %v5993 = vsel %vm5918, %v5991, %v5992
      %v5994 = vrot.slane %v422, 1
      %v5995 = vsel %vm5918, %v5992, %v5994
      %v5996 = vrot.slane %v423, 1
      %v5997 = vsel %vm5918, %v5994, %v5996
      %v5998 = vrot.slane %v424, 1
      %v5999 = vsel %vm5918, %v5996, %v5998
      %v6000 = vrot.slane %v425, 1
      %v6001 = vrot.slane %v426, 1
      %v6002 = vsel %vm5918, %v6000, %v6001
      %v6003 = vrot.slane %v427, 1
      %v6004 = vsel %vm5918, %v6001, %v6003
      %v6005 = vrot.slane %v428, 1
      %v6006 = vsel %vm5918, %v6003, %v6005
      %v6007 = vrot.slane %v429, 1
      %v6008 = vsel %vm5918, %v6005, %v6007
      %v6009 = vrot.slane %v430, 1
      %v6010 = vrot.slane %v431, 1
      %v6011 = vsel %vm5918, %v6009, %v6010
      %v6012 = vrot.slane %v432, 1
      %v6013 = vsel %vm5918, %v6010, %v6012
      %v6014 = vrot.slane %v433, 1
      %v6015 = vsel %vm5918, %v6012, %v6014
      %v6016 = vrot.slane %v434, 1
      %v6017 = vsel %vm5918, %v6014, %v6016
      %v6018 = vrot.slane %v435, 1
      %v6019 = vrot.slane %v436, 1
      %v6020 = vsel %vm5918, %v6018, %v6019
      %v6021 = vrot.slane %v437, 1
      %v6022 = vsel %vm5918, %v6019, %v6021
      %v6023 = vrot.slane %v438, 1
      %v6024 = vsel %vm5918, %v6021, %v6023
      %v6025 = vrot.slane %v439, 1
      %v6026 = vsel %vm5918, %v6023, %v6025
      %v6027 = vrot.slane %v440, 1
      %v6028 = vrot.slane %v441, 1
      %v6029 = vsel %vm5918, %v6027, %v6028
      %v6030 = vrot.slane %v442, 1
      %v6031 = vsel %vm5918, %v6028, %v6030
      %v6032 = vrot.slane %v443, 1
      %v6033 = vsel %vm5918, %v6030, %v6032
      %v6034 = vrot.slane %v444, 1
      %v6035 = vsel %vm5918, %v6032, %v6034
      %v6036 = vrot.slane %v445, 1
      %v6037 = vrot.slane %v446, 1
      %v6038 = vsel %vm5918, %v6036, %v6037
      %v6039 = vrot.slane %v447, 1
      %v6040 = vsel %vm5918, %v6037, %v6039
      %v6041 = vrot.slane %v448, 1
      %v6042 = vsel %vm5918, %v6039, %v6041
      %v6043 = vrot.slane %v449, 1
      %v6044 = vsel %vm5918, %v6041, %v6043
      %v6045 = vrot.slane %v450, 1
      %v6046 = vrot.slane %v451, 1
      %v6047 = vsel %vm5918, %v6045, %v6046
      %v6048 = vrot.slane %v452, 1
      %v6049 = vsel %vm5918, %v6046, %v6048
      %v6050 = vrot.slane %v453, 1
      %v6051 = vsel %vm5918, %v6048, %v6050
      %v6052 = vrot.slane %v454, 1
      %v6053 = vsel %vm5918, %v6050, %v6052
      %v6054 = vrot.slane %v455, 1
      %v6055 = vrot.slane %v456, 1
      %v6056 = vsel %vm5918, %v6054, %v6055
      %v6057 = vrot.slane %v457, 1
      %v6058 = vsel %vm5918, %v6055, %v6057
      %v6059 = vrot.slane %v458, 1
      %v6060 = vsel %vm5918, %v6057, %v6059
      %v6061 = vrot.slane %v459, 1
      %v6062 = vsel %vm5918, %v6059, %v6061
      %v6127 = vadd.f32 %v5921, %v5774
      %v6128 = vadd.f32 %v5923, %v5775
      %v6129 = vadd.f32 %v5925, %v5776
      %v6130 = vadd.f32 %v5927, %v5777
      %v6131 = vadd.f32 %v5930, %v5778
      %v6132 = vadd.f32 %v5932, %v5779
      %v6133 = vadd.f32 %v5934, %v5780
      %v6134 = vadd.f32 %v5936, %v5781
      %v6135 = vadd.f32 %v5939, %v5782
      %v6136 = vadd.f32 %v5941, %v5783
      %v6137 = vadd.f32 %v5943, %v5784
      %v6138 = vadd.f32 %v5945, %v5785
      %v6139 = vadd.f32 %v5948, %v5786
      %v6140 = vadd.f32 %v5950, %v5787
      %v6141 = vadd.f32 %v5952, %v5788
      %v6142 = vadd.f32 %v5954, %v5789
      %v6143 = vadd.f32 %v5957, %v5790
      %v6144 = vadd.f32 %v5959, %v5791
      %v6145 = vadd.f32 %v5961, %v5792
      %v6146 = vadd.f32 %v5963, %v5793
      %v6147 = vadd.f32 %v5966, %v5794
      %v6148 = vadd.f32 %v5968, %v5795
      %v6149 = vadd.f32 %v5970, %v5796
      %v6150 = vadd.f32 %v5972, %v5797
      %v6151 = vadd.f32 %v5975, %v5798
      %v6152 = vadd.f32 %v5977, %v5799
      %v6153 = vadd.f32 %v5979, %v5800
      %v6154 = vadd.f32 %v5981, %v5801
      %v6155 = vadd.f32 %v5984, %v5802
      %v6156 = vadd.f32 %v5986, %v5803
      %v6157 = vadd.f32 %v5988, %v5804
      %v6158 = vadd.f32 %v5990, %v5805
      %v6159 = vadd.f32 %v5993, %v5806
      %v6160 = vadd.f32 %v5995, %v5807
      %v6161 = vadd.f32 %v5997, %v5808
      %v6162 = vadd.f32 %v5999, %v5809
      %v6163 = vadd.f32 %v6002, %v5810
      %v6164 = vadd.f32 %v6004, %v5811
      %v6165 = vadd.f32 %v6006, %v5812
      %v6166 = vadd.f32 %v6008, %v5813
      %v6167 = vadd.f32 %v6011, %v5814
      %v6168 = vadd.f32 %v6013, %v5815
      %v6169 = vadd.f32 %v6015, %v5816
      %v6170 = vadd.f32 %v6017, %v5817
      %v6171 = vadd.f32 %v6020, %v5818
      %v6172 = vadd.f32 %v6022, %v5819
      %v6173 = vadd.f32 %v6024, %v5820
      %v6174 = vadd.f32 %v6026, %v5821
      %v6175 = vadd.f32 %v6029, %v5822
      %v6176 = vadd.f32 %v6031, %v5823
      %v6177 = vadd.f32 %v6033, %v5824
      %v6178 = vadd.f32 %v6035, %v5825
      %v6179 = vadd.f32 %v6038, %v5826
      %v6180 = vadd.f32 %v6040, %v5827
      %v6181 = vadd.f32 %v6042, %v5828
      %v6182 = vadd.f32 %v6044, %v5829
      %v6183 = vadd.f32 %v6047, %v5830
      %v6184 = vadd.f32 %v6049, %v5831
      %v6185 = vadd.f32 %v6051, %v5832
      %v6186 = vadd.f32 %v6053, %v5833
      %v6187 = vadd.f32 %v6056, %v5834
      %v6188 = vadd.f32 %v6058, %v5835
      %v6189 = vadd.f32 %v6060, %v5836
      %v6190 = vadd.f32 %v6062, %v5837
      %6191 = vst.msk [vmem:[%s372] sm:$0xff] %vm843, %v6127
      %6192 = vst.msk [vmem:[%s372 + $0x8] sm:$0xff] %vm843, %v6128
      %6193 = vst.msk [vmem:[%s372 + $0x10] sm:$0xff] %vm843, %v6129
      %6194 = vst.msk [vmem:[%s372 + $0x18] sm:$0xff] %vm843, %v6130
      %6195 = vst.msk [vmem:[%s372 + $0x20] sm:$0xff] %vm843, %v6131
      %6196 = vst.msk [vmem:[%s372 + $0x28] sm:$0xff] %vm843, %v6132
      %6197 = vst.msk [vmem:[%s372 + $0x30] sm:$0xff] %vm843, %v6133
      %6198 = vst.msk [vmem:[%s372 + $0x38] sm:$0xff] %vm843, %v6134
      %6199 = vst.msk [vmem:[%s372 + $0x40] sm:$0xff] %vm843, %v6135
      %6200 = vst.msk [vmem:[%s372 + $0x48] sm:$0xff] %vm843, %v6136
      %6201 = vst.msk [vmem:[%s372 + $0x50] sm:$0xff] %vm843, %v6137
      %6202 = vst.msk [vmem:[%s372 + $0x58] sm:$0xff] %vm843, %v6138
      %6203 = vst.msk [vmem:[%s372 + $0x60] sm:$0xff] %vm843, %v6139
      %6204 = vst.msk [vmem:[%s372 + $0x68] sm:$0xff] %vm843, %v6140
      %6205 = vst.msk [vmem:[%s372 + $0x70] sm:$0xff] %vm843, %v6141
      %6206 = vst.msk [vmem:[%s372 + $0x78] sm:$0xff] %vm843, %v6142
      %6207 = vst.msk [vmem:[%s372 + $0x80] sm:$0xff] %vm843, %v6143
      %6208 = vst.msk [vmem:[%s372 + $0x88] sm:$0xff] %vm843, %v6144
      %6209 = vst.msk [vmem:[%s372 + $0x90] sm:$0xff] %vm843, %v6145
      %6210 = vst.msk [vmem:[%s372 + $0x98] sm:$0xff] %vm843, %v6146
      %6211 = vst.msk [vmem:[%s372 + $0xa0] sm:$0xff] %vm843, %v6147
      %6212 = vst.msk [vmem:[%s372 + $0xa8] sm:$0xff] %vm843, %v6148
      %6213 = vst.msk [vmem:[%s372 + $0xb0] sm:$0xff] %vm843, %v6149
      %6214 = vst.msk [vmem:[%s372 + $0xb8] sm:$0xff] %vm843, %v6150
      %6215 = vst.msk [vmem:[%s372 + $0xc0] sm:$0xff] %vm843, %v6151
      %6216 = vst.msk [vmem:[%s372 + $0xc8] sm:$0xff] %vm843, %v6152
      %6217 = vst.msk [vmem:[%s372 + $0xd0] sm:$0xff] %vm843, %v6153
      %6218 = vst.msk [vmem:[%s372 + $0xd8] sm:$0xff] %vm843, %v6154
      %6219 = vst.msk [vmem:[%s372 + $0xe0] sm:$0xff] %vm843, %v6155
      %6220 = vst.msk [vmem:[%s372 + $0xe8] sm:$0xff] %vm843, %v6156
      %6221 = vst.msk [vmem:[%s372 + $0xf0] sm:$0xff] %vm843, %v6157
      %6222 = vst.msk [vmem:[%s372 + $0xf8] sm:$0xff] %vm843, %v6158
      %6223 = vst.msk [vmem:[%s372 + $0x100] sm:$0xff] %vm843, %v6159
      %6224 = vst.msk [vmem:[%s372 + $0x108] sm:$0xff] %vm843, %v6160
      %6225 = vst.msk [vmem:[%s372 + $0x110] sm:$0xff] %vm843, %v6161
      %6226 = vst.msk [vmem:[%s372 + $0x118] sm:$0xff] %vm843, %v6162
      %6227 = vst.msk [vmem:[%s372 + $0x120] sm:$0xff] %vm843, %v6163
      %6228 = vst.msk [vmem:[%s372 + $0x128] sm:$0xff] %vm843, %v6164
      %6229 = vst.msk [vmem:[%s372 + $0x130] sm:$0xff] %vm843, %v6165
      %6230 = vst.msk [vmem:[%s372 + $0x138] sm:$0xff] %vm843, %v6166
      %6231 = vst.msk [vmem:[%s372 + $0x140] sm:$0xff] %vm843, %v6167
      %6232 = vst.msk [vmem:[%s372 + $0x148] sm:$0xff] %vm843, %v6168
      %6233 = vst.msk [vmem:[%s372 + $0x150] sm:$0xff] %vm843, %v6169
      %6234 = vst.msk [vmem:[%s372 + $0x158] sm:$0xff] %vm843, %v6170
      %6235 = vst.msk [vmem:[%s372 + $0x160] sm:$0xff] %vm843, %v6171
      %6236 = vst.msk [vmem:[%s372 + $0x168] sm:$0xff] %vm843, %v6172
      %6237 = vst.msk [vmem:[%s372 + $0x170] sm:$0xff] %vm843, %v6173
      %6238 = vst.msk [vmem:[%s372 + $0x178] sm:$0xff] %vm843, %v6174
      %6239 = vst.msk [vmem:[%s372 + $0x180] sm:$0xff] %vm843, %v6175
      %6240 = vst.msk [vmem:[%s372 + $0x188] sm:$0xff] %vm843, %v6176
      %6241 = vst.msk [vmem:[%s372 + $0x190] sm:$0xff] %vm843, %v6177
      %6242 = vst.msk [vmem:[%s372 + $0x198] sm:$0xff] %vm843, %v6178
      %6243 = vst.msk [vmem:[%s372 + $0x1a0] sm:$0xff] %vm843, %v6179
      %6244 = vst.msk [vmem:[%s372 + $0x1a8] sm:$0xff] %vm843, %v6180
      %6245 = vst.msk [vmem:[%s372 + $0x1b0] sm:$0xff] %vm843, %v6181
      %6246 = vst.msk [vmem:[%s372 + $0x1b8] sm:$0xff] %vm843, %v6182
      %6247 = vst.msk [vmem:[%s372 + $0x1c0] sm:$0xff] %vm843, %v6183
      %6248 = vst.msk [vmem:[%s372 + $0x1c8] sm:$0xff] %vm843, %v6184
      %6249 = vst.msk [vmem:[%s372 + $0x1d0] sm:$0xff] %vm843, %v6185
      %6250 = vst.msk [vmem:[%s372 + $0x1d8] sm:$0xff] %vm843, %v6186
      %6251 = vst.msk [vmem:[%s372 + $0x1e0] sm:$0xff] %vm843, %v6187
      %6252 = vst.msk [vmem:[%s372 + $0x1e8] sm:$0xff] %vm843, %v6188
      %6253 = vst.msk [vmem:[%s372 + $0x1f0] sm:$0xff] %vm843, %v6189
      %6254 = vst.msk [vmem:[%s372 + $0x1f8] sm:$0xff] %vm843, %v6190
      %s6255 = smul.u32 16, %s22
      %p6256 = scmp.lt.s32.totalorder %s21, 1
      %s6257 = scalar_select %p6256, %s21, 1
      %p6258 = scmp.lt.s32.totalorder %s6255, 31
      %s6259 = scalar_select %p6258, %s6255, 31
      %s6260 = smul.addr %s6259, 4
      %s6261 = smul.addr %s6257, 128
      %s6262 = sadd.s32 %s6260, %s6261
      %s6263 = smul.addr %s6262, 8
      %s6264 = scalar_lea.vmem %s6, %s6263
      // Predicated region
      $region45: #{upblock_forward.3} parent=43 // pred_check
        %p6265 = pneg %p193
      $region46: #{upblock_forward.3} parent=43 // pred_check_branch
        %6267 = sbr.rel (%p6265) target = $region48
      $region47: #{upblock_forward.3} parent=43 // pred_region
        %s6268 = smul.u32 16, %s22
      $region48: #{upblock_forward.3} parent=43 // pred_fallthru
        _
    $region44: #{upblock_forward.3} parent=5 // pred_fallthru
      _
    %p6269 = scmp.le.s32.totalorder 2, %s12
    // Predicated region
    $region49: #{upblock_forward.3} parent=5 // pred_check
      %p6270 = pneg %p6269
    $region50: #{upblock_forward.3} parent=5 // pred_check_branch
      %6272 = sbr.rel (%p6270) target = $region52
    $region51: #{upblock_forward.3} parent=5 // pred_region
      %s6273 = ssub.s32 %s12, 2
      // Predicated region
      $region53: #{upblock_forward.3} parent=51 // pred_check
        %p6274 = pneg %p199
      $region54: #{upblock_forward.3} parent=51 // pred_check_branch
        %6276 = sbr.rel (%p6274) target = $region56
      $region55: #{upblock_forward.3} parent=51 // pred_region
        %s6277 = smul.u32 16, %s24
        %p6278 = scmp.lt.s32.totalorder %s23, 1
        %s6279 = scalar_select %p6278, %s23, 1
        %p6280 = scmp.lt.s32.totalorder %s6277, 31
        %s6281 = scalar_select %p6280, %s6277, 31
        %s6282 = smul.addr %s6281, 4
        %s6283 = smul.addr %s6279, 128
        %s6284 = sadd.s32 %s6282, %s6283
        %s6285 = smul.addr %s6284, 8
        %s6286 = scalar_lea.vmem %s6, %s6285
      $region56: #{upblock_forward.3} parent=51 // pred_fallthru
        _
    $region52: #{upblock_forward.3} parent=5 // pred_fallthru
      _
  $region6: #{upblock_forward.3} parent=0 // loop_footer
    %s16 = sadd.s32 1, %s12
  $region7: #{upblock_forward.3} parent=0 // loop_footer_branch
    %11 = sbr.rel target = $region3
  $region8: #{upblock_forward.3} parent=0 // loop_exit
    _

</llo_original>
